<compile_context>
chip_gen: v6e
topology: v6e:2x2x1
jax: 0.10.0
libtpu: 0.0.40
codegen_flags: <defaults>
</compile_context>

<pallas_src>
import numpy as np
import jax
import jax.numpy as jnp
from jax import lax
from jax.experimental import pallas as pl
from jax.experimental.pallas import tpu as pltpu

# Keep true f32 matmul semantics (torch computes in f32).  Applies to both the Pallas
# kernel dots and the pure-JAX reference, so the 1e-3 check below is meaningful.
jax.config.update("jax_default_matmul_precision", "highest")

# pl.Squeezed() drops the size-1 batch dim from the kernel refs; fall back to the
# equivalent `None` block-dim on older jax versions.
_SQ = pl.Squeezed() if hasattr(pl, "Squeezed") else None


# ----------------------------- shared math helpers -----------------------------
_SQRT_2_OVER_PI = np.float32(0.7978845608028654)
_GELU_C = np.float32(0.044715)


def _gelu(x):
    # tanh-form GELU: the tanh runs on the EUP slot (otherwise idle) instead of the
    # ~10 VALU ops of a rational-erf polynomial.
    # TODO(synk): torch.nn.GELU() uses exact erf; Mosaic has no erf lowering, and the
    # tanh form deviates from exact GELU by at most ~3e-4.  The reference below uses
    # the same formula so the check verifies the kernel, not the GELU variant.
    return 0.5 * x * (1.0 + jnp.tanh(_SQRT_2_OVER_PI * (x + _GELU_C * x * x * x)))


# NOTE(perf): pl.reciprocal(..., approx=True) was considered for the softmax
# denominators / l_sent normalization (perf feedback), but its reduced precision
# (~bf16 level in the generic lowering) blows the 1e-3 f32 accuracy budget of this
# module; exact division is negligible at these (64,64)/(64,8) shapes.
def _softmax_rows(a):
    # softmax over the last (lane) axis.
    m = jnp.max(a, axis=-1, keepdims=True)
    e = jnp.exp(a - m)
    return e / jnp.sum(e, axis=-1, keepdims=True)


def _softmax_cols(a):
    # softmax over the first (sublane) axis -- used instead of materializing a.T.
    m = jnp.max(a, axis=0, keepdims=True)
    e = jnp.exp(a - m)
    return e / jnp.sum(e, axis=0, keepdims=True)


def _inst_norm_tokens(a, eps=1e-5):
    # InstanceNorm1d (affine=False, biased var) over the token axis (axis 0).
    mu = jnp.mean(a, axis=0, keepdims=True)
    var = jnp.mean((a - mu) ** 2, axis=0, keepdims=True)
    return (a - mu) * lax.rsqrt(var + eps)


# ----------------------------------- kernel ------------------------------------
def _efn_kernel(x_ref, l_ref, mrow_ref, mcol_ref,
                wpv_ref, wpl_ref, bp_ref,
                wlp_ref, blp_ref,
                wq_ref, bq_ref, wk_ref, bk_ref,
                ww_ref, bw_ref,
                out_ref):
    # Leading batch dim is squeezed in every per-batch BlockSpec -> refs arrive 2-D.
    x = x_ref[...]            # (HW, v_in)
    lt = l_ref[...]           # (N_l, l_in)
    mask_row = mrow_ref[...]  # (1, N_l)
    mask_col = mcol_ref[...]  # (N_l, 1)

    hw = x.shape[0]
    dim = wq_ref.shape[1]
    scale = np.float32(dim ** -0.5)

    # ---------------- EFN trunk ----------------
    # sentence embedding: masked mean of language features over tokens
    denom = jnp.sum(mask_row, axis=-1, keepdims=True)               # (1, 1)
    l_sent = jnp.sum(lt * mask_col, axis=0, keepdims=True) / denom  # (1, l_in)

    # project: Conv1d(v_in + l_in -> dim, k=1) + GELU (concat split into two matmuls)
    m_pre = (jnp.dot(x, wpv_ref[...], preferred_element_type=jnp.float32)
             + jnp.dot(l_sent, wpl_ref[...], preferred_element_type=jnp.float32)
             + bp_ref[...])
    M = _gelu(m_pre)                                                   # (HW, dim)

    # lang_project: Conv1d(l_in -> dim, k=1) + GELU, then token mask
    lang = _gelu(jnp.dot(lt, wlp_ref[...], preferred_element_type=jnp.float32)
                 + blp_ref[...]) * mask_col                            # (N_l, dim)

    # cross-modal attention producing L
    score = lax.dot_general(M, lang, (((1,), (1,)), ((), ())),
                            preferred_element_type=jnp.float32)        # (HW, N_l)
    score = score * scale + (10000.0 * mask_row - 10000.0)
    score = _softmax_rows(score)
    L = jnp.dot(score, lang, preferred_element_type=jnp.float32)       # (HW, dim)

    # ---------------- EFNAttention ----------------
    # TODO(synk): HW > 225 branch (AvgPool2d(2) + bilinear Upsample) not implemented;
    # with HW <= 225 the PyTorch module skips it as well.
    Mq = _inst_norm_tokens(jnp.dot(M, wq_ref[...], preferred_element_type=jnp.float32)
                           + bq_ref[...])                              # f_query
    Lk = _inst_norm_tokens(jnp.dot(L, wk_ref[...], preferred_element_type=jnp.float32)
                           + bk_ref[...])                              # f_key

    sim = lax.dot_general(Mq, Lk, (((1,), (1,)), ((), ())),
                          preferred_element_type=jnp.float32) * scale  # (HW, HW)
    sm1 = _softmax_rows(sim)   # softmax over dim=-1
    sm2 = _softmax_cols(sim)   # softmax over dim=-2; the permute(0,2,1) of the spec is
                               # folded into the Mp contraction below (no sim.T copy).

    Lp = jnp.dot(sm1, Lk, preferred_element_type=jnp.float32)          # (HW, dim)
    # Mp[i, :] = sum_j sm2[j, i] * Mq[j, :]  -> contract axis 0 of sm2 with axis 0 of Mq
    Mp = lax.dot_general(sm2, Mq, (((0,), (0,)), ((), ())),
                         preferred_element_type=jnp.float32)           # (HW, dim)

    # W: Conv1d(2*dim -> dim, k=3, pad=1) over tokens.  The three taps of the Lp-half
    # and Mp-half are packed along lanes into one (HW, 6*dim) operand and contracted
    # against the pre-packed (6*dim, dim) weight -> one MXU matmul instead of six.
    row_idx = lax.broadcasted_iota(jnp.int32, (hw, 1), 0)
    not_first = (row_idx > 0).astype(jnp.float32)        # zero row 0 after prev-tap
    not_last = (row_idx < hw - 1).astype(jnp.float32)    # zero last row after next-tap

    def prev_tap(a):   # row t <- a[t-1]
        return pltpu.roll(a, shift=1, axis=0) * not_first

    def next_tap(a):   # row t <- a[t+1]  (shift = hw-1 == -1 mod hw; must be >= 0)
        return pltpu.roll(a, shift=hw - 1, axis=0) * not_last

    taps = jnp.concatenate(
        [prev_tap(Lp), prev_tap(Mp), Lp, Mp, next_tap(Lp), next_tap(Mp)], axis=-1)
    acc = jnp.dot(taps, ww_ref[...], preferred_element_type=jnp.float32) + bw_ref[...]

    # NOTE(perf): dim=32 (<128 lanes) makes the final store a masked vst; fine at this
    # size, revisit (pack a lane-dense output slab) if HW/dim ever scale up.
    out_ref[...] = _inst_norm_tokens(acc).astype(out_ref.dtype)


# ---------------------------------- wrapper -------------------------------------
def efn_forward(x, l, l_mask, params):
    """x: (B, HW, v_in)   l: (B, l_in, N_l)   l_mask: (B, N_l, 1)  -> (B, HW, dim)."""
    B, HW, v_in = x.shape
    _, l_in, N_l = l.shape
    dim = params["wq"].shape[1]

    lt = jnp.transpose(l, (0, 2, 1))             # (B, N_l, l_in)
    mask_row = jnp.transpose(l_mask, (0, 2, 1))  # (B, 1, N_l)
    mask_col = l_mask                            # (B, N_l, 1)

    # Pre-pack the k=3 conv weights of `W` on the Cin axis in the same order the kernel
    # packs the taps along lanes: [prev(Lp), prev(Mp), Lp, Mp, next(Lp), next(Mp)].
    # (wwl[k] = torch W.weight[:, :dim, k].T, wwm[k] = torch W.weight[:, dim:, k].T.)
    ww_packed = jnp.concatenate(
        [params["wwl"][0], params["wwm"][0],
         params["wwl"][1], params["wwm"][1],
         params["wwl"][2], params["wwm"][2]], axis=0)   # (6*dim, dim)

    full2 = lambda a: pl.BlockSpec(a.shape, lambda b: (0, 0))

    in_specs = [
        pl.BlockSpec((_SQ, HW, v_in), lambda b: (b, 0, 0)),
        pl.BlockSpec((_SQ, N_l, l_in), lambda b: (b, 0, 0)),
        pl.BlockSpec((_SQ, 1, N_l), lambda b: (b, 0, 0)),
        pl.BlockSpec((_SQ, N_l, 1), lambda b: (b, 0, 0)),
        full2(params["wpv"]), full2(params["wpl"]), full2(params["bp"]),
        full2(params["wlp"]), full2(params["blp"]),
        full2(params["wq"]), full2(params["bq"]),
        full2(params["wk"]), full2(params["bk"]),
        full2(ww_packed), full2(params["bw"]),
    ]

    return pl.pallas_call(
        _efn_kernel,
        out_shape=jax.ShapeDtypeStruct((B, HW, dim), jnp.float32),
        grid_spec=pltpu.PrefetchScalarGridSpec(
            num_scalar_prefetch=0,
            grid=(B,),
            in_specs=in_specs,
            out_specs=pl.BlockSpec((_SQ, HW, dim), lambda b: (b, 0, 0)),
        ),
        # Batch elements are independent: "parallel" lets Mosaic shard the B axis across
        # the two TensorCores of a v7x chip (no-op on single-TC v5e/v6e).
        compiler_params=pltpu.CompilerParams(dimension_semantics=("parallel",)),
    )(x, lt, mask_row, mask_col,
      params["wpv"], params["wpl"], params["bp"],
      params["wlp"], params["blp"],
      params["wq"], params["bq"], params["wk"], params["bk"],
      ww_packed, params["bw"])


# ----------------------------- pure-JAX reference -------------------------------
def efn_reference(x, l, l_mask, p):
    mask_row = jnp.transpose(l_mask, (0, 2, 1))   # (B,1,N_l)
    mask_col = l_mask                             # (B,N_l,1)
    lt = jnp.transpose(l, (0, 2, 1))              # (B,N_l,l_in)
    dim = p["wq"].shape[1]
    scale = dim ** -0.5

    def inorm(v, eps=1e-5):
        mu = jnp.mean(v, axis=1, keepdims=True)
        var = jnp.mean((v - mu) ** 2, axis=1, keepdims=True)
        return (v - mu) / jnp.sqrt(var + eps)

    l_sent = jnp.sum(lt * mask_col, axis=1, keepdims=True) / jnp.sum(
        mask_row, axis=-1, keepdims=True)                              # (B,1,l_in)
    M = _gelu(x @ p["wpv"] + l_sent @ p["wpl"] + p["bp"])              # (B,HW,dim)
    lang = _gelu(lt @ p["wlp"] + p["blp"]) * mask_col                  # (B,N_l,dim)
    score = jnp.einsum("bqd,bkd->bqk", M, lang) * scale + (10000.0 * mask_row - 10000.0)
    score = jax.nn.softmax(score, axis=-1)
    L = score @ lang                                                   # (B,HW,dim)

    Mq = inorm(M @ p["wq"] + p["bq"])
    Lk = inorm(L @ p["wk"] + p["bk"])
    sim = jnp.einsum("bqd,bkd->bqk", Mq, Lk) * scale
    sm1 = jax.nn.softmax(sim, axis=-1)
    sm2 = jnp.transpose(jax.nn.softmax(sim, axis=-2), (0, 2, 1))
    Lp = sm1 @ Lk
    Mp = sm2 @ Mq

    def shift(a, s):   # s=+1: row t <- a[t-1]; s=-1: row t <- a[t+1]
        z = jnp.zeros_like(a[:, :1, :])
        return jnp.concatenate([z, a[:, :-1, :]], 1) if s == 1 else \
               jnp.concatenate([a[:, 1:, :], z], 1)

    acc = p["bw"]
    for k, s in ((0, 1), (1, 0), (2, -1)):
        lp_s = Lp if s == 0 else shift(Lp, s)
        mp_s = Mp if s == 0 else shift(Mp, s)
        acc = acc + lp_s @ p["wwl"][k] + mp_s @ p["wwm"][k]
    return inorm(acc)


# ------------------------------------ main ---------------------------------------
if __name__ == "__main__":
    B, HW, v_in, l_in, N_l, dim = 2, 64, 24, 16, 8, 32

    key = jax.random.PRNGKey(0)
    keys = jax.random.split(key, 16)

    def rnd(k, shape, s=0.2):
        return (s * jax.random.normal(k, shape)).astype(jnp.float32)

    # Weights stored as (Cin, Cout); `wwl`/`wwm` are the k=3 conv taps for the Lp-half /
    # Mp-half of the 2*dim input channels (PyTorch W.weight[:, :dim, k].T etc.).
    params = {
        "wpv": rnd(keys[0], (v_in, dim)),
        "wpl": rnd(keys[1], (l_in, dim)),
        "bp":  rnd(keys[2], (1, dim), 0.05),
        "wlp": rnd(keys[3], (l_in, dim)),
        "blp": rnd(keys[4], (1, dim), 0.05),
        "wq":  rnd(keys[5], (dim, dim)),
        "bq":  rnd(keys[6], (1, dim), 0.05),
        "wk":  rnd(keys[7], (dim, dim)),
        "bk":  rnd(keys[8], (1, dim), 0.05),
        "wwl": rnd(keys[9], (3, dim, dim)),
        "wwm": rnd(keys[10], (3, dim, dim)),
        "bw":  rnd(keys[11], (1, dim), 0.05),
    }

    x = rnd(keys[12], (B, HW, v_in), 1.0)          # visual features (B, HW, v_in)
    l = rnd(keys[13], (B, l_in, N_l), 1.0)         # language features (B, l_in, N_l)
    lens = jnp.array([5, N_l])                     # valid tokens per batch
    tok = jnp.arange(N_l)[None, :]
    l_mask = (tok < lens[:, None]).astype(jnp.float32)[..., None]   # (B, N_l, 1)

    out = jax.block_until_ready(efn_forward(x, l, l_mask, params))
    ref = efn_reference(x, l, l_mask, params)

    assert out.shape == (B, HW, dim)
    assert bool(jnp.all(jnp.isfinite(out)))
    err = float(jnp.max(jnp.abs(out - ref)))
    assert err < 1e-3, f"max abs err {err}"
    print("KERNEL_OK")
</pallas_src>

<mosaic_0001>
module attributes {stable_mosaic.version = 11 : i64} {
  func.func @_efn_kernel(%arg0: i32, %arg1: memref<1x64x24xf32, #tpu.memory_space<vmem>>, %arg2: memref<1x8x16xf32, #tpu.memory_space<vmem>>, %arg3: memref<1x1x8xf32, #tpu.memory_space<vmem>>, %arg4: memref<1x8x1xf32, #tpu.memory_space<vmem>>, %arg5: memref<24x32xf32, #tpu.memory_space<vmem>>, %arg6: memref<16x32xf32, #tpu.memory_space<vmem>>, %arg7: memref<1x32xf32, #tpu.memory_space<vmem>>, %arg8: memref<16x32xf32, #tpu.memory_space<vmem>>, %arg9: memref<1x32xf32, #tpu.memory_space<vmem>>, %arg10: memref<32x32xf32, #tpu.memory_space<vmem>>, %arg11: memref<1x32xf32, #tpu.memory_space<vmem>>, %arg12: memref<32x32xf32, #tpu.memory_space<vmem>>, %arg13: memref<1x32xf32, #tpu.memory_space<vmem>>, %arg14: memref<192x32xf32, #tpu.memory_space<vmem>>, %arg15: memref<1x32xf32, #tpu.memory_space<vmem>>, %arg16: memref<1x64x32xf32, #tpu.memory_space<vmem>>) attributes {dimension_semantics = [#tpu.dimension_semantics<parallel>], iteration_bounds = array<i64: 2>, scalar_prefetch = 0 : i64, scratch_operands = 0 : i64, tpu.core_type = #tpu.core_type<tc>, window_params = [{transform_indices = @transform_0, window_bounds = array<i64: 1, 64, 24>}, {transform_indices = @transform_1, window_bounds = array<i64: 1, 8, 16>}, {transform_indices = @transform_2, window_bounds = array<i64: 1, 1, 8>}, {transform_indices = @transform_3, window_bounds = array<i64: 1, 8, 1>}, {pipeline_mode = #tpu.pipeline_mode<synchronous>, transform_indices = @transform_4, window_bounds = array<i64: 24, 32>}, {pipeline_mode = #tpu.pipeline_mode<synchronous>, transform_indices = @transform_5, window_bounds = array<i64: 16, 32>}, {pipeline_mode = #tpu.pipeline_mode<synchronous>, transform_indices = @transform_6, window_bounds = array<i64: 1, 32>}, {pipeline_mode = #tpu.pipeline_mode<synchronous>, transform_indices = @transform_7, window_bounds = array<i64: 16, 32>}, {pipeline_mode = #tpu.pipeline_mode<synchronous>, transform_indices = @transform_8, window_bounds = array<i64: 1, 32>}, {pipeline_mode = #tpu.pipeline_mode<synchronous>, transform_indices = @transform_9, window_bounds = array<i64: 32, 32>}, {pipeline_mode = #tpu.pipeline_mode<synchronous>, transform_indices = @transform_10, window_bounds = array<i64: 1, 32>}, {pipeline_mode = #tpu.pipeline_mode<synchronous>, transform_indices = @transform_11, window_bounds = array<i64: 32, 32>}, {pipeline_mode = #tpu.pipeline_mode<synchronous>, transform_indices = @transform_12, window_bounds = array<i64: 1, 32>}, {pipeline_mode = #tpu.pipeline_mode<synchronous>, transform_indices = @transform_13, window_bounds = array<i64: 192, 32>}, {pipeline_mode = #tpu.pipeline_mode<synchronous>, transform_indices = @transform_14, window_bounds = array<i64: 1, 32>}, {transform_indices = @transform_15, window_bounds = array<i64: 1, 64, 32>}]} {
    %c0 = arith.constant 0 : index
    %c0_0 = arith.constant 0 : index
    %c0_1 = arith.constant 0 : index
    %0 = vector.load %arg1[%c0, %c0_0, %c0_1] : memref<1x64x24xf32, #tpu.memory_space<vmem>>, vector<1x64x24xf32>
    %1 = vector.shape_cast %0 : vector<1x64x24xf32> to vector<64x24xf32>
    %c0_2 = arith.constant 0 : index
    %c0_3 = arith.constant 0 : index
    %c0_4 = arith.constant 0 : index
    %2 = vector.load %arg2[%c0_2, %c0_3, %c0_4] : memref<1x8x16xf32, #tpu.memory_space<vmem>>, vector<1x8x16xf32>
    %3 = vector.shape_cast %2 : vector<1x8x16xf32> to vector<8x16xf32>
    %c0_5 = arith.constant 0 : index
    %c0_6 = arith.constant 0 : index
    %c0_7 = arith.constant 0 : index
    %4 = vector.load %arg3[%c0_5, %c0_6, %c0_7] : memref<1x1x8xf32, #tpu.memory_space<vmem>>, vector<1x1x8xf32>
    %5 = vector.shape_cast %4 : vector<1x1x8xf32> to vector<1x8xf32>
    %c0_8 = arith.constant 0 : index
    %c0_9 = arith.constant 0 : index
    %c0_10 = arith.constant 0 : index
    %6 = vector.load %arg4[%c0_8, %c0_9, %c0_10] : memref<1x8x1xf32, #tpu.memory_space<vmem>>, vector<1x8x1xf32>
    %7 = vector.shape_cast %6 : vector<1x8x1xf32> to vector<8x1xf32>
    %cst = arith.constant dense<0.000000e+00> : vector<1xf32>
    %8 = vector.multi_reduction <add>, %5, %cst [1] : vector<1x8xf32> to vector<1xf32>
    %9 = vector.shape_cast %8 : vector<1xf32> to vector<1x1xf32>
    %10 = vector.broadcast %7 : vector<8x1xf32> to vector<8x16xf32>
    %11 = arith.mulf %3, %10 : vector<8x16xf32>
    %cst_11 = arith.constant dense<0.000000e+00> : vector<16xf32>
    %12 = vector.multi_reduction <add>, %11, %cst_11 [0] : vector<8x16xf32> to vector<16xf32>
    %13 = vector.shape_cast %12 : vector<16xf32> to vector<1x16xf32>
    %14 = vector.broadcast %9 : vector<1x1xf32> to vector<1x16xf32>
    %15 = arith.divf %13, %14 : vector<1x16xf32>
    %c0_12 = arith.constant 0 : index
    %c0_13 = arith.constant 0 : index
    %16 = vector.load %arg5[%c0_12, %c0_13] : memref<24x32xf32, #tpu.memory_space<vmem>>, vector<24x32xf32>
    %cst_14 = arith.constant dense<0.000000e+00> : vector<64x32xf32>
    %17 = tpu.matmul %1, %16, %cst_14 {dimension_numbers = #tpu.dot_dimension_numbers<[1], [0], [0], [1], [0, 0, 1, 1], [], []>, precision = #tpu.contract_precision<fp32>} : vector<64x24xf32>, vector<24x32xf32>, vector<64x32xf32> -> vector<64x32xf32>
    %c0_15 = arith.constant 0 : index
    %c0_16 = arith.constant 0 : index
    %18 = vector.load %arg6[%c0_15, %c0_16] : memref<16x32xf32, #tpu.memory_space<vmem>>, vector<16x32xf32>
    %cst_17 = arith.constant dense<0.000000e+00> : vector<1x32xf32>
    %19 = tpu.matmul %15, %18, %cst_17 {dimension_numbers = #tpu.dot_dimension_numbers<[1], [0], [0], [1], [0, 0, 1, 1], [], []>, precision = #tpu.contract_precision<fp32>} : vector<1x16xf32>, vector<16x32xf32>, vector<1x32xf32> -> vector<1x32xf32>
    %20 = vector.broadcast %19 : vector<1x32xf32> to vector<64x32xf32>
    %21 = arith.addf %17, %20 : vector<64x32xf32>
    %c0_18 = arith.constant 0 : index
    %c0_19 = arith.constant 0 : index
    %22 = vector.load %arg7[%c0_18, %c0_19] : memref<1x32xf32, #tpu.memory_space<vmem>>, vector<1x32xf32>
    %23 = vector.broadcast %22 : vector<1x32xf32> to vector<64x32xf32>
    %24 = arith.addf %21, %23 : vector<64x32xf32>
    %cst_20 = arith.constant 5.000000e-01 : f32
    %25 = vector.broadcast %cst_20 : f32 to vector<64x32xf32>
    %26 = arith.mulf %25, %24 : vector<64x32xf32>
    %cst_21 = arith.constant 4.471500e-02 : f32
    %27 = vector.broadcast %cst_21 : f32 to vector<64x32xf32>
    %28 = arith.mulf %27, %24 : vector<64x32xf32>
    %29 = arith.mulf %28, %24 : vector<64x32xf32>
    %30 = arith.mulf %29, %24 : vector<64x32xf32>
    %31 = arith.addf %24, %30 : vector<64x32xf32>
    %cst_22 = arith.constant 0.797884583 : f32
    %32 = vector.broadcast %cst_22 : f32 to vector<64x32xf32>
    %33 = arith.mulf %32, %31 : vector<64x32xf32>
    %34 = math.tanh %33 : vector<64x32xf32>
    %cst_23 = arith.constant 1.000000e+00 : f32
    %35 = vector.broadcast %cst_23 : f32 to vector<64x32xf32>
    %36 = arith.addf %35, %34 : vector<64x32xf32>
    %37 = arith.mulf %26, %36 : vector<64x32xf32>
    %c0_24 = arith.constant 0 : index
    %c0_25 = arith.constant 0 : index
    %38 = vector.load %arg8[%c0_24, %c0_25] : memref<16x32xf32, #tpu.memory_space<vmem>>, vector<16x32xf32>
    %cst_26 = arith.constant dense<0.000000e+00> : vector<8x32xf32>
    %39 = tpu.matmul %3, %38, %cst_26 {dimension_numbers = #tpu.dot_dimension_numbers<[1], [0], [0], [1], [0, 0, 1, 1], [], []>, precision = #tpu.contract_precision<fp32>} : vector<8x16xf32>, vector<16x32xf32>, vector<8x32xf32> -> vector<8x32xf32>
    %c0_27 = arith.constant 0 : index
    %c0_28 = arith.constant 0 : index
    %40 = vector.load %arg9[%c0_27, %c0_28] : memref<1x32xf32, #tpu.memory_space<vmem>>, vector<1x32xf32>
    %41 = vector.broadcast %40 : vector<1x32xf32> to vector<8x32xf32>
    %42 = arith.addf %39, %41 : vector<8x32xf32>
    %cst_29 = arith.constant 5.000000e-01 : f32
    %43 = vector.broadcast %cst_29 : f32 to vector<8x32xf32>
    %44 = arith.mulf %43, %42 : vector<8x32xf32>
    %cst_30 = arith.constant 4.471500e-02 : f32
    %45 = vector.broadcast %cst_30 : f32 to vector<8x32xf32>
    %46 = arith.mulf %45, %42 : vector<8x32xf32>
    %47 = arith.mulf %46, %42 : vector<8x32xf32>
    %48 = arith.mulf %47, %42 : vector<8x32xf32>
    %49 = arith.addf %42, %48 : vector<8x32xf32>
    %cst_31 = arith.constant 0.797884583 : f32
    %50 = vector.broadcast %cst_31 : f32 to vector<8x32xf32>
    %51 = arith.mulf %50, %49 : vector<8x32xf32>
    %52 = math.tanh %51 : vector<8x32xf32>
    %cst_32 = arith.constant 1.000000e+00 : f32
    %53 = vector.broadcast %cst_32 : f32 to vector<8x32xf32>
    %54 = arith.addf %53, %52 : vector<8x32xf32>
    %55 = arith.mulf %44, %54 : vector<8x32xf32>
    %56 = vector.broadcast %7 : vector<8x1xf32> to vector<8x32xf32>
    %57 = arith.mulf %55, %56 : vector<8x32xf32>
    %cst_33 = arith.constant dense<0.000000e+00> : vector<64x8xf32>
    %58 = tpu.matmul %37, %57, %cst_33 {dimension_numbers = #tpu.dot_dimension_numbers<[1], [1], [0], [0], [0, 0, 1, 0], [], []>, precision = #tpu.contract_precision<fp32>} : vector<64x32xf32>, vector<8x32xf32>, vector<64x8xf32> -> vector<64x8xf32>
    %cst_34 = arith.constant 0.176776692 : f32
    %59 = vector.broadcast %cst_34 : f32 to vector<64x8xf32>
    %60 = arith.mulf %58, %59 : vector<64x8xf32>
    %cst_35 = arith.constant 1.000000e+04 : f32
    %61 = vector.broadcast %cst_35 : f32 to vector<1x8xf32>
    %62 = arith.mulf %61, %5 : vector<1x8xf32>
    %cst_36 = arith.constant 1.000000e+04 : f32
    %63 = vector.broadcast %cst_36 : f32 to vector<1x8xf32>
    %64 = arith.subf %62, %63 : vector<1x8xf32>
    %65 = vector.broadcast %64 : vector<1x8xf32> to vector<64x8xf32>
    %66 = arith.addf %60, %65 : vector<64x8xf32>
    %cst_37 = arith.constant dense<0xFF800000> : vector<64xf32>
    %67 = vector.multi_reduction <maximumf>, %66, %cst_37 [1] : vector<64x8xf32> to vector<64xf32>
    %68 = vector.shape_cast %67 : vector<64xf32> to vector<64x1xf32>
    %69 = vector.broadcast %68 : vector<64x1xf32> to vector<64x8xf32>
    %70 = arith.subf %66, %69 : vector<64x8xf32>
    %71 = math.exp %70 : vector<64x8xf32>
    %cst_38 = arith.constant dense<0.000000e+00> : vector<64xf32>
    %72 = vector.multi_reduction <add>, %71, %cst_38 [1] : vector<64x8xf32> to vector<64xf32>
    %73 = vector.shape_cast %72 : vector<64xf32> to vector<64x1xf32>
    %74 = vector.broadcast %73 : vector<64x1xf32> to vector<64x8xf32>
    %75 = arith.divf %71, %74 : vector<64x8xf32>
    %cst_39 = arith.constant dense<0.000000e+00> : vector<64x32xf32>
    %76 = tpu.matmul %75, %57, %cst_39 {dimension_numbers = #tpu.dot_dimension_numbers<[1], [0], [0], [1], [0, 0, 1, 1], [], []>, precision = #tpu.contract_precision<fp32>} : vector<64x8xf32>, vector<8x32xf32>, vector<64x32xf32> -> vector<64x32xf32>
    %c0_40 = arith.constant 0 : index
    %c0_41 = arith.constant 0 : index
    %77 = vector.load %arg10[%c0_40, %c0_41] : memref<32x32xf32, #tpu.memory_space<vmem>>, vector<32x32xf32>
    %cst_42 = arith.constant dense<0.000000e+00> : vector<64x32xf32>
    %78 = tpu.matmul %37, %77, %cst_42 {dimension_numbers = #tpu.dot_dimension_numbers<[1], [0], [0], [1], [0, 0, 1, 1], [], []>, precision = #tpu.contract_precision<fp32>} : vector<64x32xf32>, vector<32x32xf32>, vector<64x32xf32> -> vector<64x32xf32>
    %c0_43 = arith.constant 0 : index
    %c0_44 = arith.constant 0 : index
    %79 = vector.load %arg11[%c0_43, %c0_44] : memref<1x32xf32, #tpu.memory_space<vmem>>, vector<1x32xf32>
    %80 = vector.broadcast %79 : vector<1x32xf32> to vector<64x32xf32>
    %81 = arith.addf %78, %80 : vector<64x32xf32>
    %cst_45 = arith.constant dense<0.000000e+00> : vector<32xf32>
    %82 = vector.multi_reduction <add>, %81, %cst_45 [0] : vector<64x32xf32> to vector<32xf32>
    %83 = vector.shape_cast %82 : vector<32xf32> to vector<1x32xf32>
    %cst_46 = arith.constant 6.400000e+01 : f32
    %84 = vector.broadcast %cst_46 : f32 to vector<1x32xf32>
    %85 = arith.divf %83, %84 : vector<1x32xf32>
    %86 = vector.broadcast %85 : vector<1x32xf32> to vector<64x32xf32>
    %87 = arith.subf %81, %86 : vector<64x32xf32>
    %88 = arith.mulf %87, %87 : vector<64x32xf32>
    %cst_47 = arith.constant dense<0.000000e+00> : vector<32xf32>
    %89 = vector.multi_reduction <add>, %88, %cst_47 [0] : vector<64x32xf32> to vector<32xf32>
    %90 = vector.shape_cast %89 : vector<32xf32> to vector<1x32xf32>
    %cst_48 = arith.constant 6.400000e+01 : f32
    %91 = vector.broadcast %cst_48 : f32 to vector<1x32xf32>
    %92 = arith.divf %90, %91 : vector<1x32xf32>
    %93 = vector.broadcast %85 : vector<1x32xf32> to vector<64x32xf32>
    %94 = arith.subf %81, %93 : vector<64x32xf32>
    %cst_49 = arith.constant 9.99999974E-6 : f32
    %95 = vector.broadcast %cst_49 : f32 to vector<1x32xf32>
    %96 = arith.addf %92, %95 : vector<1x32xf32>
    %97 = math.rsqrt %96 : vector<1x32xf32>
    %98 = vector.broadcast %97 : vector<1x32xf32> to vector<64x32xf32>
    %99 = arith.mulf %94, %98 : vector<64x32xf32>
    %c0_50 = arith.constant 0 : index
    %c0_51 = arith.constant 0 : index
    %100 = vector.load %arg12[%c0_50, %c0_51] : memref<32x32xf32, #tpu.memory_space<vmem>>, vector<32x32xf32>
    %cst_52 = arith.constant dense<0.000000e+00> : vector<64x32xf32>
    %101 = tpu.matmul %76, %100, %cst_52 {dimension_numbers = #tpu.dot_dimension_numbers<[1], [0], [0], [1], [0, 0, 1, 1], [], []>, precision = #tpu.contract_precision<fp32>} : vector<64x32xf32>, vector<32x32xf32>, vector<64x32xf32> -> vector<64x32xf32>
    %c0_53 = arith.constant 0 : index
    %c0_54 = arith.constant 0 : index
    %102 = vector.load %arg13[%c0_53, %c0_54] : memref<1x32xf32, #tpu.memory_space<vmem>>, vector<1x32xf32>
    %103 = vector.broadcast %102 : vector<1x32xf32> to vector<64x32xf32>
    %104 = arith.addf %101, %103 : vector<64x32xf32>
    %cst_55 = arith.constant dense<0.000000e+00> : vector<32xf32>
    %105 = vector.multi_reduction <add>, %104, %cst_55 [0] : vector<64x32xf32> to vector<32xf32>
    %106 = vector.shape_cast %105 : vector<32xf32> to vector<1x32xf32>
    %cst_56 = arith.constant 6.400000e+01 : f32
    %107 = vector.broadcast %cst_56 : f32 to vector<1x32xf32>
    %108 = arith.divf %106, %107 : vector<1x32xf32>
    %109 = vector.broadcast %108 : vector<1x32xf32> to vector<64x32xf32>
    %110 = arith.subf %104, %109 : vector<64x32xf32>
    %111 = arith.mulf %110, %110 : vector<64x32xf32>
    %cst_57 = arith.constant dense<0.000000e+00> : vector<32xf32>
    %112 = vector.multi_reduction <add>, %111, %cst_57 [0] : vector<64x32xf32> to vector<32xf32>
    %113 = vector.shape_cast %112 : vector<32xf32> to vector<1x32xf32>
    %cst_58 = arith.constant 6.400000e+01 : f32
    %114 = vector.broadcast %cst_58 : f32 to vector<1x32xf32>
    %115 = arith.divf %113, %114 : vector<1x32xf32>
    %116 = vector.broadcast %108 : vector<1x32xf32> to vector<64x32xf32>
    %117 = arith.subf %104, %116 : vector<64x32xf32>
    %cst_59 = arith.constant 9.99999974E-6 : f32
    %118 = vector.broadcast %cst_59 : f32 to vector<1x32xf32>
    %119 = arith.addf %115, %118 : vector<1x32xf32>
    %120 = math.rsqrt %119 : vector<1x32xf32>
    %121 = vector.broadcast %120 : vector<1x32xf32> to vector<64x32xf32>
    %122 = arith.mulf %117, %121 : vector<64x32xf32>
    %cst_60 = arith.constant dense<0.000000e+00> : vector<64x64xf32>
    %123 = tpu.matmul %99, %122, %cst_60 {dimension_numbers = #tpu.dot_dimension_numbers<[1], [1], [0], [0], [0, 0, 1, 0], [], []>, precision = #tpu.contract_precision<fp32>} : vector<64x32xf32>, vector<64x32xf32>, vector<64x64xf32> -> vector<64x64xf32>
    %cst_61 = arith.constant 0.176776692 : f32
    %124 = vector.broadcast %cst_61 : f32 to vector<64x64xf32>
    %125 = arith.mulf %123, %124 : vector<64x64xf32>
    %cst_62 = arith.constant dense<0xFF800000> : vector<64xf32>
    %126 = vector.multi_reduction <maximumf>, %125, %cst_62 [1] : vector<64x64xf32> to vector<64xf32>
    %127 = vector.shape_cast %126 : vector<64xf32> to vector<64x1xf32>
    %128 = vector.broadcast %127 : vector<64x1xf32> to vector<64x64xf32>
    %129 = arith.subf %125, %128 : vector<64x64xf32>
    %130 = math.exp %129 : vector<64x64xf32>
    %cst_63 = arith.constant dense<0.000000e+00> : vector<64xf32>
    %131 = vector.multi_reduction <add>, %130, %cst_63 [1] : vector<64x64xf32> to vector<64xf32>
    %132 = vector.shape_cast %131 : vector<64xf32> to vector<64x1xf32>
    %133 = vector.broadcast %132 : vector<64x1xf32> to vector<64x64xf32>
    %134 = arith.divf %130, %133 : vector<64x64xf32>
    %cst_64 = arith.constant dense<0xFF800000> : vector<64xf32>
    %135 = vector.multi_reduction <maximumf>, %125, %cst_64 [0] : vector<64x64xf32> to vector<64xf32>
    %136 = vector.shape_cast %135 : vector<64xf32> to vector<1x64xf32>
    %137 = vector.broadcast %136 : vector<1x64xf32> to vector<64x64xf32>
    %138 = arith.subf %125, %137 : vector<64x64xf32>
    %139 = math.exp %138 : vector<64x64xf32>
    %cst_65 = arith.constant dense<0.000000e+00> : vector<64xf32>
    %140 = vector.multi_reduction <add>, %139, %cst_65 [0] : vector<64x64xf32> to vector<64xf32>
    %141 = vector.shape_cast %140 : vector<64xf32> to vector<1x64xf32>
    %142 = vector.broadcast %141 : vector<1x64xf32> to vector<64x64xf32>
    %143 = arith.divf %139, %142 : vector<64x64xf32>
    %cst_66 = arith.constant dense<0.000000e+00> : vector<64x32xf32>
    %144 = tpu.matmul %134, %122, %cst_66 {dimension_numbers = #tpu.dot_dimension_numbers<[1], [0], [0], [1], [0, 0, 1, 1], [], []>, precision = #tpu.contract_precision<fp32>} : vector<64x64xf32>, vector<64x32xf32>, vector<64x32xf32> -> vector<64x32xf32>
    %cst_67 = arith.constant dense<0.000000e+00> : vector<64x32xf32>
    %145 = tpu.matmul %143, %99, %cst_67 {dimension_numbers = #tpu.dot_dimension_numbers<[0], [0], [1], [1], [0, 1, 1, 1], [], []>, precision = #tpu.contract_precision<fp32>} : vector<64x64xf32>, vector<64x32xf32>, vector<64x32xf32> -> vector<64x32xf32>
    %146 = tpu.iota {dimensions = array<i32: 0>} : vector<64x1xi32>
    %c0_i32 = arith.constant 0 : i32
    %147 = vector.broadcast %c0_i32 : i32 to vector<64x1xi32>
    %148 = arith.cmpi sgt, %146, %147 : vector<64x1xi32>
    %149 = arith.extui %148 : vector<64x1xi1> to vector<64x1xi32>
    %150 = arith.sitofp %149 : vector<64x1xi32> to vector<64x1xf32>
    %c63_i32 = arith.constant 63 : i32
    %151 = vector.broadcast %c63_i32 : i32 to vector<64x1xi32>
    %152 = arith.cmpi slt, %146, %151 : vector<64x1xi32>
    %153 = arith.extui %152 : vector<64x1xi1> to vector<64x1xi32>
    %154 = arith.sitofp %153 : vector<64x1xi32> to vector<64x1xf32>
    %c1_i32 = arith.constant 1 : i32
    %155 = tpu.dynamic_rotate %144 by %c1_i32 dim 0 : vector<64x32xf32>, i32 -> vector<64x32xf32>
    %156 = vector.broadcast %150 : vector<64x1xf32> to vector<64x32xf32>
    %157 = arith.mulf %155, %156 : vector<64x32xf32>
    %c1_i32_68 = arith.constant 1 : i32
    %158 = tpu.dynamic_rotate %145 by %c1_i32_68 dim 0 : vector<64x32xf32>, i32 -> vector<64x32xf32>
    %159 = vector.broadcast %150 : vector<64x1xf32> to vector<64x32xf32>
    %160 = arith.mulf %158, %159 : vector<64x32xf32>
    %c63_i32_69 = arith.constant 63 : i32
    %161 = tpu.dynamic_rotate %144 by %c63_i32_69 dim 0 : vector<64x32xf32>, i32 -> vector<64x32xf32>
    %162 = vector.broadcast %154 : vector<64x1xf32> to vector<64x32xf32>
    %163 = arith.mulf %161, %162 : vector<64x32xf32>
    %c63_i32_70 = arith.constant 63 : i32
    %164 = tpu.dynamic_rotate %145 by %c63_i32_70 dim 0 : vector<64x32xf32>, i32 -> vector<64x32xf32>
    %165 = vector.broadcast %154 : vector<64x1xf32> to vector<64x32xf32>
    %166 = arith.mulf %164, %165 : vector<64x32xf32>
    %167 = tpu.concatenate %157, %160, %144, %145, %163, %166 in 1 : vector<64x32xf32>, vector<64x32xf32>, vector<64x32xf32>, vector<64x32xf32>, vector<64x32xf32>, vector<64x32xf32> -> vector<64x192xf32>
    %c0_71 = arith.constant 0 : index
    %c0_72 = arith.constant 0 : index
    %168 = vector.load %arg14[%c0_71, %c0_72] : memref<192x32xf32, #tpu.memory_space<vmem>>, vector<192x32xf32>
    %cst_73 = arith.constant dense<0.000000e+00> : vector<64x32xf32>
    %169 = tpu.matmul %167, %168, %cst_73 {dimension_numbers = #tpu.dot_dimension_numbers<[1], [0], [0], [1], [0, 0, 1, 1], [], []>, precision = #tpu.contract_precision<fp32>} : vector<64x192xf32>, vector<192x32xf32>, vector<64x32xf32> -> vector<64x32xf32>
    %c0_74 = arith.constant 0 : index
    %c0_75 = arith.constant 0 : index
    %170 = vector.load %arg15[%c0_74, %c0_75] : memref<1x32xf32, #tpu.memory_space<vmem>>, vector<1x32xf32>
    %171 = vector.broadcast %170 : vector<1x32xf32> to vector<64x32xf32>
    %172 = arith.addf %169, %171 : vector<64x32xf32>
    %cst_76 = arith.constant dense<0.000000e+00> : vector<32xf32>
    %173 = vector.multi_reduction <add>, %172, %cst_76 [0] : vector<64x32xf32> to vector<32xf32>
    %174 = vector.shape_cast %173 : vector<32xf32> to vector<1x32xf32>
    %cst_77 = arith.constant 6.400000e+01 : f32
    %175 = vector.broadcast %cst_77 : f32 to vector<1x32xf32>
    %176 = arith.divf %174, %175 : vector<1x32xf32>
    %177 = vector.broadcast %176 : vector<1x32xf32> to vector<64x32xf32>
    %178 = arith.subf %172, %177 : vector<64x32xf32>
    %179 = arith.mulf %178, %178 : vector<64x32xf32>
    %cst_78 = arith.constant dense<0.000000e+00> : vector<32xf32>
    %180 = vector.multi_reduction <add>, %179, %cst_78 [0] : vector<64x32xf32> to vector<32xf32>
    %181 = vector.shape_cast %180 : vector<32xf32> to vector<1x32xf32>
    %cst_79 = arith.constant 6.400000e+01 : f32
    %182 = vector.broadcast %cst_79 : f32 to vector<1x32xf32>
    %183 = arith.divf %181, %182 : vector<1x32xf32>
    %184 = vector.broadcast %176 : vector<1x32xf32> to vector<64x32xf32>
    %185 = arith.subf %172, %184 : vector<64x32xf32>
    %cst_80 = arith.constant 9.99999974E-6 : f32
    %186 = vector.broadcast %cst_80 : f32 to vector<1x32xf32>
    %187 = arith.addf %183, %186 : vector<1x32xf32>
    %188 = math.rsqrt %187 : vector<1x32xf32>
    %189 = vector.broadcast %188 : vector<1x32xf32> to vector<64x32xf32>
    %190 = arith.mulf %185, %189 : vector<64x32xf32>
    %c0_81 = arith.constant 0 : index
    %c0_82 = arith.constant 0 : index
    %c0_83 = arith.constant 0 : index
    %191 = vector.load %arg16[%c0_81, %c0_82, %c0_83] : memref<1x64x32xf32, #tpu.memory_space<vmem>>, vector<1x64x32xf32>
    %192 = vector.shape_cast %191 : vector<1x64x32xf32> to vector<64x32xf32>
    %193 = vector.shape_cast %190 : vector<64x32xf32> to vector<1x64x32xf32>
    tpu.vector_store %arg16[%c0_81, %c0_82, %c0_83], %193 {strides = array<i32>} : memref<1x64x32xf32, #tpu.memory_space<vmem>>, vector<1x64x32xf32>,
    return
  }
  func.func @transform_0(%arg0: i32) -> (i32, i32, i32) {
    %c0_i32 = arith.constant 0 : i32
    %c0_i32_0 = arith.constant 0 : i32
    %c0_i32_1 = arith.constant 0 : i32
    return %arg0, %c0_i32, %c0_i32_0 : i32, i32, i32
  }
  func.func @transform_1(%arg0: i32) -> (i32, i32, i32) {
    %c0_i32 = arith.constant 0 : i32
    %c0_i32_0 = arith.constant 0 : i32
    %c0_i32_1 = arith.constant 0 : i32
    return %arg0, %c0_i32, %c0_i32_0 : i32, i32, i32
  }
  func.func @transform_2(%arg0: i32) -> (i32, i32, i32) {
    %c0_i32 = arith.constant 0 : i32
    %c0_i32_0 = arith.constant 0 : i32
    %c0_i32_1 = arith.constant 0 : i32
    return %arg0, %c0_i32, %c0_i32_0 : i32, i32, i32
  }
  func.func @transform_3(%arg0: i32) -> (i32, i32, i32) {
    %c0_i32 = arith.constant 0 : i32
    %c0_i32_0 = arith.constant 0 : i32
    %c0_i32_1 = arith.constant 0 : i32
    return %arg0, %c0_i32, %c0_i32_0 : i32, i32, i32
  }
  func.func @transform_4(%arg0: i32) -> (i32, i32) {
    %c0_i32 = arith.constant 0 : i32
    %c0_i32_0 = arith.constant 0 : i32
    %c0_i32_1 = arith.constant 0 : i32
    return %c0_i32, %c0_i32_0 : i32, i32
  }
  func.func @transform_5(%arg0: i32) -> (i32, i32) {
    %c0_i32 = arith.constant 0 : i32
    %c0_i32_0 = arith.constant 0 : i32
    %c0_i32_1 = arith.constant 0 : i32
    return %c0_i32, %c0_i32_0 : i32, i32
  }
  func.func @transform_6(%arg0: i32) -> (i32, i32) {
    %c0_i32 = arith.constant 0 : i32
    %c0_i32_0 = arith.constant 0 : i32
    %c0_i32_1 = arith.constant 0 : i32
    return %c0_i32, %c0_i32_0 : i32, i32
  }
  func.func @transform_7(%arg0: i32) -> (i32, i32) {
    %c0_i32 = arith.constant 0 : i32
    %c0_i32_0 = arith.constant 0 : i32
    %c0_i32_1 = arith.constant 0 : i32
    return %c0_i32, %c0_i32_0 : i32, i32
  }
  func.func @transform_8(%arg0: i32) -> (i32, i32) {
    %c0_i32 = arith.constant 0 : i32
    %c0_i32_0 = arith.constant 0 : i32
    %c0_i32_1 = arith.constant 0 : i32
    return %c0_i32, %c0_i32_0 : i32, i32
  }
  func.func @transform_9(%arg0: i32) -> (i32, i32) {
    %c0_i32 = arith.constant 0 : i32
    %c0_i32_0 = arith.constant 0 : i32
    %c0_i32_1 = arith.constant 0 : i32
    return %c0_i32, %c0_i32_0 : i32, i32
  }
  func.func @transform_10(%arg0: i32) -> (i32, i32) {
    %c0_i32 = arith.constant 0 : i32
    %c0_i32_0 = arith.constant 0 : i32
    %c0_i32_1 = arith.constant 0 : i32
    return %c0_i32, %c0_i32_0 : i32, i32
  }
  func.func @transform_11(%arg0: i32) -> (i32, i32) {
    %c0_i32 = arith.constant 0 : i32
    %c0_i32_0 = arith.constant 0 : i32
    %c0_i32_1 = arith.constant 0 : i32
    return %c0_i32, %c0_i32_0 : i32, i32
  }
  func.func @transform_12(%arg0: i32) -> (i32, i32) {
    %c0_i32 = arith.constant 0 : i32
    %c0_i32_0 = arith.constant 0 : i32
    %c0_i32_1 = arith.constant 0 : i32
    return %c0_i32, %c0_i32_0 : i32, i32
  }
  func.func @transform_13(%arg0: i32) -> (i32, i32) {
    %c0_i32 = arith.constant 0 : i32
    %c0_i32_0 = arith.constant 0 : i32
    %c0_i32_1 = arith.constant 0 : i32
    return %c0_i32, %c0_i32_0 : i32, i32
  }
  func.func @transform_14(%arg0: i32) -> (i32, i32) {
    %c0_i32 = arith.constant 0 : i32
    %c0_i32_0 = arith.constant 0 : i32
    %c0_i32_1 = arith.constant 0 : i32
    return %c0_i32, %c0_i32_0 : i32, i32
  }
  func.func @transform_15(%arg0: i32) -> (i32, i32, i32) {
    %c0_i32 = arith.constant 0 : i32
    %c0_i32_0 = arith.constant 0 : i32
    %c0_i32_1 = arith.constant 0 : i32
    return %arg0, %c0_i32, %c0_i32_0 : i32, i32, i32
  }
}

</mosaic_0001>

<llo_original>
// kernel: tpu_custom_call.1
$region0: #{tpu_custom_call.1}
  #allocation0 [shape = 'u32[]', space=smem, size = 0x4, offset = 0x4, fixed_abs, tag = 'smem constant byte address 0x4 - core index']
  #allocation1 [shape = 'u32[144,128]{1,0:T(1,128)}', space=vmem, size = 0x12000, scoped, tag = 'internal scratch']
  %s0 = inlined_call_operand.vmem [shape: f32[2,64,24], index: 0, kind: input, shape index: {}]
  %s1 = inlined_call_operand.vmem [shape: f32[2,8,16], index: 1, kind: input, shape index: {}]
  %s2 = inlined_call_operand.vmem [shape: f32[2,1,8], index: 2, kind: input, shape index: {}]
  %s3 = inlined_call_operand.vmem [shape: f32[2,8,1], index: 3, kind: input, shape index: {}]
  %s4 = inlined_call_operand.vmem [shape: f32[24,32], index: 4, kind: input, shape index: {}]
  %s5 = inlined_call_operand.vmem [shape: f32[16,32], index: 5, kind: input, shape index: {}]
  %s6 = inlined_call_operand.vmem [shape: f32[1,32], index: 6, kind: input, shape index: {}]
  %s7 = inlined_call_operand.vmem [shape: f32[16,32], index: 7, kind: input, shape index: {}]
  %s8 = inlined_call_operand.vmem [shape: f32[1,32], index: 8, kind: input, shape index: {}]
  %s9 = inlined_call_operand.vmem [shape: f32[32,32], index: 9, kind: input, shape index: {}]
  %s10 = inlined_call_operand.vmem [shape: f32[1,32], index: 10, kind: input, shape index: {}]
  %s11 = inlined_call_operand.vmem [shape: f32[32,32], index: 11, kind: input, shape index: {}]
  %s12 = inlined_call_operand.vmem [shape: f32[1,32], index: 12, kind: input, shape index: {}]
  %s13 = inlined_call_operand.vmem [shape: f32[192,32], index: 13, kind: input, shape index: {}]
  %s14 = inlined_call_operand.vmem [shape: f32[1,32], index: 14, kind: input, shape index: {}]
  %s15 = inlined_call_operand.vmem [shape: f32[2,64,32], index: 15, kind: output, shape index: {}]
  %s16 = sld [smem:[#allocation0]]
  $region93: #{tpu_custom_call.1} parent=0
    _
  %s18 = ssub.s32 1, %s16
  %s19 = scalar_select 0, %s18, %s16
  loop: start=0, step=1, limit=4
  $region2: #{tpu_custom_call.1} parent=0 // loop_pre_header
    _
  $region3: #{tpu_custom_call.1} parent=0 // loop_header
    %s21 = sphi 0, %s25
    %p22 = scmp.ge.s32.totalorder %s21, 4
    %s31 = sphi 0, %s33
    %s34 = sphi 0, %s31
    %s35 = sphi 0, %s34
    %s51 = sphi 0, %s35
    %s57 = sphi 0, %s59
    %s60 = sphi 0, %s57
    %s61 = sphi 0, %s60
    %s77 = sphi 0, %s61
    %s83 = sphi 0, %s85
    %s86 = sphi 0, %s83
    %s87 = sphi 0, %s86
    %s103 = sphi 0, %s87
    %s109 = sphi 0, %s111
    %s112 = sphi 0, %s109
    %s113 = sphi 0, %s112
    %s129 = sphi 0, %s113
    %s133 = sphi 0, %s133
    %s135 = sphi 0, %s133
    %s136 = sphi 0, %s135
    %s150 = sphi 0, %s136
    %s154 = sphi 0, %s154
    %s156 = sphi 0, %s154
    %s157 = sphi 0, %s156
    %s171 = sphi 0, %s157
    %s175 = sphi 0, %s175
    %s177 = sphi 0, %s175
    %s178 = sphi 0, %s177
    %s192 = sphi 0, %s178
    %s196 = sphi 0, %s196
    %s198 = sphi 0, %s196
    %s199 = sphi 0, %s198
    %s213 = sphi 0, %s199
    %s217 = sphi 0, %s217
    %s219 = sphi 0, %s217
    %s220 = sphi 0, %s219
    %s234 = sphi 0, %s220
    %s238 = sphi 0, %s238
    %s240 = sphi 0, %s238
    %s241 = sphi 0, %s240
    %s255 = sphi 0, %s241
    %s259 = sphi 0, %s259
    %s261 = sphi 0, %s259
    %s262 = sphi 0, %s261
    %s276 = sphi 0, %s262
    %s280 = sphi 0, %s280
    %s282 = sphi 0, %s280
    %s283 = sphi 0, %s282
    %s297 = sphi 0, %s283
    %s301 = sphi 0, %s301
    %s303 = sphi 0, %s301
    %s304 = sphi 0, %s303
    %s318 = sphi 0, %s304
    %s322 = sphi 0, %s322
    %s324 = sphi 0, %s322
    %s325 = sphi 0, %s324
    %s339 = sphi 0, %s325
    %s343 = sphi 0, %s343
    %s345 = sphi 0, %s343
    %s346 = sphi 0, %s345
    %s360 = sphi 0, %s346
    %s366 = sphi 0, %s368
    %s369 = sphi 0, %s366
    %s370 = sphi 0, %s369
    %s386 = sphi 0, %s370
  $region4: #{tpu_custom_call.1} parent=0 // loop_header_branch
    %24 = sbr.rel (%p22) target = $region8
  $region5: #{tpu_custom_call.1} parent=0 // loop_body
    %s26 = ssub.s32 %s21, 1
    %s27 = ssub.s32 %s21, 2
    %s28 = sadd.s32 %s21, 1
    %s29 = ssub.s32 %s21, %s28
    %p30 = scmp.eq.s32.totalorder %s29, 0
    %s32 = sadd.s32 %s31, 1
    %s33 = scalar_select %p30, %s31, %s32
    %p36 = pneg %p30
    %p37 = scmp.eq.s32.totalorder %s21, 1
    %p38 = por %p36, %p37
    %p39 = scmp.ne.s32.totalorder %s31, %s34
    %p40 = scmp.eq.s32.totalorder %s21, 0
    %p41 = por %p39, %p40
    %p42 = scmp.ne.s32.totalorder %s31, %s34
    %p43 = scmp.eq.s32.totalorder %s26, 1
    %p44 = por %p42, %p43
    %p45 = scmp.ne.s32.totalorder %s34, %s35
    %p46 = scmp.eq.s32.totalorder %s26, 0
    %p47 = por %p45, %p46
    %p48 = scmp.ne.s32.totalorder %s34, %s35
    %p49 = scmp.eq.s32.totalorder %s27, 1
    %p50 = por %p48, %p49
    %p52 = scmp.ne.s32.totalorder %s35, %s51
    %p53 = scmp.eq.s32.totalorder %s27, 0
    %p54 = por %p52, %p53
    %s55 = ssub.s32 %s21, %s28
    %p56 = scmp.eq.s32.totalorder %s55, 0
    %s58 = sadd.s32 %s57, 1
    %s59 = scalar_select %p56, %s57, %s58
    %p62 = pneg %p56
    %p63 = scmp.eq.s32.totalorder %s21, 1
    %p64 = por %p62, %p63
    %p65 = scmp.ne.s32.totalorder %s57, %s60
    %p66 = scmp.eq.s32.totalorder %s21, 0
    %p67 = por %p65, %p66
    %p68 = scmp.ne.s32.totalorder %s57, %s60
    %p69 = scmp.eq.s32.totalorder %s26, 1
    %p70 = por %p68, %p69
    %p71 = scmp.ne.s32.totalorder %s60, %s61
    %p72 = scmp.eq.s32.totalorder %s26, 0
    %p73 = por %p71, %p72
    %p74 = scmp.ne.s32.totalorder %s60, %s61
    %p75 = scmp.eq.s32.totalorder %s27, 1
    %p76 = por %p74, %p75
    %p78 = scmp.ne.s32.totalorder %s61, %s77
    %p79 = scmp.eq.s32.totalorder %s27, 0
    %p80 = por %p78, %p79
    %s81 = ssub.s32 %s21, %s28
    %p82 = scmp.eq.s32.totalorder %s81, 0
    %s84 = sadd.s32 %s83, 1
    %s85 = scalar_select %p82, %s83, %s84
    %p88 = pneg %p82
    %p89 = scmp.eq.s32.totalorder %s21, 1
    %p90 = por %p88, %p89
    %p91 = scmp.ne.s32.totalorder %s83, %s86
    %p92 = scmp.eq.s32.totalorder %s21, 0
    %p93 = por %p91, %p92
    %p94 = scmp.ne.s32.totalorder %s83, %s86
    %p95 = scmp.eq.s32.totalorder %s26, 1
    %p96 = por %p94, %p95
    %p97 = scmp.ne.s32.totalorder %s86, %s87
    %p98 = scmp.eq.s32.totalorder %s26, 0
    %p99 = por %p97, %p98
    %p100 = scmp.ne.s32.totalorder %s86, %s87
    %p101 = scmp.eq.s32.totalorder %s27, 1
    %p102 = por %p100, %p101
    %p104 = scmp.ne.s32.totalorder %s87, %s103
    %p105 = scmp.eq.s32.totalorder %s27, 0
    %p106 = por %p104, %p105
    %s107 = ssub.s32 %s21, %s28
    %p108 = scmp.eq.s32.totalorder %s107, 0
    %s110 = sadd.s32 %s109, 1
    %s111 = scalar_select %p108, %s109, %s110
    %p114 = pneg %p108
    %p115 = scmp.eq.s32.totalorder %s21, 1
    %p116 = por %p114, %p115
    %p117 = scmp.ne.s32.totalorder %s109, %s112
    %p118 = scmp.eq.s32.totalorder %s21, 0
    %p119 = por %p117, %p118
    %p120 = scmp.ne.s32.totalorder %s109, %s112
    %p121 = scmp.eq.s32.totalorder %s26, 1
    %p122 = por %p120, %p121
    %p123 = scmp.ne.s32.totalorder %s112, %s113
    %p124 = scmp.eq.s32.totalorder %s26, 0
    %p125 = por %p123, %p124
    %p126 = scmp.ne.s32.totalorder %s112, %s113
    %p127 = scmp.eq.s32.totalorder %s27, 1
    %p128 = por %p126, %p127
    %p130 = scmp.ne.s32.totalorder %s113, %s129
    %p131 = scmp.eq.s32.totalorder %s27, 0
    %p132 = por %p130, %p131
    %s134 = sadd.s32 %s133, 1
    %p137 = scmp.eq.s32.totalorder %s21, 1
    %p138 = scmp.ne.s32.totalorder %s133, %s135
    %p139 = scmp.eq.s32.totalorder %s21, 0
    %p140 = por %p138, %p139
    %p141 = scmp.ne.s32.totalorder %s133, %s135
    %p142 = scmp.eq.s32.totalorder %s26, 1
    %p143 = por %p141, %p142
    %p144 = scmp.ne.s32.totalorder %s135, %s136
    %p145 = scmp.eq.s32.totalorder %s26, 0
    %p146 = por %p144, %p145
    %p147 = scmp.ne.s32.totalorder %s135, %s136
    %p148 = scmp.eq.s32.totalorder %s27, 1
    %p149 = por %p147, %p148
    %p151 = scmp.ne.s32.totalorder %s136, %s150
    %p152 = scmp.eq.s32.totalorder %s27, 0
    %p153 = por %p151, %p152
    %s155 = sadd.s32 %s154, 1
    %p158 = scmp.eq.s32.totalorder %s21, 1
    %p159 = scmp.ne.s32.totalorder %s154, %s156
    %p160 = scmp.eq.s32.totalorder %s21, 0
    %p161 = por %p159, %p160
    %p162 = scmp.ne.s32.totalorder %s154, %s156
    %p163 = scmp.eq.s32.totalorder %s26, 1
    %p164 = por %p162, %p163
    %p165 = scmp.ne.s32.totalorder %s156, %s157
    %p166 = scmp.eq.s32.totalorder %s26, 0
    %p167 = por %p165, %p166
    %p168 = scmp.ne.s32.totalorder %s156, %s157
    %p169 = scmp.eq.s32.totalorder %s27, 1
    %p170 = por %p168, %p169
    %p172 = scmp.ne.s32.totalorder %s157, %s171
    %p173 = scmp.eq.s32.totalorder %s27, 0
    %p174 = por %p172, %p173
    %s176 = sadd.s32 %s175, 1
    %p179 = scmp.eq.s32.totalorder %s21, 1
    %p180 = scmp.ne.s32.totalorder %s175, %s177
    %p181 = scmp.eq.s32.totalorder %s21, 0
    %p182 = por %p180, %p181
    %p183 = scmp.ne.s32.totalorder %s175, %s177
    %p184 = scmp.eq.s32.totalorder %s26, 1
    %p185 = por %p183, %p184
    %p186 = scmp.ne.s32.totalorder %s177, %s178
    %p187 = scmp.eq.s32.totalorder %s26, 0
    %p188 = por %p186, %p187
    %p189 = scmp.ne.s32.totalorder %s177, %s178
    %p190 = scmp.eq.s32.totalorder %s27, 1
    %p191 = por %p189, %p190
    %p193 = scmp.ne.s32.totalorder %s178, %s192
    %p194 = scmp.eq.s32.totalorder %s27, 0
    %p195 = por %p193, %p194
    %s197 = sadd.s32 %s196, 1
    %p200 = scmp.eq.s32.totalorder %s21, 1
    %p201 = scmp.ne.s32.totalorder %s196, %s198
    %p202 = scmp.eq.s32.totalorder %s21, 0
    %p203 = por %p201, %p202
    %p204 = scmp.ne.s32.totalorder %s196, %s198
    %p205 = scmp.eq.s32.totalorder %s26, 1
    %p206 = por %p204, %p205
    %p207 = scmp.ne.s32.totalorder %s198, %s199
    %p208 = scmp.eq.s32.totalorder %s26, 0
    %p209 = por %p207, %p208
    %p210 = scmp.ne.s32.totalorder %s198, %s199
    %p211 = scmp.eq.s32.totalorder %s27, 1
    %p212 = por %p210, %p211
    %p214 = scmp.ne.s32.totalorder %s199, %s213
    %p215 = scmp.eq.s32.totalorder %s27, 0
    %p216 = por %p214, %p215
    %s218 = sadd.s32 %s217, 1
    %p221 = scmp.eq.s32.totalorder %s21, 1
    %p222 = scmp.ne.s32.totalorder %s217, %s219
    %p223 = scmp.eq.s32.totalorder %s21, 0
    %p224 = por %p222, %p223
    %p225 = scmp.ne.s32.totalorder %s217, %s219
    %p226 = scmp.eq.s32.totalorder %s26, 1
    %p227 = por %p225, %p226
    %p228 = scmp.ne.s32.totalorder %s219, %s220
    %p229 = scmp.eq.s32.totalorder %s26, 0
    %p230 = por %p228, %p229
    %p231 = scmp.ne.s32.totalorder %s219, %s220
    %p232 = scmp.eq.s32.totalorder %s27, 1
    %p233 = por %p231, %p232
    %p235 = scmp.ne.s32.totalorder %s220, %s234
    %p236 = scmp.eq.s32.totalorder %s27, 0
    %p237 = por %p235, %p236
    %s239 = sadd.s32 %s238, 1
    %p242 = scmp.eq.s32.totalorder %s21, 1
    %p243 = scmp.ne.s32.totalorder %s238, %s240
    %p244 = scmp.eq.s32.totalorder %s21, 0
    %p245 = por %p243, %p244
    %p246 = scmp.ne.s32.totalorder %s238, %s240
    %p247 = scmp.eq.s32.totalorder %s26, 1
    %p248 = por %p246, %p247
    %p249 = scmp.ne.s32.totalorder %s240, %s241
    %p250 = scmp.eq.s32.totalorder %s26, 0
    %p251 = por %p249, %p250
    %p252 = scmp.ne.s32.totalorder %s240, %s241
    %p253 = scmp.eq.s32.totalorder %s27, 1
    %p254 = por %p252, %p253
    %p256 = scmp.ne.s32.totalorder %s241, %s255
    %p257 = scmp.eq.s32.totalorder %s27, 0
    %p258 = por %p256, %p257
    %s260 = sadd.s32 %s259, 1
    %p263 = scmp.eq.s32.totalorder %s21, 1
    %p264 = scmp.ne.s32.totalorder %s259, %s261
    %p265 = scmp.eq.s32.totalorder %s21, 0
    %p266 = por %p264, %p265
    %p267 = scmp.ne.s32.totalorder %s259, %s261
    %p268 = scmp.eq.s32.totalorder %s26, 1
    %p269 = por %p267, %p268
    %p270 = scmp.ne.s32.totalorder %s261, %s262
    %p271 = scmp.eq.s32.totalorder %s26, 0
    %p272 = por %p270, %p271
    %p273 = scmp.ne.s32.totalorder %s261, %s262
    %p274 = scmp.eq.s32.totalorder %s27, 1
    %p275 = por %p273, %p274
    %p277 = scmp.ne.s32.totalorder %s262, %s276
    %p278 = scmp.eq.s32.totalorder %s27, 0
    %p279 = por %p277, %p278
    %s281 = sadd.s32 %s280, 1
    %p284 = scmp.eq.s32.totalorder %s21, 1
    %p285 = scmp.ne.s32.totalorder %s280, %s282
    %p286 = scmp.eq.s32.totalorder %s21, 0
    %p287 = por %p285, %p286
    %p288 = scmp.ne.s32.totalorder %s280, %s282
    %p289 = scmp.eq.s32.totalorder %s26, 1
    %p290 = por %p288, %p289
    %p291 = scmp.ne.s32.totalorder %s282, %s283
    %p292 = scmp.eq.s32.totalorder %s26, 0
    %p293 = por %p291, %p292
    %p294 = scmp.ne.s32.totalorder %s282, %s283
    %p295 = scmp.eq.s32.totalorder %s27, 1
    %p296 = por %p294, %p295
    %p298 = scmp.ne.s32.totalorder %s283, %s297
    %p299 = scmp.eq.s32.totalorder %s27, 0
    %p300 = por %p298, %p299
    %s302 = sadd.s32 %s301, 1
    %p305 = scmp.eq.s32.totalorder %s21, 1
    %p306 = scmp.ne.s32.totalorder %s301, %s303
    %p307 = scmp.eq.s32.totalorder %s21, 0
    %p308 = por %p306, %p307
    %p309 = scmp.ne.s32.totalorder %s301, %s303
    %p310 = scmp.eq.s32.totalorder %s26, 1
    %p311 = por %p309, %p310
    %p312 = scmp.ne.s32.totalorder %s303, %s304
    %p313 = scmp.eq.s32.totalorder %s26, 0
    %p314 = por %p312, %p313
    %p315 = scmp.ne.s32.totalorder %s303, %s304
    %p316 = scmp.eq.s32.totalorder %s27, 1
    %p317 = por %p315, %p316
    %p319 = scmp.ne.s32.totalorder %s304, %s318
    %p320 = scmp.eq.s32.totalorder %s27, 0
    %p321 = por %p319, %p320
    %s323 = sadd.s32 %s322, 1
    %p326 = scmp.eq.s32.totalorder %s21, 1
    %p327 = scmp.ne.s32.totalorder %s322, %s324
    %p328 = scmp.eq.s32.totalorder %s21, 0
    %p329 = por %p327, %p328
    %p330 = scmp.ne.s32.totalorder %s322, %s324
    %p331 = scmp.eq.s32.totalorder %s26, 1
    %p332 = por %p330, %p331
    %p333 = scmp.ne.s32.totalorder %s324, %s325
    %p334 = scmp.eq.s32.totalorder %s26, 0
    %p335 = por %p333, %p334
    %p336 = scmp.ne.s32.totalorder %s324, %s325
    %p337 = scmp.eq.s32.totalorder %s27, 1
    %p338 = por %p336, %p337
    %p340 = scmp.ne.s32.totalorder %s325, %s339
    %p341 = scmp.eq.s32.totalorder %s27, 0
    %p342 = por %p340, %p341
    %s344 = sadd.s32 %s343, 1
    %p347 = scmp.eq.s32.totalorder %s21, 1
    %p348 = scmp.ne.s32.totalorder %s343, %s345
    %p349 = scmp.eq.s32.totalorder %s21, 0
    %p350 = por %p348, %p349
    %p351 = scmp.ne.s32.totalorder %s343, %s345
    %p352 = scmp.eq.s32.totalorder %s26, 1
    %p353 = por %p351, %p352
    %p354 = scmp.ne.s32.totalorder %s345, %s346
    %p355 = scmp.eq.s32.totalorder %s26, 0
    %p356 = por %p354, %p355
    %p357 = scmp.ne.s32.totalorder %s345, %s346
    %p358 = scmp.eq.s32.totalorder %s27, 1
    %p359 = por %p357, %p358
    %p361 = scmp.ne.s32.totalorder %s346, %s360
    %p362 = scmp.eq.s32.totalorder %s27, 0
    %p363 = por %p361, %p362
    %s364 = ssub.s32 %s21, %s28
    %p365 = scmp.eq.s32.totalorder %s364, 0
    %s367 = sadd.s32 %s366, 1
    %s368 = scalar_select %p365, %s366, %s367
    %p371 = pneg %p365
    %p372 = scmp.eq.s32.totalorder %s21, 1
    %p373 = por %p371, %p372
    %p374 = scmp.ne.s32.totalorder %s366, %s369
    %p375 = scmp.eq.s32.totalorder %s21, 0
    %p376 = por %p374, %p375
    %p377 = scmp.ne.s32.totalorder %s366, %s369
    %p378 = scmp.eq.s32.totalorder %s26, 1
    %p379 = por %p377, %p378
    %p380 = scmp.ne.s32.totalorder %s369, %s370
    %p381 = scmp.eq.s32.totalorder %s26, 0
    %p382 = por %p380, %p381
    %p383 = scmp.ne.s32.totalorder %s369, %s370
    %p384 = scmp.eq.s32.totalorder %s27, 1
    %p385 = por %p383, %p384
    %p387 = scmp.ne.s32.totalorder %s370, %s386
    %p388 = scmp.eq.s32.totalorder %s27, 0
    %p389 = por %p387, %p388
    %p390 = scmp.le.s32.totalorder 1, %s21
    %p391 = scmp.lt.s32.totalorder %s21, 3
    %p392 = pnand %p390, %p391
    %p393 = pneg %p392
    // Predicated region
    $region9: #{tpu_custom_call.1} parent=5 // pred_check
      _
    $region10: #{tpu_custom_call.1} parent=5 // pred_check_branch
      %395 = sbr.rel (%p392) target = $region12
    $region11: #{tpu_custom_call.1} parent=5 // pred_region
      %s396 = ssub.s32 %s21, 1
      // Predicated region
      $region13: #{tpu_custom_call.1} parent=11 // pred_check
        %p397 = pneg %p146
      $region14: #{tpu_custom_call.1} parent=11 // pred_check_branch
        %399 = sbr.rel (%p397) target = $region16
      $region15: #{tpu_custom_call.1} parent=11 // pred_region
        _
      $region16: #{tpu_custom_call.1} parent=11 // pred_fallthru
        _
      // Predicated region
      $region17: #{tpu_custom_call.1} parent=11 // pred_check
        %p400 = pneg %p167
      $region18: #{tpu_custom_call.1} parent=11 // pred_check_branch
        %402 = sbr.rel (%p400) target = $region20
      $region19: #{tpu_custom_call.1} parent=11 // pred_region
        _
      $region20: #{tpu_custom_call.1} parent=11 // pred_fallthru
        _
      // Predicated region
      $region21: #{tpu_custom_call.1} parent=11 // pred_check
        %p403 = pneg %p188
      $region22: #{tpu_custom_call.1} parent=11 // pred_check_branch
        %405 = sbr.rel (%p403) target = $region24
      $region23: #{tpu_custom_call.1} parent=11 // pred_region
        _
      $region24: #{tpu_custom_call.1} parent=11 // pred_fallthru
        _
      // Predicated region
      $region25: #{tpu_custom_call.1} parent=11 // pred_check
        %p406 = pneg %p209
      $region26: #{tpu_custom_call.1} parent=11 // pred_check_branch
        %408 = sbr.rel (%p406) target = $region28
      $region27: #{tpu_custom_call.1} parent=11 // pred_region
        _
      $region28: #{tpu_custom_call.1} parent=11 // pred_fallthru
        _
      // Predicated region
      $region29: #{tpu_custom_call.1} parent=11 // pred_check
        %p409 = pneg %p230
      $region30: #{tpu_custom_call.1} parent=11 // pred_check_branch
        %411 = sbr.rel (%p409) target = $region32
      $region31: #{tpu_custom_call.1} parent=11 // pred_region
        _
      $region32: #{tpu_custom_call.1} parent=11 // pred_fallthru
        _
      // Predicated region
      $region33: #{tpu_custom_call.1} parent=11 // pred_check
        %p412 = pneg %p251
      $region34: #{tpu_custom_call.1} parent=11 // pred_check_branch
        %414 = sbr.rel (%p412) target = $region36
      $region35: #{tpu_custom_call.1} parent=11 // pred_region
        _
      $region36: #{tpu_custom_call.1} parent=11 // pred_fallthru
        _
      // Predicated region
      $region37: #{tpu_custom_call.1} parent=11 // pred_check
        %p415 = pneg %p272
      $region38: #{tpu_custom_call.1} parent=11 // pred_check_branch
        %417 = sbr.rel (%p415) target = $region40
      $region39: #{tpu_custom_call.1} parent=11 // pred_region
        _
      $region40: #{tpu_custom_call.1} parent=11 // pred_fallthru
        _
      // Predicated region
      $region41: #{tpu_custom_call.1} parent=11 // pred_check
        %p418 = pneg %p293
      $region42: #{tpu_custom_call.1} parent=11 // pred_check_branch
        %420 = sbr.rel (%p418) target = $region44
      $region43: #{tpu_custom_call.1} parent=11 // pred_region
        _
      $region44: #{tpu_custom_call.1} parent=11 // pred_fallthru
        _
      // Predicated region
      $region45: #{tpu_custom_call.1} parent=11 // pred_check
        %p421 = pneg %p314
      $region46: #{tpu_custom_call.1} parent=11 // pred_check_branch
        %423 = sbr.rel (%p421) target = $region48
      $region47: #{tpu_custom_call.1} parent=11 // pred_region
        _
      $region48: #{tpu_custom_call.1} parent=11 // pred_fallthru
        _
      // Predicated region
      $region49: #{tpu_custom_call.1} parent=11 // pred_check
        %p424 = pneg %p335
      $region50: #{tpu_custom_call.1} parent=11 // pred_check_branch
        %426 = sbr.rel (%p424) target = $region52
      $region51: #{tpu_custom_call.1} parent=11 // pred_region
        _
      $region52: #{tpu_custom_call.1} parent=11 // pred_fallthru
        _
      // Predicated region
      $region53: #{tpu_custom_call.1} parent=11 // pred_check
        %p427 = pneg %p356
      $region54: #{tpu_custom_call.1} parent=11 // pred_check_branch
        %429 = sbr.rel (%p427) target = $region56
      $region55: #{tpu_custom_call.1} parent=11 // pred_region
        _
      $region56: #{tpu_custom_call.1} parent=11 // pred_fallthru
        _
    $region12: #{tpu_custom_call.1} parent=5 // pred_fallthru
      _
    %p430 = scmp.lt.s32.totalorder %s21, 2
    // Predicated region
    $region57: #{tpu_custom_call.1} parent=5 // pred_check
      %p431 = pneg %p430
    $region58: #{tpu_custom_call.1} parent=5 // pred_check_branch
      %433 = sbr.rel (%p431) target = $region60
    $region59: #{tpu_custom_call.1} parent=5 // pred_region
      // Predicated region
      $region61: #{tpu_custom_call.1} parent=59 // pred_check
        %p434 = pneg %p41
      $region62: #{tpu_custom_call.1} parent=59 // pred_check_branch
        %436 = sbr.rel (%p434) target = $region64
      $region63: #{tpu_custom_call.1} parent=59 // pred_region
        %p437 = scmp.lt.s32.totalorder %s21, 1
        %s438 = scalar_select %p437, %s21, 1
        %s439 = smul.addr %s438, 8
        %s440 = smul.addr %s439, 8
        %s441 = scalar_lea.vmem %s0, %s440
      $region64: #{tpu_custom_call.1} parent=59 // pred_fallthru
        _
      // Predicated region
      $region65: #{tpu_custom_call.1} parent=59 // pred_check
        %p442 = pneg %p67
      $region66: #{tpu_custom_call.1} parent=59 // pred_check_branch
        %444 = sbr.rel (%p442) target = $region68
      $region67: #{tpu_custom_call.1} parent=59 // pred_region
        %p445 = scmp.lt.s32.totalorder %s21, 1
        %s446 = scalar_select %p445, %s21, 1
        %s447 = smul.addr %s446, 8
        %s448 = scalar_lea.vmem %s1, %s447
      $region68: #{tpu_custom_call.1} parent=59 // pred_fallthru
        _
      // Predicated region
      $region69: #{tpu_custom_call.1} parent=59 // pred_check
        %p449 = pneg %p93
      $region70: #{tpu_custom_call.1} parent=59 // pred_check_branch
        %451 = sbr.rel (%p449) target = $region72
      $region71: #{tpu_custom_call.1} parent=59 // pred_region
        %p452 = scmp.lt.s32.totalorder %s21, 1
        %s453 = scalar_select %p452, %s21, 1
        %s454 = scalar_lea.vmem %s2, %s453
      $region72: #{tpu_custom_call.1} parent=59 // pred_fallthru
        _
      // Predicated region
      $region73: #{tpu_custom_call.1} parent=59 // pred_check
        %p455 = pneg %p119
      $region74: #{tpu_custom_call.1} parent=59 // pred_check_branch
        %457 = sbr.rel (%p455) target = $region76
      $region75: #{tpu_custom_call.1} parent=59 // pred_region
        %p458 = scmp.lt.s32.totalorder %s21, 1
        %s459 = scalar_select %p458, %s21, 1
        %s460 = smul.addr %s459, 8
        %s461 = scalar_lea.vmem %s3, %s460
      $region76: #{tpu_custom_call.1} parent=59 // pred_fallthru
        _
    $region60: #{tpu_custom_call.1} parent=5 // pred_fallthru
      _
    %p462 = scmp.le.s32.totalorder 1, %s21
    %p463 = scmp.lt.s32.totalorder %s21, 3
    %p464 = pnand %p462, %p463
    %p465 = pneg %p464
    // Predicated region
    $region77: #{tpu_custom_call.1} parent=5 // pred_check
      _
    $region78: #{tpu_custom_call.1} parent=5 // pred_check_branch
      %467 = sbr.rel (%p464) target = $region80
    $region79: #{tpu_custom_call.1} parent=5 // pred_region
      %s468 = ssub.s32 %s21, 1
      %p469 = scmp.lt.s32.totalorder %s26, 1
      %s470 = scalar_select %p469, %s26, 1
      %s471 = smul.addr %s470, 8
      %s472 = smul.addr %s471, 8
      %s473 = scalar_lea.vmem %s0, %s472
      %p474 = pneg %p47
      %p475 = pneg %p44
      %p476 = scmp.lt.s32.totalorder %s26, 1
      %s477 = scalar_select %p476, %s26, 1
      %s478 = smul.addr %s477, 8
      %s479 = scalar_lea.vmem %s1, %s478
      %p480 = pneg %p73
      %p481 = pneg %p70
      %p482 = scmp.lt.s32.totalorder %s26, 1
      %s483 = scalar_select %p482, %s26, 1
      %s484 = scalar_lea.vmem %s2, %s483
      %p485 = pneg %p99
      %p486 = pneg %p96
      %p487 = scmp.lt.s32.totalorder %s26, 1
      %s488 = scalar_select %p487, %s26, 1
      %s489 = smul.addr %s488, 8
      %s490 = scalar_lea.vmem %s3, %s489
      %p491 = pneg %p125
      %p492 = pneg %p122
      %p493 = pneg %p146
      %p494 = pneg %p143
      %p495 = pneg %p167
      %p496 = pneg %p164
      %p497 = pneg %p188
      %p498 = pneg %p185
      %p499 = pneg %p209
      %p500 = pneg %p206
      %p501 = pneg %p230
      %p502 = pneg %p227
      %p503 = pneg %p251
      %p504 = pneg %p248
      %p505 = pneg %p272
      %p506 = pneg %p269
      %p507 = pneg %p293
      %p508 = pneg %p290
      %p509 = pneg %p314
      %p510 = pneg %p311
      %p511 = pneg %p335
      %p512 = pneg %p332
      %p513 = pneg %p356
      %p514 = pneg %p353
      %p515 = pneg %p382
      %p516 = pneg %p379
      %p517 = scmp.lt.s32.totalorder %s26, 1
      %s518 = scalar_select %p517, %s26, 1
      %s519 = smul.addr %s518, 8
      %s520 = smul.addr %s519, 8
      %s521 = scalar_lea.vmem %s15, %s520
      %p522 = scmp.lt.s32.totalorder %s26, 1
      %s523 = scalar_select %p522, %s26, 1
      %s524 = smul.addr %s523, 8
      %s525 = smul.addr %s524, 8
      %s526 = scalar_lea.vmem %s0, %s525
      %p527 = scmp.lt.s32.totalorder %s26, 1
      %s528 = scalar_select %p527, %s26, 1
      %s529 = smul.addr %s528, 8
      %s530 = scalar_lea.vmem %s1, %s529
      %p531 = scmp.lt.s32.totalorder %s26, 1
      %s532 = scalar_select %p531, %s26, 1
      %s533 = scalar_lea.vmem %s2, %s532
      %p534 = scmp.lt.s32.totalorder %s26, 1
      %s535 = scalar_select %p534, %s26, 1
      %s536 = smul.addr %s535, 8
      %s537 = scalar_lea.vmem %s3, %s536
      %p538 = scmp.lt.s32.totalorder %s26, 1
      %s539 = scalar_select %p538, %s26, 1
      %s540 = smul.addr %s539, 8
      %s541 = smul.addr %s540, 8
      %s542 = scalar_lea.vmem %s15, %s541
      %v543 = vld [vmem:[%s526] sm:$0xff]
      %v544 = vld [vmem:[%s526 + $0x8] sm:$0xff]
      %v545 = vld [vmem:[%s526 + $0x10] sm:$0xff]
      %v546 = vld [vmem:[%s526 + $0x18] sm:$0xff]
      %v547 = vld [vmem:[%s526 + $0x20] sm:$0xff]
      %v548 = vld [vmem:[%s526 + $0x28] sm:$0xff]
      %v549 = vld [vmem:[%s526 + $0x30] sm:$0xff]
      %v550 = vld [vmem:[%s526 + $0x38] sm:$0xff]
      %v551 = vld [vmem:[%s530] sm:$0xff]
      %v552 = vld [vmem:[%s533] sm:$0x1]
      %v553 = vld [vmem:[%s537] sm:$0xff]
      %vm554 = vcmask 57344
      %v555 = vsel %vm554, %v552, 0.0
      %556 = vadd.xlane.f32.xlu0 %v555
      %v557 = vpop.xlane.xlu0 %556
      %559 = vset.pattern.permute.xlu0 0
      %560 = vperm.xlu0 %559, %v553
      %v561 = vpop.permute.xlu0 %560
      %v563 = vmul.f32 %v551, %v561
      %vm564 = vcmask 130048
      %v565 = vsel %vm564, %v563, 0.0
      %v566 = vrot.slane %v565, 4
      %v567 = vadd.f32 %v565, %v566
      %v568 = vrot.slane %v567, 2
      %v569 = vadd.f32 %v567, %v568
      %v570 = vrot.slane %v569, 1
      %v571 = vadd.f32 %v569, %v570
      %v572 = vrcp.pop %v557
      %v573 = vmul.f32 %v571, %v572
      %v574 = vld [vmem:[%s4] sm:$0xff]
      %v575 = vld [vmem:[%s4 + $0x8] sm:$0xff]
      %v576 = vld [vmem:[%s4 + $0x10] sm:$0xff]
      %v577 = vld [vmem:[%s5] sm:$0xff]
      %v578 = vld [vmem:[%s5 + $0x8] sm:$0xff]
      %v580 = vsel %vm564, %v573, 0
      %582 = vmatprep.subr.mxu0 0.0
      %583 = vmatpush1.msra.mxu0 0.0
      %584 = vmatprep.subr.mxu0 0.0
      %585 = vmatpush1.msra.mxu0 0.0
      %586 = vmatprep.subr.mxu0 0.0
      %587 = vmatpush1.msra.mxu0 0.0
      %588 = vmatprep.subr.mxu0 0.0
      %589 = vmatpush1.msra.mxu0 0.0
      %590 = vmatprep.subr.mxu0 0.0
      %591 = vmatpush1.msra.mxu0 0.0
      %592 = vmatprep.subr.mxu0 0.0
      %593 = vmatpush1.msra.mxu0 0.0
      %594 = vmatprep.subr.mxu0 0.0
      %595 = vmatpush1.msra.mxu0 0.0
      %596 = vmatprep.subr.mxu0 0.0
      %597 = vmatpush1.msra.mxu0 0.0
      %598 = vmatprep.subr.mxu0 0.0
      %599 = vmatpush1.msra.mxu0 0.0
      %600 = vmatprep.subr.mxu0 0.0
      %601 = vmatpush1.msra.mxu0 0.0
      %602 = vmatprep.subr.mxu0 0.0
      %603 = vmatpush1.msra.mxu0 0.0
      %604 = vmatprep.subr.mxu0 0.0
      %605 = vmatpush1.msra.mxu0 0.0
      %606 = vmatprep.subr.mxu0 0.0
      %607 = vmatpush1.msra.mxu0 0.0
      %608 = vmatprep.subr.mxu0 0.0
      %609 = vmatpush1.msra.mxu0 0.0
      %610 = vmatprep.subr.mxu0 0.0
      %v611 = vand.u32 %v578, 4294901760
      %612 = vmatpush1.msra.mxu0 %v611
      %613 = vmatprep.subr.mxu0 0.0
      %v614 = vand.u32 %v577, 4294901760
      %615 = vmatpush1.msra.mxu0 %v614
      %616 = vmatprep.subr.mxu0 0.0
      %617 = vmatpush2.msra.mxu0 0.0
      %618 = vmatprep.subr.mxu0 0.0
      %619 = vmatpush2.msra.mxu0 0.0
      %620 = vmatprep.subr.mxu0 0.0
      %621 = vmatpush2.msra.mxu0 0.0
      %622 = vmatprep.subr.mxu0 0.0
      %623 = vmatpush2.msra.mxu0 0.0
      %624 = vmatprep.subr.mxu0 0.0
      %625 = vmatpush2.msra.mxu0 0.0
      %626 = vmatprep.subr.mxu0 0.0
      %627 = vmatpush2.msra.mxu0 0.0
      %628 = vmatprep.subr.mxu0 0.0
      %629 = vmatpush2.msra.mxu0 0.0
      %630 = vmatprep.subr.mxu0 0.0
      %631 = vmatpush2.msra.mxu0 0.0
      %632 = vmatprep.subr.mxu0 0.0
      %633 = vmatpush2.msra.mxu0 0.0
      %634 = vmatprep.subr.mxu0 0.0
      %635 = vmatpush2.msra.mxu0 0.0
      %636 = vmatprep.subr.mxu0 0.0
      %637 = vmatpush2.msra.mxu0 0.0
      %638 = vmatprep.subr.mxu0 0.0
      %639 = vmatpush2.msra.mxu0 0.0
      %640 = vmatprep.subr.mxu0 0.0
      %641 = vmatpush2.msra.mxu0 0.0
      %642 = vmatprep.subr.mxu0 0.0
      %643 = vmatpush2.msra.mxu0 0.0
      %644 = vmatprep.subr.mxu0 0.0
      %645 = vmatpush2.msra.mxu0 0.0
      %646 = vmatprep.subr.mxu0 0.0
      %647 = vmatpush2.msra.mxu0 0.0
      %648 = vmatprep.mubr.f32.mxu0 0.0
      %v649 = vand.u32 %v580, 4294901760
      %v650 = vsub.f32 %v580, %v649
      %v651 = vand.u32 %v650, 4294901760
      %v652 = vsub.f32 %v650, %v651
      %v653 = vand.u32 %v652, 4294901760
      %654 = vmatmul.mubr.f32.gmra.mxu0 %v653
      %v655 = vpop.f32.mrf.mxu0
      %v656 = vadd.f32 0.0, %v655
      %v657 = vpop.f32.mrf.mxu0
      %658 = vdwg.mxu0
      %659 = vmatprep.subr.mxu0 0.0
      %660 = vmatpush1.msra.mxu0 0.0
      %661 = vmatprep.subr.mxu0 0.0
      %662 = vmatpush1.msra.mxu0 0.0
      %663 = vmatprep.subr.mxu0 0.0
      %664 = vmatpush1.msra.mxu0 0.0
      %665 = vmatprep.subr.mxu0 0.0
      %666 = vmatpush1.msra.mxu0 0.0
      %667 = vmatprep.subr.mxu0 0.0
      %668 = vmatpush1.msra.mxu0 0.0
      %669 = vmatprep.subr.mxu0 0.0
      %670 = vmatpush1.msra.mxu0 0.0
      %671 = vmatprep.subr.mxu0 0.0
      %672 = vmatpush1.msra.mxu0 0.0
      %673 = vmatprep.subr.mxu0 0.0
      %674 = vmatpush1.msra.mxu0 0.0
      %675 = vmatprep.subr.mxu0 0.0
      %676 = vmatpush1.msra.mxu0 0.0
      %677 = vmatprep.subr.mxu0 0.0
      %678 = vmatpush1.msra.mxu0 0.0
      %679 = vmatprep.subr.mxu0 0.0
      %680 = vmatpush1.msra.mxu0 0.0
      %681 = vmatprep.subr.mxu0 0.0
      %682 = vmatpush1.msra.mxu0 0.0
      %683 = vmatprep.subr.mxu0 0.0
      %684 = vmatpush1.msra.mxu0 0.0
      %685 = vmatprep.subr.mxu0 0.0
      %686 = vmatpush1.msra.mxu0 0.0
      %687 = vmatprep.subr.mxu0 0.0
      %v688 = vand.u32 %v578, 4294901760
      %v689 = vsub.f32 %v578, %v688
      %v690 = vand.u32 %v689, 4294901760
      %v691 = vsub.f32 %v689, %v690
      %v692 = vand.u32 %v691, 4294901760
      %693 = vmatpush1.msra.mxu0 %v692
      %694 = vmatprep.subr.mxu0 0.0
      %v695 = vand.u32 %v577, 4294901760
      %v696 = vsub.f32 %v577, %v695
      %v697 = vand.u32 %v696, 4294901760
      %v698 = vsub.f32 %v696, %v697
      %v699 = vand.u32 %v698, 4294901760
      %700 = vmatpush1.msra.mxu0 %v699
      %701 = vmatprep.subr.mxu0 0.0
      %702 = vmatpush2.msra.mxu0 0.0
      %703 = vmatprep.subr.mxu0 0.0
      %704 = vmatpush2.msra.mxu0 0.0
      %705 = vmatprep.subr.mxu0 0.0
      %706 = vmatpush2.msra.mxu0 0.0
      %707 = vmatprep.subr.mxu0 0.0
      %708 = vmatpush2.msra.mxu0 0.0
      %709 = vmatprep.subr.mxu0 0.0
      %710 = vmatpush2.msra.mxu0 0.0
      %711 = vmatprep.subr.mxu0 0.0
      %712 = vmatpush2.msra.mxu0 0.0
      %713 = vmatprep.subr.mxu0 0.0
      %714 = vmatpush2.msra.mxu0 0.0
      %715 = vmatprep.subr.mxu0 0.0
      %716 = vmatpush2.msra.mxu0 0.0
      %717 = vmatprep.subr.mxu0 0.0
      %718 = vmatpush2.msra.mxu0 0.0
      %719 = vmatprep.subr.mxu0 0.0
      %720 = vmatpush2.msra.mxu0 0.0
      %721 = vmatprep.subr.mxu0 0.0
      %722 = vmatpush2.msra.mxu0 0.0
      %723 = vmatprep.subr.mxu0 0.0
      %724 = vmatpush2.msra.mxu0 0.0
      %725 = vmatprep.subr.mxu0 0.0
      %726 = vmatpush2.msra.mxu0 0.0
      %727 = vmatprep.subr.mxu0 0.0
      %728 = vmatpush2.msra.mxu0 0.0
      %729 = vmatprep.subr.mxu0 0.0
      %730 = vmatpush2.msra.mxu0 0.0
      %731 = vmatprep.subr.mxu0 0.0
      %732 = vmatpush2.msra.mxu0 0.0
      %733 = vmatprep.mubr.f32.mxu0 0.0
      %v734 = vand.u32 %v580, 4294901760
      %735 = vmatmul.mubr.f32.gmra.mxu0 %v734
      %v736 = vpop.f32.mrf.mxu0
      %v737 = vadd.f32 %v656, %v736
      %v738 = vpop.f32.mrf.mxu0
      %739 = vdwg.mxu0
      %740 = vmatprep.subr.mxu0 0.0
      %741 = vmatpush1.msra.mxu0 0.0
      %742 = vmatprep.subr.mxu0 0.0
      %743 = vmatpush1.msra.mxu0 0.0
      %744 = vmatprep.subr.mxu0 0.0
      %745 = vmatpush1.msra.mxu0 0.0
      %746 = vmatprep.subr.mxu0 0.0
      %747 = vmatpush1.msra.mxu0 0.0
      %748 = vmatprep.subr.mxu0 0.0
      %749 = vmatpush1.msra.mxu0 0.0
      %750 = vmatprep.subr.mxu0 0.0
      %751 = vmatpush1.msra.mxu0 0.0
      %752 = vmatprep.subr.mxu0 0.0
      %753 = vmatpush1.msra.mxu0 0.0
      %754 = vmatprep.subr.mxu0 0.0
      %755 = vmatpush1.msra.mxu0 0.0
      %756 = vmatprep.subr.mxu0 0.0
      %757 = vmatpush1.msra.mxu0 0.0
      %758 = vmatprep.subr.mxu0 0.0
      %759 = vmatpush1.msra.mxu0 0.0
      %760 = vmatprep.subr.mxu0 0.0
      %761 = vmatpush1.msra.mxu0 0.0
      %762 = vmatprep.subr.mxu0 0.0
      %763 = vmatpush1.msra.mxu0 0.0
      %764 = vmatprep.subr.mxu0 0.0
      %765 = vmatpush1.msra.mxu0 0.0
      %766 = vmatprep.subr.mxu0 0.0
      %767 = vmatpush1.msra.mxu0 0.0
      %768 = vmatprep.subr.mxu0 0.0
      %v769 = vand.u32 %v578, 4294901760
      %v770 = vsub.f32 %v578, %v769
      %771 = vmatpush1.msra.mxu0 %v770
      %772 = vmatprep.subr.mxu0 0.0
      %v773 = vand.u32 %v577, 4294901760
      %v774 = vsub.f32 %v577, %v773
      %775 = vmatpush1.msra.mxu0 %v774
      %776 = vmatprep.subr.mxu0 0.0
      %777 = vmatpush2.msra.mxu0 0.0
      %778 = vmatprep.subr.mxu0 0.0
      %779 = vmatpush2.msra.mxu0 0.0
      %780 = vmatprep.subr.mxu0 0.0
      %781 = vmatpush2.msra.mxu0 0.0
      %782 = vmatprep.subr.mxu0 0.0
      %783 = vmatpush2.msra.mxu0 0.0
      %784 = vmatprep.subr.mxu0 0.0
      %785 = vmatpush2.msra.mxu0 0.0
      %786 = vmatprep.subr.mxu0 0.0
      %787 = vmatpush2.msra.mxu0 0.0
      %788 = vmatprep.subr.mxu0 0.0
      %789 = vmatpush2.msra.mxu0 0.0
      %790 = vmatprep.subr.mxu0 0.0
      %791 = vmatpush2.msra.mxu0 0.0
      %792 = vmatprep.subr.mxu0 0.0
      %793 = vmatpush2.msra.mxu0 0.0
      %794 = vmatprep.subr.mxu0 0.0
      %795 = vmatpush2.msra.mxu0 0.0
      %796 = vmatprep.subr.mxu0 0.0
      %797 = vmatpush2.msra.mxu0 0.0
      %798 = vmatprep.subr.mxu0 0.0
      %799 = vmatpush2.msra.mxu0 0.0
      %800 = vmatprep.subr.mxu0 0.0
      %801 = vmatpush2.msra.mxu0 0.0
      %802 = vmatprep.subr.mxu0 0.0
      %803 = vmatpush2.msra.mxu0 0.0
      %804 = vmatprep.subr.mxu0 0.0
      %805 = vmatpush2.msra.mxu0 0.0
      %806 = vmatprep.subr.mxu0 0.0
      %807 = vmatpush2.msra.mxu0 0.0
      %808 = vmatprep.mubr.f32.mxu0 0.0
      %v809 = vand.u32 %v580, 4294901760
      %v810 = vsub.f32 %v580, %v809
      %811 = vmatmul.mubr.f32.gmra.mxu0 %v810
      %v812 = vpop.f32.mrf.mxu0
      %v813 = vadd.f32 %v737, %v812
      %v814 = vpop.f32.mrf.mxu0
      %815 = vdwg.mxu0
      %816 = vmatprep.subr.mxu0 0.0
      %817 = vmatpush1.msra.mxu0 0.0
      %818 = vmatprep.subr.mxu0 0.0
      %819 = vmatpush1.msra.mxu0 0.0
      %820 = vmatprep.subr.mxu0 0.0
      %821 = vmatpush1.msra.mxu0 0.0
      %822 = vmatprep.subr.mxu0 0.0
      %823 = vmatpush1.msra.mxu0 0.0
      %824 = vmatprep.subr.mxu0 0.0
      %825 = vmatpush1.msra.mxu0 0.0
      %826 = vmatprep.subr.mxu0 0.0
      %827 = vmatpush1.msra.mxu0 0.0
      %828 = vmatprep.subr.mxu0 0.0
      %829 = vmatpush1.msra.mxu0 0.0
      %830 = vmatprep.subr.mxu0 0.0
      %831 = vmatpush1.msra.mxu0 0.0
      %832 = vmatprep.subr.mxu0 0.0
      %833 = vmatpush1.msra.mxu0 0.0
      %834 = vmatprep.subr.mxu0 0.0
      %835 = vmatpush1.msra.mxu0 0.0
      %836 = vmatprep.subr.mxu0 0.0
      %837 = vmatpush1.msra.mxu0 0.0
      %838 = vmatprep.subr.mxu0 0.0
      %839 = vmatpush1.msra.mxu0 0.0
      %840 = vmatprep.subr.mxu0 0.0
      %841 = vmatpush1.msra.mxu0 0.0
      %842 = vmatprep.subr.mxu0 0.0
      %843 = vmatpush1.msra.mxu0 0.0
      %844 = vmatprep.subr.mxu0 0.0
      %v845 = vand.u32 %v578, 4294901760
      %846 = vmatpush1.msra.mxu0 %v845
      %847 = vmatprep.subr.mxu0 0.0
      %v848 = vand.u32 %v577, 4294901760
      %849 = vmatpush1.msra.mxu0 %v848
      %850 = vmatprep.subr.mxu0 0.0
      %851 = vmatpush2.msra.mxu0 0.0
      %852 = vmatprep.subr.mxu0 0.0
      %853 = vmatpush2.msra.mxu0 0.0
      %854 = vmatprep.subr.mxu0 0.0
      %855 = vmatpush2.msra.mxu0 0.0
      %856 = vmatprep.subr.mxu0 0.0
      %857 = vmatpush2.msra.mxu0 0.0
      %858 = vmatprep.subr.mxu0 0.0
      %859 = vmatpush2.msra.mxu0 0.0
      %860 = vmatprep.subr.mxu0 0.0
      %861 = vmatpush2.msra.mxu0 0.0
      %862 = vmatprep.subr.mxu0 0.0
      %863 = vmatpush2.msra.mxu0 0.0
      %864 = vmatprep.subr.mxu0 0.0
      %865 = vmatpush2.msra.mxu0 0.0
      %866 = vmatprep.subr.mxu0 0.0
      %867 = vmatpush2.msra.mxu0 0.0
      %868 = vmatprep.subr.mxu0 0.0
      %869 = vmatpush2.msra.mxu0 0.0
      %870 = vmatprep.subr.mxu0 0.0
      %871 = vmatpush2.msra.mxu0 0.0
      %872 = vmatprep.subr.mxu0 0.0
      %873 = vmatpush2.msra.mxu0 0.0
      %874 = vmatprep.subr.mxu0 0.0
      %875 = vmatpush2.msra.mxu0 0.0
      %876 = vmatprep.subr.mxu0 0.0
      %877 = vmatpush2.msra.mxu0 0.0
      %878 = vmatprep.subr.mxu0 0.0
      %879 = vmatpush2.msra.mxu0 0.0
      %880 = vmatprep.subr.mxu0 0.0
      %881 = vmatpush2.msra.mxu0 0.0
      %882 = vmatprep.mubr.f32.mxu0 0.0
      %v883 = vand.u32 %v580, 4294901760
      %v884 = vsub.f32 %v580, %v883
      %v885 = vand.u32 %v884, 4294901760
      %886 = vmatmul.mubr.f32.gmra.mxu0 %v885
      %v887 = vpop.f32.mrf.mxu0
      %v888 = vadd.f32 %v813, %v887
      %v889 = vpop.f32.mrf.mxu0
      %890 = vdwg.mxu0
      %891 = vmatprep.subr.mxu0 0.0
      %892 = vmatpush1.msra.mxu0 0.0
      %893 = vmatprep.subr.mxu0 0.0
      %894 = vmatpush1.msra.mxu0 0.0
      %895 = vmatprep.subr.mxu0 0.0
      %896 = vmatpush1.msra.mxu0 0.0
      %897 = vmatprep.subr.mxu0 0.0
      %898 = vmatpush1.msra.mxu0 0.0
      %899 = vmatprep.subr.mxu0 0.0
      %900 = vmatpush1.msra.mxu0 0.0
      %901 = vmatprep.subr.mxu0 0.0
      %902 = vmatpush1.msra.mxu0 0.0
      %903 = vmatprep.subr.mxu0 0.0
      %904 = vmatpush1.msra.mxu0 0.0
      %905 = vmatprep.subr.mxu0 0.0
      %906 = vmatpush1.msra.mxu0 0.0
      %907 = vmatprep.subr.mxu0 0.0
      %908 = vmatpush1.msra.mxu0 0.0
      %909 = vmatprep.subr.mxu0 0.0
      %910 = vmatpush1.msra.mxu0 0.0
      %911 = vmatprep.subr.mxu0 0.0
      %912 = vmatpush1.msra.mxu0 0.0
      %913 = vmatprep.subr.mxu0 0.0
      %914 = vmatpush1.msra.mxu0 0.0
      %915 = vmatprep.subr.mxu0 0.0
      %916 = vmatpush1.msra.mxu0 0.0
      %917 = vmatprep.subr.mxu0 0.0
      %918 = vmatpush1.msra.mxu0 0.0
      %919 = vmatprep.subr.mxu0 0.0
      %v920 = vand.u32 %v578, 4294901760
      %v921 = vsub.f32 %v578, %v920
      %v922 = vand.u32 %v921, 4294901760
      %923 = vmatpush1.msra.mxu0 %v922
      %924 = vmatprep.subr.mxu0 0.0
      %v925 = vand.u32 %v577, 4294901760
      %v926 = vsub.f32 %v577, %v925
      %v927 = vand.u32 %v926, 4294901760
      %928 = vmatpush1.msra.mxu0 %v927
      %929 = vmatprep.subr.mxu0 0.0
      %930 = vmatpush2.msra.mxu0 0.0
      %931 = vmatprep.subr.mxu0 0.0
      %932 = vmatpush2.msra.mxu0 0.0
      %933 = vmatprep.subr.mxu0 0.0
      %934 = vmatpush2.msra.mxu0 0.0
      %935 = vmatprep.subr.mxu0 0.0
      %936 = vmatpush2.msra.mxu0 0.0
      %937 = vmatprep.subr.mxu0 0.0
      %938 = vmatpush2.msra.mxu0 0.0
      %939 = vmatprep.subr.mxu0 0.0
      %940 = vmatpush2.msra.mxu0 0.0
      %941 = vmatprep.subr.mxu0 0.0
      %942 = vmatpush2.msra.mxu0 0.0
      %943 = vmatprep.subr.mxu0 0.0
      %944 = vmatpush2.msra.mxu0 0.0
      %945 = vmatprep.subr.mxu0 0.0
      %946 = vmatpush2.msra.mxu0 0.0
      %947 = vmatprep.subr.mxu0 0.0
      %948 = vmatpush2.msra.mxu0 0.0
      %949 = vmatprep.subr.mxu0 0.0
      %950 = vmatpush2.msra.mxu0 0.0
      %951 = vmatprep.subr.mxu0 0.0
      %952 = vmatpush2.msra.mxu0 0.0
      %953 = vmatprep.subr.mxu0 0.0
      %954 = vmatpush2.msra.mxu0 0.0
      %955 = vmatprep.subr.mxu0 0.0
      %956 = vmatpush2.msra.mxu0 0.0
      %957 = vmatprep.subr.mxu0 0.0
      %958 = vmatpush2.msra.mxu0 0.0
      %959 = vmatprep.subr.mxu0 0.0
      %960 = vmatpush2.msra.mxu0 0.0
      %961 = vmatprep.mubr.f32.mxu0 0.0
      %v962 = vand.u32 %v580, 4294901760
      %963 = vmatmul.mubr.f32.gmra.mxu0 %v962
      %v964 = vpop.f32.mrf.mxu0
      %v965 = vadd.f32 %v888, %v964
      %v966 = vpop.f32.mrf.mxu0
      %967 = vdwg.mxu0
      %968 = vmatprep.subr.mxu0 0.0
      %969 = vmatpush1.msra.mxu0 0.0
      %970 = vmatprep.subr.mxu0 0.0
      %971 = vmatpush1.msra.mxu0 0.0
      %972 = vmatprep.subr.mxu0 0.0
      %973 = vmatpush1.msra.mxu0 0.0
      %974 = vmatprep.subr.mxu0 0.0
      %975 = vmatpush1.msra.mxu0 0.0
      %976 = vmatprep.subr.mxu0 0.0
      %977 = vmatpush1.msra.mxu0 0.0
      %978 = vmatprep.subr.mxu0 0.0
      %979 = vmatpush1.msra.mxu0 0.0
      %980 = vmatprep.subr.mxu0 0.0
      %981 = vmatpush1.msra.mxu0 0.0
      %982 = vmatprep.subr.mxu0 0.0
      %983 = vmatpush1.msra.mxu0 0.0
      %984 = vmatprep.subr.mxu0 0.0
      %985 = vmatpush1.msra.mxu0 0.0
      %986 = vmatprep.subr.mxu0 0.0
      %987 = vmatpush1.msra.mxu0 0.0
      %988 = vmatprep.subr.mxu0 0.0
      %989 = vmatpush1.msra.mxu0 0.0
      %990 = vmatprep.subr.mxu0 0.0
      %991 = vmatpush1.msra.mxu0 0.0
      %992 = vmatprep.subr.mxu0 0.0
      %993 = vmatpush1.msra.mxu0 0.0
      %994 = vmatprep.subr.mxu0 0.0
      %995 = vmatpush1.msra.mxu0 0.0
      %996 = vmatprep.subr.mxu0 0.0
      %v997 = vand.u32 %v578, 4294901760
      %998 = vmatpush1.msra.mxu0 %v997
      %999 = vmatprep.subr.mxu0 0.0
      %v1000 = vand.u32 %v577, 4294901760
      %1001 = vmatpush1.msra.mxu0 %v1000
      %1002 = vmatprep.subr.mxu0 0.0
      %1003 = vmatpush2.msra.mxu0 0.0
      %1004 = vmatprep.subr.mxu0 0.0
      %1005 = vmatpush2.msra.mxu0 0.0
      %1006 = vmatprep.subr.mxu0 0.0
      %1007 = vmatpush2.msra.mxu0 0.0
      %1008 = vmatprep.subr.mxu0 0.0
      %1009 = vmatpush2.msra.mxu0 0.0
      %1010 = vmatprep.subr.mxu0 0.0
      %1011 = vmatpush2.msra.mxu0 0.0
      %1012 = vmatprep.subr.mxu0 0.0
      %1013 = vmatpush2.msra.mxu0 0.0
      %1014 = vmatprep.subr.mxu0 0.0
      %1015 = vmatpush2.msra.mxu0 0.0
      %1016 = vmatprep.subr.mxu0 0.0
      %1017 = vmatpush2.msra.mxu0 0.0
      %1018 = vmatprep.subr.mxu0 0.0
      %1019 = vmatpush2.msra.mxu0 0.0
      %1020 = vmatprep.subr.mxu0 0.0
      %1021 = vmatpush2.msra.mxu0 0.0
      %1022 = vmatprep.subr.mxu0 0.0
      %1023 = vmatpush2.msra.mxu0 0.0
      %1024 = vmatprep.subr.mxu0 0.0
      %1025 = vmatpush2.msra.mxu0 0.0
      %1026 = vmatprep.subr.mxu0 0.0
      %1027 = vmatpush2.msra.mxu0 0.0
      %1028 = vmatprep.subr.mxu0 0.0
      %1029 = vmatpush2.msra.mxu0 0.0
      %1030 = vmatprep.subr.mxu0 0.0
      %1031 = vmatpush2.msra.mxu0 0.0
      %1032 = vmatprep.subr.mxu0 0.0
      %1033 = vmatpush2.msra.mxu0 0.0
      %1034 = vmatprep.mubr.f32.mxu0 0.0
      %v1035 = vand.u32 %v580, 4294901760
      %1036 = vmatmul.mubr.f32.gmra.mxu0 %v1035
      %v1037 = vpop.f32.mrf.mxu0
      %v1038 = vadd.f32 %v965, %v1037
      %v1039 = vpop.f32.mrf.mxu0
      %1040 = vdwg.mxu0
      %v1041 = vlaneseq
      %v1042 = vshrl.u32 %v1041, 7
      %v1043 = vsub.s32 0, %v1042
      %v1044 = vrot.slane %v1038, %v1043
      %vm1045 = vcmask 195584
      %v1047 = vsel %vm1045, %v543, 0
      %v1050 = vsel %vm1045, %v544, 0
      %v1053 = vsel %vm1045, %v545, 0
      %v1056 = vsel %vm1045, %v546, 0
      %v1059 = vsel %vm1045, %v547, 0
      %v1062 = vsel %vm1045, %v548, 0
      %v1065 = vsel %vm1045, %v549, 0
      %v1068 = vsel %vm1045, %v550, 0
      %1070 = vmatprep.subr.mxu0 0.0
      %1071 = vmatpush1.msra.mxu0 0.0
      %1072 = vmatprep.subr.mxu0 0.0
      %1073 = vmatpush1.msra.mxu0 0.0
      %1074 = vmatprep.subr.mxu0 0.0
      %1075 = vmatpush1.msra.mxu0 0.0
      %1076 = vmatprep.subr.mxu0 0.0
      %1077 = vmatpush1.msra.mxu0 0.0
      %1078 = vmatprep.subr.mxu0 0.0
      %1079 = vmatpush1.msra.mxu0 0.0
      %1080 = vmatprep.subr.mxu0 0.0
      %1081 = vmatpush1.msra.mxu0 0.0
      %1082 = vmatprep.subr.mxu0 0.0
      %1083 = vmatpush1.msra.mxu0 0.0
      %1084 = vmatprep.subr.mxu0 0.0
      %1085 = vmatpush1.msra.mxu0 0.0
      %1086 = vmatprep.subr.mxu0 0.0
      %1087 = vmatpush1.msra.mxu0 0.0
      %1088 = vmatprep.subr.mxu0 0.0
      %1089 = vmatpush1.msra.mxu0 0.0
      %1090 = vmatprep.subr.mxu0 0.0
      %1091 = vmatpush1.msra.mxu0 0.0
      %1092 = vmatprep.subr.mxu0 0.0
      %1093 = vmatpush1.msra.mxu0 0.0
      %1094 = vmatprep.subr.mxu0 0.0
      %1095 = vmatpush1.msra.mxu0 0.0
      %1096 = vmatprep.subr.mxu0 0.0
      %v1097 = vand.u32 %v576, 4294901760
      %1098 = vmatpush1.msra.mxu0 %v1097
      %1099 = vmatprep.subr.mxu0 0.0
      %v1100 = vand.u32 %v575, 4294901760
      %1101 = vmatpush1.msra.mxu0 %v1100
      %1102 = vmatprep.subr.mxu0 0.0
      %v1103 = vand.u32 %v574, 4294901760
      %1104 = vmatpush1.msra.mxu0 %v1103
      %1105 = vmatprep.subr.mxu0 0.0
      %1106 = vmatpush2.msra.mxu0 0.0
      %1107 = vmatprep.subr.mxu0 0.0
      %1108 = vmatpush2.msra.mxu0 0.0
      %1109 = vmatprep.subr.mxu0 0.0
      %1110 = vmatpush2.msra.mxu0 0.0
      %1111 = vmatprep.subr.mxu0 0.0
      %1112 = vmatpush2.msra.mxu0 0.0
      %1113 = vmatprep.subr.mxu0 0.0
      %1114 = vmatpush2.msra.mxu0 0.0
      %1115 = vmatprep.subr.mxu0 0.0
      %1116 = vmatpush2.msra.mxu0 0.0
      %1117 = vmatprep.subr.mxu0 0.0
      %1118 = vmatpush2.msra.mxu0 0.0
      %1119 = vmatprep.subr.mxu0 0.0
      %1120 = vmatpush2.msra.mxu0 0.0
      %1121 = vmatprep.subr.mxu0 0.0
      %1122 = vmatpush2.msra.mxu0 0.0
      %1123 = vmatprep.subr.mxu0 0.0
      %1124 = vmatpush2.msra.mxu0 0.0
      %1125 = vmatprep.subr.mxu0 0.0
      %1126 = vmatpush2.msra.mxu0 0.0
      %1127 = vmatprep.subr.mxu0 0.0
      %1128 = vmatpush2.msra.mxu0 0.0
      %1129 = vmatprep.subr.mxu0 0.0
      %1130 = vmatpush2.msra.mxu0 0.0
      %1131 = vmatprep.subr.mxu0 0.0
      %1132 = vmatpush2.msra.mxu0 0.0
      %1133 = vmatprep.subr.mxu0 0.0
      %1134 = vmatpush2.msra.mxu0 0.0
      %1135 = vmatprep.subr.mxu0 0.0
      %1136 = vmatpush2.msra.mxu0 0.0
      %1137 = vmatprep.mubr.f32.mxu0 0.0
      %v1138 = vand.u32 %v1047, 4294901760
      %v1139 = vsub.f32 %v1047, %v1138
      %v1140 = vand.u32 %v1139, 4294901760
      %v1141 = vsub.f32 %v1139, %v1140
      %v1142 = vand.u32 %v1141, 4294901760
      %1143 = vmatmul.mubr.f32.gmra.mxu0 %v1142
      %v1144 = vpop.f32.mrf.mxu0
      %v1145 = vadd.f32 %v1044, %v1144
      %v1146 = vpop.f32.mrf.mxu0
      %1147 = vmatprep.mubr.f32.mxu0 0.0
      %v1148 = vand.u32 %v1050, 4294901760
      %v1149 = vsub.f32 %v1050, %v1148
      %v1150 = vand.u32 %v1149, 4294901760
      %v1151 = vsub.f32 %v1149, %v1150
      %v1152 = vand.u32 %v1151, 4294901760
      %1153 = vmatmul.mubr.f32.gmra.mxu0 %v1152
      %v1154 = vpop.f32.mrf.mxu0
      %v1155 = vadd.f32 %v1044, %v1154
      %v1156 = vpop.f32.mrf.mxu0
      %1157 = vmatprep.mubr.f32.mxu0 0.0
      %v1158 = vand.u32 %v1053, 4294901760
      %v1159 = vsub.f32 %v1053, %v1158
      %v1160 = vand.u32 %v1159, 4294901760
      %v1161 = vsub.f32 %v1159, %v1160
      %v1162 = vand.u32 %v1161, 4294901760
      %1163 = vmatmul.mubr.f32.gmra.mxu0 %v1162
      %v1164 = vpop.f32.mrf.mxu0
      %v1165 = vadd.f32 %v1044, %v1164
      %v1166 = vpop.f32.mrf.mxu0
      %1167 = vmatprep.mubr.f32.mxu0 0.0
      %v1168 = vand.u32 %v1056, 4294901760
      %v1169 = vsub.f32 %v1056, %v1168
      %v1170 = vand.u32 %v1169, 4294901760
      %v1171 = vsub.f32 %v1169, %v1170
      %v1172 = vand.u32 %v1171, 4294901760
      %1173 = vmatmul.mubr.f32.gmra.mxu0 %v1172
      %v1174 = vpop.f32.mrf.mxu0
      %v1175 = vadd.f32 %v1044, %v1174
      %v1176 = vpop.f32.mrf.mxu0
      %1177 = vmatprep.mubr.f32.mxu0 0.0
      %v1178 = vand.u32 %v1059, 4294901760
      %v1179 = vsub.f32 %v1059, %v1178
      %v1180 = vand.u32 %v1179, 4294901760
      %v1181 = vsub.f32 %v1179, %v1180
      %v1182 = vand.u32 %v1181, 4294901760
      %1183 = vmatmul.mubr.f32.gmra.mxu0 %v1182
      %v1184 = vpop.f32.mrf.mxu0
      %v1185 = vadd.f32 %v1044, %v1184
      %v1186 = vpop.f32.mrf.mxu0
      %1187 = vmatprep.mubr.f32.mxu0 0.0
      %v1188 = vand.u32 %v1062, 4294901760
      %v1189 = vsub.f32 %v1062, %v1188
      %v1190 = vand.u32 %v1189, 4294901760
      %v1191 = vsub.f32 %v1189, %v1190
      %v1192 = vand.u32 %v1191, 4294901760
      %1193 = vmatmul.mubr.f32.gmra.mxu0 %v1192
      %v1194 = vpop.f32.mrf.mxu0
      %v1195 = vadd.f32 %v1044, %v1194
      %v1196 = vpop.f32.mrf.mxu0
      %1197 = vmatprep.mubr.f32.mxu0 0.0
      %v1198 = vand.u32 %v1065, 4294901760
      %v1199 = vsub.f32 %v1065, %v1198
      %v1200 = vand.u32 %v1199, 4294901760
      %v1201 = vsub.f32 %v1199, %v1200
      %v1202 = vand.u32 %v1201, 4294901760
      %1203 = vmatmul.mubr.f32.gmra.mxu0 %v1202
      %v1204 = vpop.f32.mrf.mxu0
      %v1205 = vadd.f32 %v1044, %v1204
      %v1206 = vpop.f32.mrf.mxu0
      %1207 = vmatprep.mubr.f32.mxu0 0.0
      %v1208 = vand.u32 %v1068, 4294901760
      %v1209 = vsub.f32 %v1068, %v1208
      %v1210 = vand.u32 %v1209, 4294901760
      %v1211 = vsub.f32 %v1209, %v1210
      %v1212 = vand.u32 %v1211, 4294901760
      %1213 = vmatmul.mubr.f32.gmra.mxu0 %v1212
      %v1214 = vpop.f32.mrf.mxu0
      %v1215 = vadd.f32 %v1044, %v1214
      %v1216 = vpop.f32.mrf.mxu0
      %1217 = vdwg.mxu0
      %1218 = vmatprep.subr.mxu0 0.0
      %1219 = vmatpush1.msra.mxu0 0.0
      %1220 = vmatprep.subr.mxu0 0.0
      %1221 = vmatpush1.msra.mxu0 0.0
      %1222 = vmatprep.subr.mxu0 0.0
      %1223 = vmatpush1.msra.mxu0 0.0
      %1224 = vmatprep.subr.mxu0 0.0
      %1225 = vmatpush1.msra.mxu0 0.0
      %1226 = vmatprep.subr.mxu0 0.0
      %1227 = vmatpush1.msra.mxu0 0.0
      %1228 = vmatprep.subr.mxu0 0.0
      %1229 = vmatpush1.msra.mxu0 0.0
      %1230 = vmatprep.subr.mxu0 0.0
      %1231 = vmatpush1.msra.mxu0 0.0
      %1232 = vmatprep.subr.mxu0 0.0
      %1233 = vmatpush1.msra.mxu0 0.0
      %1234 = vmatprep.subr.mxu0 0.0
      %1235 = vmatpush1.msra.mxu0 0.0
      %1236 = vmatprep.subr.mxu0 0.0
      %1237 = vmatpush1.msra.mxu0 0.0
      %1238 = vmatprep.subr.mxu0 0.0
      %1239 = vmatpush1.msra.mxu0 0.0
      %1240 = vmatprep.subr.mxu0 0.0
      %1241 = vmatpush1.msra.mxu0 0.0
      %1242 = vmatprep.subr.mxu0 0.0
      %1243 = vmatpush1.msra.mxu0 0.0
      %1244 = vmatprep.subr.mxu0 0.0
      %v1245 = vand.u32 %v576, 4294901760
      %v1246 = vsub.f32 %v576, %v1245
      %v1247 = vand.u32 %v1246, 4294901760
      %v1248 = vsub.f32 %v1246, %v1247
      %v1249 = vand.u32 %v1248, 4294901760
      %1250 = vmatpush1.msra.mxu0 %v1249
      %1251 = vmatprep.subr.mxu0 0.0
      %v1252 = vand.u32 %v575, 4294901760
      %v1253 = vsub.f32 %v575, %v1252
      %v1254 = vand.u32 %v1253, 4294901760
      %v1255 = vsub.f32 %v1253, %v1254
      %v1256 = vand.u32 %v1255, 4294901760
      %1257 = vmatpush1.msra.mxu0 %v1256
      %1258 = vmatprep.subr.mxu0 0.0
      %v1259 = vand.u32 %v574, 4294901760
      %v1260 = vsub.f32 %v574, %v1259
      %v1261 = vand.u32 %v1260, 4294901760
      %v1262 = vsub.f32 %v1260, %v1261
      %v1263 = vand.u32 %v1262, 4294901760
      %1264 = vmatpush1.msra.mxu0 %v1263
      %1265 = vmatprep.subr.mxu0 0.0
      %1266 = vmatpush2.msra.mxu0 0.0
      %1267 = vmatprep.subr.mxu0 0.0
      %1268 = vmatpush2.msra.mxu0 0.0
      %1269 = vmatprep.subr.mxu0 0.0
      %1270 = vmatpush2.msra.mxu0 0.0
      %1271 = vmatprep.subr.mxu0 0.0
      %1272 = vmatpush2.msra.mxu0 0.0
      %1273 = vmatprep.subr.mxu0 0.0
      %1274 = vmatpush2.msra.mxu0 0.0
      %1275 = vmatprep.subr.mxu0 0.0
      %1276 = vmatpush2.msra.mxu0 0.0
      %1277 = vmatprep.subr.mxu0 0.0
      %1278 = vmatpush2.msra.mxu0 0.0
      %1279 = vmatprep.subr.mxu0 0.0
      %1280 = vmatpush2.msra.mxu0 0.0
      %1281 = vmatprep.subr.mxu0 0.0
      %1282 = vmatpush2.msra.mxu0 0.0
      %1283 = vmatprep.subr.mxu0 0.0
      %1284 = vmatpush2.msra.mxu0 0.0
      %1285 = vmatprep.subr.mxu0 0.0
      %1286 = vmatpush2.msra.mxu0 0.0
      %1287 = vmatprep.subr.mxu0 0.0
      %1288 = vmatpush2.msra.mxu0 0.0
      %1289 = vmatprep.subr.mxu0 0.0
      %1290 = vmatpush2.msra.mxu0 0.0
      %1291 = vmatprep.subr.mxu0 0.0
      %1292 = vmatpush2.msra.mxu0 0.0
      %1293 = vmatprep.subr.mxu0 0.0
      %1294 = vmatpush2.msra.mxu0 0.0
      %1295 = vmatprep.subr.mxu0 0.0
      %1296 = vmatpush2.msra.mxu0 0.0
      %1297 = vmatprep.mubr.f32.mxu0 0.0
      %v1298 = vand.u32 %v1047, 4294901760
      %1299 = vmatmul.mubr.f32.gmra.mxu0 %v1298
      %v1300 = vpop.f32.mrf.mxu0
      %v1301 = vadd.f32 %v1145, %v1300
      %v1302 = vpop.f32.mrf.mxu0
      %1303 = vmatprep.mubr.f32.mxu0 0.0
      %v1304 = vand.u32 %v1050, 4294901760
      %1305 = vmatmul.mubr.f32.gmra.mxu0 %v1304
      %v1306 = vpop.f32.mrf.mxu0
      %v1307 = vadd.f32 %v1155, %v1306
      %v1308 = vpop.f32.mrf.mxu0
      %1309 = vmatprep.mubr.f32.mxu0 0.0
      %v1310 = vand.u32 %v1053, 4294901760
      %1311 = vmatmul.mubr.f32.gmra.mxu0 %v1310
      %v1312 = vpop.f32.mrf.mxu0
      %v1313 = vadd.f32 %v1165, %v1312
      %v1314 = vpop.f32.mrf.mxu0
      %1315 = vmatprep.mubr.f32.mxu0 0.0
      %v1316 = vand.u32 %v1056, 4294901760
      %1317 = vmatmul.mubr.f32.gmra.mxu0 %v1316
      %v1318 = vpop.f32.mrf.mxu0
      %v1319 = vadd.f32 %v1175, %v1318
      %v1320 = vpop.f32.mrf.mxu0
      %1321 = vmatprep.mubr.f32.mxu0 0.0
      %v1322 = vand.u32 %v1059, 4294901760
      %1323 = vmatmul.mubr.f32.gmra.mxu0 %v1322
      %v1324 = vpop.f32.mrf.mxu0
      %v1325 = vadd.f32 %v1185, %v1324
      %v1326 = vpop.f32.mrf.mxu0
      %1327 = vmatprep.mubr.f32.mxu0 0.0
      %v1328 = vand.u32 %v1062, 4294901760
      %1329 = vmatmul.mubr.f32.gmra.mxu0 %v1328
      %v1330 = vpop.f32.mrf.mxu0
      %v1331 = vadd.f32 %v1195, %v1330
      %v1332 = vpop.f32.mrf.mxu0
      %1333 = vmatprep.mubr.f32.mxu0 0.0
      %v1334 = vand.u32 %v1065, 4294901760
      %1335 = vmatmul.mubr.f32.gmra.mxu0 %v1334
      %v1336 = vpop.f32.mrf.mxu0
      %v1337 = vadd.f32 %v1205, %v1336
      %v1338 = vpop.f32.mrf.mxu0
      %1339 = vmatprep.mubr.f32.mxu0 0.0
      %v1340 = vand.u32 %v1068, 4294901760
      %1341 = vmatmul.mubr.f32.gmra.mxu0 %v1340
      %v1342 = vpop.f32.mrf.mxu0
      %v1343 = vadd.f32 %v1215, %v1342
      %v1344 = vpop.f32.mrf.mxu0
      %1345 = vdwg.mxu0
      %1346 = vmatprep.subr.mxu0 0.0
      %1347 = vmatpush1.msra.mxu0 0.0
      %1348 = vmatprep.subr.mxu0 0.0
      %1349 = vmatpush1.msra.mxu0 0.0
      %1350 = vmatprep.subr.mxu0 0.0
      %1351 = vmatpush1.msra.mxu0 0.0
      %1352 = vmatprep.subr.mxu0 0.0
      %1353 = vmatpush1.msra.mxu0 0.0
      %1354 = vmatprep.subr.mxu0 0.0
      %1355 = vmatpush1.msra.mxu0 0.0
      %1356 = vmatprep.subr.mxu0 0.0
      %1357 = vmatpush1.msra.mxu0 0.0
      %1358 = vmatprep.subr.mxu0 0.0
      %1359 = vmatpush1.msra.mxu0 0.0
      %1360 = vmatprep.subr.mxu0 0.0
      %1361 = vmatpush1.msra.mxu0 0.0
      %1362 = vmatprep.subr.mxu0 0.0
      %1363 = vmatpush1.msra.mxu0 0.0
      %1364 = vmatprep.subr.mxu0 0.0
      %1365 = vmatpush1.msra.mxu0 0.0
      %1366 = vmatprep.subr.mxu0 0.0
      %1367 = vmatpush1.msra.mxu0 0.0
      %1368 = vmatprep.subr.mxu0 0.0
      %1369 = vmatpush1.msra.mxu0 0.0
      %1370 = vmatprep.subr.mxu0 0.0
      %1371 = vmatpush1.msra.mxu0 0.0
      %1372 = vmatprep.subr.mxu0 0.0
      %v1373 = vand.u32 %v576, 4294901760
      %v1374 = vsub.f32 %v576, %v1373
      %1375 = vmatpush1.msra.mxu0 %v1374
      %1376 = vmatprep.subr.mxu0 0.0
      %v1377 = vand.u32 %v575, 4294901760
      %v1378 = vsub.f32 %v575, %v1377
      %1379 = vmatpush1.msra.mxu0 %v1378
      %1380 = vmatprep.subr.mxu0 0.0
      %v1381 = vand.u32 %v574, 4294901760
      %v1382 = vsub.f32 %v574, %v1381
      %1383 = vmatpush1.msra.mxu0 %v1382
      %1384 = vmatprep.subr.mxu0 0.0
      %1385 = vmatpush2.msra.mxu0 0.0
      %1386 = vmatprep.subr.mxu0 0.0
      %1387 = vmatpush2.msra.mxu0 0.0
      %1388 = vmatprep.subr.mxu0 0.0
      %1389 = vmatpush2.msra.mxu0 0.0
      %1390 = vmatprep.subr.mxu0 0.0
      %1391 = vmatpush2.msra.mxu0 0.0
      %1392 = vmatprep.subr.mxu0 0.0
      %1393 = vmatpush2.msra.mxu0 0.0
      %1394 = vmatprep.subr.mxu0 0.0
      %1395 = vmatpush2.msra.mxu0 0.0
      %1396 = vmatprep.subr.mxu0 0.0
      %1397 = vmatpush2.msra.mxu0 0.0
      %1398 = vmatprep.subr.mxu0 0.0
      %1399 = vmatpush2.msra.mxu0 0.0
      %1400 = vmatprep.subr.mxu0 0.0
      %1401 = vmatpush2.msra.mxu0 0.0
      %1402 = vmatprep.subr.mxu0 0.0
      %1403 = vmatpush2.msra.mxu0 0.0
      %1404 = vmatprep.subr.mxu0 0.0
      %1405 = vmatpush2.msra.mxu0 0.0
      %1406 = vmatprep.subr.mxu0 0.0
      %1407 = vmatpush2.msra.mxu0 0.0
      %1408 = vmatprep.subr.mxu0 0.0
      %1409 = vmatpush2.msra.mxu0 0.0
      %1410 = vmatprep.subr.mxu0 0.0
      %1411 = vmatpush2.msra.mxu0 0.0
      %1412 = vmatprep.subr.mxu0 0.0
      %1413 = vmatpush2.msra.mxu0 0.0
      %1414 = vmatprep.subr.mxu0 0.0
      %1415 = vmatpush2.msra.mxu0 0.0
      %1416 = vmatprep.mubr.f32.mxu0 0.0
      %v1417 = vand.u32 %v1047, 4294901760
      %v1418 = vsub.f32 %v1047, %v1417
      %1419 = vmatmul.mubr.f32.gmra.mxu0 %v1418
      %v1420 = vpop.f32.mrf.mxu0
      %v1421 = vadd.f32 %v1301, %v1420
      %v1422 = vpop.f32.mrf.mxu0
      %1423 = vmatprep.mubr.f32.mxu0 0.0
      %v1424 = vand.u32 %v1050, 4294901760
      %v1425 = vsub.f32 %v1050, %v1424
      %1426 = vmatmul.mubr.f32.gmra.mxu0 %v1425
      %v1427 = vpop.f32.mrf.mxu0
      %v1428 = vadd.f32 %v1307, %v1427
      %v1429 = vpop.f32.mrf.mxu0
      %1430 = vmatprep.mubr.f32.mxu0 0.0
      %v1431 = vand.u32 %v1053, 4294901760
      %v1432 = vsub.f32 %v1053, %v1431
      %1433 = vmatmul.mubr.f32.gmra.mxu0 %v1432
      %v1434 = vpop.f32.mrf.mxu0
      %v1435 = vadd.f32 %v1313, %v1434
      %v1436 = vpop.f32.mrf.mxu0
      %1437 = vmatprep.mubr.f32.mxu0 0.0
      %v1438 = vand.u32 %v1056, 4294901760
      %v1439 = vsub.f32 %v1056, %v1438
      %1440 = vmatmul.mubr.f32.gmra.mxu0 %v1439
      %v1441 = vpop.f32.mrf.mxu0
      %v1442 = vadd.f32 %v1319, %v1441
      %v1443 = vpop.f32.mrf.mxu0
      %1444 = vmatprep.mubr.f32.mxu0 0.0
      %v1445 = vand.u32 %v1059, 4294901760
      %v1446 = vsub.f32 %v1059, %v1445
      %1447 = vmatmul.mubr.f32.gmra.mxu0 %v1446
      %v1448 = vpop.f32.mrf.mxu0
      %v1449 = vadd.f32 %v1325, %v1448
      %v1450 = vpop.f32.mrf.mxu0
      %1451 = vmatprep.mubr.f32.mxu0 0.0
      %v1452 = vand.u32 %v1062, 4294901760
      %v1453 = vsub.f32 %v1062, %v1452
      %1454 = vmatmul.mubr.f32.gmra.mxu0 %v1453
      %v1455 = vpop.f32.mrf.mxu0
      %v1456 = vadd.f32 %v1331, %v1455
      %v1457 = vpop.f32.mrf.mxu0
      %1458 = vmatprep.mubr.f32.mxu0 0.0
      %v1459 = vand.u32 %v1065, 4294901760
      %v1460 = vsub.f32 %v1065, %v1459
      %1461 = vmatmul.mubr.f32.gmra.mxu0 %v1460
      %v1462 = vpop.f32.mrf.mxu0
      %v1463 = vadd.f32 %v1337, %v1462
      %v1464 = vpop.f32.mrf.mxu0
      %1465 = vmatprep.mubr.f32.mxu0 0.0
      %v1466 = vand.u32 %v1068, 4294901760
      %v1467 = vsub.f32 %v1068, %v1466
      %1468 = vmatmul.mubr.f32.gmra.mxu0 %v1467
      %v1469 = vpop.f32.mrf.mxu0
      %v1470 = vadd.f32 %v1343, %v1469
      %v1471 = vpop.f32.mrf.mxu0
      %1472 = vdwg.mxu0
      %1473 = vmatprep.subr.mxu0 0.0
      %1474 = vmatpush1.msra.mxu0 0.0
      %1475 = vmatprep.subr.mxu0 0.0
      %1476 = vmatpush1.msra.mxu0 0.0
      %1477 = vmatprep.subr.mxu0 0.0
      %1478 = vmatpush1.msra.mxu0 0.0
      %1479 = vmatprep.subr.mxu0 0.0
      %1480 = vmatpush1.msra.mxu0 0.0
      %1481 = vmatprep.subr.mxu0 0.0
      %1482 = vmatpush1.msra.mxu0 0.0
      %1483 = vmatprep.subr.mxu0 0.0
      %1484 = vmatpush1.msra.mxu0 0.0
      %1485 = vmatprep.subr.mxu0 0.0
      %1486 = vmatpush1.msra.mxu0 0.0
      %1487 = vmatprep.subr.mxu0 0.0
      %1488 = vmatpush1.msra.mxu0 0.0
      %1489 = vmatprep.subr.mxu0 0.0
      %1490 = vmatpush1.msra.mxu0 0.0
      %1491 = vmatprep.subr.mxu0 0.0
      %1492 = vmatpush1.msra.mxu0 0.0
      %1493 = vmatprep.subr.mxu0 0.0
      %1494 = vmatpush1.msra.mxu0 0.0
      %1495 = vmatprep.subr.mxu0 0.0
      %1496 = vmatpush1.msra.mxu0 0.0
      %1497 = vmatprep.subr.mxu0 0.0
      %1498 = vmatpush1.msra.mxu0 0.0
      %1499 = vmatprep.subr.mxu0 0.0
      %v1500 = vand.u32 %v576, 4294901760
      %1501 = vmatpush1.msra.mxu0 %v1500
      %1502 = vmatprep.subr.mxu0 0.0
      %v1503 = vand.u32 %v575, 4294901760
      %1504 = vmatpush1.msra.mxu0 %v1503
      %1505 = vmatprep.subr.mxu0 0.0
      %v1506 = vand.u32 %v574, 4294901760
      %1507 = vmatpush1.msra.mxu0 %v1506
      %1508 = vmatprep.subr.mxu0 0.0
      %1509 = vmatpush2.msra.mxu0 0.0
      %1510 = vmatprep.subr.mxu0 0.0
      %1511 = vmatpush2.msra.mxu0 0.0
      %1512 = vmatprep.subr.mxu0 0.0
      %1513 = vmatpush2.msra.mxu0 0.0
      %1514 = vmatprep.subr.mxu0 0.0
      %1515 = vmatpush2.msra.mxu0 0.0
      %1516 = vmatprep.subr.mxu0 0.0
      %1517 = vmatpush2.msra.mxu0 0.0
      %1518 = vmatprep.subr.mxu0 0.0
      %1519 = vmatpush2.msra.mxu0 0.0
      %1520 = vmatprep.subr.mxu0 0.0
      %1521 = vmatpush2.msra.mxu0 0.0
      %1522 = vmatprep.subr.mxu0 0.0
      %1523 = vmatpush2.msra.mxu0 0.0
      %1524 = vmatprep.subr.mxu0 0.0
      %1525 = vmatpush2.msra.mxu0 0.0
      %1526 = vmatprep.subr.mxu0 0.0
      %1527 = vmatpush2.msra.mxu0 0.0
      %1528 = vmatprep.subr.mxu0 0.0
      %1529 = vmatpush2.msra.mxu0 0.0
      %1530 = vmatprep.subr.mxu0 0.0
      %1531 = vmatpush2.msra.mxu0 0.0
      %1532 = vmatprep.subr.mxu0 0.0
      %1533 = vmatpush2.msra.mxu0 0.0
      %1534 = vmatprep.subr.mxu0 0.0
      %1535 = vmatpush2.msra.mxu0 0.0
      %1536 = vmatprep.subr.mxu0 0.0
      %1537 = vmatpush2.msra.mxu0 0.0
      %1538 = vmatprep.subr.mxu0 0.0
      %1539 = vmatpush2.msra.mxu0 0.0
      %1540 = vmatprep.mubr.f32.mxu0 0.0
      %v1541 = vand.u32 %v1047, 4294901760
      %v1542 = vsub.f32 %v1047, %v1541
      %v1543 = vand.u32 %v1542, 4294901760
      %1544 = vmatmul.mubr.f32.gmra.mxu0 %v1543
      %v1545 = vpop.f32.mrf.mxu0
      %v1546 = vadd.f32 %v1421, %v1545
      %v1547 = vpop.f32.mrf.mxu0
      %1548 = vmatprep.mubr.f32.mxu0 0.0
      %v1549 = vand.u32 %v1050, 4294901760
      %v1550 = vsub.f32 %v1050, %v1549
      %v1551 = vand.u32 %v1550, 4294901760
      %1552 = vmatmul.mubr.f32.gmra.mxu0 %v1551
      %v1553 = vpop.f32.mrf.mxu0
      %v1554 = vadd.f32 %v1428, %v1553
      %v1555 = vpop.f32.mrf.mxu0
      %1556 = vmatprep.mubr.f32.mxu0 0.0
      %v1557 = vand.u32 %v1053, 4294901760
      %v1558 = vsub.f32 %v1053, %v1557
      %v1559 = vand.u32 %v1558, 4294901760
      %1560 = vmatmul.mubr.f32.gmra.mxu0 %v1559
      %v1561 = vpop.f32.mrf.mxu0
      %v1562 = vadd.f32 %v1435, %v1561
      %v1563 = vpop.f32.mrf.mxu0
      %1564 = vmatprep.mubr.f32.mxu0 0.0
      %v1565 = vand.u32 %v1056, 4294901760
      %v1566 = vsub.f32 %v1056, %v1565
      %v1567 = vand.u32 %v1566, 4294901760
      %1568 = vmatmul.mubr.f32.gmra.mxu0 %v1567
      %v1569 = vpop.f32.mrf.mxu0
      %v1570 = vadd.f32 %v1442, %v1569
      %v1571 = vpop.f32.mrf.mxu0
      %1572 = vmatprep.mubr.f32.mxu0 0.0
      %v1573 = vand.u32 %v1059, 4294901760
      %v1574 = vsub.f32 %v1059, %v1573
      %v1575 = vand.u32 %v1574, 4294901760
      %1576 = vmatmul.mubr.f32.gmra.mxu0 %v1575
      %v1577 = vpop.f32.mrf.mxu0
      %v1578 = vadd.f32 %v1449, %v1577
      %v1579 = vpop.f32.mrf.mxu0
      %1580 = vmatprep.mubr.f32.mxu0 0.0
      %v1581 = vand.u32 %v1062, 4294901760
      %v1582 = vsub.f32 %v1062, %v1581
      %v1583 = vand.u32 %v1582, 4294901760
      %1584 = vmatmul.mubr.f32.gmra.mxu0 %v1583
      %v1585 = vpop.f32.mrf.mxu0
      %v1586 = vadd.f32 %v1456, %v1585
      %v1587 = vpop.f32.mrf.mxu0
      %1588 = vmatprep.mubr.f32.mxu0 0.0
      %v1589 = vand.u32 %v1065, 4294901760
      %v1590 = vsub.f32 %v1065, %v1589
      %v1591 = vand.u32 %v1590, 4294901760
      %1592 = vmatmul.mubr.f32.gmra.mxu0 %v1591
      %v1593 = vpop.f32.mrf.mxu0
      %v1594 = vadd.f32 %v1463, %v1593
      %v1595 = vpop.f32.mrf.mxu0
      %1596 = vmatprep.mubr.f32.mxu0 0.0
      %v1597 = vand.u32 %v1068, 4294901760
      %v1598 = vsub.f32 %v1068, %v1597
      %v1599 = vand.u32 %v1598, 4294901760
      %1600 = vmatmul.mubr.f32.gmra.mxu0 %v1599
      %v1601 = vpop.f32.mrf.mxu0
      %v1602 = vadd.f32 %v1470, %v1601
      %v1603 = vpop.f32.mrf.mxu0
      %1604 = vdwg.mxu0
      %1605 = vmatprep.subr.mxu0 0.0
      %1606 = vmatpush1.msra.mxu0 0.0
      %1607 = vmatprep.subr.mxu0 0.0
      %1608 = vmatpush1.msra.mxu0 0.0
      %1609 = vmatprep.subr.mxu0 0.0
      %1610 = vmatpush1.msra.mxu0 0.0
      %1611 = vmatprep.subr.mxu0 0.0
      %1612 = vmatpush1.msra.mxu0 0.0
      %1613 = vmatprep.subr.mxu0 0.0
      %1614 = vmatpush1.msra.mxu0 0.0
      %1615 = vmatprep.subr.mxu0 0.0
      %1616 = vmatpush1.msra.mxu0 0.0
      %1617 = vmatprep.subr.mxu0 0.0
      %1618 = vmatpush1.msra.mxu0 0.0
      %1619 = vmatprep.subr.mxu0 0.0
      %1620 = vmatpush1.msra.mxu0 0.0
      %1621 = vmatprep.subr.mxu0 0.0
      %1622 = vmatpush1.msra.mxu0 0.0
      %1623 = vmatprep.subr.mxu0 0.0
      %1624 = vmatpush1.msra.mxu0 0.0
      %1625 = vmatprep.subr.mxu0 0.0
      %1626 = vmatpush1.msra.mxu0 0.0
      %1627 = vmatprep.subr.mxu0 0.0
      %1628 = vmatpush1.msra.mxu0 0.0
      %1629 = vmatprep.subr.mxu0 0.0
      %1630 = vmatpush1.msra.mxu0 0.0
      %1631 = vmatprep.subr.mxu0 0.0
      %v1632 = vand.u32 %v576, 4294901760
      %v1633 = vsub.f32 %v576, %v1632
      %v1634 = vand.u32 %v1633, 4294901760
      %1635 = vmatpush1.msra.mxu0 %v1634
      %1636 = vmatprep.subr.mxu0 0.0
      %v1637 = vand.u32 %v575, 4294901760
      %v1638 = vsub.f32 %v575, %v1637
      %v1639 = vand.u32 %v1638, 4294901760
      %1640 = vmatpush1.msra.mxu0 %v1639
      %1641 = vmatprep.subr.mxu0 0.0
      %v1642 = vand.u32 %v574, 4294901760
      %v1643 = vsub.f32 %v574, %v1642
      %v1644 = vand.u32 %v1643, 4294901760
      %1645 = vmatpush1.msra.mxu0 %v1644
      %1646 = vmatprep.subr.mxu0 0.0
      %1647 = vmatpush2.msra.mxu0 0.0
      %1648 = vmatprep.subr.mxu0 0.0
      %1649 = vmatpush2.msra.mxu0 0.0
      %1650 = vmatprep.subr.mxu0 0.0
      %1651 = vmatpush2.msra.mxu0 0.0
      %1652 = vmatprep.subr.mxu0 0.0
      %1653 = vmatpush2.msra.mxu0 0.0
      %1654 = vmatprep.subr.mxu0 0.0
      %1655 = vmatpush2.msra.mxu0 0.0
      %1656 = vmatprep.subr.mxu0 0.0
      %1657 = vmatpush2.msra.mxu0 0.0
      %1658 = vmatprep.subr.mxu0 0.0
      %1659 = vmatpush2.msra.mxu0 0.0
      %1660 = vmatprep.subr.mxu0 0.0
      %1661 = vmatpush2.msra.mxu0 0.0
      %1662 = vmatprep.subr.mxu0 0.0
      %1663 = vmatpush2.msra.mxu0 0.0
      %1664 = vmatprep.subr.mxu0 0.0
      %1665 = vmatpush2.msra.mxu0 0.0
      %1666 = vmatprep.subr.mxu0 0.0
      %1667 = vmatpush2.msra.mxu0 0.0
      %1668 = vmatprep.subr.mxu0 0.0
      %1669 = vmatpush2.msra.mxu0 0.0
      %1670 = vmatprep.subr.mxu0 0.0
      %1671 = vmatpush2.msra.mxu0 0.0
      %1672 = vmatprep.subr.mxu0 0.0
      %1673 = vmatpush2.msra.mxu0 0.0
      %1674 = vmatprep.subr.mxu0 0.0
      %1675 = vmatpush2.msra.mxu0 0.0
      %1676 = vmatprep.subr.mxu0 0.0
      %1677 = vmatpush2.msra.mxu0 0.0
      %1678 = vmatprep.mubr.f32.mxu0 0.0
      %v1679 = vand.u32 %v1047, 4294901760
      %1680 = vmatmul.mubr.f32.gmra.mxu0 %v1679
      %v1681 = vpop.f32.mrf.mxu0
      %v1682 = vadd.f32 %v1546, %v1681
      %v1683 = vpop.f32.mrf.mxu0
      %1684 = vmatprep.mubr.f32.mxu0 0.0
      %v1685 = vand.u32 %v1050, 4294901760
      %1686 = vmatmul.mubr.f32.gmra.mxu0 %v1685
      %v1687 = vpop.f32.mrf.mxu0
      %v1688 = vadd.f32 %v1554, %v1687
      %v1689 = vpop.f32.mrf.mxu0
      %1690 = vmatprep.mubr.f32.mxu0 0.0
      %v1691 = vand.u32 %v1053, 4294901760
      %1692 = vmatmul.mubr.f32.gmra.mxu0 %v1691
      %v1693 = vpop.f32.mrf.mxu0
      %v1694 = vadd.f32 %v1562, %v1693
      %v1695 = vpop.f32.mrf.mxu0
      %1696 = vmatprep.mubr.f32.mxu0 0.0
      %v1697 = vand.u32 %v1056, 4294901760
      %1698 = vmatmul.mubr.f32.gmra.mxu0 %v1697
      %v1699 = vpop.f32.mrf.mxu0
      %v1700 = vadd.f32 %v1570, %v1699
      %v1701 = vpop.f32.mrf.mxu0
      %1702 = vmatprep.mubr.f32.mxu0 0.0
      %v1703 = vand.u32 %v1059, 4294901760
      %1704 = vmatmul.mubr.f32.gmra.mxu0 %v1703
      %v1705 = vpop.f32.mrf.mxu0
      %v1706 = vadd.f32 %v1578, %v1705
      %v1707 = vpop.f32.mrf.mxu0
      %1708 = vmatprep.mubr.f32.mxu0 0.0
      %v1709 = vand.u32 %v1062, 4294901760
      %1710 = vmatmul.mubr.f32.gmra.mxu0 %v1709
      %v1711 = vpop.f32.mrf.mxu0
      %v1712 = vadd.f32 %v1586, %v1711
      %v1713 = vpop.f32.mrf.mxu0
      %1714 = vmatprep.mubr.f32.mxu0 0.0
      %v1715 = vand.u32 %v1065, 4294901760
      %1716 = vmatmul.mubr.f32.gmra.mxu0 %v1715
      %v1717 = vpop.f32.mrf.mxu0
      %v1718 = vadd.f32 %v1594, %v1717
      %v1719 = vpop.f32.mrf.mxu0
      %1720 = vmatprep.mubr.f32.mxu0 0.0
      %v1721 = vand.u32 %v1068, 4294901760
      %1722 = vmatmul.mubr.f32.gmra.mxu0 %v1721
      %v1723 = vpop.f32.mrf.mxu0
      %v1724 = vadd.f32 %v1602, %v1723
      %v1725 = vpop.f32.mrf.mxu0
      %1726 = vdwg.mxu0
      %1727 = vmatprep.subr.mxu0 0.0
      %1728 = vmatpush1.msra.mxu0 0.0
      %1729 = vmatprep.subr.mxu0 0.0
      %1730 = vmatpush1.msra.mxu0 0.0
      %1731 = vmatprep.subr.mxu0 0.0
      %1732 = vmatpush1.msra.mxu0 0.0
      %1733 = vmatprep.subr.mxu0 0.0
      %1734 = vmatpush1.msra.mxu0 0.0
      %1735 = vmatprep.subr.mxu0 0.0
      %1736 = vmatpush1.msra.mxu0 0.0
      %1737 = vmatprep.subr.mxu0 0.0
      %1738 = vmatpush1.msra.mxu0 0.0
      %1739 = vmatprep.subr.mxu0 0.0
      %1740 = vmatpush1.msra.mxu0 0.0
      %1741 = vmatprep.subr.mxu0 0.0
      %1742 = vmatpush1.msra.mxu0 0.0
      %1743 = vmatprep.subr.mxu0 0.0
      %1744 = vmatpush1.msra.mxu0 0.0
      %1745 = vmatprep.subr.mxu0 0.0
      %1746 = vmatpush1.msra.mxu0 0.0
      %1747 = vmatprep.subr.mxu0 0.0
      %1748 = vmatpush1.msra.mxu0 0.0
      %1749 = vmatprep.subr.mxu0 0.0
      %1750 = vmatpush1.msra.mxu0 0.0
      %1751 = vmatprep.subr.mxu0 0.0
      %1752 = vmatpush1.msra.mxu0 0.0
      %1753 = vmatprep.subr.mxu0 0.0
      %v1754 = vand.u32 %v576, 4294901760
      %1755 = vmatpush1.msra.mxu0 %v1754
      %1756 = vmatprep.subr.mxu0 0.0
      %v1757 = vand.u32 %v575, 4294901760
      %1758 = vmatpush1.msra.mxu0 %v1757
      %1759 = vmatprep.subr.mxu0 0.0
      %v1760 = vand.u32 %v574, 4294901760
      %1761 = vmatpush1.msra.mxu0 %v1760
      %1762 = vmatprep.subr.mxu0 0.0
      %1763 = vmatpush2.msra.mxu0 0.0
      %1764 = vmatprep.subr.mxu0 0.0
      %1765 = vmatpush2.msra.mxu0 0.0
      %1766 = vmatprep.subr.mxu0 0.0
      %1767 = vmatpush2.msra.mxu0 0.0
      %1768 = vmatprep.subr.mxu0 0.0
      %1769 = vmatpush2.msra.mxu0 0.0
      %1770 = vmatprep.subr.mxu0 0.0
      %1771 = vmatpush2.msra.mxu0 0.0
      %1772 = vmatprep.subr.mxu0 0.0
      %1773 = vmatpush2.msra.mxu0 0.0
      %1774 = vmatprep.subr.mxu0 0.0
      %1775 = vmatpush2.msra.mxu0 0.0
      %1776 = vmatprep.subr.mxu0 0.0
      %1777 = vmatpush2.msra.mxu0 0.0
      %1778 = vmatprep.subr.mxu0 0.0
      %1779 = vmatpush2.msra.mxu0 0.0
      %1780 = vmatprep.subr.mxu0 0.0
      %1781 = vmatpush2.msra.mxu0 0.0
      %1782 = vmatprep.subr.mxu0 0.0
      %1783 = vmatpush2.msra.mxu0 0.0
      %1784 = vmatprep.subr.mxu0 0.0
      %1785 = vmatpush2.msra.mxu0 0.0
      %1786 = vmatprep.subr.mxu0 0.0
      %1787 = vmatpush2.msra.mxu0 0.0
      %1788 = vmatprep.subr.mxu0 0.0
      %1789 = vmatpush2.msra.mxu0 0.0
      %1790 = vmatprep.subr.mxu0 0.0
      %1791 = vmatpush2.msra.mxu0 0.0
      %1792 = vmatprep.subr.mxu0 0.0
      %1793 = vmatpush2.msra.mxu0 0.0
      %1794 = vmatprep.mubr.f32.mxu0 0.0
      %v1795 = vand.u32 %v1047, 4294901760
      %1796 = vmatmul.mubr.f32.gmra.mxu0 %v1795
      %v1797 = vpop.f32.mrf.mxu0
      %v1798 = vadd.f32 %v1682, %v1797
      %v1799 = vpop.f32.mrf.mxu0
      %1800 = vmatprep.mubr.f32.mxu0 0.0
      %v1801 = vand.u32 %v1050, 4294901760
      %1802 = vmatmul.mubr.f32.gmra.mxu0 %v1801
      %v1803 = vpop.f32.mrf.mxu0
      %v1804 = vadd.f32 %v1688, %v1803
      %v1805 = vpop.f32.mrf.mxu0
      %1806 = vmatprep.mubr.f32.mxu0 0.0
      %v1807 = vand.u32 %v1053, 4294901760
      %1808 = vmatmul.mubr.f32.gmra.mxu0 %v1807
      %v1809 = vpop.f32.mrf.mxu0
      %v1810 = vadd.f32 %v1694, %v1809
      %v1811 = vpop.f32.mrf.mxu0
      %1812 = vmatprep.mubr.f32.mxu0 0.0
      %v1813 = vand.u32 %v1056, 4294901760
      %1814 = vmatmul.mubr.f32.gmra.mxu0 %v1813
      %v1815 = vpop.f32.mrf.mxu0
      %v1816 = vadd.f32 %v1700, %v1815
      %v1817 = vpop.f32.mrf.mxu0
      %1818 = vmatprep.mubr.f32.mxu0 0.0
      %v1819 = vand.u32 %v1059, 4294901760
      %1820 = vmatmul.mubr.f32.gmra.mxu0 %v1819
      %v1821 = vpop.f32.mrf.mxu0
      %v1822 = vadd.f32 %v1706, %v1821
      %v1823 = vpop.f32.mrf.mxu0
      %1824 = vmatprep.mubr.f32.mxu0 0.0
      %v1825 = vand.u32 %v1062, 4294901760
      %1826 = vmatmul.mubr.f32.gmra.mxu0 %v1825
      %v1827 = vpop.f32.mrf.mxu0
      %v1828 = vadd.f32 %v1712, %v1827
      %v1829 = vpop.f32.mrf.mxu0
      %1830 = vmatprep.mubr.f32.mxu0 0.0
      %v1831 = vand.u32 %v1065, 4294901760
      %1832 = vmatmul.mubr.f32.gmra.mxu0 %v1831
      %v1833 = vpop.f32.mrf.mxu0
      %v1834 = vadd.f32 %v1718, %v1833
      %v1835 = vpop.f32.mrf.mxu0
      %1836 = vmatprep.mubr.f32.mxu0 0.0
      %v1837 = vand.u32 %v1068, 4294901760
      %1838 = vmatmul.mubr.f32.gmra.mxu0 %v1837
      %v1839 = vpop.f32.mrf.mxu0
      %v1840 = vadd.f32 %v1724, %v1839
      %v1841 = vpop.f32.mrf.mxu0
      %1842 = vdwg.mxu0
      %v1843 = vld [vmem:[%s6] sm:$0x1]
      %v1845 = vlaneseq
      %v1846 = vshrl.u32 %v1845, 7
      %v1847 = vsub.s32 0, %v1846
      %v1848 = vrot.slane %v1843, %v1847
      %v1850 = vadd.f32 %v1798, %v1848
      %v1851 = vadd.f32 %v1804, %v1848
      %v1852 = vadd.f32 %v1810, %v1848
      %v1853 = vadd.f32 %v1816, %v1848
      %v1854 = vadd.f32 %v1822, %v1848
      %v1855 = vadd.f32 %v1828, %v1848
      %v1856 = vadd.f32 %v1834, %v1848
      %v1857 = vadd.f32 %v1840, %v1848
      %v1858 = vmul.f32 %v1850, 0.5
      %v1859 = vmul.f32 %v1851, 0.5
      %v1860 = vmul.f32 %v1852, 0.5
      %v1861 = vmul.f32 %v1853, 0.5
      %v1862 = vmul.f32 %v1854, 0.5
      %v1863 = vmul.f32 %v1855, 0.5
      %v1864 = vmul.f32 %v1856, 0.5
      %v1865 = vmul.f32 %v1857, 0.5
      %v1866 = vmul.f32 %v1850, 0.044715
      %v1867 = vmul.f32 %v1851, 0.044715
      %v1868 = vmul.f32 %v1852, 0.044715
      %v1869 = vmul.f32 %v1853, 0.044715
      %v1870 = vmul.f32 %v1854, 0.044715
      %v1871 = vmul.f32 %v1855, 0.044715
      %v1872 = vmul.f32 %v1856, 0.044715
      %v1873 = vmul.f32 %v1857, 0.044715
      %v1874 = vmul.f32 %v1866, %v1850
      %v1875 = vmul.f32 %v1867, %v1851
      %v1876 = vmul.f32 %v1868, %v1852
      %v1877 = vmul.f32 %v1869, %v1853
      %v1878 = vmul.f32 %v1870, %v1854
      %v1879 = vmul.f32 %v1871, %v1855
      %v1880 = vmul.f32 %v1872, %v1856
      %v1881 = vmul.f32 %v1873, %v1857
      %v1882 = vmul.f32 %v1874, %v1850
      %v1883 = vmul.f32 %v1875, %v1851
      %v1884 = vmul.f32 %v1876, %v1852
      %v1885 = vmul.f32 %v1877, %v1853
      %v1886 = vmul.f32 %v1878, %v1854
      %v1887 = vmul.f32 %v1879, %v1855
      %v1888 = vmul.f32 %v1880, %v1856
      %v1889 = vmul.f32 %v1881, %v1857
      %v1890 = vadd.f32 %v1850, %v1882
      %v1891 = vadd.f32 %v1851, %v1883
      %v1892 = vadd.f32 %v1852, %v1884
      %v1893 = vadd.f32 %v1853, %v1885
      %v1894 = vadd.f32 %v1854, %v1886
      %v1895 = vadd.f32 %v1855, %v1887
      %v1896 = vadd.f32 %v1856, %v1888
      %v1897 = vadd.f32 %v1857, %v1889
      %v1898 = vmul.f32 %v1890, 0.7978846
      %v1899 = vmul.f32 %v1891, 0.7978846
      %v1900 = vmul.f32 %v1892, 0.7978846
      %v1901 = vmul.f32 %v1893, 0.7978846
      %v1902 = vmul.f32 %v1894, 0.7978846
      %v1903 = vmul.f32 %v1895, 0.7978846
      %v1904 = vmul.f32 %v1896, 0.7978846
      %v1905 = vmul.f32 %v1897, 0.7978846
      %v1906 = vtanh.pop %v1898
      %v1907 = vtanh.pop %v1899
      %v1908 = vtanh.pop %v1900
      %v1909 = vtanh.pop %v1901
      %v1910 = vtanh.pop %v1902
      %v1911 = vtanh.pop %v1903
      %v1912 = vtanh.pop %v1904
      %v1913 = vtanh.pop %v1905
      %v1914 = vadd.f32 %v1906, 1.0
      %v1915 = vadd.f32 %v1907, 1.0
      %v1916 = vadd.f32 %v1908, 1.0
      %v1917 = vadd.f32 %v1909, 1.0
      %v1918 = vadd.f32 %v1910, 1.0
      %v1919 = vadd.f32 %v1911, 1.0
      %v1920 = vadd.f32 %v1912, 1.0
      %v1921 = vadd.f32 %v1913, 1.0
      %v1922 = vmul.f32 %v1858, %v1914
      %v1923 = vmul.f32 %v1859, %v1915
      %v1924 = vmul.f32 %v1860, %v1916
      %v1925 = vmul.f32 %v1861, %v1917
      %v1926 = vmul.f32 %v1862, %v1918
      %v1927 = vmul.f32 %v1863, %v1919
      %v1928 = vmul.f32 %v1864, %v1920
      %v1929 = vmul.f32 %v1865, %v1921
      %v1930 = vld [vmem:[%s7] sm:$0xff]
      %v1931 = vld [vmem:[%s7 + $0x8] sm:$0xff]
      %v1932 = vld [vmem:[%s8] sm:$0x1]
      %v1934 = vlaneseq
      %v1935 = vshrl.u32 %v1934, 7
      %v1936 = vsub.s32 0, %v1935
      %v1937 = vrot.slane %v1932, %v1936
      %v1940 = vsel %vm564, %v551, 0
      %1942 = vmatprep.subr.mxu0 0.0
      %1943 = vmatpush1.msra.mxu0 0.0
      %1944 = vmatprep.subr.mxu0 0.0
      %1945 = vmatpush1.msra.mxu0 0.0
      %1946 = vmatprep.subr.mxu0 0.0
      %1947 = vmatpush1.msra.mxu0 0.0
      %1948 = vmatprep.subr.mxu0 0.0
      %1949 = vmatpush1.msra.mxu0 0.0
      %1950 = vmatprep.subr.mxu0 0.0
      %1951 = vmatpush1.msra.mxu0 0.0
      %1952 = vmatprep.subr.mxu0 0.0
      %1953 = vmatpush1.msra.mxu0 0.0
      %1954 = vmatprep.subr.mxu0 0.0
      %1955 = vmatpush1.msra.mxu0 0.0
      %1956 = vmatprep.subr.mxu0 0.0
      %1957 = vmatpush1.msra.mxu0 0.0
      %1958 = vmatprep.subr.mxu0 0.0
      %1959 = vmatpush1.msra.mxu0 0.0
      %1960 = vmatprep.subr.mxu0 0.0
      %1961 = vmatpush1.msra.mxu0 0.0
      %1962 = vmatprep.subr.mxu0 0.0
      %1963 = vmatpush1.msra.mxu0 0.0
      %1964 = vmatprep.subr.mxu0 0.0
      %1965 = vmatpush1.msra.mxu0 0.0
      %1966 = vmatprep.subr.mxu0 0.0
      %1967 = vmatpush1.msra.mxu0 0.0
      %1968 = vmatprep.subr.mxu0 0.0
      %1969 = vmatpush1.msra.mxu0 0.0
      %1970 = vmatprep.subr.mxu0 0.0
      %v1971 = vand.u32 %v1931, 4294901760
      %1972 = vmatpush1.msra.mxu0 %v1971
      %1973 = vmatprep.subr.mxu0 0.0
      %v1974 = vand.u32 %v1930, 4294901760
      %1975 = vmatpush1.msra.mxu0 %v1974
      %1976 = vmatprep.subr.mxu0 0.0
      %1977 = vmatpush2.msra.mxu0 0.0
      %1978 = vmatprep.subr.mxu0 0.0
      %1979 = vmatpush2.msra.mxu0 0.0
      %1980 = vmatprep.subr.mxu0 0.0
      %1981 = vmatpush2.msra.mxu0 0.0
      %1982 = vmatprep.subr.mxu0 0.0
      %1983 = vmatpush2.msra.mxu0 0.0
      %1984 = vmatprep.subr.mxu0 0.0
      %1985 = vmatpush2.msra.mxu0 0.0
      %1986 = vmatprep.subr.mxu0 0.0
      %1987 = vmatpush2.msra.mxu0 0.0
      %1988 = vmatprep.subr.mxu0 0.0
      %1989 = vmatpush2.msra.mxu0 0.0
      %1990 = vmatprep.subr.mxu0 0.0
      %1991 = vmatpush2.msra.mxu0 0.0
      %1992 = vmatprep.subr.mxu0 0.0
      %1993 = vmatpush2.msra.mxu0 0.0
      %1994 = vmatprep.subr.mxu0 0.0
      %1995 = vmatpush2.msra.mxu0 0.0
      %1996 = vmatprep.subr.mxu0 0.0
      %1997 = vmatpush2.msra.mxu0 0.0
      %1998 = vmatprep.subr.mxu0 0.0
      %1999 = vmatpush2.msra.mxu0 0.0
      %2000 = vmatprep.subr.mxu0 0.0
      %2001 = vmatpush2.msra.mxu0 0.0
      %2002 = vmatprep.subr.mxu0 0.0
      %2003 = vmatpush2.msra.mxu0 0.0
      %2004 = vmatprep.subr.mxu0 0.0
      %2005 = vmatpush2.msra.mxu0 0.0
      %2006 = vmatprep.subr.mxu0 0.0
      %2007 = vmatpush2.msra.mxu0 0.0
      %2008 = vmatprep.mubr.f32.mxu0 0.0
      %v2009 = vand.u32 %v1940, 4294901760
      %v2010 = vsub.f32 %v1940, %v2009
      %v2011 = vand.u32 %v2010, 4294901760
      %v2012 = vsub.f32 %v2010, %v2011
      %v2013 = vand.u32 %v2012, 4294901760
      %2014 = vmatmul.mubr.f32.gmra.mxu0 %v2013
      %v2015 = vpop.f32.mrf.mxu0
      %v2016 = vadd.f32 %v1937, %v2015
      %v2017 = vpop.f32.mrf.mxu0
      %2018 = vdwg.mxu0
      %2019 = vmatprep.subr.mxu0 0.0
      %2020 = vmatpush1.msra.mxu0 0.0
      %2021 = vmatprep.subr.mxu0 0.0
      %2022 = vmatpush1.msra.mxu0 0.0
      %2023 = vmatprep.subr.mxu0 0.0
      %2024 = vmatpush1.msra.mxu0 0.0
      %2025 = vmatprep.subr.mxu0 0.0
      %2026 = vmatpush1.msra.mxu0 0.0
      %2027 = vmatprep.subr.mxu0 0.0
      %2028 = vmatpush1.msra.mxu0 0.0
      %2029 = vmatprep.subr.mxu0 0.0
      %2030 = vmatpush1.msra.mxu0 0.0
      %2031 = vmatprep.subr.mxu0 0.0
      %2032 = vmatpush1.msra.mxu0 0.0
      %2033 = vmatprep.subr.mxu0 0.0
      %2034 = vmatpush1.msra.mxu0 0.0
      %2035 = vmatprep.subr.mxu0 0.0
      %2036 = vmatpush1.msra.mxu0 0.0
      %2037 = vmatprep.subr.mxu0 0.0
      %2038 = vmatpush1.msra.mxu0 0.0
      %2039 = vmatprep.subr.mxu0 0.0
      %2040 = vmatpush1.msra.mxu0 0.0
      %2041 = vmatprep.subr.mxu0 0.0
      %2042 = vmatpush1.msra.mxu0 0.0
      %2043 = vmatprep.subr.mxu0 0.0
      %2044 = vmatpush1.msra.mxu0 0.0
      %2045 = vmatprep.subr.mxu0 0.0
      %2046 = vmatpush1.msra.mxu0 0.0
      %2047 = vmatprep.subr.mxu0 0.0
      %v2048 = vand.u32 %v1931, 4294901760
      %v2049 = vsub.f32 %v1931, %v2048
      %v2050 = vand.u32 %v2049, 4294901760
      %v2051 = vsub.f32 %v2049, %v2050
      %v2052 = vand.u32 %v2051, 4294901760
      %2053 = vmatpush1.msra.mxu0 %v2052
      %2054 = vmatprep.subr.mxu0 0.0
      %v2055 = vand.u32 %v1930, 4294901760
      %v2056 = vsub.f32 %v1930, %v2055
      %v2057 = vand.u32 %v2056, 4294901760
      %v2058 = vsub.f32 %v2056, %v2057
      %v2059 = vand.u32 %v2058, 4294901760
      %2060 = vmatpush1.msra.mxu0 %v2059
      %2061 = vmatprep.subr.mxu0 0.0
      %2062 = vmatpush2.msra.mxu0 0.0
      %2063 = vmatprep.subr.mxu0 0.0
      %2064 = vmatpush2.msra.mxu0 0.0
      %2065 = vmatprep.subr.mxu0 0.0
      %2066 = vmatpush2.msra.mxu0 0.0
      %2067 = vmatprep.subr.mxu0 0.0
      %2068 = vmatpush2.msra.mxu0 0.0
      %2069 = vmatprep.subr.mxu0 0.0
      %2070 = vmatpush2.msra.mxu0 0.0
      %2071 = vmatprep.subr.mxu0 0.0
      %2072 = vmatpush2.msra.mxu0 0.0
      %2073 = vmatprep.subr.mxu0 0.0
      %2074 = vmatpush2.msra.mxu0 0.0
      %2075 = vmatprep.subr.mxu0 0.0
      %2076 = vmatpush2.msra.mxu0 0.0
      %2077 = vmatprep.subr.mxu0 0.0
      %2078 = vmatpush2.msra.mxu0 0.0
      %2079 = vmatprep.subr.mxu0 0.0
      %2080 = vmatpush2.msra.mxu0 0.0
      %2081 = vmatprep.subr.mxu0 0.0
      %2082 = vmatpush2.msra.mxu0 0.0
      %2083 = vmatprep.subr.mxu0 0.0
      %2084 = vmatpush2.msra.mxu0 0.0
      %2085 = vmatprep.subr.mxu0 0.0
      %2086 = vmatpush2.msra.mxu0 0.0
      %2087 = vmatprep.subr.mxu0 0.0
      %2088 = vmatpush2.msra.mxu0 0.0
      %2089 = vmatprep.subr.mxu0 0.0
      %2090 = vmatpush2.msra.mxu0 0.0
      %2091 = vmatprep.subr.mxu0 0.0
      %2092 = vmatpush2.msra.mxu0 0.0
      %2093 = vmatprep.mubr.f32.mxu0 0.0
      %v2094 = vand.u32 %v1940, 4294901760
      %2095 = vmatmul.mubr.f32.gmra.mxu0 %v2094
      %v2096 = vpop.f32.mrf.mxu0
      %v2097 = vadd.f32 %v2016, %v2096
      %v2098 = vpop.f32.mrf.mxu0
      %2099 = vdwg.mxu0
      %2100 = vmatprep.subr.mxu0 0.0
      %2101 = vmatpush1.msra.mxu0 0.0
      %2102 = vmatprep.subr.mxu0 0.0
      %2103 = vmatpush1.msra.mxu0 0.0
      %2104 = vmatprep.subr.mxu0 0.0
      %2105 = vmatpush1.msra.mxu0 0.0
      %2106 = vmatprep.subr.mxu0 0.0
      %2107 = vmatpush1.msra.mxu0 0.0
      %2108 = vmatprep.subr.mxu0 0.0
      %2109 = vmatpush1.msra.mxu0 0.0
      %2110 = vmatprep.subr.mxu0 0.0
      %2111 = vmatpush1.msra.mxu0 0.0
      %2112 = vmatprep.subr.mxu0 0.0
      %2113 = vmatpush1.msra.mxu0 0.0
      %2114 = vmatprep.subr.mxu0 0.0
      %2115 = vmatpush1.msra.mxu0 0.0
      %2116 = vmatprep.subr.mxu0 0.0
      %2117 = vmatpush1.msra.mxu0 0.0
      %2118 = vmatprep.subr.mxu0 0.0
      %2119 = vmatpush1.msra.mxu0 0.0
      %2120 = vmatprep.subr.mxu0 0.0
      %2121 = vmatpush1.msra.mxu0 0.0
      %2122 = vmatprep.subr.mxu0 0.0
      %2123 = vmatpush1.msra.mxu0 0.0
      %2124 = vmatprep.subr.mxu0 0.0
      %2125 = vmatpush1.msra.mxu0 0.0
      %2126 = vmatprep.subr.mxu0 0.0
      %2127 = vmatpush1.msra.mxu0 0.0
      %2128 = vmatprep.subr.mxu0 0.0
      %v2129 = vand.u32 %v1931, 4294901760
      %v2130 = vsub.f32 %v1931, %v2129
      %2131 = vmatpush1.msra.mxu0 %v2130
      %2132 = vmatprep.subr.mxu0 0.0
      %v2133 = vand.u32 %v1930, 4294901760
      %v2134 = vsub.f32 %v1930, %v2133
      %2135 = vmatpush1.msra.mxu0 %v2134
      %2136 = vmatprep.subr.mxu0 0.0
      %2137 = vmatpush2.msra.mxu0 0.0
      %2138 = vmatprep.subr.mxu0 0.0
      %2139 = vmatpush2.msra.mxu0 0.0
      %2140 = vmatprep.subr.mxu0 0.0
      %2141 = vmatpush2.msra.mxu0 0.0
      %2142 = vmatprep.subr.mxu0 0.0
      %2143 = vmatpush2.msra.mxu0 0.0
      %2144 = vmatprep.subr.mxu0 0.0
      %2145 = vmatpush2.msra.mxu0 0.0
      %2146 = vmatprep.subr.mxu0 0.0
      %2147 = vmatpush2.msra.mxu0 0.0
      %2148 = vmatprep.subr.mxu0 0.0
      %2149 = vmatpush2.msra.mxu0 0.0
      %2150 = vmatprep.subr.mxu0 0.0
      %2151 = vmatpush2.msra.mxu0 0.0
      %2152 = vmatprep.subr.mxu0 0.0
      %2153 = vmatpush2.msra.mxu0 0.0
      %2154 = vmatprep.subr.mxu0 0.0
      %2155 = vmatpush2.msra.mxu0 0.0
      %2156 = vmatprep.subr.mxu0 0.0
      %2157 = vmatpush2.msra.mxu0 0.0
      %2158 = vmatprep.subr.mxu0 0.0
      %2159 = vmatpush2.msra.mxu0 0.0
      %2160 = vmatprep.subr.mxu0 0.0
      %2161 = vmatpush2.msra.mxu0 0.0
      %2162 = vmatprep.subr.mxu0 0.0
      %2163 = vmatpush2.msra.mxu0 0.0
      %2164 = vmatprep.subr.mxu0 0.0
      %2165 = vmatpush2.msra.mxu0 0.0
      %2166 = vmatprep.subr.mxu0 0.0
      %2167 = vmatpush2.msra.mxu0 0.0
      %2168 = vmatprep.mubr.f32.mxu0 0.0
      %v2169 = vand.u32 %v1940, 4294901760
      %v2170 = vsub.f32 %v1940, %v2169
      %2171 = vmatmul.mubr.f32.gmra.mxu0 %v2170
      %v2172 = vpop.f32.mrf.mxu0
      %v2173 = vadd.f32 %v2097, %v2172
      %v2174 = vpop.f32.mrf.mxu0
      %2175 = vdwg.mxu0
      %2176 = vmatprep.subr.mxu0 0.0
      %2177 = vmatpush1.msra.mxu0 0.0
      %2178 = vmatprep.subr.mxu0 0.0
      %2179 = vmatpush1.msra.mxu0 0.0
      %2180 = vmatprep.subr.mxu0 0.0
      %2181 = vmatpush1.msra.mxu0 0.0
      %2182 = vmatprep.subr.mxu0 0.0
      %2183 = vmatpush1.msra.mxu0 0.0
      %2184 = vmatprep.subr.mxu0 0.0
      %2185 = vmatpush1.msra.mxu0 0.0
      %2186 = vmatprep.subr.mxu0 0.0
      %2187 = vmatpush1.msra.mxu0 0.0
      %2188 = vmatprep.subr.mxu0 0.0
      %2189 = vmatpush1.msra.mxu0 0.0
      %2190 = vmatprep.subr.mxu0 0.0
      %2191 = vmatpush1.msra.mxu0 0.0
      %2192 = vmatprep.subr.mxu0 0.0
      %2193 = vmatpush1.msra.mxu0 0.0
      %2194 = vmatprep.subr.mxu0 0.0
      %2195 = vmatpush1.msra.mxu0 0.0
      %2196 = vmatprep.subr.mxu0 0.0
      %2197 = vmatpush1.msra.mxu0 0.0
      %2198 = vmatprep.subr.mxu0 0.0
      %2199 = vmatpush1.msra.mxu0 0.0
      %2200 = vmatprep.subr.mxu0 0.0
      %2201 = vmatpush1.msra.mxu0 0.0
      %2202 = vmatprep.subr.mxu0 0.0
      %2203 = vmatpush1.msra.mxu0 0.0
      %2204 = vmatprep.subr.mxu0 0.0
      %v2205 = vand.u32 %v1931, 4294901760
      %2206 = vmatpush1.msra.mxu0 %v2205
      %2207 = vmatprep.subr.mxu0 0.0
      %v2208 = vand.u32 %v1930, 4294901760
      %2209 = vmatpush1.msra.mxu0 %v2208
      %2210 = vmatprep.subr.mxu0 0.0
      %2211 = vmatpush2.msra.mxu0 0.0
      %2212 = vmatprep.subr.mxu0 0.0
      %2213 = vmatpush2.msra.mxu0 0.0
      %2214 = vmatprep.subr.mxu0 0.0
      %2215 = vmatpush2.msra.mxu0 0.0
      %2216 = vmatprep.subr.mxu0 0.0
      %2217 = vmatpush2.msra.mxu0 0.0
      %2218 = vmatprep.subr.mxu0 0.0
      %2219 = vmatpush2.msra.mxu0 0.0
      %2220 = vmatprep.subr.mxu0 0.0
      %2221 = vmatpush2.msra.mxu0 0.0
      %2222 = vmatprep.subr.mxu0 0.0
      %2223 = vmatpush2.msra.mxu0 0.0
      %2224 = vmatprep.subr.mxu0 0.0
      %2225 = vmatpush2.msra.mxu0 0.0
      %2226 = vmatprep.subr.mxu0 0.0
      %2227 = vmatpush2.msra.mxu0 0.0
      %2228 = vmatprep.subr.mxu0 0.0
      %2229 = vmatpush2.msra.mxu0 0.0
      %2230 = vmatprep.subr.mxu0 0.0
      %2231 = vmatpush2.msra.mxu0 0.0
      %2232 = vmatprep.subr.mxu0 0.0
      %2233 = vmatpush2.msra.mxu0 0.0
      %2234 = vmatprep.subr.mxu0 0.0
      %2235 = vmatpush2.msra.mxu0 0.0
      %2236 = vmatprep.subr.mxu0 0.0
      %2237 = vmatpush2.msra.mxu0 0.0
      %2238 = vmatprep.subr.mxu0 0.0
      %2239 = vmatpush2.msra.mxu0 0.0
      %2240 = vmatprep.subr.mxu0 0.0
      %2241 = vmatpush2.msra.mxu0 0.0
      %2242 = vmatprep.mubr.f32.mxu0 0.0
      %v2243 = vand.u32 %v1940, 4294901760
      %v2244 = vsub.f32 %v1940, %v2243
      %v2245 = vand.u32 %v2244, 4294901760
      %2246 = vmatmul.mubr.f32.gmra.mxu0 %v2245
      %v2247 = vpop.f32.mrf.mxu0
      %v2248 = vadd.f32 %v2173, %v2247
      %v2249 = vpop.f32.mrf.mxu0
      %2250 = vdwg.mxu0
      %2251 = vmatprep.subr.mxu0 0.0
      %2252 = vmatpush1.msra.mxu0 0.0
      %2253 = vmatprep.subr.mxu0 0.0
      %2254 = vmatpush1.msra.mxu0 0.0
      %2255 = vmatprep.subr.mxu0 0.0
      %2256 = vmatpush1.msra.mxu0 0.0
      %2257 = vmatprep.subr.mxu0 0.0
      %2258 = vmatpush1.msra.mxu0 0.0
      %2259 = vmatprep.subr.mxu0 0.0
      %2260 = vmatpush1.msra.mxu0 0.0
      %2261 = vmatprep.subr.mxu0 0.0
      %2262 = vmatpush1.msra.mxu0 0.0
      %2263 = vmatprep.subr.mxu0 0.0
      %2264 = vmatpush1.msra.mxu0 0.0
      %2265 = vmatprep.subr.mxu0 0.0
      %2266 = vmatpush1.msra.mxu0 0.0
      %2267 = vmatprep.subr.mxu0 0.0
      %2268 = vmatpush1.msra.mxu0 0.0
      %2269 = vmatprep.subr.mxu0 0.0
      %2270 = vmatpush1.msra.mxu0 0.0
      %2271 = vmatprep.subr.mxu0 0.0
      %2272 = vmatpush1.msra.mxu0 0.0
      %2273 = vmatprep.subr.mxu0 0.0
      %2274 = vmatpush1.msra.mxu0 0.0
      %2275 = vmatprep.subr.mxu0 0.0
      %2276 = vmatpush1.msra.mxu0 0.0
      %2277 = vmatprep.subr.mxu0 0.0
      %2278 = vmatpush1.msra.mxu0 0.0
      %2279 = vmatprep.subr.mxu0 0.0
      %v2280 = vand.u32 %v1931, 4294901760
      %v2281 = vsub.f32 %v1931, %v2280
      %v2282 = vand.u32 %v2281, 4294901760
      %2283 = vmatpush1.msra.mxu0 %v2282
      %2284 = vmatprep.subr.mxu0 0.0
      %v2285 = vand.u32 %v1930, 4294901760
      %v2286 = vsub.f32 %v1930, %v2285
      %v2287 = vand.u32 %v2286, 4294901760
      %2288 = vmatpush1.msra.mxu0 %v2287
      %2289 = vmatprep.subr.mxu0 0.0
      %2290 = vmatpush2.msra.mxu0 0.0
      %2291 = vmatprep.subr.mxu0 0.0
      %2292 = vmatpush2.msra.mxu0 0.0
      %2293 = vmatprep.subr.mxu0 0.0
      %2294 = vmatpush2.msra.mxu0 0.0
      %2295 = vmatprep.subr.mxu0 0.0
      %2296 = vmatpush2.msra.mxu0 0.0
      %2297 = vmatprep.subr.mxu0 0.0
      %2298 = vmatpush2.msra.mxu0 0.0
      %2299 = vmatprep.subr.mxu0 0.0
      %2300 = vmatpush2.msra.mxu0 0.0
      %2301 = vmatprep.subr.mxu0 0.0
      %2302 = vmatpush2.msra.mxu0 0.0
      %2303 = vmatprep.subr.mxu0 0.0
      %2304 = vmatpush2.msra.mxu0 0.0
      %2305 = vmatprep.subr.mxu0 0.0
      %2306 = vmatpush2.msra.mxu0 0.0
      %2307 = vmatprep.subr.mxu0 0.0
      %2308 = vmatpush2.msra.mxu0 0.0
      %2309 = vmatprep.subr.mxu0 0.0
      %2310 = vmatpush2.msra.mxu0 0.0
      %2311 = vmatprep.subr.mxu0 0.0
      %2312 = vmatpush2.msra.mxu0 0.0
      %2313 = vmatprep.subr.mxu0 0.0
      %2314 = vmatpush2.msra.mxu0 0.0
      %2315 = vmatprep.subr.mxu0 0.0
      %2316 = vmatpush2.msra.mxu0 0.0
      %2317 = vmatprep.subr.mxu0 0.0
      %2318 = vmatpush2.msra.mxu0 0.0
      %2319 = vmatprep.subr.mxu0 0.0
      %2320 = vmatpush2.msra.mxu0 0.0
      %2321 = vmatprep.mubr.f32.mxu0 0.0
      %v2322 = vand.u32 %v1940, 4294901760
      %2323 = vmatmul.mubr.f32.gmra.mxu0 %v2322
      %v2324 = vpop.f32.mrf.mxu0
      %v2325 = vadd.f32 %v2248, %v2324
      %v2326 = vpop.f32.mrf.mxu0
      %2327 = vdwg.mxu0
      %2328 = vmatprep.subr.mxu0 0.0
      %2329 = vmatpush1.msra.mxu0 0.0
      %2330 = vmatprep.subr.mxu0 0.0
      %2331 = vmatpush1.msra.mxu0 0.0
      %2332 = vmatprep.subr.mxu0 0.0
      %2333 = vmatpush1.msra.mxu0 0.0
      %2334 = vmatprep.subr.mxu0 0.0
      %2335 = vmatpush1.msra.mxu0 0.0
      %2336 = vmatprep.subr.mxu0 0.0
      %2337 = vmatpush1.msra.mxu0 0.0
      %2338 = vmatprep.subr.mxu0 0.0
      %2339 = vmatpush1.msra.mxu0 0.0
      %2340 = vmatprep.subr.mxu0 0.0
      %2341 = vmatpush1.msra.mxu0 0.0
      %2342 = vmatprep.subr.mxu0 0.0
      %2343 = vmatpush1.msra.mxu0 0.0
      %2344 = vmatprep.subr.mxu0 0.0
      %2345 = vmatpush1.msra.mxu0 0.0
      %2346 = vmatprep.subr.mxu0 0.0
      %2347 = vmatpush1.msra.mxu0 0.0
      %2348 = vmatprep.subr.mxu0 0.0
      %2349 = vmatpush1.msra.mxu0 0.0
      %2350 = vmatprep.subr.mxu0 0.0
      %2351 = vmatpush1.msra.mxu0 0.0
      %2352 = vmatprep.subr.mxu0 0.0
      %2353 = vmatpush1.msra.mxu0 0.0
      %2354 = vmatprep.subr.mxu0 0.0
      %2355 = vmatpush1.msra.mxu0 0.0
      %2356 = vmatprep.subr.mxu0 0.0
      %v2357 = vand.u32 %v1931, 4294901760
      %2358 = vmatpush1.msra.mxu0 %v2357
      %2359 = vmatprep.subr.mxu0 0.0
      %v2360 = vand.u32 %v1930, 4294901760
      %2361 = vmatpush1.msra.mxu0 %v2360
      %2362 = vmatprep.subr.mxu0 0.0
      %2363 = vmatpush2.msra.mxu0 0.0
      %2364 = vmatprep.subr.mxu0 0.0
      %2365 = vmatpush2.msra.mxu0 0.0
      %2366 = vmatprep.subr.mxu0 0.0
      %2367 = vmatpush2.msra.mxu0 0.0
      %2368 = vmatprep.subr.mxu0 0.0
      %2369 = vmatpush2.msra.mxu0 0.0
      %2370 = vmatprep.subr.mxu0 0.0
      %2371 = vmatpush2.msra.mxu0 0.0
      %2372 = vmatprep.subr.mxu0 0.0
      %2373 = vmatpush2.msra.mxu0 0.0
      %2374 = vmatprep.subr.mxu0 0.0
      %2375 = vmatpush2.msra.mxu0 0.0
      %2376 = vmatprep.subr.mxu0 0.0
      %2377 = vmatpush2.msra.mxu0 0.0
      %2378 = vmatprep.subr.mxu0 0.0
      %2379 = vmatpush2.msra.mxu0 0.0
      %2380 = vmatprep.subr.mxu0 0.0
      %2381 = vmatpush2.msra.mxu0 0.0
      %2382 = vmatprep.subr.mxu0 0.0
      %2383 = vmatpush2.msra.mxu0 0.0
      %2384 = vmatprep.subr.mxu0 0.0
      %2385 = vmatpush2.msra.mxu0 0.0
      %2386 = vmatprep.subr.mxu0 0.0
      %2387 = vmatpush2.msra.mxu0 0.0
      %2388 = vmatprep.subr.mxu0 0.0
      %2389 = vmatpush2.msra.mxu0 0.0
      %2390 = vmatprep.subr.mxu0 0.0
      %2391 = vmatpush2.msra.mxu0 0.0
      %2392 = vmatprep.subr.mxu0 0.0
      %2393 = vmatpush2.msra.mxu0 0.0
      %2394 = vmatprep.mubr.f32.mxu0 0.0
      %v2395 = vand.u32 %v1940, 4294901760
      %2396 = vmatmul.mubr.f32.gmra.mxu0 %v2395
      %v2397 = vpop.f32.mrf.mxu0
      %v2398 = vadd.f32 %v2325, %v2397
      %v2399 = vpop.f32.mrf.mxu0
      %2400 = vdwg.mxu0
      %v2401 = vmul.f32 %v2398, 0.5
      %v2402 = vmul.f32 %v2398, 0.044715
      %v2403 = vmul.f32 %v2402, %v2398
      %v2404 = vmul.f32 %v2403, %v2398
      %v2405 = vadd.f32 %v2398, %v2404
      %v2406 = vmul.f32 %v2405, 0.7978846
      %v2407 = vtanh.pop %v2406
      %v2408 = vadd.f32 %v2407, 1.0
      %v2409 = vmul.f32 %v2401, %v2408
      %v2410 = vmul.f32 %v2409, %v561
      %vm2411 = vcmask 261120
      %v2413 = vsel %vm2411, %v1922, 0
      %v2416 = vsel %vm2411, %v1923, 0
      %v2419 = vsel %vm2411, %v1924, 0
      %v2422 = vsel %vm2411, %v1925, 0
      %v2425 = vsel %vm2411, %v1926, 0
      %v2428 = vsel %vm2411, %v1927, 0
      %v2431 = vsel %vm2411, %v1928, 0
      %v2434 = vsel %vm2411, %v1929, 0
      %v2437 = vsel %vm2411, %v2410, 0
      %2439 = vmatprep.subr.mxu0 0.0
      %2440 = vmatpush1.xpose.msra.mxu0 0.0
      %2441 = vmatprep.subr.mxu0 0.0
      %2442 = vmatpush1.xpose.msra.mxu0 0.0
      %2443 = vmatprep.subr.mxu0 0.0
      %2444 = vmatpush1.xpose.msra.mxu0 0.0
      %2445 = vmatprep.subr.mxu0 0.0
      %2446 = vmatpush1.xpose.msra.mxu0 0.0
      %2447 = vmatprep.subr.mxu0 0.0
      %2448 = vmatpush1.xpose.msra.mxu0 0.0
      %2449 = vmatprep.subr.mxu0 0.0
      %2450 = vmatpush1.xpose.msra.mxu0 0.0
      %2451 = vmatprep.subr.mxu0 0.0
      %2452 = vmatpush1.xpose.msra.mxu0 0.0
      %2453 = vmatprep.subr.mxu0 0.0
      %2454 = vmatpush1.xpose.msra.mxu0 0.0
      %2455 = vmatprep.subr.mxu0 0.0
      %2456 = vmatpush1.xpose.msra.mxu0 0.0
      %2457 = vmatprep.subr.mxu0 0.0
      %2458 = vmatpush1.xpose.msra.mxu0 0.0
      %2459 = vmatprep.subr.mxu0 0.0
      %2460 = vmatpush1.xpose.msra.mxu0 0.0
      %2461 = vmatprep.subr.mxu0 0.0
      %2462 = vmatpush1.xpose.msra.mxu0 0.0
      %2463 = vmatprep.subr.mxu0 0.0
      %2464 = vmatpush1.xpose.msra.mxu0 0.0
      %2465 = vmatprep.subr.mxu0 0.0
      %2466 = vmatpush1.xpose.msra.mxu0 0.0
      %2467 = vmatprep.subr.mxu0 0.0
      %2468 = vmatpush1.xpose.msra.mxu0 0.0
      %2469 = vmatprep.subr.mxu0 0.0
      %v2470 = vand.u32 %v2437, 4294901760
      %2471 = vmatpush1.xpose.msra.mxu0 %v2470
      %2472 = vmatprep.subr.mxu0 0.0
      %2473 = vmatpush2.xpose.msra.mxu0 0.0
      %2474 = vmatprep.subr.mxu0 0.0
      %2475 = vmatpush2.xpose.msra.mxu0 0.0
      %2476 = vmatprep.subr.mxu0 0.0
      %2477 = vmatpush2.xpose.msra.mxu0 0.0
      %2478 = vmatprep.subr.mxu0 0.0
      %2479 = vmatpush2.xpose.msra.mxu0 0.0
      %2480 = vmatprep.subr.mxu0 0.0
      %2481 = vmatpush2.xpose.msra.mxu0 0.0
      %2482 = vmatprep.subr.mxu0 0.0
      %2483 = vmatpush2.xpose.msra.mxu0 0.0
      %2484 = vmatprep.subr.mxu0 0.0
      %2485 = vmatpush2.xpose.msra.mxu0 0.0
      %2486 = vmatprep.subr.mxu0 0.0
      %2487 = vmatpush2.xpose.msra.mxu0 0.0
      %2488 = vmatprep.subr.mxu0 0.0
      %2489 = vmatpush2.xpose.msra.mxu0 0.0
      %2490 = vmatprep.subr.mxu0 0.0
      %2491 = vmatpush2.xpose.msra.mxu0 0.0
      %2492 = vmatprep.subr.mxu0 0.0
      %2493 = vmatpush2.xpose.msra.mxu0 0.0
      %2494 = vmatprep.subr.mxu0 0.0
      %2495 = vmatpush2.xpose.msra.mxu0 0.0
      %2496 = vmatprep.subr.mxu0 0.0
      %2497 = vmatpush2.xpose.msra.mxu0 0.0
      %2498 = vmatprep.subr.mxu0 0.0
      %2499 = vmatpush2.xpose.msra.mxu0 0.0
      %2500 = vmatprep.subr.mxu0 0.0
      %2501 = vmatpush2.xpose.msra.mxu0 0.0
      %2502 = vmatprep.subr.mxu0 0.0
      %2503 = vmatpush2.xpose.msra.mxu0 0.0
      %2504 = vmatprep.mubr.f32.mxu0 0.0
      %v2505 = vand.u32 %v2413, 4294901760
      %v2506 = vsub.f32 %v2413, %v2505
      %v2507 = vand.u32 %v2506, 4294901760
      %v2508 = vsub.f32 %v2506, %v2507
      %v2509 = vand.u32 %v2508, 4294901760
      %2510 = vmatmul.mubr.f32.gmra.mxu0 %v2509
      %v2511 = vpop.f32.mrf.mxu0
      %v2512 = vadd.f32 0.0, %v2511
      %v2513 = vpop.f32.mrf.mxu0
      %2514 = vmatprep.mubr.f32.mxu0 0.0
      %v2515 = vand.u32 %v2416, 4294901760
      %v2516 = vsub.f32 %v2416, %v2515
      %v2517 = vand.u32 %v2516, 4294901760
      %v2518 = vsub.f32 %v2516, %v2517
      %v2519 = vand.u32 %v2518, 4294901760
      %2520 = vmatmul.mubr.f32.gmra.mxu0 %v2519
      %v2521 = vpop.f32.mrf.mxu0
      %v2522 = vadd.f32 0.0, %v2521
      %v2523 = vpop.f32.mrf.mxu0
      %2524 = vmatprep.mubr.f32.mxu0 0.0
      %v2525 = vand.u32 %v2419, 4294901760
      %v2526 = vsub.f32 %v2419, %v2525
      %v2527 = vand.u32 %v2526, 4294901760
      %v2528 = vsub.f32 %v2526, %v2527
      %v2529 = vand.u32 %v2528, 4294901760
      %2530 = vmatmul.mubr.f32.gmra.mxu0 %v2529
      %v2531 = vpop.f32.mrf.mxu0
      %v2532 = vadd.f32 0.0, %v2531
      %v2533 = vpop.f32.mrf.mxu0
      %2534 = vmatprep.mubr.f32.mxu0 0.0
      %v2535 = vand.u32 %v2422, 4294901760
      %v2536 = vsub.f32 %v2422, %v2535
      %v2537 = vand.u32 %v2536, 4294901760
      %v2538 = vsub.f32 %v2536, %v2537
      %v2539 = vand.u32 %v2538, 4294901760
      %2540 = vmatmul.mubr.f32.gmra.mxu0 %v2539
      %v2541 = vpop.f32.mrf.mxu0
      %v2542 = vadd.f32 0.0, %v2541
      %v2543 = vpop.f32.mrf.mxu0
      %2544 = vmatprep.mubr.f32.mxu0 0.0
      %v2545 = vand.u32 %v2425, 4294901760
      %v2546 = vsub.f32 %v2425, %v2545
      %v2547 = vand.u32 %v2546, 4294901760
      %v2548 = vsub.f32 %v2546, %v2547
      %v2549 = vand.u32 %v2548, 4294901760
      %2550 = vmatmul.mubr.f32.gmra.mxu0 %v2549
      %v2551 = vpop.f32.mrf.mxu0
      %v2552 = vadd.f32 0.0, %v2551
      %v2553 = vpop.f32.mrf.mxu0
      %2554 = vmatprep.mubr.f32.mxu0 0.0
      %v2555 = vand.u32 %v2428, 4294901760
      %v2556 = vsub.f32 %v2428, %v2555
      %v2557 = vand.u32 %v2556, 4294901760
      %v2558 = vsub.f32 %v2556, %v2557
      %v2559 = vand.u32 %v2558, 4294901760
      %2560 = vmatmul.mubr.f32.gmra.mxu0 %v2559
      %v2561 = vpop.f32.mrf.mxu0
      %v2562 = vadd.f32 0.0, %v2561
      %v2563 = vpop.f32.mrf.mxu0
      %2564 = vmatprep.mubr.f32.mxu0 0.0
      %v2565 = vand.u32 %v2431, 4294901760
      %v2566 = vsub.f32 %v2431, %v2565
      %v2567 = vand.u32 %v2566, 4294901760
      %v2568 = vsub.f32 %v2566, %v2567
      %v2569 = vand.u32 %v2568, 4294901760
      %2570 = vmatmul.mubr.f32.gmra.mxu0 %v2569
      %v2571 = vpop.f32.mrf.mxu0
      %v2572 = vadd.f32 0.0, %v2571
      %v2573 = vpop.f32.mrf.mxu0
      %2574 = vmatprep.mubr.f32.mxu0 0.0
      %v2575 = vand.u32 %v2434, 4294901760
      %v2576 = vsub.f32 %v2434, %v2575
      %v2577 = vand.u32 %v2576, 4294901760
      %v2578 = vsub.f32 %v2576, %v2577
      %v2579 = vand.u32 %v2578, 4294901760
      %2580 = vmatmul.mubr.f32.gmra.mxu0 %v2579
      %v2581 = vpop.f32.mrf.mxu0
      %v2582 = vadd.f32 0.0, %v2581
      %v2583 = vpop.f32.mrf.mxu0
      %2584 = vdwg.mxu0
      %2585 = vmatprep.subr.mxu0 0.0
      %2586 = vmatpush1.xpose.msra.mxu0 0.0
      %2587 = vmatprep.subr.mxu0 0.0
      %2588 = vmatpush1.xpose.msra.mxu0 0.0
      %2589 = vmatprep.subr.mxu0 0.0
      %2590 = vmatpush1.xpose.msra.mxu0 0.0
      %2591 = vmatprep.subr.mxu0 0.0
      %2592 = vmatpush1.xpose.msra.mxu0 0.0
      %2593 = vmatprep.subr.mxu0 0.0
      %2594 = vmatpush1.xpose.msra.mxu0 0.0
      %2595 = vmatprep.subr.mxu0 0.0
      %2596 = vmatpush1.xpose.msra.mxu0 0.0
      %2597 = vmatprep.subr.mxu0 0.0
      %2598 = vmatpush1.xpose.msra.mxu0 0.0
      %2599 = vmatprep.subr.mxu0 0.0
      %2600 = vmatpush1.xpose.msra.mxu0 0.0
      %2601 = vmatprep.subr.mxu0 0.0
      %2602 = vmatpush1.xpose.msra.mxu0 0.0
      %2603 = vmatprep.subr.mxu0 0.0
      %2604 = vmatpush1.xpose.msra.mxu0 0.0
      %2605 = vmatprep.subr.mxu0 0.0
      %2606 = vmatpush1.xpose.msra.mxu0 0.0
      %2607 = vmatprep.subr.mxu0 0.0
      %2608 = vmatpush1.xpose.msra.mxu0 0.0
      %2609 = vmatprep.subr.mxu0 0.0
      %2610 = vmatpush1.xpose.msra.mxu0 0.0
      %2611 = vmatprep.subr.mxu0 0.0
      %2612 = vmatpush1.xpose.msra.mxu0 0.0
      %2613 = vmatprep.subr.mxu0 0.0
      %2614 = vmatpush1.xpose.msra.mxu0 0.0
      %2615 = vmatprep.subr.mxu0 0.0
      %v2616 = vand.u32 %v2437, 4294901760
      %v2617 = vsub.f32 %v2437, %v2616
      %v2618 = vand.u32 %v2617, 4294901760
      %v2619 = vsub.f32 %v2617, %v2618
      %v2620 = vand.u32 %v2619, 4294901760
      %2621 = vmatpush1.xpose.msra.mxu0 %v2620
      %2622 = vmatprep.subr.mxu0 0.0
      %2623 = vmatpush2.xpose.msra.mxu0 0.0
      %2624 = vmatprep.subr.mxu0 0.0
      %2625 = vmatpush2.xpose.msra.mxu0 0.0
      %2626 = vmatprep.subr.mxu0 0.0
      %2627 = vmatpush2.xpose.msra.mxu0 0.0
      %2628 = vmatprep.subr.mxu0 0.0
      %2629 = vmatpush2.xpose.msra.mxu0 0.0
      %2630 = vmatprep.subr.mxu0 0.0
      %2631 = vmatpush2.xpose.msra.mxu0 0.0
      %2632 = vmatprep.subr.mxu0 0.0
      %2633 = vmatpush2.xpose.msra.mxu0 0.0
      %2634 = vmatprep.subr.mxu0 0.0
      %2635 = vmatpush2.xpose.msra.mxu0 0.0
      %2636 = vmatprep.subr.mxu0 0.0
      %2637 = vmatpush2.xpose.msra.mxu0 0.0
      %2638 = vmatprep.subr.mxu0 0.0
      %2639 = vmatpush2.xpose.msra.mxu0 0.0
      %2640 = vmatprep.subr.mxu0 0.0
      %2641 = vmatpush2.xpose.msra.mxu0 0.0
      %2642 = vmatprep.subr.mxu0 0.0
      %2643 = vmatpush2.xpose.msra.mxu0 0.0
      %2644 = vmatprep.subr.mxu0 0.0
      %2645 = vmatpush2.xpose.msra.mxu0 0.0
      %2646 = vmatprep.subr.mxu0 0.0
      %2647 = vmatpush2.xpose.msra.mxu0 0.0
      %2648 = vmatprep.subr.mxu0 0.0
      %2649 = vmatpush2.xpose.msra.mxu0 0.0
      %2650 = vmatprep.subr.mxu0 0.0
      %2651 = vmatpush2.xpose.msra.mxu0 0.0
      %2652 = vmatprep.subr.mxu0 0.0
      %2653 = vmatpush2.xpose.msra.mxu0 0.0
      %2654 = vmatprep.mubr.f32.mxu0 0.0
      %v2655 = vand.u32 %v2413, 4294901760
      %2656 = vmatmul.mubr.f32.gmra.mxu0 %v2655
      %v2657 = vpop.f32.mrf.mxu0
      %v2658 = vadd.f32 %v2512, %v2657
      %v2659 = vpop.f32.mrf.mxu0
      %2660 = vmatprep.mubr.f32.mxu0 0.0
      %v2661 = vand.u32 %v2416, 4294901760
      %2662 = vmatmul.mubr.f32.gmra.mxu0 %v2661
      %v2663 = vpop.f32.mrf.mxu0
      %v2664 = vadd.f32 %v2522, %v2663
      %v2665 = vpop.f32.mrf.mxu0
      %2666 = vmatprep.mubr.f32.mxu0 0.0
      %v2667 = vand.u32 %v2419, 4294901760
      %2668 = vmatmul.mubr.f32.gmra.mxu0 %v2667
      %v2669 = vpop.f32.mrf.mxu0
      %v2670 = vadd.f32 %v2532, %v2669
      %v2671 = vpop.f32.mrf.mxu0
      %2672 = vmatprep.mubr.f32.mxu0 0.0
      %v2673 = vand.u32 %v2422, 4294901760
      %2674 = vmatmul.mubr.f32.gmra.mxu0 %v2673
      %v2675 = vpop.f32.mrf.mxu0
      %v2676 = vadd.f32 %v2542, %v2675
      %v2677 = vpop.f32.mrf.mxu0
      %2678 = vmatprep.mubr.f32.mxu0 0.0
      %v2679 = vand.u32 %v2425, 4294901760
      %2680 = vmatmul.mubr.f32.gmra.mxu0 %v2679
      %v2681 = vpop.f32.mrf.mxu0
      %v2682 = vadd.f32 %v2552, %v2681
      %v2683 = vpop.f32.mrf.mxu0
      %2684 = vmatprep.mubr.f32.mxu0 0.0
      %v2685 = vand.u32 %v2428, 4294901760
      %2686 = vmatmul.mubr.f32.gmra.mxu0 %v2685
      %v2687 = vpop.f32.mrf.mxu0
      %v2688 = vadd.f32 %v2562, %v2687
      %v2689 = vpop.f32.mrf.mxu0
      %2690 = vmatprep.mubr.f32.mxu0 0.0
      %v2691 = vand.u32 %v2431, 4294901760
      %2692 = vmatmul.mubr.f32.gmra.mxu0 %v2691
      %v2693 = vpop.f32.mrf.mxu0
      %v2694 = vadd.f32 %v2572, %v2693
      %v2695 = vpop.f32.mrf.mxu0
      %2696 = vmatprep.mubr.f32.mxu0 0.0
      %v2697 = vand.u32 %v2434, 4294901760
      %2698 = vmatmul.mubr.f32.gmra.mxu0 %v2697
      %v2699 = vpop.f32.mrf.mxu0
      %v2700 = vadd.f32 %v2582, %v2699
      %v2701 = vpop.f32.mrf.mxu0
      %2702 = vdwg.mxu0
      %2703 = vmatprep.subr.mxu0 0.0
      %2704 = vmatpush1.xpose.msra.mxu0 0.0
      %2705 = vmatprep.subr.mxu0 0.0
      %2706 = vmatpush1.xpose.msra.mxu0 0.0
      %2707 = vmatprep.subr.mxu0 0.0
      %2708 = vmatpush1.xpose.msra.mxu0 0.0
      %2709 = vmatprep.subr.mxu0 0.0
      %2710 = vmatpush1.xpose.msra.mxu0 0.0
      %2711 = vmatprep.subr.mxu0 0.0
      %2712 = vmatpush1.xpose.msra.mxu0 0.0
      %2713 = vmatprep.subr.mxu0 0.0
      %2714 = vmatpush1.xpose.msra.mxu0 0.0
      %2715 = vmatprep.subr.mxu0 0.0
      %2716 = vmatpush1.xpose.msra.mxu0 0.0
      %2717 = vmatprep.subr.mxu0 0.0
      %2718 = vmatpush1.xpose.msra.mxu0 0.0
      %2719 = vmatprep.subr.mxu0 0.0
      %2720 = vmatpush1.xpose.msra.mxu0 0.0
      %2721 = vmatprep.subr.mxu0 0.0
      %2722 = vmatpush1.xpose.msra.mxu0 0.0
      %2723 = vmatprep.subr.mxu0 0.0
      %2724 = vmatpush1.xpose.msra.mxu0 0.0
      %2725 = vmatprep.subr.mxu0 0.0
      %2726 = vmatpush1.xpose.msra.mxu0 0.0
      %2727 = vmatprep.subr.mxu0 0.0
      %2728 = vmatpush1.xpose.msra.mxu0 0.0
      %2729 = vmatprep.subr.mxu0 0.0
      %2730 = vmatpush1.xpose.msra.mxu0 0.0
      %2731 = vmatprep.subr.mxu0 0.0
      %2732 = vmatpush1.xpose.msra.mxu0 0.0
      %2733 = vmatprep.subr.mxu0 0.0
      %v2734 = vand.u32 %v2437, 4294901760
      %v2735 = vsub.f32 %v2437, %v2734
      %2736 = vmatpush1.xpose.msra.mxu0 %v2735
      %2737 = vmatprep.subr.mxu0 0.0
      %2738 = vmatpush2.xpose.msra.mxu0 0.0
      %2739 = vmatprep.subr.mxu0 0.0
      %2740 = vmatpush2.xpose.msra.mxu0 0.0
      %2741 = vmatprep.subr.mxu0 0.0
      %2742 = vmatpush2.xpose.msra.mxu0 0.0
      %2743 = vmatprep.subr.mxu0 0.0
      %2744 = vmatpush2.xpose.msra.mxu0 0.0
      %2745 = vmatprep.subr.mxu0 0.0
      %2746 = vmatpush2.xpose.msra.mxu0 0.0
      %2747 = vmatprep.subr.mxu0 0.0
      %2748 = vmatpush2.xpose.msra.mxu0 0.0
      %2749 = vmatprep.subr.mxu0 0.0
      %2750 = vmatpush2.xpose.msra.mxu0 0.0
      %2751 = vmatprep.subr.mxu0 0.0
      %2752 = vmatpush2.xpose.msra.mxu0 0.0
      %2753 = vmatprep.subr.mxu0 0.0
      %2754 = vmatpush2.xpose.msra.mxu0 0.0
      %2755 = vmatprep.subr.mxu0 0.0
      %2756 = vmatpush2.xpose.msra.mxu0 0.0
      %2757 = vmatprep.subr.mxu0 0.0
      %2758 = vmatpush2.xpose.msra.mxu0 0.0
      %2759 = vmatprep.subr.mxu0 0.0
      %2760 = vmatpush2.xpose.msra.mxu0 0.0
      %2761 = vmatprep.subr.mxu0 0.0
      %2762 = vmatpush2.xpose.msra.mxu0 0.0
      %2763 = vmatprep.subr.mxu0 0.0
      %2764 = vmatpush2.xpose.msra.mxu0 0.0
      %2765 = vmatprep.subr.mxu0 0.0
      %2766 = vmatpush2.xpose.msra.mxu0 0.0
      %2767 = vmatprep.subr.mxu0 0.0
      %2768 = vmatpush2.xpose.msra.mxu0 0.0
      %2769 = vmatprep.mubr.f32.mxu0 0.0
      %v2770 = vand.u32 %v2413, 4294901760
      %v2771 = vsub.f32 %v2413, %v2770
      %2772 = vmatmul.mubr.f32.gmra.mxu0 %v2771
      %v2773 = vpop.f32.mrf.mxu0
      %v2774 = vadd.f32 %v2658, %v2773
      %v2775 = vpop.f32.mrf.mxu0
      %2776 = vmatprep.mubr.f32.mxu0 0.0
      %v2777 = vand.u32 %v2416, 4294901760
      %v2778 = vsub.f32 %v2416, %v2777
      %2779 = vmatmul.mubr.f32.gmra.mxu0 %v2778
      %v2780 = vpop.f32.mrf.mxu0
      %v2781 = vadd.f32 %v2664, %v2780
      %v2782 = vpop.f32.mrf.mxu0
      %2783 = vmatprep.mubr.f32.mxu0 0.0
      %v2784 = vand.u32 %v2419, 4294901760
      %v2785 = vsub.f32 %v2419, %v2784
      %2786 = vmatmul.mubr.f32.gmra.mxu0 %v2785
      %v2787 = vpop.f32.mrf.mxu0
      %v2788 = vadd.f32 %v2670, %v2787
      %v2789 = vpop.f32.mrf.mxu0
      %2790 = vmatprep.mubr.f32.mxu0 0.0
      %v2791 = vand.u32 %v2422, 4294901760
      %v2792 = vsub.f32 %v2422, %v2791
      %2793 = vmatmul.mubr.f32.gmra.mxu0 %v2792
      %v2794 = vpop.f32.mrf.mxu0
      %v2795 = vadd.f32 %v2676, %v2794
      %v2796 = vpop.f32.mrf.mxu0
      %2797 = vmatprep.mubr.f32.mxu0 0.0
      %v2798 = vand.u32 %v2425, 4294901760
      %v2799 = vsub.f32 %v2425, %v2798
      %2800 = vmatmul.mubr.f32.gmra.mxu0 %v2799
      %v2801 = vpop.f32.mrf.mxu0
      %v2802 = vadd.f32 %v2682, %v2801
      %v2803 = vpop.f32.mrf.mxu0
      %2804 = vmatprep.mubr.f32.mxu0 0.0
      %v2805 = vand.u32 %v2428, 4294901760
      %v2806 = vsub.f32 %v2428, %v2805
      %2807 = vmatmul.mubr.f32.gmra.mxu0 %v2806
      %v2808 = vpop.f32.mrf.mxu0
      %v2809 = vadd.f32 %v2688, %v2808
      %v2810 = vpop.f32.mrf.mxu0
      %2811 = vmatprep.mubr.f32.mxu0 0.0
      %v2812 = vand.u32 %v2431, 4294901760
      %v2813 = vsub.f32 %v2431, %v2812
      %2814 = vmatmul.mubr.f32.gmra.mxu0 %v2813
      %v2815 = vpop.f32.mrf.mxu0
      %v2816 = vadd.f32 %v2694, %v2815
      %v2817 = vpop.f32.mrf.mxu0
      %2818 = vmatprep.mubr.f32.mxu0 0.0
      %v2819 = vand.u32 %v2434, 4294901760
      %v2820 = vsub.f32 %v2434, %v2819
      %2821 = vmatmul.mubr.f32.gmra.mxu0 %v2820
      %v2822 = vpop.f32.mrf.mxu0
      %v2823 = vadd.f32 %v2700, %v2822
      %v2824 = vpop.f32.mrf.mxu0
      %2825 = vdwg.mxu0
      %2826 = vmatprep.subr.mxu0 0.0
      %2827 = vmatpush1.xpose.msra.mxu0 0.0
      %2828 = vmatprep.subr.mxu0 0.0
      %2829 = vmatpush1.xpose.msra.mxu0 0.0
      %2830 = vmatprep.subr.mxu0 0.0
      %2831 = vmatpush1.xpose.msra.mxu0 0.0
      %2832 = vmatprep.subr.mxu0 0.0
      %2833 = vmatpush1.xpose.msra.mxu0 0.0
      %2834 = vmatprep.subr.mxu0 0.0
      %2835 = vmatpush1.xpose.msra.mxu0 0.0
      %2836 = vmatprep.subr.mxu0 0.0
      %2837 = vmatpush1.xpose.msra.mxu0 0.0
      %2838 = vmatprep.subr.mxu0 0.0
      %2839 = vmatpush1.xpose.msra.mxu0 0.0
      %2840 = vmatprep.subr.mxu0 0.0
      %2841 = vmatpush1.xpose.msra.mxu0 0.0
      %2842 = vmatprep.subr.mxu0 0.0
      %2843 = vmatpush1.xpose.msra.mxu0 0.0
      %2844 = vmatprep.subr.mxu0 0.0
      %2845 = vmatpush1.xpose.msra.mxu0 0.0
      %2846 = vmatprep.subr.mxu0 0.0
      %2847 = vmatpush1.xpose.msra.mxu0 0.0
      %2848 = vmatprep.subr.mxu0 0.0
      %2849 = vmatpush1.xpose.msra.mxu0 0.0
      %2850 = vmatprep.subr.mxu0 0.0
      %2851 = vmatpush1.xpose.msra.mxu0 0.0
      %2852 = vmatprep.subr.mxu0 0.0
      %2853 = vmatpush1.xpose.msra.mxu0 0.0
      %2854 = vmatprep.subr.mxu0 0.0
      %2855 = vmatpush1.xpose.msra.mxu0 0.0
      %2856 = vmatprep.subr.mxu0 0.0
      %v2857 = vand.u32 %v2437, 4294901760
      %2858 = vmatpush1.xpose.msra.mxu0 %v2857
      %2859 = vmatprep.subr.mxu0 0.0
      %2860 = vmatpush2.xpose.msra.mxu0 0.0
      %2861 = vmatprep.subr.mxu0 0.0
      %2862 = vmatpush2.xpose.msra.mxu0 0.0
      %2863 = vmatprep.subr.mxu0 0.0
      %2864 = vmatpush2.xpose.msra.mxu0 0.0
      %2865 = vmatprep.subr.mxu0 0.0
      %2866 = vmatpush2.xpose.msra.mxu0 0.0
      %2867 = vmatprep.subr.mxu0 0.0
      %2868 = vmatpush2.xpose.msra.mxu0 0.0
      %2869 = vmatprep.subr.mxu0 0.0
      %2870 = vmatpush2.xpose.msra.mxu0 0.0
      %2871 = vmatprep.subr.mxu0 0.0
      %2872 = vmatpush2.xpose.msra.mxu0 0.0
      %2873 = vmatprep.subr.mxu0 0.0
      %2874 = vmatpush2.xpose.msra.mxu0 0.0
      %2875 = vmatprep.subr.mxu0 0.0
      %2876 = vmatpush2.xpose.msra.mxu0 0.0
      %2877 = vmatprep.subr.mxu0 0.0
      %2878 = vmatpush2.xpose.msra.mxu0 0.0
      %2879 = vmatprep.subr.mxu0 0.0
      %2880 = vmatpush2.xpose.msra.mxu0 0.0
      %2881 = vmatprep.subr.mxu0 0.0
      %2882 = vmatpush2.xpose.msra.mxu0 0.0
      %2883 = vmatprep.subr.mxu0 0.0
      %2884 = vmatpush2.xpose.msra.mxu0 0.0
      %2885 = vmatprep.subr.mxu0 0.0
      %2886 = vmatpush2.xpose.msra.mxu0 0.0
      %2887 = vmatprep.subr.mxu0 0.0
      %2888 = vmatpush2.xpose.msra.mxu0 0.0
      %2889 = vmatprep.subr.mxu0 0.0
      %2890 = vmatpush2.xpose.msra.mxu0 0.0
      %2891 = vmatprep.mubr.f32.mxu0 0.0
      %v2892 = vand.u32 %v2413, 4294901760
      %v2893 = vsub.f32 %v2413, %v2892
      %v2894 = vand.u32 %v2893, 4294901760
      %2895 = vmatmul.mubr.f32.gmra.mxu0 %v2894
      %v2896 = vpop.f32.mrf.mxu0
      %v2897 = vadd.f32 %v2774, %v2896
      %v2898 = vpop.f32.mrf.mxu0
      %2899 = vmatprep.mubr.f32.mxu0 0.0
      %v2900 = vand.u32 %v2416, 4294901760
      %v2901 = vsub.f32 %v2416, %v2900
      %v2902 = vand.u32 %v2901, 4294901760
      %2903 = vmatmul.mubr.f32.gmra.mxu0 %v2902
      %v2904 = vpop.f32.mrf.mxu0
      %v2905 = vadd.f32 %v2781, %v2904
      %v2906 = vpop.f32.mrf.mxu0
      %2907 = vmatprep.mubr.f32.mxu0 0.0
      %v2908 = vand.u32 %v2419, 4294901760
      %v2909 = vsub.f32 %v2419, %v2908
      %v2910 = vand.u32 %v2909, 4294901760
      %2911 = vmatmul.mubr.f32.gmra.mxu0 %v2910
      %v2912 = vpop.f32.mrf.mxu0
      %v2913 = vadd.f32 %v2788, %v2912
      %v2914 = vpop.f32.mrf.mxu0
      %2915 = vmatprep.mubr.f32.mxu0 0.0
      %v2916 = vand.u32 %v2422, 4294901760
      %v2917 = vsub.f32 %v2422, %v2916
      %v2918 = vand.u32 %v2917, 4294901760
      %2919 = vmatmul.mubr.f32.gmra.mxu0 %v2918
      %v2920 = vpop.f32.mrf.mxu0
      %v2921 = vadd.f32 %v2795, %v2920
      %v2922 = vpop.f32.mrf.mxu0
      %2923 = vmatprep.mubr.f32.mxu0 0.0
      %v2924 = vand.u32 %v2425, 4294901760
      %v2925 = vsub.f32 %v2425, %v2924
      %v2926 = vand.u32 %v2925, 4294901760
      %2927 = vmatmul.mubr.f32.gmra.mxu0 %v2926
      %v2928 = vpop.f32.mrf.mxu0
      %v2929 = vadd.f32 %v2802, %v2928
      %v2930 = vpop.f32.mrf.mxu0
      %2931 = vmatprep.mubr.f32.mxu0 0.0
      %v2932 = vand.u32 %v2428, 4294901760
      %v2933 = vsub.f32 %v2428, %v2932
      %v2934 = vand.u32 %v2933, 4294901760
      %2935 = vmatmul.mubr.f32.gmra.mxu0 %v2934
      %v2936 = vpop.f32.mrf.mxu0
      %v2937 = vadd.f32 %v2809, %v2936
      %v2938 = vpop.f32.mrf.mxu0
      %2939 = vmatprep.mubr.f32.mxu0 0.0
      %v2940 = vand.u32 %v2431, 4294901760
      %v2941 = vsub.f32 %v2431, %v2940
      %v2942 = vand.u32 %v2941, 4294901760
      %2943 = vmatmul.mubr.f32.gmra.mxu0 %v2942
      %v2944 = vpop.f32.mrf.mxu0
      %v2945 = vadd.f32 %v2816, %v2944
      %v2946 = vpop.f32.mrf.mxu0
      %2947 = vmatprep.mubr.f32.mxu0 0.0
      %v2948 = vand.u32 %v2434, 4294901760
      %v2949 = vsub.f32 %v2434, %v2948
      %v2950 = vand.u32 %v2949, 4294901760
      %2951 = vmatmul.mubr.f32.gmra.mxu0 %v2950
      %v2952 = vpop.f32.mrf.mxu0
      %v2953 = vadd.f32 %v2823, %v2952
      %v2954 = vpop.f32.mrf.mxu0
      %2955 = vdwg.mxu0
      %2956 = vmatprep.subr.mxu0 0.0
      %2957 = vmatpush1.xpose.msra.mxu0 0.0
      %2958 = vmatprep.subr.mxu0 0.0
      %2959 = vmatpush1.xpose.msra.mxu0 0.0
      %2960 = vmatprep.subr.mxu0 0.0
      %2961 = vmatpush1.xpose.msra.mxu0 0.0
      %2962 = vmatprep.subr.mxu0 0.0
      %2963 = vmatpush1.xpose.msra.mxu0 0.0
      %2964 = vmatprep.subr.mxu0 0.0
      %2965 = vmatpush1.xpose.msra.mxu0 0.0
      %2966 = vmatprep.subr.mxu0 0.0
      %2967 = vmatpush1.xpose.msra.mxu0 0.0
      %2968 = vmatprep.subr.mxu0 0.0
      %2969 = vmatpush1.xpose.msra.mxu0 0.0
      %2970 = vmatprep.subr.mxu0 0.0
      %2971 = vmatpush1.xpose.msra.mxu0 0.0
      %2972 = vmatprep.subr.mxu0 0.0
      %2973 = vmatpush1.xpose.msra.mxu0 0.0
      %2974 = vmatprep.subr.mxu0 0.0
      %2975 = vmatpush1.xpose.msra.mxu0 0.0
      %2976 = vmatprep.subr.mxu0 0.0
      %2977 = vmatpush1.xpose.msra.mxu0 0.0
      %2978 = vmatprep.subr.mxu0 0.0
      %2979 = vmatpush1.xpose.msra.mxu0 0.0
      %2980 = vmatprep.subr.mxu0 0.0
      %2981 = vmatpush1.xpose.msra.mxu0 0.0
      %2982 = vmatprep.subr.mxu0 0.0
      %2983 = vmatpush1.xpose.msra.mxu0 0.0
      %2984 = vmatprep.subr.mxu0 0.0
      %2985 = vmatpush1.xpose.msra.mxu0 0.0
      %2986 = vmatprep.subr.mxu0 0.0
      %v2987 = vand.u32 %v2437, 4294901760
      %v2988 = vsub.f32 %v2437, %v2987
      %v2989 = vand.u32 %v2988, 4294901760
      %2990 = vmatpush1.xpose.msra.mxu0 %v2989
      %2991 = vmatprep.subr.mxu0 0.0
      %2992 = vmatpush2.xpose.msra.mxu0 0.0
      %2993 = vmatprep.subr.mxu0 0.0
      %2994 = vmatpush2.xpose.msra.mxu0 0.0
      %2995 = vmatprep.subr.mxu0 0.0
      %2996 = vmatpush2.xpose.msra.mxu0 0.0
      %2997 = vmatprep.subr.mxu0 0.0
      %2998 = vmatpush2.xpose.msra.mxu0 0.0
      %2999 = vmatprep.subr.mxu0 0.0
      %3000 = vmatpush2.xpose.msra.mxu0 0.0
      %3001 = vmatprep.subr.mxu0 0.0
      %3002 = vmatpush2.xpose.msra.mxu0 0.0
      %3003 = vmatprep.subr.mxu0 0.0
      %3004 = vmatpush2.xpose.msra.mxu0 0.0
      %3005 = vmatprep.subr.mxu0 0.0
      %3006 = vmatpush2.xpose.msra.mxu0 0.0
      %3007 = vmatprep.subr.mxu0 0.0
      %3008 = vmatpush2.xpose.msra.mxu0 0.0
      %3009 = vmatprep.subr.mxu0 0.0
      %3010 = vmatpush2.xpose.msra.mxu0 0.0
      %3011 = vmatprep.subr.mxu0 0.0
      %3012 = vmatpush2.xpose.msra.mxu0 0.0
      %3013 = vmatprep.subr.mxu0 0.0
      %3014 = vmatpush2.xpose.msra.mxu0 0.0
      %3015 = vmatprep.subr.mxu0 0.0
      %3016 = vmatpush2.xpose.msra.mxu0 0.0
      %3017 = vmatprep.subr.mxu0 0.0
      %3018 = vmatpush2.xpose.msra.mxu0 0.0
      %3019 = vmatprep.subr.mxu0 0.0
      %3020 = vmatpush2.xpose.msra.mxu0 0.0
      %3021 = vmatprep.subr.mxu0 0.0
      %3022 = vmatpush2.xpose.msra.mxu0 0.0
      %3023 = vmatprep.mubr.f32.mxu0 0.0
      %v3024 = vand.u32 %v2413, 4294901760
      %3025 = vmatmul.mubr.f32.gmra.mxu0 %v3024
      %v3026 = vpop.f32.mrf.mxu0
      %v3027 = vadd.f32 %v2897, %v3026
      %v3028 = vpop.f32.mrf.mxu0
      %3029 = vmatprep.mubr.f32.mxu0 0.0
      %v3030 = vand.u32 %v2416, 4294901760
      %3031 = vmatmul.mubr.f32.gmra.mxu0 %v3030
      %v3032 = vpop.f32.mrf.mxu0
      %v3033 = vadd.f32 %v2905, %v3032
      %v3034 = vpop.f32.mrf.mxu0
      %3035 = vmatprep.mubr.f32.mxu0 0.0
      %v3036 = vand.u32 %v2419, 4294901760
      %3037 = vmatmul.mubr.f32.gmra.mxu0 %v3036
      %v3038 = vpop.f32.mrf.mxu0
      %v3039 = vadd.f32 %v2913, %v3038
      %v3040 = vpop.f32.mrf.mxu0
      %3041 = vmatprep.mubr.f32.mxu0 0.0
      %v3042 = vand.u32 %v2422, 4294901760
      %3043 = vmatmul.mubr.f32.gmra.mxu0 %v3042
      %v3044 = vpop.f32.mrf.mxu0
      %v3045 = vadd.f32 %v2921, %v3044
      %v3046 = vpop.f32.mrf.mxu0
      %3047 = vmatprep.mubr.f32.mxu0 0.0
      %v3048 = vand.u32 %v2425, 4294901760
      %3049 = vmatmul.mubr.f32.gmra.mxu0 %v3048
      %v3050 = vpop.f32.mrf.mxu0
      %v3051 = vadd.f32 %v2929, %v3050
      %v3052 = vpop.f32.mrf.mxu0
      %3053 = vmatprep.mubr.f32.mxu0 0.0
      %v3054 = vand.u32 %v2428, 4294901760
      %3055 = vmatmul.mubr.f32.gmra.mxu0 %v3054
      %v3056 = vpop.f32.mrf.mxu0
      %v3057 = vadd.f32 %v2937, %v3056
      %v3058 = vpop.f32.mrf.mxu0
      %3059 = vmatprep.mubr.f32.mxu0 0.0
      %v3060 = vand.u32 %v2431, 4294901760
      %3061 = vmatmul.mubr.f32.gmra.mxu0 %v3060
      %v3062 = vpop.f32.mrf.mxu0
      %v3063 = vadd.f32 %v2945, %v3062
      %v3064 = vpop.f32.mrf.mxu0
      %3065 = vmatprep.mubr.f32.mxu0 0.0
      %v3066 = vand.u32 %v2434, 4294901760
      %3067 = vmatmul.mubr.f32.gmra.mxu0 %v3066
      %v3068 = vpop.f32.mrf.mxu0
      %v3069 = vadd.f32 %v2953, %v3068
      %v3070 = vpop.f32.mrf.mxu0
      %3071 = vdwg.mxu0
      %3072 = vmatprep.subr.mxu0 0.0
      %3073 = vmatpush1.xpose.msra.mxu0 0.0
      %3074 = vmatprep.subr.mxu0 0.0
      %3075 = vmatpush1.xpose.msra.mxu0 0.0
      %3076 = vmatprep.subr.mxu0 0.0
      %3077 = vmatpush1.xpose.msra.mxu0 0.0
      %3078 = vmatprep.subr.mxu0 0.0
      %3079 = vmatpush1.xpose.msra.mxu0 0.0
      %3080 = vmatprep.subr.mxu0 0.0
      %3081 = vmatpush1.xpose.msra.mxu0 0.0
      %3082 = vmatprep.subr.mxu0 0.0
      %3083 = vmatpush1.xpose.msra.mxu0 0.0
      %3084 = vmatprep.subr.mxu0 0.0
      %3085 = vmatpush1.xpose.msra.mxu0 0.0
      %3086 = vmatprep.subr.mxu0 0.0
      %3087 = vmatpush1.xpose.msra.mxu0 0.0
      %3088 = vmatprep.subr.mxu0 0.0
      %3089 = vmatpush1.xpose.msra.mxu0 0.0
      %3090 = vmatprep.subr.mxu0 0.0
      %3091 = vmatpush1.xpose.msra.mxu0 0.0
      %3092 = vmatprep.subr.mxu0 0.0
      %3093 = vmatpush1.xpose.msra.mxu0 0.0
      %3094 = vmatprep.subr.mxu0 0.0
      %3095 = vmatpush1.xpose.msra.mxu0 0.0
      %3096 = vmatprep.subr.mxu0 0.0
      %3097 = vmatpush1.xpose.msra.mxu0 0.0
      %3098 = vmatprep.subr.mxu0 0.0
      %3099 = vmatpush1.xpose.msra.mxu0 0.0
      %3100 = vmatprep.subr.mxu0 0.0
      %3101 = vmatpush1.xpose.msra.mxu0 0.0
      %3102 = vmatprep.subr.mxu0 0.0
      %v3103 = vand.u32 %v2437, 4294901760
      %3104 = vmatpush1.xpose.msra.mxu0 %v3103
      %3105 = vmatprep.subr.mxu0 0.0
      %3106 = vmatpush2.xpose.msra.mxu0 0.0
      %3107 = vmatprep.subr.mxu0 0.0
      %3108 = vmatpush2.xpose.msra.mxu0 0.0
      %3109 = vmatprep.subr.mxu0 0.0
      %3110 = vmatpush2.xpose.msra.mxu0 0.0
      %3111 = vmatprep.subr.mxu0 0.0
      %3112 = vmatpush2.xpose.msra.mxu0 0.0
      %3113 = vmatprep.subr.mxu0 0.0
      %3114 = vmatpush2.xpose.msra.mxu0 0.0
      %3115 = vmatprep.subr.mxu0 0.0
      %3116 = vmatpush2.xpose.msra.mxu0 0.0
      %3117 = vmatprep.subr.mxu0 0.0
      %3118 = vmatpush2.xpose.msra.mxu0 0.0
      %3119 = vmatprep.subr.mxu0 0.0
      %3120 = vmatpush2.xpose.msra.mxu0 0.0
      %3121 = vmatprep.subr.mxu0 0.0
      %3122 = vmatpush2.xpose.msra.mxu0 0.0
      %3123 = vmatprep.subr.mxu0 0.0
      %3124 = vmatpush2.xpose.msra.mxu0 0.0
      %3125 = vmatprep.subr.mxu0 0.0
      %3126 = vmatpush2.xpose.msra.mxu0 0.0
      %3127 = vmatprep.subr.mxu0 0.0
      %3128 = vmatpush2.xpose.msra.mxu0 0.0
      %3129 = vmatprep.subr.mxu0 0.0
      %3130 = vmatpush2.xpose.msra.mxu0 0.0
      %3131 = vmatprep.subr.mxu0 0.0
      %3132 = vmatpush2.xpose.msra.mxu0 0.0
      %3133 = vmatprep.subr.mxu0 0.0
      %3134 = vmatpush2.xpose.msra.mxu0 0.0
      %3135 = vmatprep.subr.mxu0 0.0
      %3136 = vmatpush2.xpose.msra.mxu0 0.0
      %3137 = vmatprep.mubr.f32.mxu0 0.0
      %v3138 = vand.u32 %v2413, 4294901760
      %3139 = vmatmul.mubr.f32.gmra.mxu0 %v3138
      %v3140 = vpop.f32.mrf.mxu0
      %v3141 = vadd.f32 %v3027, %v3140
      %v3142 = vpop.f32.mrf.mxu0
      %3143 = vmatprep.mubr.f32.mxu0 0.0
      %v3144 = vand.u32 %v2416, 4294901760
      %3145 = vmatmul.mubr.f32.gmra.mxu0 %v3144
      %v3146 = vpop.f32.mrf.mxu0
      %v3147 = vadd.f32 %v3033, %v3146
      %v3148 = vpop.f32.mrf.mxu0
      %3149 = vmatprep.mubr.f32.mxu0 0.0
      %v3150 = vand.u32 %v2419, 4294901760
      %3151 = vmatmul.mubr.f32.gmra.mxu0 %v3150
      %v3152 = vpop.f32.mrf.mxu0
      %v3153 = vadd.f32 %v3039, %v3152
      %v3154 = vpop.f32.mrf.mxu0
      %3155 = vmatprep.mubr.f32.mxu0 0.0
      %v3156 = vand.u32 %v2422, 4294901760
      %3157 = vmatmul.mubr.f32.gmra.mxu0 %v3156
      %v3158 = vpop.f32.mrf.mxu0
      %v3159 = vadd.f32 %v3045, %v3158
      %v3160 = vpop.f32.mrf.mxu0
      %3161 = vmatprep.mubr.f32.mxu0 0.0
      %v3162 = vand.u32 %v2425, 4294901760
      %3163 = vmatmul.mubr.f32.gmra.mxu0 %v3162
      %v3164 = vpop.f32.mrf.mxu0
      %v3165 = vadd.f32 %v3051, %v3164
      %v3166 = vpop.f32.mrf.mxu0
      %3167 = vmatprep.mubr.f32.mxu0 0.0
      %v3168 = vand.u32 %v2428, 4294901760
      %3169 = vmatmul.mubr.f32.gmra.mxu0 %v3168
      %v3170 = vpop.f32.mrf.mxu0
      %v3171 = vadd.f32 %v3057, %v3170
      %v3172 = vpop.f32.mrf.mxu0
      %3173 = vmatprep.mubr.f32.mxu0 0.0
      %v3174 = vand.u32 %v2431, 4294901760
      %3175 = vmatmul.mubr.f32.gmra.mxu0 %v3174
      %v3176 = vpop.f32.mrf.mxu0
      %v3177 = vadd.f32 %v3063, %v3176
      %v3178 = vpop.f32.mrf.mxu0
      %3179 = vmatprep.mubr.f32.mxu0 0.0
      %v3180 = vand.u32 %v2434, 4294901760
      %3181 = vmatmul.mubr.f32.gmra.mxu0 %v3180
      %v3182 = vpop.f32.mrf.mxu0
      %v3183 = vadd.f32 %v3069, %v3182
      %v3184 = vpop.f32.mrf.mxu0
      %3185 = vdwg.mxu0
      %v3186 = vmul.f32 %v3141, 0.17677669
      %v3187 = vmul.f32 %v3147, 0.17677669
      %v3188 = vmul.f32 %v3153, 0.17677669
      %v3189 = vmul.f32 %v3159, 0.17677669
      %v3190 = vmul.f32 %v3165, 0.17677669
      %v3191 = vmul.f32 %v3171, 0.17677669
      %v3192 = vmul.f32 %v3177, 0.17677669
      %v3193 = vmul.f32 %v3183, 0.17677669
      %v3194 = vmul.f32 %v552, 10000.0
      %v3195 = vsub.f32 %v3194, 10000.0
      %v3197 = vlaneseq
      %v3198 = vshrl.u32 %v3197, 7
      %v3199 = vsub.s32 0, %v3198
      %v3200 = vrot.slane %v3195, %v3199
      %v3202 = vadd.f32 %v3186, %v3200
      %v3203 = vadd.f32 %v3187, %v3200
      %v3204 = vadd.f32 %v3188, %v3200
      %v3205 = vadd.f32 %v3189, %v3200
      %v3206 = vadd.f32 %v3190, %v3200
      %v3207 = vadd.f32 %v3191, %v3200
      %v3208 = vadd.f32 %v3192, %v3200
      %v3209 = vadd.f32 %v3193, %v3200
      %vm3210 = vcmask 64512
      %v3211 = vsel %vm3210, %v3202, -inf
      %3212 = vmax.xlane.f32.xlu0 %v3211
      %v3213 = vpop.xlane.xlu0 %3212
      %v3214 = vsel %vm3210, %v3203, -inf
      %3215 = vmax.xlane.f32.xlu0 %v3214
      %v3216 = vpop.xlane.xlu0 %3215
      %v3217 = vsel %vm3210, %v3204, -inf
      %3218 = vmax.xlane.f32.xlu0 %v3217
      %v3219 = vpop.xlane.xlu0 %3218
      %v3220 = vsel %vm3210, %v3205, -inf
      %3221 = vmax.xlane.f32.xlu0 %v3220
      %v3222 = vpop.xlane.xlu0 %3221
      %v3223 = vsel %vm3210, %v3206, -inf
      %3224 = vmax.xlane.f32.xlu0 %v3223
      %v3225 = vpop.xlane.xlu0 %3224
      %v3226 = vsel %vm3210, %v3207, -inf
      %3227 = vmax.xlane.f32.xlu0 %v3226
      %v3228 = vpop.xlane.xlu0 %3227
      %v3229 = vsel %vm3210, %v3208, -inf
      %3230 = vmax.xlane.f32.xlu0 %v3229
      %v3231 = vpop.xlane.xlu0 %3230
      %v3232 = vsel %vm3210, %v3209, -inf
      %3233 = vmax.xlane.f32.xlu0 %v3232
      %v3234 = vpop.xlane.xlu0 %3233
      %v3235 = vsub.f32 %v3202, %v3213
      %v3236 = vsub.f32 %v3203, %v3216
      %v3237 = vsub.f32 %v3204, %v3219
      %v3238 = vsub.f32 %v3205, %v3222
      %v3239 = vsub.f32 %v3206, %v3225
      %v3240 = vsub.f32 %v3207, %v3228
      %v3241 = vsub.f32 %v3208, %v3231
      %v3242 = vsub.f32 %v3209, %v3234
      %v3243 = vmul.f32 %v3235, 1.442695
      %v3244 = vpow.pop %v3243
      %v3245 = vmul.f32 %v3236, 1.442695
      %v3246 = vpow.pop %v3245
      %v3247 = vmul.f32 %v3237, 1.442695
      %v3248 = vpow.pop %v3247
      %v3249 = vmul.f32 %v3238, 1.442695
      %v3250 = vpow.pop %v3249
      %v3251 = vmul.f32 %v3239, 1.442695
      %v3252 = vpow.pop %v3251
      %v3253 = vmul.f32 %v3240, 1.442695
      %v3254 = vpow.pop %v3253
      %v3255 = vmul.f32 %v3241, 1.442695
      %v3256 = vpow.pop %v3255
      %v3257 = vmul.f32 %v3242, 1.442695
      %v3258 = vpow.pop %v3257
      %v3259 = vsel %vm3210, %v3244, 0.0
      %3260 = vadd.xlane.f32.xlu0 %v3259
      %v3261 = vpop.xlane.xlu0 %3260
      %v3262 = vsel %vm3210, %v3246, 0.0
      %3263 = vadd.xlane.f32.xlu0 %v3262
      %v3264 = vpop.xlane.xlu0 %3263
      %v3265 = vsel %vm3210, %v3248, 0.0
      %3266 = vadd.xlane.f32.xlu0 %v3265
      %v3267 = vpop.xlane.xlu0 %3266
      %v3268 = vsel %vm3210, %v3250, 0.0
      %3269 = vadd.xlane.f32.xlu0 %v3268
      %v3270 = vpop.xlane.xlu0 %3269
      %v3271 = vsel %vm3210, %v3252, 0.0
      %3272 = vadd.xlane.f32.xlu0 %v3271
      %v3273 = vpop.xlane.xlu0 %3272
      %v3274 = vsel %vm3210, %v3254, 0.0
      %3275 = vadd.xlane.f32.xlu0 %v3274
      %v3276 = vpop.xlane.xlu0 %3275
      %v3277 = vsel %vm3210, %v3256, 0.0
      %3278 = vadd.xlane.f32.xlu0 %v3277
      %v3279 = vpop.xlane.xlu0 %3278
      %v3280 = vsel %vm3210, %v3258, 0.0
      %3281 = vadd.xlane.f32.xlu0 %v3280
      %v3282 = vpop.xlane.xlu0 %3281
      %v3283 = vrcp.pop %v3261
      %v3284 = vmul.f32 %v3244, %v3283
      %v3285 = vrcp.pop %v3264
      %v3286 = vmul.f32 %v3246, %v3285
      %v3287 = vrcp.pop %v3267
      %v3288 = vmul.f32 %v3248, %v3287
      %v3289 = vrcp.pop %v3270
      %v3290 = vmul.f32 %v3250, %v3289
      %v3291 = vrcp.pop %v3273
      %v3292 = vmul.f32 %v3252, %v3291
      %v3293 = vrcp.pop %v3276
      %v3294 = vmul.f32 %v3254, %v3293
      %v3295 = vrcp.pop %v3279
      %v3296 = vmul.f32 %v3256, %v3295
      %v3297 = vrcp.pop %v3282
      %v3298 = vmul.f32 %v3258, %v3297
      %v3300 = vsel %vm3210, %v3284, 0
      %v3303 = vsel %vm3210, %v3286, 0
      %v3306 = vsel %vm3210, %v3288, 0
      %v3309 = vsel %vm3210, %v3290, 0
      %v3312 = vsel %vm3210, %v3292, 0
      %v3315 = vsel %vm3210, %v3294, 0
      %v3318 = vsel %vm3210, %v3296, 0
      %v3321 = vsel %vm3210, %v3298, 0
      %3323 = vmatprep.subr.mxu0 0.0
      %3324 = vmatpush1.msra.mxu0 0.0
      %3325 = vmatprep.subr.mxu0 0.0
      %3326 = vmatpush1.msra.mxu0 0.0
      %3327 = vmatprep.subr.mxu0 0.0
      %3328 = vmatpush1.msra.mxu0 0.0
      %3329 = vmatprep.subr.mxu0 0.0
      %3330 = vmatpush1.msra.mxu0 0.0
      %3331 = vmatprep.subr.mxu0 0.0
      %3332 = vmatpush1.msra.mxu0 0.0
      %3333 = vmatprep.subr.mxu0 0.0
      %3334 = vmatpush1.msra.mxu0 0.0
      %3335 = vmatprep.subr.mxu0 0.0
      %3336 = vmatpush1.msra.mxu0 0.0
      %3337 = vmatprep.subr.mxu0 0.0
      %3338 = vmatpush1.msra.mxu0 0.0
      %3339 = vmatprep.subr.mxu0 0.0
      %3340 = vmatpush1.msra.mxu0 0.0
      %3341 = vmatprep.subr.mxu0 0.0
      %3342 = vmatpush1.msra.mxu0 0.0
      %3343 = vmatprep.subr.mxu0 0.0
      %3344 = vmatpush1.msra.mxu0 0.0
      %3345 = vmatprep.subr.mxu0 0.0
      %3346 = vmatpush1.msra.mxu0 0.0
      %3347 = vmatprep.subr.mxu0 0.0
      %3348 = vmatpush1.msra.mxu0 0.0
      %3349 = vmatprep.subr.mxu0 0.0
      %3350 = vmatpush1.msra.mxu0 0.0
      %3351 = vmatprep.subr.mxu0 0.0
      %3352 = vmatpush1.msra.mxu0 0.0
      %3353 = vmatprep.subr.mxu0 0.0
      %v3354 = vand.u32 %v2410, 4294901760
      %3355 = vmatpush1.msra.mxu0 %v3354
      %3356 = vmatprep.subr.mxu0 0.0
      %3357 = vmatpush2.msra.mxu0 0.0
      %3358 = vmatprep.subr.mxu0 0.0
      %3359 = vmatpush2.msra.mxu0 0.0
      %3360 = vmatprep.subr.mxu0 0.0
      %3361 = vmatpush2.msra.mxu0 0.0
      %3362 = vmatprep.subr.mxu0 0.0
      %3363 = vmatpush2.msra.mxu0 0.0
      %3364 = vmatprep.subr.mxu0 0.0
      %3365 = vmatpush2.msra.mxu0 0.0
      %3366 = vmatprep.subr.mxu0 0.0
      %3367 = vmatpush2.msra.mxu0 0.0
      %3368 = vmatprep.subr.mxu0 0.0
      %3369 = vmatpush2.msra.mxu0 0.0
      %3370 = vmatprep.subr.mxu0 0.0
      %3371 = vmatpush2.msra.mxu0 0.0
      %3372 = vmatprep.subr.mxu0 0.0
      %3373 = vmatpush2.msra.mxu0 0.0
      %3374 = vmatprep.subr.mxu0 0.0
      %3375 = vmatpush2.msra.mxu0 0.0
      %3376 = vmatprep.subr.mxu0 0.0
      %3377 = vmatpush2.msra.mxu0 0.0
      %3378 = vmatprep.subr.mxu0 0.0
      %3379 = vmatpush2.msra.mxu0 0.0
      %3380 = vmatprep.subr.mxu0 0.0
      %3381 = vmatpush2.msra.mxu0 0.0
      %3382 = vmatprep.subr.mxu0 0.0
      %3383 = vmatpush2.msra.mxu0 0.0
      %3384 = vmatprep.subr.mxu0 0.0
      %3385 = vmatpush2.msra.mxu0 0.0
      %3386 = vmatprep.subr.mxu0 0.0
      %3387 = vmatpush2.msra.mxu0 0.0
      %3388 = vmatprep.mubr.f32.mxu0 0.0
      %v3389 = vand.u32 %v3300, 4294901760
      %v3390 = vsub.f32 %v3300, %v3389
      %v3391 = vand.u32 %v3390, 4294901760
      %v3392 = vsub.f32 %v3390, %v3391
      %v3393 = vand.u32 %v3392, 4294901760
      %3394 = vmatmul.mubr.f32.gmra.mxu0 %v3393
      %v3395 = vpop.f32.mrf.mxu0
      %v3396 = vadd.f32 0.0, %v3395
      %v3397 = vpop.f32.mrf.mxu0
      %3398 = vmatprep.mubr.f32.mxu0 0.0
      %v3399 = vand.u32 %v3303, 4294901760
      %v3400 = vsub.f32 %v3303, %v3399
      %v3401 = vand.u32 %v3400, 4294901760
      %v3402 = vsub.f32 %v3400, %v3401
      %v3403 = vand.u32 %v3402, 4294901760
      %3404 = vmatmul.mubr.f32.gmra.mxu0 %v3403
      %v3405 = vpop.f32.mrf.mxu0
      %v3406 = vadd.f32 0.0, %v3405
      %v3407 = vpop.f32.mrf.mxu0
      %3408 = vmatprep.mubr.f32.mxu0 0.0
      %v3409 = vand.u32 %v3306, 4294901760
      %v3410 = vsub.f32 %v3306, %v3409
      %v3411 = vand.u32 %v3410, 4294901760
      %v3412 = vsub.f32 %v3410, %v3411
      %v3413 = vand.u32 %v3412, 4294901760
      %3414 = vmatmul.mubr.f32.gmra.mxu0 %v3413
      %v3415 = vpop.f32.mrf.mxu0
      %v3416 = vadd.f32 0.0, %v3415
      %v3417 = vpop.f32.mrf.mxu0
      %3418 = vmatprep.mubr.f32.mxu0 0.0
      %v3419 = vand.u32 %v3309, 4294901760
      %v3420 = vsub.f32 %v3309, %v3419
      %v3421 = vand.u32 %v3420, 4294901760
      %v3422 = vsub.f32 %v3420, %v3421
      %v3423 = vand.u32 %v3422, 4294901760
      %3424 = vmatmul.mubr.f32.gmra.mxu0 %v3423
      %v3425 = vpop.f32.mrf.mxu0
      %v3426 = vadd.f32 0.0, %v3425
      %v3427 = vpop.f32.mrf.mxu0
      %3428 = vmatprep.mubr.f32.mxu0 0.0
      %v3429 = vand.u32 %v3312, 4294901760
      %v3430 = vsub.f32 %v3312, %v3429
      %v3431 = vand.u32 %v3430, 4294901760
      %v3432 = vsub.f32 %v3430, %v3431
      %v3433 = vand.u32 %v3432, 4294901760
      %3434 = vmatmul.mubr.f32.gmra.mxu0 %v3433
      %v3435 = vpop.f32.mrf.mxu0
      %v3436 = vadd.f32 0.0, %v3435
      %v3437 = vpop.f32.mrf.mxu0
      %3438 = vmatprep.mubr.f32.mxu0 0.0
      %v3439 = vand.u32 %v3315, 4294901760
      %v3440 = vsub.f32 %v3315, %v3439
      %v3441 = vand.u32 %v3440, 4294901760
      %v3442 = vsub.f32 %v3440, %v3441
      %v3443 = vand.u32 %v3442, 4294901760
      %3444 = vmatmul.mubr.f32.gmra.mxu0 %v3443
      %v3445 = vpop.f32.mrf.mxu0
      %v3446 = vadd.f32 0.0, %v3445
      %v3447 = vpop.f32.mrf.mxu0
      %3448 = vmatprep.mubr.f32.mxu0 0.0
      %v3449 = vand.u32 %v3318, 4294901760
      %v3450 = vsub.f32 %v3318, %v3449
      %v3451 = vand.u32 %v3450, 4294901760
      %v3452 = vsub.f32 %v3450, %v3451
      %v3453 = vand.u32 %v3452, 4294901760
      %3454 = vmatmul.mubr.f32.gmra.mxu0 %v3453
      %v3455 = vpop.f32.mrf.mxu0
      %v3456 = vadd.f32 0.0, %v3455
      %v3457 = vpop.f32.mrf.mxu0
      %3458 = vmatprep.mubr.f32.mxu0 0.0
      %v3459 = vand.u32 %v3321, 4294901760
      %v3460 = vsub.f32 %v3321, %v3459
      %v3461 = vand.u32 %v3460, 4294901760
      %v3462 = vsub.f32 %v3460, %v3461
      %v3463 = vand.u32 %v3462, 4294901760
      %3464 = vmatmul.mubr.f32.gmra.mxu0 %v3463
      %v3465 = vpop.f32.mrf.mxu0
      %v3466 = vadd.f32 0.0, %v3465
      %v3467 = vpop.f32.mrf.mxu0
      %3468 = vdwg.mxu0
      %3469 = vmatprep.subr.mxu0 0.0
      %3470 = vmatpush1.msra.mxu0 0.0
      %3471 = vmatprep.subr.mxu0 0.0
      %3472 = vmatpush1.msra.mxu0 0.0
      %3473 = vmatprep.subr.mxu0 0.0
      %3474 = vmatpush1.msra.mxu0 0.0
      %3475 = vmatprep.subr.mxu0 0.0
      %3476 = vmatpush1.msra.mxu0 0.0
      %3477 = vmatprep.subr.mxu0 0.0
      %3478 = vmatpush1.msra.mxu0 0.0
      %3479 = vmatprep.subr.mxu0 0.0
      %3480 = vmatpush1.msra.mxu0 0.0
      %3481 = vmatprep.subr.mxu0 0.0
      %3482 = vmatpush1.msra.mxu0 0.0
      %3483 = vmatprep.subr.mxu0 0.0
      %3484 = vmatpush1.msra.mxu0 0.0
      %3485 = vmatprep.subr.mxu0 0.0
      %3486 = vmatpush1.msra.mxu0 0.0
      %3487 = vmatprep.subr.mxu0 0.0
      %3488 = vmatpush1.msra.mxu0 0.0
      %3489 = vmatprep.subr.mxu0 0.0
      %3490 = vmatpush1.msra.mxu0 0.0
      %3491 = vmatprep.subr.mxu0 0.0
      %3492 = vmatpush1.msra.mxu0 0.0
      %3493 = vmatprep.subr.mxu0 0.0
      %3494 = vmatpush1.msra.mxu0 0.0
      %3495 = vmatprep.subr.mxu0 0.0
      %3496 = vmatpush1.msra.mxu0 0.0
      %3497 = vmatprep.subr.mxu0 0.0
      %3498 = vmatpush1.msra.mxu0 0.0
      %3499 = vmatprep.subr.mxu0 0.0
      %v3500 = vand.u32 %v2410, 4294901760
      %v3501 = vsub.f32 %v2410, %v3500
      %v3502 = vand.u32 %v3501, 4294901760
      %v3503 = vsub.f32 %v3501, %v3502
      %v3504 = vand.u32 %v3503, 4294901760
      %3505 = vmatpush1.msra.mxu0 %v3504
      %3506 = vmatprep.subr.mxu0 0.0
      %3507 = vmatpush2.msra.mxu0 0.0
      %3508 = vmatprep.subr.mxu0 0.0
      %3509 = vmatpush2.msra.mxu0 0.0
      %3510 = vmatprep.subr.mxu0 0.0
      %3511 = vmatpush2.msra.mxu0 0.0
      %3512 = vmatprep.subr.mxu0 0.0
      %3513 = vmatpush2.msra.mxu0 0.0
      %3514 = vmatprep.subr.mxu0 0.0
      %3515 = vmatpush2.msra.mxu0 0.0
      %3516 = vmatprep.subr.mxu0 0.0
      %3517 = vmatpush2.msra.mxu0 0.0
      %3518 = vmatprep.subr.mxu0 0.0
      %3519 = vmatpush2.msra.mxu0 0.0
      %3520 = vmatprep.subr.mxu0 0.0
      %3521 = vmatpush2.msra.mxu0 0.0
      %3522 = vmatprep.subr.mxu0 0.0
      %3523 = vmatpush2.msra.mxu0 0.0
      %3524 = vmatprep.subr.mxu0 0.0
      %3525 = vmatpush2.msra.mxu0 0.0
      %3526 = vmatprep.subr.mxu0 0.0
      %3527 = vmatpush2.msra.mxu0 0.0
      %3528 = vmatprep.subr.mxu0 0.0
      %3529 = vmatpush2.msra.mxu0 0.0
      %3530 = vmatprep.subr.mxu0 0.0
      %3531 = vmatpush2.msra.mxu0 0.0
      %3532 = vmatprep.subr.mxu0 0.0
      %3533 = vmatpush2.msra.mxu0 0.0
      %3534 = vmatprep.subr.mxu0 0.0
      %3535 = vmatpush2.msra.mxu0 0.0
      %3536 = vmatprep.subr.mxu0 0.0
      %3537 = vmatpush2.msra.mxu0 0.0
      %3538 = vmatprep.mubr.f32.mxu0 0.0
      %v3539 = vand.u32 %v3300, 4294901760
      %3540 = vmatmul.mubr.f32.gmra.mxu0 %v3539
      %v3541 = vpop.f32.mrf.mxu0
      %v3542 = vadd.f32 %v3396, %v3541
      %v3543 = vpop.f32.mrf.mxu0
      %3544 = vmatprep.mubr.f32.mxu0 0.0
      %v3545 = vand.u32 %v3303, 4294901760
      %3546 = vmatmul.mubr.f32.gmra.mxu0 %v3545
      %v3547 = vpop.f32.mrf.mxu0
      %v3548 = vadd.f32 %v3406, %v3547
      %v3549 = vpop.f32.mrf.mxu0
      %3550 = vmatprep.mubr.f32.mxu0 0.0
      %v3551 = vand.u32 %v3306, 4294901760
      %3552 = vmatmul.mubr.f32.gmra.mxu0 %v3551
      %v3553 = vpop.f32.mrf.mxu0
      %v3554 = vadd.f32 %v3416, %v3553
      %v3555 = vpop.f32.mrf.mxu0
      %3556 = vmatprep.mubr.f32.mxu0 0.0
      %v3557 = vand.u32 %v3309, 4294901760
      %3558 = vmatmul.mubr.f32.gmra.mxu0 %v3557
      %v3559 = vpop.f32.mrf.mxu0
      %v3560 = vadd.f32 %v3426, %v3559
      %v3561 = vpop.f32.mrf.mxu0
      %3562 = vmatprep.mubr.f32.mxu0 0.0
      %v3563 = vand.u32 %v3312, 4294901760
      %3564 = vmatmul.mubr.f32.gmra.mxu0 %v3563
      %v3565 = vpop.f32.mrf.mxu0
      %v3566 = vadd.f32 %v3436, %v3565
      %v3567 = vpop.f32.mrf.mxu0
      %3568 = vmatprep.mubr.f32.mxu0 0.0
      %v3569 = vand.u32 %v3315, 4294901760
      %3570 = vmatmul.mubr.f32.gmra.mxu0 %v3569
      %v3571 = vpop.f32.mrf.mxu0
      %v3572 = vadd.f32 %v3446, %v3571
      %v3573 = vpop.f32.mrf.mxu0
      %3574 = vmatprep.mubr.f32.mxu0 0.0
      %v3575 = vand.u32 %v3318, 4294901760
      %3576 = vmatmul.mubr.f32.gmra.mxu0 %v3575
      %v3577 = vpop.f32.mrf.mxu0
      %v3578 = vadd.f32 %v3456, %v3577
      %v3579 = vpop.f32.mrf.mxu0
      %3580 = vmatprep.mubr.f32.mxu0 0.0
      %v3581 = vand.u32 %v3321, 4294901760
      %3582 = vmatmul.mubr.f32.gmra.mxu0 %v3581
      %v3583 = vpop.f32.mrf.mxu0
      %v3584 = vadd.f32 %v3466, %v3583
      %v3585 = vpop.f32.mrf.mxu0
      %3586 = vdwg.mxu0
      %3587 = vmatprep.subr.mxu0 0.0
      %3588 = vmatpush1.msra.mxu0 0.0
      %3589 = vmatprep.subr.mxu0 0.0
      %3590 = vmatpush1.msra.mxu0 0.0
      %3591 = vmatprep.subr.mxu0 0.0
      %3592 = vmatpush1.msra.mxu0 0.0
      %3593 = vmatprep.subr.mxu0 0.0
      %3594 = vmatpush1.msra.mxu0 0.0
      %3595 = vmatprep.subr.mxu0 0.0
      %3596 = vmatpush1.msra.mxu0 0.0
      %3597 = vmatprep.subr.mxu0 0.0
      %3598 = vmatpush1.msra.mxu0 0.0
      %3599 = vmatprep.subr.mxu0 0.0
      %3600 = vmatpush1.msra.mxu0 0.0
      %3601 = vmatprep.subr.mxu0 0.0
      %3602 = vmatpush1.msra.mxu0 0.0
      %3603 = vmatprep.subr.mxu0 0.0
      %3604 = vmatpush1.msra.mxu0 0.0
      %3605 = vmatprep.subr.mxu0 0.0
      %3606 = vmatpush1.msra.mxu0 0.0
      %3607 = vmatprep.subr.mxu0 0.0
      %3608 = vmatpush1.msra.mxu0 0.0
      %3609 = vmatprep.subr.mxu0 0.0
      %3610 = vmatpush1.msra.mxu0 0.0
      %3611 = vmatprep.subr.mxu0 0.0
      %3612 = vmatpush1.msra.mxu0 0.0
      %3613 = vmatprep.subr.mxu0 0.0
      %3614 = vmatpush1.msra.mxu0 0.0
      %3615 = vmatprep.subr.mxu0 0.0
      %3616 = vmatpush1.msra.mxu0 0.0
      %3617 = vmatprep.subr.mxu0 0.0
      %v3618 = vand.u32 %v2410, 4294901760
      %v3619 = vsub.f32 %v2410, %v3618
      %3620 = vmatpush1.msra.mxu0 %v3619
      %3621 = vmatprep.subr.mxu0 0.0
      %3622 = vmatpush2.msra.mxu0 0.0
      %3623 = vmatprep.subr.mxu0 0.0
      %3624 = vmatpush2.msra.mxu0 0.0
      %3625 = vmatprep.subr.mxu0 0.0
      %3626 = vmatpush2.msra.mxu0 0.0
      %3627 = vmatprep.subr.mxu0 0.0
      %3628 = vmatpush2.msra.mxu0 0.0
      %3629 = vmatprep.subr.mxu0 0.0
      %3630 = vmatpush2.msra.mxu0 0.0
      %3631 = vmatprep.subr.mxu0 0.0
      %3632 = vmatpush2.msra.mxu0 0.0
      %3633 = vmatprep.subr.mxu0 0.0
      %3634 = vmatpush2.msra.mxu0 0.0
      %3635 = vmatprep.subr.mxu0 0.0
      %3636 = vmatpush2.msra.mxu0 0.0
      %3637 = vmatprep.subr.mxu0 0.0
      %3638 = vmatpush2.msra.mxu0 0.0
      %3639 = vmatprep.subr.mxu0 0.0
      %3640 = vmatpush2.msra.mxu0 0.0
      %3641 = vmatprep.subr.mxu0 0.0
      %3642 = vmatpush2.msra.mxu0 0.0
      %3643 = vmatprep.subr.mxu0 0.0
      %3644 = vmatpush2.msra.mxu0 0.0
      %3645 = vmatprep.subr.mxu0 0.0
      %3646 = vmatpush2.msra.mxu0 0.0
      %3647 = vmatprep.subr.mxu0 0.0
      %3648 = vmatpush2.msra.mxu0 0.0
      %3649 = vmatprep.subr.mxu0 0.0
      %3650 = vmatpush2.msra.mxu0 0.0
      %3651 = vmatprep.subr.mxu0 0.0
      %3652 = vmatpush2.msra.mxu0 0.0
      %3653 = vmatprep.mubr.f32.mxu0 0.0
      %v3654 = vand.u32 %v3300, 4294901760
      %v3655 = vsub.f32 %v3300, %v3654
      %3656 = vmatmul.mubr.f32.gmra.mxu0 %v3655
      %v3657 = vpop.f32.mrf.mxu0
      %v3658 = vadd.f32 %v3542, %v3657
      %v3659 = vpop.f32.mrf.mxu0
      %3660 = vmatprep.mubr.f32.mxu0 0.0
      %v3661 = vand.u32 %v3303, 4294901760
      %v3662 = vsub.f32 %v3303, %v3661
      %3663 = vmatmul.mubr.f32.gmra.mxu0 %v3662
      %v3664 = vpop.f32.mrf.mxu0
      %v3665 = vadd.f32 %v3548, %v3664
      %v3666 = vpop.f32.mrf.mxu0
      %3667 = vmatprep.mubr.f32.mxu0 0.0
      %v3668 = vand.u32 %v3306, 4294901760
      %v3669 = vsub.f32 %v3306, %v3668
      %3670 = vmatmul.mubr.f32.gmra.mxu0 %v3669
      %v3671 = vpop.f32.mrf.mxu0
      %v3672 = vadd.f32 %v3554, %v3671
      %v3673 = vpop.f32.mrf.mxu0
      %3674 = vmatprep.mubr.f32.mxu0 0.0
      %v3675 = vand.u32 %v3309, 4294901760
      %v3676 = vsub.f32 %v3309, %v3675
      %3677 = vmatmul.mubr.f32.gmra.mxu0 %v3676
      %v3678 = vpop.f32.mrf.mxu0
      %v3679 = vadd.f32 %v3560, %v3678
      %v3680 = vpop.f32.mrf.mxu0
      %3681 = vmatprep.mubr.f32.mxu0 0.0
      %v3682 = vand.u32 %v3312, 4294901760
      %v3683 = vsub.f32 %v3312, %v3682
      %3684 = vmatmul.mubr.f32.gmra.mxu0 %v3683
      %v3685 = vpop.f32.mrf.mxu0
      %v3686 = vadd.f32 %v3566, %v3685
      %v3687 = vpop.f32.mrf.mxu0
      %3688 = vmatprep.mubr.f32.mxu0 0.0
      %v3689 = vand.u32 %v3315, 4294901760
      %v3690 = vsub.f32 %v3315, %v3689
      %3691 = vmatmul.mubr.f32.gmra.mxu0 %v3690
      %v3692 = vpop.f32.mrf.mxu0
      %v3693 = vadd.f32 %v3572, %v3692
      %v3694 = vpop.f32.mrf.mxu0
      %3695 = vmatprep.mubr.f32.mxu0 0.0
      %v3696 = vand.u32 %v3318, 4294901760
      %v3697 = vsub.f32 %v3318, %v3696
      %3698 = vmatmul.mubr.f32.gmra.mxu0 %v3697
      %v3699 = vpop.f32.mrf.mxu0
      %v3700 = vadd.f32 %v3578, %v3699
      %v3701 = vpop.f32.mrf.mxu0
      %3702 = vmatprep.mubr.f32.mxu0 0.0
      %v3703 = vand.u32 %v3321, 4294901760
      %v3704 = vsub.f32 %v3321, %v3703
      %3705 = vmatmul.mubr.f32.gmra.mxu0 %v3704
      %v3706 = vpop.f32.mrf.mxu0
      %v3707 = vadd.f32 %v3584, %v3706
      %v3708 = vpop.f32.mrf.mxu0
      %3709 = vdwg.mxu0
      %3710 = vmatprep.subr.mxu0 0.0
      %3711 = vmatpush1.msra.mxu0 0.0
      %3712 = vmatprep.subr.mxu0 0.0
      %3713 = vmatpush1.msra.mxu0 0.0
      %3714 = vmatprep.subr.mxu0 0.0
      %3715 = vmatpush1.msra.mxu0 0.0
      %3716 = vmatprep.subr.mxu0 0.0
      %3717 = vmatpush1.msra.mxu0 0.0
      %3718 = vmatprep.subr.mxu0 0.0
      %3719 = vmatpush1.msra.mxu0 0.0
      %3720 = vmatprep.subr.mxu0 0.0
      %3721 = vmatpush1.msra.mxu0 0.0
      %3722 = vmatprep.subr.mxu0 0.0
      %3723 = vmatpush1.msra.mxu0 0.0
      %3724 = vmatprep.subr.mxu0 0.0
      %3725 = vmatpush1.msra.mxu0 0.0
      %3726 = vmatprep.subr.mxu0 0.0
      %3727 = vmatpush1.msra.mxu0 0.0
      %3728 = vmatprep.subr.mxu0 0.0
      %3729 = vmatpush1.msra.mxu0 0.0
      %3730 = vmatprep.subr.mxu0 0.0
      %3731 = vmatpush1.msra.mxu0 0.0
      %3732 = vmatprep.subr.mxu0 0.0
      %3733 = vmatpush1.msra.mxu0 0.0
      %3734 = vmatprep.subr.mxu0 0.0
      %3735 = vmatpush1.msra.mxu0 0.0
      %3736 = vmatprep.subr.mxu0 0.0
      %3737 = vmatpush1.msra.mxu0 0.0
      %3738 = vmatprep.subr.mxu0 0.0
      %3739 = vmatpush1.msra.mxu0 0.0
      %3740 = vmatprep.subr.mxu0 0.0
      %v3741 = vand.u32 %v2410, 4294901760
      %3742 = vmatpush1.msra.mxu0 %v3741
      %3743 = vmatprep.subr.mxu0 0.0
      %3744 = vmatpush2.msra.mxu0 0.0
      %3745 = vmatprep.subr.mxu0 0.0
      %3746 = vmatpush2.msra.mxu0 0.0
      %3747 = vmatprep.subr.mxu0 0.0
      %3748 = vmatpush2.msra.mxu0 0.0
      %3749 = vmatprep.subr.mxu0 0.0
      %3750 = vmatpush2.msra.mxu0 0.0
      %3751 = vmatprep.subr.mxu0 0.0
      %3752 = vmatpush2.msra.mxu0 0.0
      %3753 = vmatprep.subr.mxu0 0.0
      %3754 = vmatpush2.msra.mxu0 0.0
      %3755 = vmatprep.subr.mxu0 0.0
      %3756 = vmatpush2.msra.mxu0 0.0
      %3757 = vmatprep.subr.mxu0 0.0
      %3758 = vmatpush2.msra.mxu0 0.0
      %3759 = vmatprep.subr.mxu0 0.0
      %3760 = vmatpush2.msra.mxu0 0.0
      %3761 = vmatprep.subr.mxu0 0.0
      %3762 = vmatpush2.msra.mxu0 0.0
      %3763 = vmatprep.subr.mxu0 0.0
      %3764 = vmatpush2.msra.mxu0 0.0
      %3765 = vmatprep.subr.mxu0 0.0
      %3766 = vmatpush2.msra.mxu0 0.0
      %3767 = vmatprep.subr.mxu0 0.0
      %3768 = vmatpush2.msra.mxu0 0.0
      %3769 = vmatprep.subr.mxu0 0.0
      %3770 = vmatpush2.msra.mxu0 0.0
      %3771 = vmatprep.subr.mxu0 0.0
      %3772 = vmatpush2.msra.mxu0 0.0
      %3773 = vmatprep.subr.mxu0 0.0
      %3774 = vmatpush2.msra.mxu0 0.0
      %3775 = vmatprep.mubr.f32.mxu0 0.0
      %v3776 = vand.u32 %v3300, 4294901760
      %v3777 = vsub.f32 %v3300, %v3776
      %v3778 = vand.u32 %v3777, 4294901760
      %3779 = vmatmul.mubr.f32.gmra.mxu0 %v3778
      %v3780 = vpop.f32.mrf.mxu0
      %v3781 = vadd.f32 %v3658, %v3780
      %v3782 = vpop.f32.mrf.mxu0
      %3783 = vmatprep.mubr.f32.mxu0 0.0
      %v3784 = vand.u32 %v3303, 4294901760
      %v3785 = vsub.f32 %v3303, %v3784
      %v3786 = vand.u32 %v3785, 4294901760
      %3787 = vmatmul.mubr.f32.gmra.mxu0 %v3786
      %v3788 = vpop.f32.mrf.mxu0
      %v3789 = vadd.f32 %v3665, %v3788
      %v3790 = vpop.f32.mrf.mxu0
      %3791 = vmatprep.mubr.f32.mxu0 0.0
      %v3792 = vand.u32 %v3306, 4294901760
      %v3793 = vsub.f32 %v3306, %v3792
      %v3794 = vand.u32 %v3793, 4294901760
      %3795 = vmatmul.mubr.f32.gmra.mxu0 %v3794
      %v3796 = vpop.f32.mrf.mxu0
      %v3797 = vadd.f32 %v3672, %v3796
      %v3798 = vpop.f32.mrf.mxu0
      %3799 = vmatprep.mubr.f32.mxu0 0.0
      %v3800 = vand.u32 %v3309, 4294901760
      %v3801 = vsub.f32 %v3309, %v3800
      %v3802 = vand.u32 %v3801, 4294901760
      %3803 = vmatmul.mubr.f32.gmra.mxu0 %v3802
      %v3804 = vpop.f32.mrf.mxu0
      %v3805 = vadd.f32 %v3679, %v3804
      %v3806 = vpop.f32.mrf.mxu0
      %3807 = vmatprep.mubr.f32.mxu0 0.0
      %v3808 = vand.u32 %v3312, 4294901760
      %v3809 = vsub.f32 %v3312, %v3808
      %v3810 = vand.u32 %v3809, 4294901760
      %3811 = vmatmul.mubr.f32.gmra.mxu0 %v3810
      %v3812 = vpop.f32.mrf.mxu0
      %v3813 = vadd.f32 %v3686, %v3812
      %v3814 = vpop.f32.mrf.mxu0
      %3815 = vmatprep.mubr.f32.mxu0 0.0
      %v3816 = vand.u32 %v3315, 4294901760
      %v3817 = vsub.f32 %v3315, %v3816
      %v3818 = vand.u32 %v3817, 4294901760
      %3819 = vmatmul.mubr.f32.gmra.mxu0 %v3818
      %v3820 = vpop.f32.mrf.mxu0
      %v3821 = vadd.f32 %v3693, %v3820
      %v3822 = vpop.f32.mrf.mxu0
      %3823 = vmatprep.mubr.f32.mxu0 0.0
      %v3824 = vand.u32 %v3318, 4294901760
      %v3825 = vsub.f32 %v3318, %v3824
      %v3826 = vand.u32 %v3825, 4294901760
      %3827 = vmatmul.mubr.f32.gmra.mxu0 %v3826
      %v3828 = vpop.f32.mrf.mxu0
      %v3829 = vadd.f32 %v3700, %v3828
      %v3830 = vpop.f32.mrf.mxu0
      %3831 = vmatprep.mubr.f32.mxu0 0.0
      %v3832 = vand.u32 %v3321, 4294901760
      %v3833 = vsub.f32 %v3321, %v3832
      %v3834 = vand.u32 %v3833, 4294901760
      %3835 = vmatmul.mubr.f32.gmra.mxu0 %v3834
      %v3836 = vpop.f32.mrf.mxu0
      %v3837 = vadd.f32 %v3707, %v3836
      %v3838 = vpop.f32.mrf.mxu0
      %3839 = vdwg.mxu0
      %3840 = vmatprep.subr.mxu0 0.0
      %3841 = vmatpush1.msra.mxu0 0.0
      %3842 = vmatprep.subr.mxu0 0.0
      %3843 = vmatpush1.msra.mxu0 0.0
      %3844 = vmatprep.subr.mxu0 0.0
      %3845 = vmatpush1.msra.mxu0 0.0
      %3846 = vmatprep.subr.mxu0 0.0
      %3847 = vmatpush1.msra.mxu0 0.0
      %3848 = vmatprep.subr.mxu0 0.0
      %3849 = vmatpush1.msra.mxu0 0.0
      %3850 = vmatprep.subr.mxu0 0.0
      %3851 = vmatpush1.msra.mxu0 0.0
      %3852 = vmatprep.subr.mxu0 0.0
      %3853 = vmatpush1.msra.mxu0 0.0
      %3854 = vmatprep.subr.mxu0 0.0
      %3855 = vmatpush1.msra.mxu0 0.0
      %3856 = vmatprep.subr.mxu0 0.0
      %3857 = vmatpush1.msra.mxu0 0.0
      %3858 = vmatprep.subr.mxu0 0.0
      %3859 = vmatpush1.msra.mxu0 0.0
      %3860 = vmatprep.subr.mxu0 0.0
      %3861 = vmatpush1.msra.mxu0 0.0
      %3862 = vmatprep.subr.mxu0 0.0
      %3863 = vmatpush1.msra.mxu0 0.0
      %3864 = vmatprep.subr.mxu0 0.0
      %3865 = vmatpush1.msra.mxu0 0.0
      %3866 = vmatprep.subr.mxu0 0.0
      %3867 = vmatpush1.msra.mxu0 0.0
      %3868 = vmatprep.subr.mxu0 0.0
      %3869 = vmatpush1.msra.mxu0 0.0
      %3870 = vmatprep.subr.mxu0 0.0
      %v3871 = vand.u32 %v2410, 4294901760
      %v3872 = vsub.f32 %v2410, %v3871
      %v3873 = vand.u32 %v3872, 4294901760
      %3874 = vmatpush1.msra.mxu0 %v3873
      %3875 = vmatprep.subr.mxu0 0.0
      %3876 = vmatpush2.msra.mxu0 0.0
      %3877 = vmatprep.subr.mxu0 0.0
      %3878 = vmatpush2.msra.mxu0 0.0
      %3879 = vmatprep.subr.mxu0 0.0
      %3880 = vmatpush2.msra.mxu0 0.0
      %3881 = vmatprep.subr.mxu0 0.0
      %3882 = vmatpush2.msra.mxu0 0.0
      %3883 = vmatprep.subr.mxu0 0.0
      %3884 = vmatpush2.msra.mxu0 0.0
      %3885 = vmatprep.subr.mxu0 0.0
      %3886 = vmatpush2.msra.mxu0 0.0
      %3887 = vmatprep.subr.mxu0 0.0
      %3888 = vmatpush2.msra.mxu0 0.0
      %3889 = vmatprep.subr.mxu0 0.0
      %3890 = vmatpush2.msra.mxu0 0.0
      %3891 = vmatprep.subr.mxu0 0.0
      %3892 = vmatpush2.msra.mxu0 0.0
      %3893 = vmatprep.subr.mxu0 0.0
      %3894 = vmatpush2.msra.mxu0 0.0
      %3895 = vmatprep.subr.mxu0 0.0
      %3896 = vmatpush2.msra.mxu0 0.0
      %3897 = vmatprep.subr.mxu0 0.0
      %3898 = vmatpush2.msra.mxu0 0.0
      %3899 = vmatprep.subr.mxu0 0.0
      %3900 = vmatpush2.msra.mxu0 0.0
      %3901 = vmatprep.subr.mxu0 0.0
      %3902 = vmatpush2.msra.mxu0 0.0
      %3903 = vmatprep.subr.mxu0 0.0
      %3904 = vmatpush2.msra.mxu0 0.0
      %3905 = vmatprep.subr.mxu0 0.0
      %3906 = vmatpush2.msra.mxu0 0.0
      %3907 = vmatprep.mubr.f32.mxu0 0.0
      %v3908 = vand.u32 %v3300, 4294901760
      %3909 = vmatmul.mubr.f32.gmra.mxu0 %v3908
      %v3910 = vpop.f32.mrf.mxu0
      %v3911 = vadd.f32 %v3781, %v3910
      %v3912 = vpop.f32.mrf.mxu0
      %3913 = vmatprep.mubr.f32.mxu0 0.0
      %v3914 = vand.u32 %v3303, 4294901760
      %3915 = vmatmul.mubr.f32.gmra.mxu0 %v3914
      %v3916 = vpop.f32.mrf.mxu0
      %v3917 = vadd.f32 %v3789, %v3916
      %v3918 = vpop.f32.mrf.mxu0
      %3919 = vmatprep.mubr.f32.mxu0 0.0
      %v3920 = vand.u32 %v3306, 4294901760
      %3921 = vmatmul.mubr.f32.gmra.mxu0 %v3920
      %v3922 = vpop.f32.mrf.mxu0
      %v3923 = vadd.f32 %v3797, %v3922
      %v3924 = vpop.f32.mrf.mxu0
      %3925 = vmatprep.mubr.f32.mxu0 0.0
      %v3926 = vand.u32 %v3309, 4294901760
      %3927 = vmatmul.mubr.f32.gmra.mxu0 %v3926
      %v3928 = vpop.f32.mrf.mxu0
      %v3929 = vadd.f32 %v3805, %v3928
      %v3930 = vpop.f32.mrf.mxu0
      %3931 = vmatprep.mubr.f32.mxu0 0.0
      %v3932 = vand.u32 %v3312, 4294901760
      %3933 = vmatmul.mubr.f32.gmra.mxu0 %v3932
      %v3934 = vpop.f32.mrf.mxu0
      %v3935 = vadd.f32 %v3813, %v3934
      %v3936 = vpop.f32.mrf.mxu0
      %3937 = vmatprep.mubr.f32.mxu0 0.0
      %v3938 = vand.u32 %v3315, 4294901760
      %3939 = vmatmul.mubr.f32.gmra.mxu0 %v3938
      %v3940 = vpop.f32.mrf.mxu0
      %v3941 = vadd.f32 %v3821, %v3940
      %v3942 = vpop.f32.mrf.mxu0
      %3943 = vmatprep.mubr.f32.mxu0 0.0
      %v3944 = vand.u32 %v3318, 4294901760
      %3945 = vmatmul.mubr.f32.gmra.mxu0 %v3944
      %v3946 = vpop.f32.mrf.mxu0
      %v3947 = vadd.f32 %v3829, %v3946
      %v3948 = vpop.f32.mrf.mxu0
      %3949 = vmatprep.mubr.f32.mxu0 0.0
      %v3950 = vand.u32 %v3321, 4294901760
      %3951 = vmatmul.mubr.f32.gmra.mxu0 %v3950
      %v3952 = vpop.f32.mrf.mxu0
      %v3953 = vadd.f32 %v3837, %v3952
      %v3954 = vpop.f32.mrf.mxu0
      %3955 = vdwg.mxu0
      %3956 = vmatprep.subr.mxu0 0.0
      %3957 = vmatpush1.msra.mxu0 0.0
      %3958 = vmatprep.subr.mxu0 0.0
      %3959 = vmatpush1.msra.mxu0 0.0
      %3960 = vmatprep.subr.mxu0 0.0
      %3961 = vmatpush1.msra.mxu0 0.0
      %3962 = vmatprep.subr.mxu0 0.0
      %3963 = vmatpush1.msra.mxu0 0.0
      %3964 = vmatprep.subr.mxu0 0.0
      %3965 = vmatpush1.msra.mxu0 0.0
      %3966 = vmatprep.subr.mxu0 0.0
      %3967 = vmatpush1.msra.mxu0 0.0
      %3968 = vmatprep.subr.mxu0 0.0
      %3969 = vmatpush1.msra.mxu0 0.0
      %3970 = vmatprep.subr.mxu0 0.0
      %3971 = vmatpush1.msra.mxu0 0.0
      %3972 = vmatprep.subr.mxu0 0.0
      %3973 = vmatpush1.msra.mxu0 0.0
      %3974 = vmatprep.subr.mxu0 0.0
      %3975 = vmatpush1.msra.mxu0 0.0
      %3976 = vmatprep.subr.mxu0 0.0
      %3977 = vmatpush1.msra.mxu0 0.0
      %3978 = vmatprep.subr.mxu0 0.0
      %3979 = vmatpush1.msra.mxu0 0.0
      %3980 = vmatprep.subr.mxu0 0.0
      %3981 = vmatpush1.msra.mxu0 0.0
      %3982 = vmatprep.subr.mxu0 0.0
      %3983 = vmatpush1.msra.mxu0 0.0
      %3984 = vmatprep.subr.mxu0 0.0
      %3985 = vmatpush1.msra.mxu0 0.0
      %3986 = vmatprep.subr.mxu0 0.0
      %v3987 = vand.u32 %v2410, 4294901760
      %3988 = vmatpush1.msra.mxu0 %v3987
      %3989 = vmatprep.subr.mxu0 0.0
      %3990 = vmatpush2.msra.mxu0 0.0
      %3991 = vmatprep.subr.mxu0 0.0
      %3992 = vmatpush2.msra.mxu0 0.0
      %3993 = vmatprep.subr.mxu0 0.0
      %3994 = vmatpush2.msra.mxu0 0.0
      %3995 = vmatprep.subr.mxu0 0.0
      %3996 = vmatpush2.msra.mxu0 0.0
      %3997 = vmatprep.subr.mxu0 0.0
      %3998 = vmatpush2.msra.mxu0 0.0
      %3999 = vmatprep.subr.mxu0 0.0
      %4000 = vmatpush2.msra.mxu0 0.0
      %4001 = vmatprep.subr.mxu0 0.0
      %4002 = vmatpush2.msra.mxu0 0.0
      %4003 = vmatprep.subr.mxu0 0.0
      %4004 = vmatpush2.msra.mxu0 0.0
      %4005 = vmatprep.subr.mxu0 0.0
      %4006 = vmatpush2.msra.mxu0 0.0
      %4007 = vmatprep.subr.mxu0 0.0
      %4008 = vmatpush2.msra.mxu0 0.0
      %4009 = vmatprep.subr.mxu0 0.0
      %4010 = vmatpush2.msra.mxu0 0.0
      %4011 = vmatprep.subr.mxu0 0.0
      %4012 = vmatpush2.msra.mxu0 0.0
      %4013 = vmatprep.subr.mxu0 0.0
      %4014 = vmatpush2.msra.mxu0 0.0
      %4015 = vmatprep.subr.mxu0 0.0
      %4016 = vmatpush2.msra.mxu0 0.0
      %4017 = vmatprep.subr.mxu0 0.0
      %4018 = vmatpush2.msra.mxu0 0.0
      %4019 = vmatprep.subr.mxu0 0.0
      %4020 = vmatpush2.msra.mxu0 0.0
      %4021 = vmatprep.mubr.f32.mxu0 0.0
      %v4022 = vand.u32 %v3300, 4294901760
      %4023 = vmatmul.mubr.f32.gmra.mxu0 %v4022
      %v4024 = vpop.f32.mrf.mxu0
      %v4025 = vadd.f32 %v3911, %v4024
      %v4026 = vpop.f32.mrf.mxu0
      %4027 = vmatprep.mubr.f32.mxu0 0.0
      %v4028 = vand.u32 %v3303, 4294901760
      %4029 = vmatmul.mubr.f32.gmra.mxu0 %v4028
      %v4030 = vpop.f32.mrf.mxu0
      %v4031 = vadd.f32 %v3917, %v4030
      %v4032 = vpop.f32.mrf.mxu0
      %4033 = vmatprep.mubr.f32.mxu0 0.0
      %v4034 = vand.u32 %v3306, 4294901760
      %4035 = vmatmul.mubr.f32.gmra.mxu0 %v4034
      %v4036 = vpop.f32.mrf.mxu0
      %v4037 = vadd.f32 %v3923, %v4036
      %v4038 = vpop.f32.mrf.mxu0
      %4039 = vmatprep.mubr.f32.mxu0 0.0
      %v4040 = vand.u32 %v3309, 4294901760
      %4041 = vmatmul.mubr.f32.gmra.mxu0 %v4040
      %v4042 = vpop.f32.mrf.mxu0
      %v4043 = vadd.f32 %v3929, %v4042
      %v4044 = vpop.f32.mrf.mxu0
      %4045 = vmatprep.mubr.f32.mxu0 0.0
      %v4046 = vand.u32 %v3312, 4294901760
      %4047 = vmatmul.mubr.f32.gmra.mxu0 %v4046
      %v4048 = vpop.f32.mrf.mxu0
      %v4049 = vadd.f32 %v3935, %v4048
      %v4050 = vpop.f32.mrf.mxu0
      %4051 = vmatprep.mubr.f32.mxu0 0.0
      %v4052 = vand.u32 %v3315, 4294901760
      %4053 = vmatmul.mubr.f32.gmra.mxu0 %v4052
      %v4054 = vpop.f32.mrf.mxu0
      %v4055 = vadd.f32 %v3941, %v4054
      %v4056 = vpop.f32.mrf.mxu0
      %4057 = vmatprep.mubr.f32.mxu0 0.0
      %v4058 = vand.u32 %v3318, 4294901760
      %4059 = vmatmul.mubr.f32.gmra.mxu0 %v4058
      %v4060 = vpop.f32.mrf.mxu0
      %v4061 = vadd.f32 %v3947, %v4060
      %v4062 = vpop.f32.mrf.mxu0
      %4063 = vmatprep.mubr.f32.mxu0 0.0
      %v4064 = vand.u32 %v3321, 4294901760
      %4065 = vmatmul.mubr.f32.gmra.mxu0 %v4064
      %v4066 = vpop.f32.mrf.mxu0
      %v4067 = vadd.f32 %v3953, %v4066
      %v4068 = vpop.f32.mrf.mxu0
      %4069 = vdwg.mxu0
      %v4070 = vld [vmem:[%s9] sm:$0xff]
      %v4071 = vld [vmem:[%s9 + $0x8] sm:$0xff]
      %v4072 = vld [vmem:[%s9 + $0x10] sm:$0xff]
      %v4073 = vld [vmem:[%s9 + $0x18] sm:$0xff]
      %v4074 = vld [vmem:[%s10] sm:$0x1]
      %v4076 = vlaneseq
      %v4077 = vshrl.u32 %v4076, 7
      %v4078 = vsub.s32 0, %v4077
      %v4079 = vrot.slane %v4074, %v4078
      %4081 = vmatprep.subr.mxu0 0.0
      %4082 = vmatpush1.msra.mxu0 0.0
      %4083 = vmatprep.subr.mxu0 0.0
      %4084 = vmatpush1.msra.mxu0 0.0
      %4085 = vmatprep.subr.mxu0 0.0
      %4086 = vmatpush1.msra.mxu0 0.0
      %4087 = vmatprep.subr.mxu0 0.0
      %4088 = vmatpush1.msra.mxu0 0.0
      %4089 = vmatprep.subr.mxu0 0.0
      %4090 = vmatpush1.msra.mxu0 0.0
      %4091 = vmatprep.subr.mxu0 0.0
      %4092 = vmatpush1.msra.mxu0 0.0
      %4093 = vmatprep.subr.mxu0 0.0
      %4094 = vmatpush1.msra.mxu0 0.0
      %4095 = vmatprep.subr.mxu0 0.0
      %4096 = vmatpush1.msra.mxu0 0.0
      %4097 = vmatprep.subr.mxu0 0.0
      %4098 = vmatpush1.msra.mxu0 0.0
      %4099 = vmatprep.subr.mxu0 0.0
      %4100 = vmatpush1.msra.mxu0 0.0
      %4101 = vmatprep.subr.mxu0 0.0
      %4102 = vmatpush1.msra.mxu0 0.0
      %4103 = vmatprep.subr.mxu0 0.0
      %4104 = vmatpush1.msra.mxu0 0.0
      %4105 = vmatprep.subr.mxu0 0.0
      %v4106 = vand.u32 %v4073, 4294901760
      %4107 = vmatpush1.msra.mxu0 %v4106
      %4108 = vmatprep.subr.mxu0 0.0
      %v4109 = vand.u32 %v4072, 4294901760
      %4110 = vmatpush1.msra.mxu0 %v4109
      %4111 = vmatprep.subr.mxu0 0.0
      %v4112 = vand.u32 %v4071, 4294901760
      %4113 = vmatpush1.msra.mxu0 %v4112
      %4114 = vmatprep.subr.mxu0 0.0
      %v4115 = vand.u32 %v4070, 4294901760
      %4116 = vmatpush1.msra.mxu0 %v4115
      %4117 = vmatprep.subr.mxu0 0.0
      %4118 = vmatpush2.msra.mxu0 0.0
      %4119 = vmatprep.subr.mxu0 0.0
      %4120 = vmatpush2.msra.mxu0 0.0
      %4121 = vmatprep.subr.mxu0 0.0
      %4122 = vmatpush2.msra.mxu0 0.0
      %4123 = vmatprep.subr.mxu0 0.0
      %4124 = vmatpush2.msra.mxu0 0.0
      %4125 = vmatprep.subr.mxu0 0.0
      %4126 = vmatpush2.msra.mxu0 0.0
      %4127 = vmatprep.subr.mxu0 0.0
      %4128 = vmatpush2.msra.mxu0 0.0
      %4129 = vmatprep.subr.mxu0 0.0
      %4130 = vmatpush2.msra.mxu0 0.0
      %4131 = vmatprep.subr.mxu0 0.0
      %4132 = vmatpush2.msra.mxu0 0.0
      %4133 = vmatprep.subr.mxu0 0.0
      %4134 = vmatpush2.msra.mxu0 0.0
      %4135 = vmatprep.subr.mxu0 0.0
      %4136 = vmatpush2.msra.mxu0 0.0
      %4137 = vmatprep.subr.mxu0 0.0
      %4138 = vmatpush2.msra.mxu0 0.0
      %4139 = vmatprep.subr.mxu0 0.0
      %4140 = vmatpush2.msra.mxu0 0.0
      %4141 = vmatprep.subr.mxu0 0.0
      %4142 = vmatpush2.msra.mxu0 0.0
      %4143 = vmatprep.subr.mxu0 0.0
      %4144 = vmatpush2.msra.mxu0 0.0
      %4145 = vmatprep.subr.mxu0 0.0
      %4146 = vmatpush2.msra.mxu0 0.0
      %4147 = vmatprep.subr.mxu0 0.0
      %4148 = vmatpush2.msra.mxu0 0.0
      %4149 = vmatprep.mubr.f32.mxu0 0.0
      %v4150 = vand.u32 %v2413, 4294901760
      %v4151 = vsub.f32 %v2413, %v4150
      %v4152 = vand.u32 %v4151, 4294901760
      %v4153 = vsub.f32 %v4151, %v4152
      %v4154 = vand.u32 %v4153, 4294901760
      %4155 = vmatmul.mubr.f32.gmra.mxu0 %v4154
      %v4156 = vpop.f32.mrf.mxu0
      %v4157 = vadd.f32 %v4079, %v4156
      %v4158 = vpop.f32.mrf.mxu0
      %4159 = vmatprep.mubr.f32.mxu0 0.0
      %v4160 = vand.u32 %v2416, 4294901760
      %v4161 = vsub.f32 %v2416, %v4160
      %v4162 = vand.u32 %v4161, 4294901760
      %v4163 = vsub.f32 %v4161, %v4162
      %v4164 = vand.u32 %v4163, 4294901760
      %4165 = vmatmul.mubr.f32.gmra.mxu0 %v4164
      %v4166 = vpop.f32.mrf.mxu0
      %v4167 = vadd.f32 %v4079, %v4166
      %v4168 = vpop.f32.mrf.mxu0
      %4169 = vmatprep.mubr.f32.mxu0 0.0
      %v4170 = vand.u32 %v2419, 4294901760
      %v4171 = vsub.f32 %v2419, %v4170
      %v4172 = vand.u32 %v4171, 4294901760
      %v4173 = vsub.f32 %v4171, %v4172
      %v4174 = vand.u32 %v4173, 4294901760
      %4175 = vmatmul.mubr.f32.gmra.mxu0 %v4174
      %v4176 = vpop.f32.mrf.mxu0
      %v4177 = vadd.f32 %v4079, %v4176
      %v4178 = vpop.f32.mrf.mxu0
      %4179 = vmatprep.mubr.f32.mxu0 0.0
      %v4180 = vand.u32 %v2422, 4294901760
      %v4181 = vsub.f32 %v2422, %v4180
      %v4182 = vand.u32 %v4181, 4294901760
      %v4183 = vsub.f32 %v4181, %v4182
      %v4184 = vand.u32 %v4183, 4294901760
      %4185 = vmatmul.mubr.f32.gmra.mxu0 %v4184
      %v4186 = vpop.f32.mrf.mxu0
      %v4187 = vadd.f32 %v4079, %v4186
      %v4188 = vpop.f32.mrf.mxu0
      %4189 = vmatprep.mubr.f32.mxu0 0.0
      %v4190 = vand.u32 %v2425, 4294901760
      %v4191 = vsub.f32 %v2425, %v4190
      %v4192 = vand.u32 %v4191, 4294901760
      %v4193 = vsub.f32 %v4191, %v4192
      %v4194 = vand.u32 %v4193, 4294901760
      %4195 = vmatmul.mubr.f32.gmra.mxu0 %v4194
      %v4196 = vpop.f32.mrf.mxu0
      %v4197 = vadd.f32 %v4079, %v4196
      %v4198 = vpop.f32.mrf.mxu0
      %4199 = vmatprep.mubr.f32.mxu0 0.0
      %v4200 = vand.u32 %v2428, 4294901760
      %v4201 = vsub.f32 %v2428, %v4200
      %v4202 = vand.u32 %v4201, 4294901760
      %v4203 = vsub.f32 %v4201, %v4202
      %v4204 = vand.u32 %v4203, 4294901760
      %4205 = vmatmul.mubr.f32.gmra.mxu0 %v4204
      %v4206 = vpop.f32.mrf.mxu0
      %v4207 = vadd.f32 %v4079, %v4206
      %v4208 = vpop.f32.mrf.mxu0
      %4209 = vmatprep.mubr.f32.mxu0 0.0
      %v4210 = vand.u32 %v2431, 4294901760
      %v4211 = vsub.f32 %v2431, %v4210
      %v4212 = vand.u32 %v4211, 4294901760
      %v4213 = vsub.f32 %v4211, %v4212
      %v4214 = vand.u32 %v4213, 4294901760
      %4215 = vmatmul.mubr.f32.gmra.mxu0 %v4214
      %v4216 = vpop.f32.mrf.mxu0
      %v4217 = vadd.f32 %v4079, %v4216
      %v4218 = vpop.f32.mrf.mxu0
      %4219 = vmatprep.mubr.f32.mxu0 0.0
      %v4220 = vand.u32 %v2434, 4294901760
      %v4221 = vsub.f32 %v2434, %v4220
      %v4222 = vand.u32 %v4221, 4294901760
      %v4223 = vsub.f32 %v4221, %v4222
      %v4224 = vand.u32 %v4223, 4294901760
      %4225 = vmatmul.mubr.f32.gmra.mxu0 %v4224
      %v4226 = vpop.f32.mrf.mxu0
      %v4227 = vadd.f32 %v4079, %v4226
      %v4228 = vpop.f32.mrf.mxu0
      %4229 = vdwg.mxu0
      %4230 = vmatprep.subr.mxu0 0.0
      %4231 = vmatpush1.msra.mxu0 0.0
      %4232 = vmatprep.subr.mxu0 0.0
      %4233 = vmatpush1.msra.mxu0 0.0
      %4234 = vmatprep.subr.mxu0 0.0
      %4235 = vmatpush1.msra.mxu0 0.0
      %4236 = vmatprep.subr.mxu0 0.0
      %4237 = vmatpush1.msra.mxu0 0.0
      %4238 = vmatprep.subr.mxu0 0.0
      %4239 = vmatpush1.msra.mxu0 0.0
      %4240 = vmatprep.subr.mxu0 0.0
      %4241 = vmatpush1.msra.mxu0 0.0
      %4242 = vmatprep.subr.mxu0 0.0
      %4243 = vmatpush1.msra.mxu0 0.0
      %4244 = vmatprep.subr.mxu0 0.0
      %4245 = vmatpush1.msra.mxu0 0.0
      %4246 = vmatprep.subr.mxu0 0.0
      %4247 = vmatpush1.msra.mxu0 0.0
      %4248 = vmatprep.subr.mxu0 0.0
      %4249 = vmatpush1.msra.mxu0 0.0
      %4250 = vmatprep.subr.mxu0 0.0
      %4251 = vmatpush1.msra.mxu0 0.0
      %4252 = vmatprep.subr.mxu0 0.0
      %4253 = vmatpush1.msra.mxu0 0.0
      %4254 = vmatprep.subr.mxu0 0.0
      %v4255 = vand.u32 %v4073, 4294901760
      %v4256 = vsub.f32 %v4073, %v4255
      %v4257 = vand.u32 %v4256, 4294901760
      %v4258 = vsub.f32 %v4256, %v4257
      %v4259 = vand.u32 %v4258, 4294901760
      %4260 = vmatpush1.msra.mxu0 %v4259
      %4261 = vmatprep.subr.mxu0 0.0
      %v4262 = vand.u32 %v4072, 4294901760
      %v4263 = vsub.f32 %v4072, %v4262
      %v4264 = vand.u32 %v4263, 4294901760
      %v4265 = vsub.f32 %v4263, %v4264
      %v4266 = vand.u32 %v4265, 4294901760
      %4267 = vmatpush1.msra.mxu0 %v4266
      %4268 = vmatprep.subr.mxu0 0.0
      %v4269 = vand.u32 %v4071, 4294901760
      %v4270 = vsub.f32 %v4071, %v4269
      %v4271 = vand.u32 %v4270, 4294901760
      %v4272 = vsub.f32 %v4270, %v4271
      %v4273 = vand.u32 %v4272, 4294901760
      %4274 = vmatpush1.msra.mxu0 %v4273
      %4275 = vmatprep.subr.mxu0 0.0
      %v4276 = vand.u32 %v4070, 4294901760
      %v4277 = vsub.f32 %v4070, %v4276
      %v4278 = vand.u32 %v4277, 4294901760
      %v4279 = vsub.f32 %v4277, %v4278
      %v4280 = vand.u32 %v4279, 4294901760
      %4281 = vmatpush1.msra.mxu0 %v4280
      %4282 = vmatprep.subr.mxu0 0.0
      %4283 = vmatpush2.msra.mxu0 0.0
      %4284 = vmatprep.subr.mxu0 0.0
      %4285 = vmatpush2.msra.mxu0 0.0
      %4286 = vmatprep.subr.mxu0 0.0
      %4287 = vmatpush2.msra.mxu0 0.0
      %4288 = vmatprep.subr.mxu0 0.0
      %4289 = vmatpush2.msra.mxu0 0.0
      %4290 = vmatprep.subr.mxu0 0.0
      %4291 = vmatpush2.msra.mxu0 0.0
      %4292 = vmatprep.subr.mxu0 0.0
      %4293 = vmatpush2.msra.mxu0 0.0
      %4294 = vmatprep.subr.mxu0 0.0
      %4295 = vmatpush2.msra.mxu0 0.0
      %4296 = vmatprep.subr.mxu0 0.0
      %4297 = vmatpush2.msra.mxu0 0.0
      %4298 = vmatprep.subr.mxu0 0.0
      %4299 = vmatpush2.msra.mxu0 0.0
      %4300 = vmatprep.subr.mxu0 0.0
      %4301 = vmatpush2.msra.mxu0 0.0
      %4302 = vmatprep.subr.mxu0 0.0
      %4303 = vmatpush2.msra.mxu0 0.0
      %4304 = vmatprep.subr.mxu0 0.0
      %4305 = vmatpush2.msra.mxu0 0.0
      %4306 = vmatprep.subr.mxu0 0.0
      %4307 = vmatpush2.msra.mxu0 0.0
      %4308 = vmatprep.subr.mxu0 0.0
      %4309 = vmatpush2.msra.mxu0 0.0
      %4310 = vmatprep.subr.mxu0 0.0
      %4311 = vmatpush2.msra.mxu0 0.0
      %4312 = vmatprep.subr.mxu0 0.0
      %4313 = vmatpush2.msra.mxu0 0.0
      %4314 = vmatprep.mubr.f32.mxu0 0.0
      %v4315 = vand.u32 %v2413, 4294901760
      %4316 = vmatmul.mubr.f32.gmra.mxu0 %v4315
      %v4317 = vpop.f32.mrf.mxu0
      %v4318 = vadd.f32 %v4157, %v4317
      %v4319 = vpop.f32.mrf.mxu0
      %4320 = vmatprep.mubr.f32.mxu0 0.0
      %v4321 = vand.u32 %v2416, 4294901760
      %4322 = vmatmul.mubr.f32.gmra.mxu0 %v4321
      %v4323 = vpop.f32.mrf.mxu0
      %v4324 = vadd.f32 %v4167, %v4323
      %v4325 = vpop.f32.mrf.mxu0
      %4326 = vmatprep.mubr.f32.mxu0 0.0
      %v4327 = vand.u32 %v2419, 4294901760
      %4328 = vmatmul.mubr.f32.gmra.mxu0 %v4327
      %v4329 = vpop.f32.mrf.mxu0
      %v4330 = vadd.f32 %v4177, %v4329
      %v4331 = vpop.f32.mrf.mxu0
      %4332 = vmatprep.mubr.f32.mxu0 0.0
      %v4333 = vand.u32 %v2422, 4294901760
      %4334 = vmatmul.mubr.f32.gmra.mxu0 %v4333
      %v4335 = vpop.f32.mrf.mxu0
      %v4336 = vadd.f32 %v4187, %v4335
      %v4337 = vpop.f32.mrf.mxu0
      %4338 = vmatprep.mubr.f32.mxu0 0.0
      %v4339 = vand.u32 %v2425, 4294901760
      %4340 = vmatmul.mubr.f32.gmra.mxu0 %v4339
      %v4341 = vpop.f32.mrf.mxu0
      %v4342 = vadd.f32 %v4197, %v4341
      %v4343 = vpop.f32.mrf.mxu0
      %4344 = vmatprep.mubr.f32.mxu0 0.0
      %v4345 = vand.u32 %v2428, 4294901760
      %4346 = vmatmul.mubr.f32.gmra.mxu0 %v4345
      %v4347 = vpop.f32.mrf.mxu0
      %v4348 = vadd.f32 %v4207, %v4347
      %v4349 = vpop.f32.mrf.mxu0
      %4350 = vmatprep.mubr.f32.mxu0 0.0
      %v4351 = vand.u32 %v2431, 4294901760
      %4352 = vmatmul.mubr.f32.gmra.mxu0 %v4351
      %v4353 = vpop.f32.mrf.mxu0
      %v4354 = vadd.f32 %v4217, %v4353
      %v4355 = vpop.f32.mrf.mxu0
      %4356 = vmatprep.mubr.f32.mxu0 0.0
      %v4357 = vand.u32 %v2434, 4294901760
      %4358 = vmatmul.mubr.f32.gmra.mxu0 %v4357
      %v4359 = vpop.f32.mrf.mxu0
      %v4360 = vadd.f32 %v4227, %v4359
      %v4361 = vpop.f32.mrf.mxu0
      %4362 = vdwg.mxu0
      %4363 = vmatprep.subr.mxu0 0.0
      %4364 = vmatpush1.msra.mxu0 0.0
      %4365 = vmatprep.subr.mxu0 0.0
      %4366 = vmatpush1.msra.mxu0 0.0
      %4367 = vmatprep.subr.mxu0 0.0
      %4368 = vmatpush1.msra.mxu0 0.0
      %4369 = vmatprep.subr.mxu0 0.0
      %4370 = vmatpush1.msra.mxu0 0.0
      %4371 = vmatprep.subr.mxu0 0.0
      %4372 = vmatpush1.msra.mxu0 0.0
      %4373 = vmatprep.subr.mxu0 0.0
      %4374 = vmatpush1.msra.mxu0 0.0
      %4375 = vmatprep.subr.mxu0 0.0
      %4376 = vmatpush1.msra.mxu0 0.0
      %4377 = vmatprep.subr.mxu0 0.0
      %4378 = vmatpush1.msra.mxu0 0.0
      %4379 = vmatprep.subr.mxu0 0.0
      %4380 = vmatpush1.msra.mxu0 0.0
      %4381 = vmatprep.subr.mxu0 0.0
      %4382 = vmatpush1.msra.mxu0 0.0
      %4383 = vmatprep.subr.mxu0 0.0
      %4384 = vmatpush1.msra.mxu0 0.0
      %4385 = vmatprep.subr.mxu0 0.0
      %4386 = vmatpush1.msra.mxu0 0.0
      %4387 = vmatprep.subr.mxu0 0.0
      %v4388 = vand.u32 %v4073, 4294901760
      %v4389 = vsub.f32 %v4073, %v4388
      %4390 = vmatpush1.msra.mxu0 %v4389
      %4391 = vmatprep.subr.mxu0 0.0
      %v4392 = vand.u32 %v4072, 4294901760
      %v4393 = vsub.f32 %v4072, %v4392
      %4394 = vmatpush1.msra.mxu0 %v4393
      %4395 = vmatprep.subr.mxu0 0.0
      %v4396 = vand.u32 %v4071, 4294901760
      %v4397 = vsub.f32 %v4071, %v4396
      %4398 = vmatpush1.msra.mxu0 %v4397
      %4399 = vmatprep.subr.mxu0 0.0
      %v4400 = vand.u32 %v4070, 4294901760
      %v4401 = vsub.f32 %v4070, %v4400
      %4402 = vmatpush1.msra.mxu0 %v4401
      %4403 = vmatprep.subr.mxu0 0.0
      %4404 = vmatpush2.msra.mxu0 0.0
      %4405 = vmatprep.subr.mxu0 0.0
      %4406 = vmatpush2.msra.mxu0 0.0
      %4407 = vmatprep.subr.mxu0 0.0
      %4408 = vmatpush2.msra.mxu0 0.0
      %4409 = vmatprep.subr.mxu0 0.0
      %4410 = vmatpush2.msra.mxu0 0.0
      %4411 = vmatprep.subr.mxu0 0.0
      %4412 = vmatpush2.msra.mxu0 0.0
      %4413 = vmatprep.subr.mxu0 0.0
      %4414 = vmatpush2.msra.mxu0 0.0
      %4415 = vmatprep.subr.mxu0 0.0
      %4416 = vmatpush2.msra.mxu0 0.0
      %4417 = vmatprep.subr.mxu0 0.0
      %4418 = vmatpush2.msra.mxu0 0.0
      %4419 = vmatprep.subr.mxu0 0.0
      %4420 = vmatpush2.msra.mxu0 0.0
      %4421 = vmatprep.subr.mxu0 0.0
      %4422 = vmatpush2.msra.mxu0 0.0
      %4423 = vmatprep.subr.mxu0 0.0
      %4424 = vmatpush2.msra.mxu0 0.0
      %4425 = vmatprep.subr.mxu0 0.0
      %4426 = vmatpush2.msra.mxu0 0.0
      %4427 = vmatprep.subr.mxu0 0.0
      %4428 = vmatpush2.msra.mxu0 0.0
      %4429 = vmatprep.subr.mxu0 0.0
      %4430 = vmatpush2.msra.mxu0 0.0
      %4431 = vmatprep.subr.mxu0 0.0
      %4432 = vmatpush2.msra.mxu0 0.0
      %4433 = vmatprep.subr.mxu0 0.0
      %4434 = vmatpush2.msra.mxu0 0.0
      %4435 = vmatprep.mubr.f32.mxu0 0.0
      %v4436 = vand.u32 %v2413, 4294901760
      %v4437 = vsub.f32 %v2413, %v4436
      %4438 = vmatmul.mubr.f32.gmra.mxu0 %v4437
      %v4439 = vpop.f32.mrf.mxu0
      %v4440 = vadd.f32 %v4318, %v4439
      %v4441 = vpop.f32.mrf.mxu0
      %4442 = vmatprep.mubr.f32.mxu0 0.0
      %v4443 = vand.u32 %v2416, 4294901760
      %v4444 = vsub.f32 %v2416, %v4443
      %4445 = vmatmul.mubr.f32.gmra.mxu0 %v4444
      %v4446 = vpop.f32.mrf.mxu0
      %v4447 = vadd.f32 %v4324, %v4446
      %v4448 = vpop.f32.mrf.mxu0
      %4449 = vmatprep.mubr.f32.mxu0 0.0
      %v4450 = vand.u32 %v2419, 4294901760
      %v4451 = vsub.f32 %v2419, %v4450
      %4452 = vmatmul.mubr.f32.gmra.mxu0 %v4451
      %v4453 = vpop.f32.mrf.mxu0
      %v4454 = vadd.f32 %v4330, %v4453
      %v4455 = vpop.f32.mrf.mxu0
      %4456 = vmatprep.mubr.f32.mxu0 0.0
      %v4457 = vand.u32 %v2422, 4294901760
      %v4458 = vsub.f32 %v2422, %v4457
      %4459 = vmatmul.mubr.f32.gmra.mxu0 %v4458
      %v4460 = vpop.f32.mrf.mxu0
      %v4461 = vadd.f32 %v4336, %v4460
      %v4462 = vpop.f32.mrf.mxu0
      %4463 = vmatprep.mubr.f32.mxu0 0.0
      %v4464 = vand.u32 %v2425, 4294901760
      %v4465 = vsub.f32 %v2425, %v4464
      %4466 = vmatmul.mubr.f32.gmra.mxu0 %v4465
      %v4467 = vpop.f32.mrf.mxu0
      %v4468 = vadd.f32 %v4342, %v4467
      %v4469 = vpop.f32.mrf.mxu0
      %4470 = vmatprep.mubr.f32.mxu0 0.0
      %v4471 = vand.u32 %v2428, 4294901760
      %v4472 = vsub.f32 %v2428, %v4471
      %4473 = vmatmul.mubr.f32.gmra.mxu0 %v4472
      %v4474 = vpop.f32.mrf.mxu0
      %v4475 = vadd.f32 %v4348, %v4474
      %v4476 = vpop.f32.mrf.mxu0
      %4477 = vmatprep.mubr.f32.mxu0 0.0
      %v4478 = vand.u32 %v2431, 4294901760
      %v4479 = vsub.f32 %v2431, %v4478
      %4480 = vmatmul.mubr.f32.gmra.mxu0 %v4479
      %v4481 = vpop.f32.mrf.mxu0
      %v4482 = vadd.f32 %v4354, %v4481
      %v4483 = vpop.f32.mrf.mxu0
      %4484 = vmatprep.mubr.f32.mxu0 0.0
      %v4485 = vand.u32 %v2434, 4294901760
      %v4486 = vsub.f32 %v2434, %v4485
      %4487 = vmatmul.mubr.f32.gmra.mxu0 %v4486
      %v4488 = vpop.f32.mrf.mxu0
      %v4489 = vadd.f32 %v4360, %v4488
      %v4490 = vpop.f32.mrf.mxu0
      %4491 = vdwg.mxu0
      %4492 = vmatprep.subr.mxu0 0.0
      %4493 = vmatpush1.msra.mxu0 0.0
      %4494 = vmatprep.subr.mxu0 0.0
      %4495 = vmatpush1.msra.mxu0 0.0
      %4496 = vmatprep.subr.mxu0 0.0
      %4497 = vmatpush1.msra.mxu0 0.0
      %4498 = vmatprep.subr.mxu0 0.0
      %4499 = vmatpush1.msra.mxu0 0.0
      %4500 = vmatprep.subr.mxu0 0.0
      %4501 = vmatpush1.msra.mxu0 0.0
      %4502 = vmatprep.subr.mxu0 0.0
      %4503 = vmatpush1.msra.mxu0 0.0
      %4504 = vmatprep.subr.mxu0 0.0
      %4505 = vmatpush1.msra.mxu0 0.0
      %4506 = vmatprep.subr.mxu0 0.0
      %4507 = vmatpush1.msra.mxu0 0.0
      %4508 = vmatprep.subr.mxu0 0.0
      %4509 = vmatpush1.msra.mxu0 0.0
      %4510 = vmatprep.subr.mxu0 0.0
      %4511 = vmatpush1.msra.mxu0 0.0
      %4512 = vmatprep.subr.mxu0 0.0
      %4513 = vmatpush1.msra.mxu0 0.0
      %4514 = vmatprep.subr.mxu0 0.0
      %4515 = vmatpush1.msra.mxu0 0.0
      %4516 = vmatprep.subr.mxu0 0.0
      %v4517 = vand.u32 %v4073, 4294901760
      %4518 = vmatpush1.msra.mxu0 %v4517
      %4519 = vmatprep.subr.mxu0 0.0
      %v4520 = vand.u32 %v4072, 4294901760
      %4521 = vmatpush1.msra.mxu0 %v4520
      %4522 = vmatprep.subr.mxu0 0.0
      %v4523 = vand.u32 %v4071, 4294901760
      %4524 = vmatpush1.msra.mxu0 %v4523
      %4525 = vmatprep.subr.mxu0 0.0
      %v4526 = vand.u32 %v4070, 4294901760
      %4527 = vmatpush1.msra.mxu0 %v4526
      %4528 = vmatprep.subr.mxu0 0.0
      %4529 = vmatpush2.msra.mxu0 0.0
      %4530 = vmatprep.subr.mxu0 0.0
      %4531 = vmatpush2.msra.mxu0 0.0
      %4532 = vmatprep.subr.mxu0 0.0
      %4533 = vmatpush2.msra.mxu0 0.0
      %4534 = vmatprep.subr.mxu0 0.0
      %4535 = vmatpush2.msra.mxu0 0.0
      %4536 = vmatprep.subr.mxu0 0.0
      %4537 = vmatpush2.msra.mxu0 0.0
      %4538 = vmatprep.subr.mxu0 0.0
      %4539 = vmatpush2.msra.mxu0 0.0
      %4540 = vmatprep.subr.mxu0 0.0
      %4541 = vmatpush2.msra.mxu0 0.0
      %4542 = vmatprep.subr.mxu0 0.0
      %4543 = vmatpush2.msra.mxu0 0.0
      %4544 = vmatprep.subr.mxu0 0.0
      %4545 = vmatpush2.msra.mxu0 0.0
      %4546 = vmatprep.subr.mxu0 0.0
      %4547 = vmatpush2.msra.mxu0 0.0
      %4548 = vmatprep.subr.mxu0 0.0
      %4549 = vmatpush2.msra.mxu0 0.0
      %4550 = vmatprep.subr.mxu0 0.0
      %4551 = vmatpush2.msra.mxu0 0.0
      %4552 = vmatprep.subr.mxu0 0.0
      %4553 = vmatpush2.msra.mxu0 0.0
      %4554 = vmatprep.subr.mxu0 0.0
      %4555 = vmatpush2.msra.mxu0 0.0
      %4556 = vmatprep.subr.mxu0 0.0
      %4557 = vmatpush2.msra.mxu0 0.0
      %4558 = vmatprep.subr.mxu0 0.0
      %4559 = vmatpush2.msra.mxu0 0.0
      %4560 = vmatprep.mubr.f32.mxu0 0.0
      %v4561 = vand.u32 %v2413, 4294901760
      %v4562 = vsub.f32 %v2413, %v4561
      %v4563 = vand.u32 %v4562, 4294901760
      %4564 = vmatmul.mubr.f32.gmra.mxu0 %v4563
      %v4565 = vpop.f32.mrf.mxu0
      %v4566 = vadd.f32 %v4440, %v4565
      %v4567 = vpop.f32.mrf.mxu0
      %4568 = vmatprep.mubr.f32.mxu0 0.0
      %v4569 = vand.u32 %v2416, 4294901760
      %v4570 = vsub.f32 %v2416, %v4569
      %v4571 = vand.u32 %v4570, 4294901760
      %4572 = vmatmul.mubr.f32.gmra.mxu0 %v4571
      %v4573 = vpop.f32.mrf.mxu0
      %v4574 = vadd.f32 %v4447, %v4573
      %v4575 = vpop.f32.mrf.mxu0
      %4576 = vmatprep.mubr.f32.mxu0 0.0
      %v4577 = vand.u32 %v2419, 4294901760
      %v4578 = vsub.f32 %v2419, %v4577
      %v4579 = vand.u32 %v4578, 4294901760
      %4580 = vmatmul.mubr.f32.gmra.mxu0 %v4579
      %v4581 = vpop.f32.mrf.mxu0
      %v4582 = vadd.f32 %v4454, %v4581
      %v4583 = vpop.f32.mrf.mxu0
      %4584 = vmatprep.mubr.f32.mxu0 0.0
      %v4585 = vand.u32 %v2422, 4294901760
      %v4586 = vsub.f32 %v2422, %v4585
      %v4587 = vand.u32 %v4586, 4294901760
      %4588 = vmatmul.mubr.f32.gmra.mxu0 %v4587
      %v4589 = vpop.f32.mrf.mxu0
      %v4590 = vadd.f32 %v4461, %v4589
      %v4591 = vpop.f32.mrf.mxu0
      %4592 = vmatprep.mubr.f32.mxu0 0.0
      %v4593 = vand.u32 %v2425, 4294901760
      %v4594 = vsub.f32 %v2425, %v4593
      %v4595 = vand.u32 %v4594, 4294901760
      %4596 = vmatmul.mubr.f32.gmra.mxu0 %v4595
      %v4597 = vpop.f32.mrf.mxu0
      %v4598 = vadd.f32 %v4468, %v4597
      %v4599 = vpop.f32.mrf.mxu0
      %4600 = vmatprep.mubr.f32.mxu0 0.0
      %v4601 = vand.u32 %v2428, 4294901760
      %v4602 = vsub.f32 %v2428, %v4601
      %v4603 = vand.u32 %v4602, 4294901760
      %4604 = vmatmul.mubr.f32.gmra.mxu0 %v4603
      %v4605 = vpop.f32.mrf.mxu0
      %v4606 = vadd.f32 %v4475, %v4605
      %v4607 = vpop.f32.mrf.mxu0
      %4608 = vmatprep.mubr.f32.mxu0 0.0
      %v4609 = vand.u32 %v2431, 4294901760
      %v4610 = vsub.f32 %v2431, %v4609
      %v4611 = vand.u32 %v4610, 4294901760
      %4612 = vmatmul.mubr.f32.gmra.mxu0 %v4611
      %v4613 = vpop.f32.mrf.mxu0
      %v4614 = vadd.f32 %v4482, %v4613
      %v4615 = vpop.f32.mrf.mxu0
      %4616 = vmatprep.mubr.f32.mxu0 0.0
      %v4617 = vand.u32 %v2434, 4294901760
      %v4618 = vsub.f32 %v2434, %v4617
      %v4619 = vand.u32 %v4618, 4294901760
      %4620 = vmatmul.mubr.f32.gmra.mxu0 %v4619
      %v4621 = vpop.f32.mrf.mxu0
      %v4622 = vadd.f32 %v4489, %v4621
      %v4623 = vpop.f32.mrf.mxu0
      %4624 = vdwg.mxu0
      %4625 = vmatprep.subr.mxu0 0.0
      %4626 = vmatpush1.msra.mxu0 0.0
      %4627 = vmatprep.subr.mxu0 0.0
      %4628 = vmatpush1.msra.mxu0 0.0
      %4629 = vmatprep.subr.mxu0 0.0
      %4630 = vmatpush1.msra.mxu0 0.0
      %4631 = vmatprep.subr.mxu0 0.0
      %4632 = vmatpush1.msra.mxu0 0.0
      %4633 = vmatprep.subr.mxu0 0.0
      %4634 = vmatpush1.msra.mxu0 0.0
      %4635 = vmatprep.subr.mxu0 0.0
      %4636 = vmatpush1.msra.mxu0 0.0
      %4637 = vmatprep.subr.mxu0 0.0
      %4638 = vmatpush1.msra.mxu0 0.0
      %4639 = vmatprep.subr.mxu0 0.0
      %4640 = vmatpush1.msra.mxu0 0.0
      %4641 = vmatprep.subr.mxu0 0.0
      %4642 = vmatpush1.msra.mxu0 0.0
      %4643 = vmatprep.subr.mxu0 0.0
      %4644 = vmatpush1.msra.mxu0 0.0
      %4645 = vmatprep.subr.mxu0 0.0
      %4646 = vmatpush1.msra.mxu0 0.0
      %4647 = vmatprep.subr.mxu0 0.0
      %4648 = vmatpush1.msra.mxu0 0.0
      %4649 = vmatprep.subr.mxu0 0.0
      %v4650 = vand.u32 %v4073, 4294901760
      %v4651 = vsub.f32 %v4073, %v4650
      %v4652 = vand.u32 %v4651, 4294901760
      %4653 = vmatpush1.msra.mxu0 %v4652
      %4654 = vmatprep.subr.mxu0 0.0
      %v4655 = vand.u32 %v4072, 4294901760
      %v4656 = vsub.f32 %v4072, %v4655
      %v4657 = vand.u32 %v4656, 4294901760
      %4658 = vmatpush1.msra.mxu0 %v4657
      %4659 = vmatprep.subr.mxu0 0.0
      %v4660 = vand.u32 %v4071, 4294901760
      %v4661 = vsub.f32 %v4071, %v4660
      %v4662 = vand.u32 %v4661, 4294901760
      %4663 = vmatpush1.msra.mxu0 %v4662
      %4664 = vmatprep.subr.mxu0 0.0
      %v4665 = vand.u32 %v4070, 4294901760
      %v4666 = vsub.f32 %v4070, %v4665
      %v4667 = vand.u32 %v4666, 4294901760
      %4668 = vmatpush1.msra.mxu0 %v4667
      %4669 = vmatprep.subr.mxu0 0.0
      %4670 = vmatpush2.msra.mxu0 0.0
      %4671 = vmatprep.subr.mxu0 0.0
      %4672 = vmatpush2.msra.mxu0 0.0
      %4673 = vmatprep.subr.mxu0 0.0
      %4674 = vmatpush2.msra.mxu0 0.0
      %4675 = vmatprep.subr.mxu0 0.0
      %4676 = vmatpush2.msra.mxu0 0.0
      %4677 = vmatprep.subr.mxu0 0.0
      %4678 = vmatpush2.msra.mxu0 0.0
      %4679 = vmatprep.subr.mxu0 0.0
      %4680 = vmatpush2.msra.mxu0 0.0
      %4681 = vmatprep.subr.mxu0 0.0
      %4682 = vmatpush2.msra.mxu0 0.0
      %4683 = vmatprep.subr.mxu0 0.0
      %4684 = vmatpush2.msra.mxu0 0.0
      %4685 = vmatprep.subr.mxu0 0.0
      %4686 = vmatpush2.msra.mxu0 0.0
      %4687 = vmatprep.subr.mxu0 0.0
      %4688 = vmatpush2.msra.mxu0 0.0
      %4689 = vmatprep.subr.mxu0 0.0
      %4690 = vmatpush2.msra.mxu0 0.0
      %4691 = vmatprep.subr.mxu0 0.0
      %4692 = vmatpush2.msra.mxu0 0.0
      %4693 = vmatprep.subr.mxu0 0.0
      %4694 = vmatpush2.msra.mxu0 0.0
      %4695 = vmatprep.subr.mxu0 0.0
      %4696 = vmatpush2.msra.mxu0 0.0
      %4697 = vmatprep.subr.mxu0 0.0
      %4698 = vmatpush2.msra.mxu0 0.0
      %4699 = vmatprep.subr.mxu0 0.0
      %4700 = vmatpush2.msra.mxu0 0.0
      %4701 = vmatprep.mubr.f32.mxu0 0.0
      %v4702 = vand.u32 %v2413, 4294901760
      %4703 = vmatmul.mubr.f32.gmra.mxu0 %v4702
      %v4704 = vpop.f32.mrf.mxu0
      %v4705 = vadd.f32 %v4566, %v4704
      %v4706 = vpop.f32.mrf.mxu0
      %4707 = vmatprep.mubr.f32.mxu0 0.0
      %v4708 = vand.u32 %v2416, 4294901760
      %4709 = vmatmul.mubr.f32.gmra.mxu0 %v4708
      %v4710 = vpop.f32.mrf.mxu0
      %v4711 = vadd.f32 %v4574, %v4710
      %v4712 = vpop.f32.mrf.mxu0
      %4713 = vmatprep.mubr.f32.mxu0 0.0
      %v4714 = vand.u32 %v2419, 4294901760
      %4715 = vmatmul.mubr.f32.gmra.mxu0 %v4714
      %v4716 = vpop.f32.mrf.mxu0
      %v4717 = vadd.f32 %v4582, %v4716
      %v4718 = vpop.f32.mrf.mxu0
      %4719 = vmatprep.mubr.f32.mxu0 0.0
      %v4720 = vand.u32 %v2422, 4294901760
      %4721 = vmatmul.mubr.f32.gmra.mxu0 %v4720
      %v4722 = vpop.f32.mrf.mxu0
      %v4723 = vadd.f32 %v4590, %v4722
      %v4724 = vpop.f32.mrf.mxu0
      %4725 = vmatprep.mubr.f32.mxu0 0.0
      %v4726 = vand.u32 %v2425, 4294901760
      %4727 = vmatmul.mubr.f32.gmra.mxu0 %v4726
      %v4728 = vpop.f32.mrf.mxu0
      %v4729 = vadd.f32 %v4598, %v4728
      %v4730 = vpop.f32.mrf.mxu0
      %4731 = vmatprep.mubr.f32.mxu0 0.0
      %v4732 = vand.u32 %v2428, 4294901760
      %4733 = vmatmul.mubr.f32.gmra.mxu0 %v4732
      %v4734 = vpop.f32.mrf.mxu0
      %v4735 = vadd.f32 %v4606, %v4734
      %v4736 = vpop.f32.mrf.mxu0
      %4737 = vmatprep.mubr.f32.mxu0 0.0
      %v4738 = vand.u32 %v2431, 4294901760
      %4739 = vmatmul.mubr.f32.gmra.mxu0 %v4738
      %v4740 = vpop.f32.mrf.mxu0
      %v4741 = vadd.f32 %v4614, %v4740
      %v4742 = vpop.f32.mrf.mxu0
      %4743 = vmatprep.mubr.f32.mxu0 0.0
      %v4744 = vand.u32 %v2434, 4294901760
      %4745 = vmatmul.mubr.f32.gmra.mxu0 %v4744
      %v4746 = vpop.f32.mrf.mxu0
      %v4747 = vadd.f32 %v4622, %v4746
      %v4748 = vpop.f32.mrf.mxu0
      %4749 = vdwg.mxu0
      %4750 = vmatprep.subr.mxu0 0.0
      %4751 = vmatpush1.msra.mxu0 0.0
      %4752 = vmatprep.subr.mxu0 0.0
      %4753 = vmatpush1.msra.mxu0 0.0
      %4754 = vmatprep.subr.mxu0 0.0
      %4755 = vmatpush1.msra.mxu0 0.0
      %4756 = vmatprep.subr.mxu0 0.0
      %4757 = vmatpush1.msra.mxu0 0.0
      %4758 = vmatprep.subr.mxu0 0.0
      %4759 = vmatpush1.msra.mxu0 0.0
      %4760 = vmatprep.subr.mxu0 0.0
      %4761 = vmatpush1.msra.mxu0 0.0
      %4762 = vmatprep.subr.mxu0 0.0
      %4763 = vmatpush1.msra.mxu0 0.0
      %4764 = vmatprep.subr.mxu0 0.0
      %4765 = vmatpush1.msra.mxu0 0.0
      %4766 = vmatprep.subr.mxu0 0.0
      %4767 = vmatpush1.msra.mxu0 0.0
      %4768 = vmatprep.subr.mxu0 0.0
      %4769 = vmatpush1.msra.mxu0 0.0
      %4770 = vmatprep.subr.mxu0 0.0
      %4771 = vmatpush1.msra.mxu0 0.0
      %4772 = vmatprep.subr.mxu0 0.0
      %4773 = vmatpush1.msra.mxu0 0.0
      %4774 = vmatprep.subr.mxu0 0.0
      %v4775 = vand.u32 %v4073, 4294901760
      %4776 = vmatpush1.msra.mxu0 %v4775
      %4777 = vmatprep.subr.mxu0 0.0
      %v4778 = vand.u32 %v4072, 4294901760
      %4779 = vmatpush1.msra.mxu0 %v4778
      %4780 = vmatprep.subr.mxu0 0.0
      %v4781 = vand.u32 %v4071, 4294901760
      %4782 = vmatpush1.msra.mxu0 %v4781
      %4783 = vmatprep.subr.mxu0 0.0
      %v4784 = vand.u32 %v4070, 4294901760
      %4785 = vmatpush1.msra.mxu0 %v4784
      %4786 = vmatprep.subr.mxu0 0.0
      %4787 = vmatpush2.msra.mxu0 0.0
      %4788 = vmatprep.subr.mxu0 0.0
      %4789 = vmatpush2.msra.mxu0 0.0
      %4790 = vmatprep.subr.mxu0 0.0
      %4791 = vmatpush2.msra.mxu0 0.0
      %4792 = vmatprep.subr.mxu0 0.0
      %4793 = vmatpush2.msra.mxu0 0.0
      %4794 = vmatprep.subr.mxu0 0.0
      %4795 = vmatpush2.msra.mxu0 0.0
      %4796 = vmatprep.subr.mxu0 0.0
      %4797 = vmatpush2.msra.mxu0 0.0
      %4798 = vmatprep.subr.mxu0 0.0
      %4799 = vmatpush2.msra.mxu0 0.0
      %4800 = vmatprep.subr.mxu0 0.0
      %4801 = vmatpush2.msra.mxu0 0.0
      %4802 = vmatprep.subr.mxu0 0.0
      %4803 = vmatpush2.msra.mxu0 0.0
      %4804 = vmatprep.subr.mxu0 0.0
      %4805 = vmatpush2.msra.mxu0 0.0
      %4806 = vmatprep.subr.mxu0 0.0
      %4807 = vmatpush2.msra.mxu0 0.0
      %4808 = vmatprep.subr.mxu0 0.0
      %4809 = vmatpush2.msra.mxu0 0.0
      %4810 = vmatprep.subr.mxu0 0.0
      %4811 = vmatpush2.msra.mxu0 0.0
      %4812 = vmatprep.subr.mxu0 0.0
      %4813 = vmatpush2.msra.mxu0 0.0
      %4814 = vmatprep.subr.mxu0 0.0
      %4815 = vmatpush2.msra.mxu0 0.0
      %4816 = vmatprep.subr.mxu0 0.0
      %4817 = vmatpush2.msra.mxu0 0.0
      %4818 = vmatprep.mubr.f32.mxu0 0.0
      %v4819 = vand.u32 %v2413, 4294901760
      %4820 = vmatmul.mubr.f32.gmra.mxu0 %v4819
      %v4821 = vpop.f32.mrf.mxu0
      %v4822 = vadd.f32 %v4705, %v4821
      %v4823 = vpop.f32.mrf.mxu0
      %4824 = vmatprep.mubr.f32.mxu0 0.0
      %v4825 = vand.u32 %v2416, 4294901760
      %4826 = vmatmul.mubr.f32.gmra.mxu0 %v4825
      %v4827 = vpop.f32.mrf.mxu0
      %v4828 = vadd.f32 %v4711, %v4827
      %v4829 = vpop.f32.mrf.mxu0
      %4830 = vmatprep.mubr.f32.mxu0 0.0
      %v4831 = vand.u32 %v2419, 4294901760
      %4832 = vmatmul.mubr.f32.gmra.mxu0 %v4831
      %v4833 = vpop.f32.mrf.mxu0
      %v4834 = vadd.f32 %v4717, %v4833
      %v4835 = vpop.f32.mrf.mxu0
      %4836 = vmatprep.mubr.f32.mxu0 0.0
      %v4837 = vand.u32 %v2422, 4294901760
      %4838 = vmatmul.mubr.f32.gmra.mxu0 %v4837
      %v4839 = vpop.f32.mrf.mxu0
      %v4840 = vadd.f32 %v4723, %v4839
      %v4841 = vpop.f32.mrf.mxu0
      %4842 = vmatprep.mubr.f32.mxu0 0.0
      %v4843 = vand.u32 %v2425, 4294901760
      %4844 = vmatmul.mubr.f32.gmra.mxu0 %v4843
      %v4845 = vpop.f32.mrf.mxu0
      %v4846 = vadd.f32 %v4729, %v4845
      %v4847 = vpop.f32.mrf.mxu0
      %4848 = vmatprep.mubr.f32.mxu0 0.0
      %v4849 = vand.u32 %v2428, 4294901760
      %4850 = vmatmul.mubr.f32.gmra.mxu0 %v4849
      %v4851 = vpop.f32.mrf.mxu0
      %v4852 = vadd.f32 %v4735, %v4851
      %v4853 = vpop.f32.mrf.mxu0
      %4854 = vmatprep.mubr.f32.mxu0 0.0
      %v4855 = vand.u32 %v2431, 4294901760
      %4856 = vmatmul.mubr.f32.gmra.mxu0 %v4855
      %v4857 = vpop.f32.mrf.mxu0
      %v4858 = vadd.f32 %v4741, %v4857
      %v4859 = vpop.f32.mrf.mxu0
      %4860 = vmatprep.mubr.f32.mxu0 0.0
      %v4861 = vand.u32 %v2434, 4294901760
      %4862 = vmatmul.mubr.f32.gmra.mxu0 %v4861
      %v4863 = vpop.f32.mrf.mxu0
      %v4864 = vadd.f32 %v4747, %v4863
      %v4865 = vpop.f32.mrf.mxu0
      %4866 = vdwg.mxu0
      %v4867 = vsel %vm2411, %v4822, 0.0
      %v4868 = vsel %vm2411, %v4828, 0.0
      %v4869 = vadd.f32 %v4867, %v4868
      %v4870 = vsel %vm2411, %v4834, 0.0
      %v4871 = vadd.f32 %v4869, %v4870
      %v4872 = vsel %vm2411, %v4840, 0.0
      %v4873 = vadd.f32 %v4871, %v4872
      %v4874 = vsel %vm2411, %v4846, 0.0
      %v4875 = vadd.f32 %v4873, %v4874
      %v4876 = vsel %vm2411, %v4852, 0.0
      %v4877 = vadd.f32 %v4875, %v4876
      %v4878 = vsel %vm2411, %v4858, 0.0
      %v4879 = vadd.f32 %v4877, %v4878
      %v4880 = vsel %vm2411, %v4864, 0.0
      %v4881 = vadd.f32 %v4879, %v4880
      %v4882 = vrot.slane %v4881, 4
      %v4883 = vadd.f32 %v4881, %v4882
      %v4884 = vrot.slane %v4883, 2
      %v4885 = vadd.f32 %v4883, %v4884
      %v4886 = vrot.slane %v4885, 1
      %v4887 = vadd.f32 %v4885, %v4886
      %v4888 = vrcp.pop 64.0
      %v4889 = vmul.f32 %v4887, %v4888
      %v4890 = vsub.f32 %v4822, %v4889
      %v4891 = vsub.f32 %v4828, %v4889
      %v4892 = vsub.f32 %v4834, %v4889
      %v4893 = vsub.f32 %v4840, %v4889
      %v4894 = vsub.f32 %v4846, %v4889
      %v4895 = vsub.f32 %v4852, %v4889
      %v4896 = vsub.f32 %v4858, %v4889
      %v4897 = vsub.f32 %v4864, %v4889
      %v4898 = vmul.f32 %v4890, %v4890
      %v4899 = vmul.f32 %v4891, %v4891
      %v4900 = vmul.f32 %v4892, %v4892
      %v4901 = vmul.f32 %v4893, %v4893
      %v4902 = vmul.f32 %v4894, %v4894
      %v4903 = vmul.f32 %v4895, %v4895
      %v4904 = vmul.f32 %v4896, %v4896
      %v4905 = vmul.f32 %v4897, %v4897
      %v4906 = vsel %vm2411, %v4898, 0.0
      %v4907 = vsel %vm2411, %v4899, 0.0
      %v4908 = vadd.f32 %v4906, %v4907
      %v4909 = vsel %vm2411, %v4900, 0.0
      %v4910 = vadd.f32 %v4908, %v4909
      %v4911 = vsel %vm2411, %v4901, 0.0
      %v4912 = vadd.f32 %v4910, %v4911
      %v4913 = vsel %vm2411, %v4902, 0.0
      %v4914 = vadd.f32 %v4912, %v4913
      %v4915 = vsel %vm2411, %v4903, 0.0
      %v4916 = vadd.f32 %v4914, %v4915
      %v4917 = vsel %vm2411, %v4904, 0.0
      %v4918 = vadd.f32 %v4916, %v4917
      %v4919 = vsel %vm2411, %v4905, 0.0
      %v4920 = vadd.f32 %v4918, %v4919
      %v4921 = vrot.slane %v4920, 4
      %v4922 = vadd.f32 %v4920, %v4921
      %v4923 = vrot.slane %v4922, 2
      %v4924 = vadd.f32 %v4922, %v4923
      %v4925 = vrot.slane %v4924, 1
      %v4926 = vadd.f32 %v4924, %v4925
      %v4927 = vmul.f32 %v4926, %v4888
      %v4928 = vadd.f32 %v4927, 1e-05
      %v4929 = vrsqrt.pop %v4928
      %v4930 = vmul.f32 %v4890, %v4929
      %v4931 = vmul.f32 %v4891, %v4929
      %v4932 = vmul.f32 %v4892, %v4929
      %v4933 = vmul.f32 %v4893, %v4929
      %v4934 = vmul.f32 %v4894, %v4929
      %v4935 = vmul.f32 %v4895, %v4929
      %v4936 = vmul.f32 %v4896, %v4929
      %v4937 = vmul.f32 %v4897, %v4929
      %v4938 = vld [vmem:[%s11] sm:$0xff]
      %v4939 = vld [vmem:[%s11 + $0x8] sm:$0xff]
      %v4940 = vld [vmem:[%s11 + $0x10] sm:$0xff]
      %v4941 = vld [vmem:[%s11 + $0x18] sm:$0xff]
      %v4942 = vld [vmem:[%s12] sm:$0x1]
      %v4944 = vlaneseq
      %v4945 = vshrl.u32 %v4944, 7
      %v4946 = vsub.s32 0, %v4945
      %v4947 = vrot.slane %v4942, %v4946
      %v4950 = vsel %vm2411, %v4025, 0
      %v4953 = vsel %vm2411, %v4031, 0
      %v4956 = vsel %vm2411, %v4037, 0
      %v4959 = vsel %vm2411, %v4043, 0
      %v4962 = vsel %vm2411, %v4049, 0
      %v4965 = vsel %vm2411, %v4055, 0
      %v4968 = vsel %vm2411, %v4061, 0
      %v4971 = vsel %vm2411, %v4067, 0
      %4973 = vmatprep.subr.mxu0 0.0
      %4974 = vmatpush1.msra.mxu0 0.0
      %4975 = vmatprep.subr.mxu0 0.0
      %4976 = vmatpush1.msra.mxu0 0.0
      %4977 = vmatprep.subr.mxu0 0.0
      %4978 = vmatpush1.msra.mxu0 0.0
      %4979 = vmatprep.subr.mxu0 0.0
      %4980 = vmatpush1.msra.mxu0 0.0
      %4981 = vmatprep.subr.mxu0 0.0
      %4982 = vmatpush1.msra.mxu0 0.0
      %4983 = vmatprep.subr.mxu0 0.0
      %4984 = vmatpush1.msra.mxu0 0.0
      %4985 = vmatprep.subr.mxu0 0.0
      %4986 = vmatpush1.msra.mxu0 0.0
      %4987 = vmatprep.subr.mxu0 0.0
      %4988 = vmatpush1.msra.mxu0 0.0
      %4989 = vmatprep.subr.mxu0 0.0
      %4990 = vmatpush1.msra.mxu0 0.0
      %4991 = vmatprep.subr.mxu0 0.0
      %4992 = vmatpush1.msra.mxu0 0.0
      %4993 = vmatprep.subr.mxu0 0.0
      %4994 = vmatpush1.msra.mxu0 0.0
      %4995 = vmatprep.subr.mxu0 0.0
      %4996 = vmatpush1.msra.mxu0 0.0
      %4997 = vmatprep.subr.mxu0 0.0
      %v4998 = vand.u32 %v4941, 4294901760
      %4999 = vmatpush1.msra.mxu0 %v4998
      %5000 = vmatprep.subr.mxu0 0.0
      %v5001 = vand.u32 %v4940, 4294901760
      %5002 = vmatpush1.msra.mxu0 %v5001
      %5003 = vmatprep.subr.mxu0 0.0
      %v5004 = vand.u32 %v4939, 4294901760
      %5005 = vmatpush1.msra.mxu0 %v5004
      %5006 = vmatprep.subr.mxu0 0.0
      %v5007 = vand.u32 %v4938, 4294901760
      %5008 = vmatpush1.msra.mxu0 %v5007
      %5009 = vmatprep.subr.mxu0 0.0
      %5010 = vmatpush2.msra.mxu0 0.0
      %5011 = vmatprep.subr.mxu0 0.0
      %5012 = vmatpush2.msra.mxu0 0.0
      %5013 = vmatprep.subr.mxu0 0.0
      %5014 = vmatpush2.msra.mxu0 0.0
      %5015 = vmatprep.subr.mxu0 0.0
      %5016 = vmatpush2.msra.mxu0 0.0
      %5017 = vmatprep.subr.mxu0 0.0
      %5018 = vmatpush2.msra.mxu0 0.0
      %5019 = vmatprep.subr.mxu0 0.0
      %5020 = vmatpush2.msra.mxu0 0.0
      %5021 = vmatprep.subr.mxu0 0.0
      %5022 = vmatpush2.msra.mxu0 0.0
      %5023 = vmatprep.subr.mxu0 0.0
      %5024 = vmatpush2.msra.mxu0 0.0
      %5025 = vmatprep.subr.mxu0 0.0
      %5026 = vmatpush2.msra.mxu0 0.0
      %5027 = vmatprep.subr.mxu0 0.0
      %5028 = vmatpush2.msra.mxu0 0.0
      %5029 = vmatprep.subr.mxu0 0.0
      %5030 = vmatpush2.msra.mxu0 0.0
      %5031 = vmatprep.subr.mxu0 0.0
      %5032 = vmatpush2.msra.mxu0 0.0
      %5033 = vmatprep.subr.mxu0 0.0
      %5034 = vmatpush2.msra.mxu0 0.0
      %5035 = vmatprep.subr.mxu0 0.0
      %5036 = vmatpush2.msra.mxu0 0.0
      %5037 = vmatprep.subr.mxu0 0.0
      %5038 = vmatpush2.msra.mxu0 0.0
      %5039 = vmatprep.subr.mxu0 0.0
      %5040 = vmatpush2.msra.mxu0 0.0
      %5041 = vmatprep.mubr.f32.mxu0 0.0
      %v5042 = vand.u32 %v4950, 4294901760
      %v5043 = vsub.f32 %v4950, %v5042
      %v5044 = vand.u32 %v5043, 4294901760
      %v5045 = vsub.f32 %v5043, %v5044
      %v5046 = vand.u32 %v5045, 4294901760
      %5047 = vmatmul.mubr.f32.gmra.mxu0 %v5046
      %v5048 = vpop.f32.mrf.mxu0
      %v5049 = vadd.f32 %v4947, %v5048
      %v5050 = vpop.f32.mrf.mxu0
      %5051 = vmatprep.mubr.f32.mxu0 0.0
      %v5052 = vand.u32 %v4953, 4294901760
      %v5053 = vsub.f32 %v4953, %v5052
      %v5054 = vand.u32 %v5053, 4294901760
      %v5055 = vsub.f32 %v5053, %v5054
      %v5056 = vand.u32 %v5055, 4294901760
      %5057 = vmatmul.mubr.f32.gmra.mxu0 %v5056
      %v5058 = vpop.f32.mrf.mxu0
      %v5059 = vadd.f32 %v4947, %v5058
      %v5060 = vpop.f32.mrf.mxu0
      %5061 = vmatprep.mubr.f32.mxu0 0.0
      %v5062 = vand.u32 %v4956, 4294901760
      %v5063 = vsub.f32 %v4956, %v5062
      %v5064 = vand.u32 %v5063, 4294901760
      %v5065 = vsub.f32 %v5063, %v5064
      %v5066 = vand.u32 %v5065, 4294901760
      %5067 = vmatmul.mubr.f32.gmra.mxu0 %v5066
      %v5068 = vpop.f32.mrf.mxu0
      %v5069 = vadd.f32 %v4947, %v5068
      %v5070 = vpop.f32.mrf.mxu0
      %5071 = vmatprep.mubr.f32.mxu0 0.0
      %v5072 = vand.u32 %v4959, 4294901760
      %v5073 = vsub.f32 %v4959, %v5072
      %v5074 = vand.u32 %v5073, 4294901760
      %v5075 = vsub.f32 %v5073, %v5074
      %v5076 = vand.u32 %v5075, 4294901760
      %5077 = vmatmul.mubr.f32.gmra.mxu0 %v5076
      %v5078 = vpop.f32.mrf.mxu0
      %v5079 = vadd.f32 %v4947, %v5078
      %v5080 = vpop.f32.mrf.mxu0
      %5081 = vmatprep.mubr.f32.mxu0 0.0
      %v5082 = vand.u32 %v4962, 4294901760
      %v5083 = vsub.f32 %v4962, %v5082
      %v5084 = vand.u32 %v5083, 4294901760
      %v5085 = vsub.f32 %v5083, %v5084
      %v5086 = vand.u32 %v5085, 4294901760
      %5087 = vmatmul.mubr.f32.gmra.mxu0 %v5086
      %v5088 = vpop.f32.mrf.mxu0
      %v5089 = vadd.f32 %v4947, %v5088
      %v5090 = vpop.f32.mrf.mxu0
      %5091 = vmatprep.mubr.f32.mxu0 0.0
      %v5092 = vand.u32 %v4965, 4294901760
      %v5093 = vsub.f32 %v4965, %v5092
      %v5094 = vand.u32 %v5093, 4294901760
      %v5095 = vsub.f32 %v5093, %v5094
      %v5096 = vand.u32 %v5095, 4294901760
      %5097 = vmatmul.mubr.f32.gmra.mxu0 %v5096
      %v5098 = vpop.f32.mrf.mxu0
      %v5099 = vadd.f32 %v4947, %v5098
      %v5100 = vpop.f32.mrf.mxu0
      %5101 = vmatprep.mubr.f32.mxu0 0.0
      %v5102 = vand.u32 %v4968, 4294901760
      %v5103 = vsub.f32 %v4968, %v5102
      %v5104 = vand.u32 %v5103, 4294901760
      %v5105 = vsub.f32 %v5103, %v5104
      %v5106 = vand.u32 %v5105, 4294901760
      %5107 = vmatmul.mubr.f32.gmra.mxu0 %v5106
      %v5108 = vpop.f32.mrf.mxu0
      %v5109 = vadd.f32 %v4947, %v5108
      %v5110 = vpop.f32.mrf.mxu0
      %5111 = vmatprep.mubr.f32.mxu0 0.0
      %v5112 = vand.u32 %v4971, 4294901760
      %v5113 = vsub.f32 %v4971, %v5112
      %v5114 = vand.u32 %v5113, 4294901760
      %v5115 = vsub.f32 %v5113, %v5114
      %v5116 = vand.u32 %v5115, 4294901760
      %5117 = vmatmul.mubr.f32.gmra.mxu0 %v5116
      %v5118 = vpop.f32.mrf.mxu0
      %v5119 = vadd.f32 %v4947, %v5118
      %v5120 = vpop.f32.mrf.mxu0
      %5121 = vdwg.mxu0
      %5122 = vmatprep.subr.mxu0 0.0
      %5123 = vmatpush1.msra.mxu0 0.0
      %5124 = vmatprep.subr.mxu0 0.0
      %5125 = vmatpush1.msra.mxu0 0.0
      %5126 = vmatprep.subr.mxu0 0.0
      %5127 = vmatpush1.msra.mxu0 0.0
      %5128 = vmatprep.subr.mxu0 0.0
      %5129 = vmatpush1.msra.mxu0 0.0
      %5130 = vmatprep.subr.mxu0 0.0
      %5131 = vmatpush1.msra.mxu0 0.0
      %5132 = vmatprep.subr.mxu0 0.0
      %5133 = vmatpush1.msra.mxu0 0.0
      %5134 = vmatprep.subr.mxu0 0.0
      %5135 = vmatpush1.msra.mxu0 0.0
      %5136 = vmatprep.subr.mxu0 0.0
      %5137 = vmatpush1.msra.mxu0 0.0
      %5138 = vmatprep.subr.mxu0 0.0
      %5139 = vmatpush1.msra.mxu0 0.0
      %5140 = vmatprep.subr.mxu0 0.0
      %5141 = vmatpush1.msra.mxu0 0.0
      %5142 = vmatprep.subr.mxu0 0.0
      %5143 = vmatpush1.msra.mxu0 0.0
      %5144 = vmatprep.subr.mxu0 0.0
      %5145 = vmatpush1.msra.mxu0 0.0
      %5146 = vmatprep.subr.mxu0 0.0
      %v5147 = vand.u32 %v4941, 4294901760
      %v5148 = vsub.f32 %v4941, %v5147
      %v5149 = vand.u32 %v5148, 4294901760
      %v5150 = vsub.f32 %v5148, %v5149
      %v5151 = vand.u32 %v5150, 4294901760
      %5152 = vmatpush1.msra.mxu0 %v5151
      %5153 = vmatprep.subr.mxu0 0.0
      %v5154 = vand.u32 %v4940, 4294901760
      %v5155 = vsub.f32 %v4940, %v5154
      %v5156 = vand.u32 %v5155, 4294901760
      %v5157 = vsub.f32 %v5155, %v5156
      %v5158 = vand.u32 %v5157, 4294901760
      %5159 = vmatpush1.msra.mxu0 %v5158
      %5160 = vmatprep.subr.mxu0 0.0
      %v5161 = vand.u32 %v4939, 4294901760
      %v5162 = vsub.f32 %v4939, %v5161
      %v5163 = vand.u32 %v5162, 4294901760
      %v5164 = vsub.f32 %v5162, %v5163
      %v5165 = vand.u32 %v5164, 4294901760
      %5166 = vmatpush1.msra.mxu0 %v5165
      %5167 = vmatprep.subr.mxu0 0.0
      %v5168 = vand.u32 %v4938, 4294901760
      %v5169 = vsub.f32 %v4938, %v5168
      %v5170 = vand.u32 %v5169, 4294901760
      %v5171 = vsub.f32 %v5169, %v5170
      %v5172 = vand.u32 %v5171, 4294901760
      %5173 = vmatpush1.msra.mxu0 %v5172
      %5174 = vmatprep.subr.mxu0 0.0
      %5175 = vmatpush2.msra.mxu0 0.0
      %5176 = vmatprep.subr.mxu0 0.0
      %5177 = vmatpush2.msra.mxu0 0.0
      %5178 = vmatprep.subr.mxu0 0.0
      %5179 = vmatpush2.msra.mxu0 0.0
      %5180 = vmatprep.subr.mxu0 0.0
      %5181 = vmatpush2.msra.mxu0 0.0
      %5182 = vmatprep.subr.mxu0 0.0
      %5183 = vmatpush2.msra.mxu0 0.0
      %5184 = vmatprep.subr.mxu0 0.0
      %5185 = vmatpush2.msra.mxu0 0.0
      %5186 = vmatprep.subr.mxu0 0.0
      %5187 = vmatpush2.msra.mxu0 0.0
      %5188 = vmatprep.subr.mxu0 0.0
      %5189 = vmatpush2.msra.mxu0 0.0
      %5190 = vmatprep.subr.mxu0 0.0
      %5191 = vmatpush2.msra.mxu0 0.0
      %5192 = vmatprep.subr.mxu0 0.0
      %5193 = vmatpush2.msra.mxu0 0.0
      %5194 = vmatprep.subr.mxu0 0.0
      %5195 = vmatpush2.msra.mxu0 0.0
      %5196 = vmatprep.subr.mxu0 0.0
      %5197 = vmatpush2.msra.mxu0 0.0
      %5198 = vmatprep.subr.mxu0 0.0
      %5199 = vmatpush2.msra.mxu0 0.0
      %5200 = vmatprep.subr.mxu0 0.0
      %5201 = vmatpush2.msra.mxu0 0.0
      %5202 = vmatprep.subr.mxu0 0.0
      %5203 = vmatpush2.msra.mxu0 0.0
      %5204 = vmatprep.subr.mxu0 0.0
      %5205 = vmatpush2.msra.mxu0 0.0
      %5206 = vmatprep.mubr.f32.mxu0 0.0
      %v5207 = vand.u32 %v4950, 4294901760
      %5208 = vmatmul.mubr.f32.gmra.mxu0 %v5207
      %v5209 = vpop.f32.mrf.mxu0
      %v5210 = vadd.f32 %v5049, %v5209
      %v5211 = vpop.f32.mrf.mxu0
      %5212 = vmatprep.mubr.f32.mxu0 0.0
      %v5213 = vand.u32 %v4953, 4294901760
      %5214 = vmatmul.mubr.f32.gmra.mxu0 %v5213
      %v5215 = vpop.f32.mrf.mxu0
      %v5216 = vadd.f32 %v5059, %v5215
      %v5217 = vpop.f32.mrf.mxu0
      %5218 = vmatprep.mubr.f32.mxu0 0.0
      %v5219 = vand.u32 %v4956, 4294901760
      %5220 = vmatmul.mubr.f32.gmra.mxu0 %v5219
      %v5221 = vpop.f32.mrf.mxu0
      %v5222 = vadd.f32 %v5069, %v5221
      %v5223 = vpop.f32.mrf.mxu0
      %5224 = vmatprep.mubr.f32.mxu0 0.0
      %v5225 = vand.u32 %v4959, 4294901760
      %5226 = vmatmul.mubr.f32.gmra.mxu0 %v5225
      %v5227 = vpop.f32.mrf.mxu0
      %v5228 = vadd.f32 %v5079, %v5227
      %v5229 = vpop.f32.mrf.mxu0
      %5230 = vmatprep.mubr.f32.mxu0 0.0
      %v5231 = vand.u32 %v4962, 4294901760
      %5232 = vmatmul.mubr.f32.gmra.mxu0 %v5231
      %v5233 = vpop.f32.mrf.mxu0
      %v5234 = vadd.f32 %v5089, %v5233
      %v5235 = vpop.f32.mrf.mxu0
      %5236 = vmatprep.mubr.f32.mxu0 0.0
      %v5237 = vand.u32 %v4965, 4294901760
      %5238 = vmatmul.mubr.f32.gmra.mxu0 %v5237
      %v5239 = vpop.f32.mrf.mxu0
      %v5240 = vadd.f32 %v5099, %v5239
      %v5241 = vpop.f32.mrf.mxu0
      %5242 = vmatprep.mubr.f32.mxu0 0.0
      %v5243 = vand.u32 %v4968, 4294901760
      %5244 = vmatmul.mubr.f32.gmra.mxu0 %v5243
      %v5245 = vpop.f32.mrf.mxu0
      %v5246 = vadd.f32 %v5109, %v5245
      %v5247 = vpop.f32.mrf.mxu0
      %5248 = vmatprep.mubr.f32.mxu0 0.0
      %v5249 = vand.u32 %v4971, 4294901760
      %5250 = vmatmul.mubr.f32.gmra.mxu0 %v5249
      %v5251 = vpop.f32.mrf.mxu0
      %v5252 = vadd.f32 %v5119, %v5251
      %v5253 = vpop.f32.mrf.mxu0
      %5254 = vdwg.mxu0
      %5255 = vmatprep.subr.mxu0 0.0
      %5256 = vmatpush1.msra.mxu0 0.0
      %5257 = vmatprep.subr.mxu0 0.0
      %5258 = vmatpush1.msra.mxu0 0.0
      %5259 = vmatprep.subr.mxu0 0.0
      %5260 = vmatpush1.msra.mxu0 0.0
      %5261 = vmatprep.subr.mxu0 0.0
      %5262 = vmatpush1.msra.mxu0 0.0
      %5263 = vmatprep.subr.mxu0 0.0
      %5264 = vmatpush1.msra.mxu0 0.0
      %5265 = vmatprep.subr.mxu0 0.0
      %5266 = vmatpush1.msra.mxu0 0.0
      %5267 = vmatprep.subr.mxu0 0.0
      %5268 = vmatpush1.msra.mxu0 0.0
      %5269 = vmatprep.subr.mxu0 0.0
      %5270 = vmatpush1.msra.mxu0 0.0
      %5271 = vmatprep.subr.mxu0 0.0
      %5272 = vmatpush1.msra.mxu0 0.0
      %5273 = vmatprep.subr.mxu0 0.0
      %5274 = vmatpush1.msra.mxu0 0.0
      %5275 = vmatprep.subr.mxu0 0.0
      %5276 = vmatpush1.msra.mxu0 0.0
      %5277 = vmatprep.subr.mxu0 0.0
      %5278 = vmatpush1.msra.mxu0 0.0
      %5279 = vmatprep.subr.mxu0 0.0
      %v5280 = vand.u32 %v4941, 4294901760
      %v5281 = vsub.f32 %v4941, %v5280
      %5282 = vmatpush1.msra.mxu0 %v5281
      %5283 = vmatprep.subr.mxu0 0.0
      %v5284 = vand.u32 %v4940, 4294901760
      %v5285 = vsub.f32 %v4940, %v5284
      %5286 = vmatpush1.msra.mxu0 %v5285
      %5287 = vmatprep.subr.mxu0 0.0
      %v5288 = vand.u32 %v4939, 4294901760
      %v5289 = vsub.f32 %v4939, %v5288
      %5290 = vmatpush1.msra.mxu0 %v5289
      %5291 = vmatprep.subr.mxu0 0.0
      %v5292 = vand.u32 %v4938, 4294901760
      %v5293 = vsub.f32 %v4938, %v5292
      %5294 = vmatpush1.msra.mxu0 %v5293
      %5295 = vmatprep.subr.mxu0 0.0
      %5296 = vmatpush2.msra.mxu0 0.0
      %5297 = vmatprep.subr.mxu0 0.0
      %5298 = vmatpush2.msra.mxu0 0.0
      %5299 = vmatprep.subr.mxu0 0.0
      %5300 = vmatpush2.msra.mxu0 0.0
      %5301 = vmatprep.subr.mxu0 0.0
      %5302 = vmatpush2.msra.mxu0 0.0
      %5303 = vmatprep.subr.mxu0 0.0
      %5304 = vmatpush2.msra.mxu0 0.0
      %5305 = vmatprep.subr.mxu0 0.0
      %5306 = vmatpush2.msra.mxu0 0.0
      %5307 = vmatprep.subr.mxu0 0.0
      %5308 = vmatpush2.msra.mxu0 0.0
      %5309 = vmatprep.subr.mxu0 0.0
      %5310 = vmatpush2.msra.mxu0 0.0
      %5311 = vmatprep.subr.mxu0 0.0
      %5312 = vmatpush2.msra.mxu0 0.0
      %5313 = vmatprep.subr.mxu0 0.0
      %5314 = vmatpush2.msra.mxu0 0.0
      %5315 = vmatprep.subr.mxu0 0.0
      %5316 = vmatpush2.msra.mxu0 0.0
      %5317 = vmatprep.subr.mxu0 0.0
      %5318 = vmatpush2.msra.mxu0 0.0
      %5319 = vmatprep.subr.mxu0 0.0
      %5320 = vmatpush2.msra.mxu0 0.0
      %5321 = vmatprep.subr.mxu0 0.0
      %5322 = vmatpush2.msra.mxu0 0.0
      %5323 = vmatprep.subr.mxu0 0.0
      %5324 = vmatpush2.msra.mxu0 0.0
      %5325 = vmatprep.subr.mxu0 0.0
      %5326 = vmatpush2.msra.mxu0 0.0
      %5327 = vmatprep.mubr.f32.mxu0 0.0
      %v5328 = vand.u32 %v4950, 4294901760
      %v5329 = vsub.f32 %v4950, %v5328
      %5330 = vmatmul.mubr.f32.gmra.mxu0 %v5329
      %v5331 = vpop.f32.mrf.mxu0
      %v5332 = vadd.f32 %v5210, %v5331
      %v5333 = vpop.f32.mrf.mxu0
      %5334 = vmatprep.mubr.f32.mxu0 0.0
      %v5335 = vand.u32 %v4953, 4294901760
      %v5336 = vsub.f32 %v4953, %v5335
      %5337 = vmatmul.mubr.f32.gmra.mxu0 %v5336
      %v5338 = vpop.f32.mrf.mxu0
      %v5339 = vadd.f32 %v5216, %v5338
      %v5340 = vpop.f32.mrf.mxu0
      %5341 = vmatprep.mubr.f32.mxu0 0.0
      %v5342 = vand.u32 %v4956, 4294901760
      %v5343 = vsub.f32 %v4956, %v5342
      %5344 = vmatmul.mubr.f32.gmra.mxu0 %v5343
      %v5345 = vpop.f32.mrf.mxu0
      %v5346 = vadd.f32 %v5222, %v5345
      %v5347 = vpop.f32.mrf.mxu0
      %5348 = vmatprep.mubr.f32.mxu0 0.0
      %v5349 = vand.u32 %v4959, 4294901760
      %v5350 = vsub.f32 %v4959, %v5349
      %5351 = vmatmul.mubr.f32.gmra.mxu0 %v5350
      %v5352 = vpop.f32.mrf.mxu0
      %v5353 = vadd.f32 %v5228, %v5352
      %v5354 = vpop.f32.mrf.mxu0
      %5355 = vmatprep.mubr.f32.mxu0 0.0
      %v5356 = vand.u32 %v4962, 4294901760
      %v5357 = vsub.f32 %v4962, %v5356
      %5358 = vmatmul.mubr.f32.gmra.mxu0 %v5357
      %v5359 = vpop.f32.mrf.mxu0
      %v5360 = vadd.f32 %v5234, %v5359
      %v5361 = vpop.f32.mrf.mxu0
      %5362 = vmatprep.mubr.f32.mxu0 0.0
      %v5363 = vand.u32 %v4965, 4294901760
      %v5364 = vsub.f32 %v4965, %v5363
      %5365 = vmatmul.mubr.f32.gmra.mxu0 %v5364
      %v5366 = vpop.f32.mrf.mxu0
      %v5367 = vadd.f32 %v5240, %v5366
      %v5368 = vpop.f32.mrf.mxu0
      %5369 = vmatprep.mubr.f32.mxu0 0.0
      %v5370 = vand.u32 %v4968, 4294901760
      %v5371 = vsub.f32 %v4968, %v5370
      %5372 = vmatmul.mubr.f32.gmra.mxu0 %v5371
      %v5373 = vpop.f32.mrf.mxu0
      %v5374 = vadd.f32 %v5246, %v5373
      %v5375 = vpop.f32.mrf.mxu0
      %5376 = vmatprep.mubr.f32.mxu0 0.0
      %v5377 = vand.u32 %v4971, 4294901760
      %v5378 = vsub.f32 %v4971, %v5377
      %5379 = vmatmul.mubr.f32.gmra.mxu0 %v5378
      %v5380 = vpop.f32.mrf.mxu0
      %v5381 = vadd.f32 %v5252, %v5380
      %v5382 = vpop.f32.mrf.mxu0
      %5383 = vdwg.mxu0
      %5384 = vmatprep.subr.mxu0 0.0
      %5385 = vmatpush1.msra.mxu0 0.0
      %5386 = vmatprep.subr.mxu0 0.0
      %5387 = vmatpush1.msra.mxu0 0.0
      %5388 = vmatprep.subr.mxu0 0.0
      %5389 = vmatpush1.msra.mxu0 0.0
      %5390 = vmatprep.subr.mxu0 0.0
      %5391 = vmatpush1.msra.mxu0 0.0
      %5392 = vmatprep.subr.mxu0 0.0
      %5393 = vmatpush1.msra.mxu0 0.0
      %5394 = vmatprep.subr.mxu0 0.0
      %5395 = vmatpush1.msra.mxu0 0.0
      %5396 = vmatprep.subr.mxu0 0.0
      %5397 = vmatpush1.msra.mxu0 0.0
      %5398 = vmatprep.subr.mxu0 0.0
      %5399 = vmatpush1.msra.mxu0 0.0
      %5400 = vmatprep.subr.mxu0 0.0
      %5401 = vmatpush1.msra.mxu0 0.0
      %5402 = vmatprep.subr.mxu0 0.0
      %5403 = vmatpush1.msra.mxu0 0.0
      %5404 = vmatprep.subr.mxu0 0.0
      %5405 = vmatpush1.msra.mxu0 0.0
      %5406 = vmatprep.subr.mxu0 0.0
      %5407 = vmatpush1.msra.mxu0 0.0
      %5408 = vmatprep.subr.mxu0 0.0
      %v5409 = vand.u32 %v4941, 4294901760
      %5410 = vmatpush1.msra.mxu0 %v5409
      %5411 = vmatprep.subr.mxu0 0.0
      %v5412 = vand.u32 %v4940, 4294901760
      %5413 = vmatpush1.msra.mxu0 %v5412
      %5414 = vmatprep.subr.mxu0 0.0
      %v5415 = vand.u32 %v4939, 4294901760
      %5416 = vmatpush1.msra.mxu0 %v5415
      %5417 = vmatprep.subr.mxu0 0.0
      %v5418 = vand.u32 %v4938, 4294901760
      %5419 = vmatpush1.msra.mxu0 %v5418
      %5420 = vmatprep.subr.mxu0 0.0
      %5421 = vmatpush2.msra.mxu0 0.0
      %5422 = vmatprep.subr.mxu0 0.0
      %5423 = vmatpush2.msra.mxu0 0.0
      %5424 = vmatprep.subr.mxu0 0.0
      %5425 = vmatpush2.msra.mxu0 0.0
      %5426 = vmatprep.subr.mxu0 0.0
      %5427 = vmatpush2.msra.mxu0 0.0
      %5428 = vmatprep.subr.mxu0 0.0
      %5429 = vmatpush2.msra.mxu0 0.0
      %5430 = vmatprep.subr.mxu0 0.0
      %5431 = vmatpush2.msra.mxu0 0.0
      %5432 = vmatprep.subr.mxu0 0.0
      %5433 = vmatpush2.msra.mxu0 0.0
      %5434 = vmatprep.subr.mxu0 0.0
      %5435 = vmatpush2.msra.mxu0 0.0
      %5436 = vmatprep.subr.mxu0 0.0
      %5437 = vmatpush2.msra.mxu0 0.0
      %5438 = vmatprep.subr.mxu0 0.0
      %5439 = vmatpush2.msra.mxu0 0.0
      %5440 = vmatprep.subr.mxu0 0.0
      %5441 = vmatpush2.msra.mxu0 0.0
      %5442 = vmatprep.subr.mxu0 0.0
      %5443 = vmatpush2.msra.mxu0 0.0
      %5444 = vmatprep.subr.mxu0 0.0
      %5445 = vmatpush2.msra.mxu0 0.0
      %5446 = vmatprep.subr.mxu0 0.0
      %5447 = vmatpush2.msra.mxu0 0.0
      %5448 = vmatprep.subr.mxu0 0.0
      %5449 = vmatpush2.msra.mxu0 0.0
      %5450 = vmatprep.subr.mxu0 0.0
      %5451 = vmatpush2.msra.mxu0 0.0
      %5452 = vmatprep.mubr.f32.mxu0 0.0
      %v5453 = vand.u32 %v4950, 4294901760
      %v5454 = vsub.f32 %v4950, %v5453
      %v5455 = vand.u32 %v5454, 4294901760
      %5456 = vmatmul.mubr.f32.gmra.mxu0 %v5455
      %v5457 = vpop.f32.mrf.mxu0
      %v5458 = vadd.f32 %v5332, %v5457
      %v5459 = vpop.f32.mrf.mxu0
      %5460 = vmatprep.mubr.f32.mxu0 0.0
      %v5461 = vand.u32 %v4953, 4294901760
      %v5462 = vsub.f32 %v4953, %v5461
      %v5463 = vand.u32 %v5462, 4294901760
      %5464 = vmatmul.mubr.f32.gmra.mxu0 %v5463
      %v5465 = vpop.f32.mrf.mxu0
      %v5466 = vadd.f32 %v5339, %v5465
      %v5467 = vpop.f32.mrf.mxu0
      %5468 = vmatprep.mubr.f32.mxu0 0.0
      %v5469 = vand.u32 %v4956, 4294901760
      %v5470 = vsub.f32 %v4956, %v5469
      %v5471 = vand.u32 %v5470, 4294901760
      %5472 = vmatmul.mubr.f32.gmra.mxu0 %v5471
      %v5473 = vpop.f32.mrf.mxu0
      %v5474 = vadd.f32 %v5346, %v5473
      %v5475 = vpop.f32.mrf.mxu0
      %5476 = vmatprep.mubr.f32.mxu0 0.0
      %v5477 = vand.u32 %v4959, 4294901760
      %v5478 = vsub.f32 %v4959, %v5477
      %v5479 = vand.u32 %v5478, 4294901760
      %5480 = vmatmul.mubr.f32.gmra.mxu0 %v5479
      %v5481 = vpop.f32.mrf.mxu0
      %v5482 = vadd.f32 %v5353, %v5481
      %v5483 = vpop.f32.mrf.mxu0
      %5484 = vmatprep.mubr.f32.mxu0 0.0
      %v5485 = vand.u32 %v4962, 4294901760
      %v5486 = vsub.f32 %v4962, %v5485
      %v5487 = vand.u32 %v5486, 4294901760
      %5488 = vmatmul.mubr.f32.gmra.mxu0 %v5487
      %v5489 = vpop.f32.mrf.mxu0
      %v5490 = vadd.f32 %v5360, %v5489
      %v5491 = vpop.f32.mrf.mxu0
      %5492 = vmatprep.mubr.f32.mxu0 0.0
      %v5493 = vand.u32 %v4965, 4294901760
      %v5494 = vsub.f32 %v4965, %v5493
      %v5495 = vand.u32 %v5494, 4294901760
      %5496 = vmatmul.mubr.f32.gmra.mxu0 %v5495
      %v5497 = vpop.f32.mrf.mxu0
      %v5498 = vadd.f32 %v5367, %v5497
      %v5499 = vpop.f32.mrf.mxu0
      %5500 = vmatprep.mubr.f32.mxu0 0.0
      %v5501 = vand.u32 %v4968, 4294901760
      %v5502 = vsub.f32 %v4968, %v5501
      %v5503 = vand.u32 %v5502, 4294901760
      %5504 = vmatmul.mubr.f32.gmra.mxu0 %v5503
      %v5505 = vpop.f32.mrf.mxu0
      %v5506 = vadd.f32 %v5374, %v5505
      %v5507 = vpop.f32.mrf.mxu0
      %5508 = vmatprep.mubr.f32.mxu0 0.0
      %v5509 = vand.u32 %v4971, 4294901760
      %v5510 = vsub.f32 %v4971, %v5509
      %v5511 = vand.u32 %v5510, 4294901760
      %5512 = vmatmul.mubr.f32.gmra.mxu0 %v5511
      %v5513 = vpop.f32.mrf.mxu0
      %v5514 = vadd.f32 %v5381, %v5513
      %v5515 = vpop.f32.mrf.mxu0
      %5516 = vdwg.mxu0
      %5517 = vmatprep.subr.mxu0 0.0
      %5518 = vmatpush1.msra.mxu0 0.0
      %5519 = vmatprep.subr.mxu0 0.0
      %5520 = vmatpush1.msra.mxu0 0.0
      %5521 = vmatprep.subr.mxu0 0.0
      %5522 = vmatpush1.msra.mxu0 0.0
      %5523 = vmatprep.subr.mxu0 0.0
      %5524 = vmatpush1.msra.mxu0 0.0
      %5525 = vmatprep.subr.mxu0 0.0
      %5526 = vmatpush1.msra.mxu0 0.0
      %5527 = vmatprep.subr.mxu0 0.0
      %5528 = vmatpush1.msra.mxu0 0.0
      %5529 = vmatprep.subr.mxu0 0.0
      %5530 = vmatpush1.msra.mxu0 0.0
      %5531 = vmatprep.subr.mxu0 0.0
      %5532 = vmatpush1.msra.mxu0 0.0
      %5533 = vmatprep.subr.mxu0 0.0
      %5534 = vmatpush1.msra.mxu0 0.0
      %5535 = vmatprep.subr.mxu0 0.0
      %5536 = vmatpush1.msra.mxu0 0.0
      %5537 = vmatprep.subr.mxu0 0.0
      %5538 = vmatpush1.msra.mxu0 0.0
      %5539 = vmatprep.subr.mxu0 0.0
      %5540 = vmatpush1.msra.mxu0 0.0
      %5541 = vmatprep.subr.mxu0 0.0
      %v5542 = vand.u32 %v4941, 4294901760
      %v5543 = vsub.f32 %v4941, %v5542
      %v5544 = vand.u32 %v5543, 4294901760
      %5545 = vmatpush1.msra.mxu0 %v5544
      %5546 = vmatprep.subr.mxu0 0.0
      %v5547 = vand.u32 %v4940, 4294901760
      %v5548 = vsub.f32 %v4940, %v5547
      %v5549 = vand.u32 %v5548, 4294901760
      %5550 = vmatpush1.msra.mxu0 %v5549
      %5551 = vmatprep.subr.mxu0 0.0
      %v5552 = vand.u32 %v4939, 4294901760
      %v5553 = vsub.f32 %v4939, %v5552
      %v5554 = vand.u32 %v5553, 4294901760
      %5555 = vmatpush1.msra.mxu0 %v5554
      %5556 = vmatprep.subr.mxu0 0.0
      %v5557 = vand.u32 %v4938, 4294901760
      %v5558 = vsub.f32 %v4938, %v5557
      %v5559 = vand.u32 %v5558, 4294901760
      %5560 = vmatpush1.msra.mxu0 %v5559
      %5561 = vmatprep.subr.mxu0 0.0
      %5562 = vmatpush2.msra.mxu0 0.0
      %5563 = vmatprep.subr.mxu0 0.0
      %5564 = vmatpush2.msra.mxu0 0.0
      %5565 = vmatprep.subr.mxu0 0.0
      %5566 = vmatpush2.msra.mxu0 0.0
      %5567 = vmatprep.subr.mxu0 0.0
      %5568 = vmatpush2.msra.mxu0 0.0
      %5569 = vmatprep.subr.mxu0 0.0
      %5570 = vmatpush2.msra.mxu0 0.0
      %5571 = vmatprep.subr.mxu0 0.0
      %5572 = vmatpush2.msra.mxu0 0.0
      %5573 = vmatprep.subr.mxu0 0.0
      %5574 = vmatpush2.msra.mxu0 0.0
      %5575 = vmatprep.subr.mxu0 0.0
      %5576 = vmatpush2.msra.mxu0 0.0
      %5577 = vmatprep.subr.mxu0 0.0
      %5578 = vmatpush2.msra.mxu0 0.0
      %5579 = vmatprep.subr.mxu0 0.0
      %5580 = vmatpush2.msra.mxu0 0.0
      %5581 = vmatprep.subr.mxu0 0.0
      %5582 = vmatpush2.msra.mxu0 0.0
      %5583 = vmatprep.subr.mxu0 0.0
      %5584 = vmatpush2.msra.mxu0 0.0
      %5585 = vmatprep.subr.mxu0 0.0
      %5586 = vmatpush2.msra.mxu0 0.0
      %5587 = vmatprep.subr.mxu0 0.0
      %5588 = vmatpush2.msra.mxu0 0.0
      %5589 = vmatprep.subr.mxu0 0.0
      %5590 = vmatpush2.msra.mxu0 0.0
      %5591 = vmatprep.subr.mxu0 0.0
      %5592 = vmatpush2.msra.mxu0 0.0
      %5593 = vmatprep.mubr.f32.mxu0 0.0
      %v5594 = vand.u32 %v4950, 4294901760
      %5595 = vmatmul.mubr.f32.gmra.mxu0 %v5594
      %v5596 = vpop.f32.mrf.mxu0
      %v5597 = vadd.f32 %v5458, %v5596
      %v5598 = vpop.f32.mrf.mxu0
      %5599 = vmatprep.mubr.f32.mxu0 0.0
      %v5600 = vand.u32 %v4953, 4294901760
      %5601 = vmatmul.mubr.f32.gmra.mxu0 %v5600
      %v5602 = vpop.f32.mrf.mxu0
      %v5603 = vadd.f32 %v5466, %v5602
      %v5604 = vpop.f32.mrf.mxu0
      %5605 = vmatprep.mubr.f32.mxu0 0.0
      %v5606 = vand.u32 %v4956, 4294901760
      %5607 = vmatmul.mubr.f32.gmra.mxu0 %v5606
      %v5608 = vpop.f32.mrf.mxu0
      %v5609 = vadd.f32 %v5474, %v5608
      %v5610 = vpop.f32.mrf.mxu0
      %5611 = vmatprep.mubr.f32.mxu0 0.0
      %v5612 = vand.u32 %v4959, 4294901760
      %5613 = vmatmul.mubr.f32.gmra.mxu0 %v5612
      %v5614 = vpop.f32.mrf.mxu0
      %v5615 = vadd.f32 %v5482, %v5614
      %v5616 = vpop.f32.mrf.mxu0
      %5617 = vmatprep.mubr.f32.mxu0 0.0
      %v5618 = vand.u32 %v4962, 4294901760
      %5619 = vmatmul.mubr.f32.gmra.mxu0 %v5618
      %v5620 = vpop.f32.mrf.mxu0
      %v5621 = vadd.f32 %v5490, %v5620
      %v5622 = vpop.f32.mrf.mxu0
      %5623 = vmatprep.mubr.f32.mxu0 0.0
      %v5624 = vand.u32 %v4965, 4294901760
      %5625 = vmatmul.mubr.f32.gmra.mxu0 %v5624
      %v5626 = vpop.f32.mrf.mxu0
      %v5627 = vadd.f32 %v5498, %v5626
      %v5628 = vpop.f32.mrf.mxu0
      %5629 = vmatprep.mubr.f32.mxu0 0.0
      %v5630 = vand.u32 %v4968, 4294901760
      %5631 = vmatmul.mubr.f32.gmra.mxu0 %v5630
      %v5632 = vpop.f32.mrf.mxu0
      %v5633 = vadd.f32 %v5506, %v5632
      %v5634 = vpop.f32.mrf.mxu0
      %5635 = vmatprep.mubr.f32.mxu0 0.0
      %v5636 = vand.u32 %v4971, 4294901760
      %5637 = vmatmul.mubr.f32.gmra.mxu0 %v5636
      %v5638 = vpop.f32.mrf.mxu0
      %v5639 = vadd.f32 %v5514, %v5638
      %v5640 = vpop.f32.mrf.mxu0
      %5641 = vdwg.mxu0
      %5642 = vmatprep.subr.mxu0 0.0
      %5643 = vmatpush1.msra.mxu0 0.0
      %5644 = vmatprep.subr.mxu0 0.0
      %5645 = vmatpush1.msra.mxu0 0.0
      %5646 = vmatprep.subr.mxu0 0.0
      %5647 = vmatpush1.msra.mxu0 0.0
      %5648 = vmatprep.subr.mxu0 0.0
      %5649 = vmatpush1.msra.mxu0 0.0
      %5650 = vmatprep.subr.mxu0 0.0
      %5651 = vmatpush1.msra.mxu0 0.0
      %5652 = vmatprep.subr.mxu0 0.0
      %5653 = vmatpush1.msra.mxu0 0.0
      %5654 = vmatprep.subr.mxu0 0.0
      %5655 = vmatpush1.msra.mxu0 0.0
      %5656 = vmatprep.subr.mxu0 0.0
      %5657 = vmatpush1.msra.mxu0 0.0
      %5658 = vmatprep.subr.mxu0 0.0
      %5659 = vmatpush1.msra.mxu0 0.0
      %5660 = vmatprep.subr.mxu0 0.0
      %5661 = vmatpush1.msra.mxu0 0.0
      %5662 = vmatprep.subr.mxu0 0.0
      %5663 = vmatpush1.msra.mxu0 0.0
      %5664 = vmatprep.subr.mxu0 0.0
      %5665 = vmatpush1.msra.mxu0 0.0
      %5666 = vmatprep.subr.mxu0 0.0
      %v5667 = vand.u32 %v4941, 4294901760
      %5668 = vmatpush1.msra.mxu0 %v5667
      %5669 = vmatprep.subr.mxu0 0.0
      %v5670 = vand.u32 %v4940, 4294901760
      %5671 = vmatpush1.msra.mxu0 %v5670
      %5672 = vmatprep.subr.mxu0 0.0
      %v5673 = vand.u32 %v4939, 4294901760
      %5674 = vmatpush1.msra.mxu0 %v5673
      %5675 = vmatprep.subr.mxu0 0.0
      %v5676 = vand.u32 %v4938, 4294901760
      %5677 = vmatpush1.msra.mxu0 %v5676
      %5678 = vmatprep.subr.mxu0 0.0
      %5679 = vmatpush2.msra.mxu0 0.0
      %5680 = vmatprep.subr.mxu0 0.0
      %5681 = vmatpush2.msra.mxu0 0.0
      %5682 = vmatprep.subr.mxu0 0.0
      %5683 = vmatpush2.msra.mxu0 0.0
      %5684 = vmatprep.subr.mxu0 0.0
      %5685 = vmatpush2.msra.mxu0 0.0
      %5686 = vmatprep.subr.mxu0 0.0
      %5687 = vmatpush2.msra.mxu0 0.0
      %5688 = vmatprep.subr.mxu0 0.0
      %5689 = vmatpush2.msra.mxu0 0.0
      %5690 = vmatprep.subr.mxu0 0.0
      %5691 = vmatpush2.msra.mxu0 0.0
      %5692 = vmatprep.subr.mxu0 0.0
      %5693 = vmatpush2.msra.mxu0 0.0
      %5694 = vmatprep.subr.mxu0 0.0
      %5695 = vmatpush2.msra.mxu0 0.0
      %5696 = vmatprep.subr.mxu0 0.0
      %5697 = vmatpush2.msra.mxu0 0.0
      %5698 = vmatprep.subr.mxu0 0.0
      %5699 = vmatpush2.msra.mxu0 0.0
      %5700 = vmatprep.subr.mxu0 0.0
      %5701 = vmatpush2.msra.mxu0 0.0
      %5702 = vmatprep.subr.mxu0 0.0
      %5703 = vmatpush2.msra.mxu0 0.0
      %5704 = vmatprep.subr.mxu0 0.0
      %5705 = vmatpush2.msra.mxu0 0.0
      %5706 = vmatprep.subr.mxu0 0.0
      %5707 = vmatpush2.msra.mxu0 0.0
      %5708 = vmatprep.subr.mxu0 0.0
      %5709 = vmatpush2.msra.mxu0 0.0
      %5710 = vmatprep.mubr.f32.mxu0 0.0
      %v5711 = vand.u32 %v4950, 4294901760
      %5712 = vmatmul.mubr.f32.gmra.mxu0 %v5711
      %v5713 = vpop.f32.mrf.mxu0
      %v5714 = vadd.f32 %v5597, %v5713
      %v5715 = vpop.f32.mrf.mxu0
      %5716 = vmatprep.mubr.f32.mxu0 0.0
      %v5717 = vand.u32 %v4953, 4294901760
      %5718 = vmatmul.mubr.f32.gmra.mxu0 %v5717
      %v5719 = vpop.f32.mrf.mxu0
      %v5720 = vadd.f32 %v5603, %v5719
      %v5721 = vpop.f32.mrf.mxu0
      %5722 = vmatprep.mubr.f32.mxu0 0.0
      %v5723 = vand.u32 %v4956, 4294901760
      %5724 = vmatmul.mubr.f32.gmra.mxu0 %v5723
      %v5725 = vpop.f32.mrf.mxu0
      %v5726 = vadd.f32 %v5609, %v5725
      %v5727 = vpop.f32.mrf.mxu0
      %5728 = vmatprep.mubr.f32.mxu0 0.0
      %v5729 = vand.u32 %v4959, 4294901760
      %5730 = vmatmul.mubr.f32.gmra.mxu0 %v5729
      %v5731 = vpop.f32.mrf.mxu0
      %v5732 = vadd.f32 %v5615, %v5731
      %v5733 = vpop.f32.mrf.mxu0
      %5734 = vmatprep.mubr.f32.mxu0 0.0
      %v5735 = vand.u32 %v4962, 4294901760
      %5736 = vmatmul.mubr.f32.gmra.mxu0 %v5735
      %v5737 = vpop.f32.mrf.mxu0
      %v5738 = vadd.f32 %v5621, %v5737
      %v5739 = vpop.f32.mrf.mxu0
      %5740 = vmatprep.mubr.f32.mxu0 0.0
      %v5741 = vand.u32 %v4965, 4294901760
      %5742 = vmatmul.mubr.f32.gmra.mxu0 %v5741
      %v5743 = vpop.f32.mrf.mxu0
      %v5744 = vadd.f32 %v5627, %v5743
      %v5745 = vpop.f32.mrf.mxu0
      %5746 = vmatprep.mubr.f32.mxu0 0.0
      %v5747 = vand.u32 %v4968, 4294901760
      %5748 = vmatmul.mubr.f32.gmra.mxu0 %v5747
      %v5749 = vpop.f32.mrf.mxu0
      %v5750 = vadd.f32 %v5633, %v5749
      %v5751 = vpop.f32.mrf.mxu0
      %5752 = vmatprep.mubr.f32.mxu0 0.0
      %v5753 = vand.u32 %v4971, 4294901760
      %5754 = vmatmul.mubr.f32.gmra.mxu0 %v5753
      %v5755 = vpop.f32.mrf.mxu0
      %v5756 = vadd.f32 %v5639, %v5755
      %v5757 = vpop.f32.mrf.mxu0
      %5758 = vdwg.mxu0
      %v5759 = vsel %vm2411, %v5714, 0.0
      %v5760 = vsel %vm2411, %v5720, 0.0
      %v5761 = vadd.f32 %v5759, %v5760
      %v5762 = vsel %vm2411, %v5726, 0.0
      %v5763 = vadd.f32 %v5761, %v5762
      %v5764 = vsel %vm2411, %v5732, 0.0
      %v5765 = vadd.f32 %v5763, %v5764
      %v5766 = vsel %vm2411, %v5738, 0.0
      %v5767 = vadd.f32 %v5765, %v5766
      %v5768 = vsel %vm2411, %v5744, 0.0
      %v5769 = vadd.f32 %v5767, %v5768
      %v5770 = vsel %vm2411, %v5750, 0.0
      %v5771 = vadd.f32 %v5769, %v5770
      %v5772 = vsel %vm2411, %v5756, 0.0
      %v5773 = vadd.f32 %v5771, %v5772
      %v5774 = vrot.slane %v5773, 4
      %v5775 = vadd.f32 %v5773, %v5774
      %v5776 = vrot.slane %v5775, 2
      %v5777 = vadd.f32 %v5775, %v5776
      %v5778 = vrot.slane %v5777, 1
      %v5779 = vadd.f32 %v5777, %v5778
      %v5780 = vmul.f32 %v5779, %v4888
      %v5781 = vsub.f32 %v5714, %v5780
      %v5782 = vsub.f32 %v5720, %v5780
      %v5783 = vsub.f32 %v5726, %v5780
      %v5784 = vsub.f32 %v5732, %v5780
      %v5785 = vsub.f32 %v5738, %v5780
      %v5786 = vsub.f32 %v5744, %v5780
      %v5787 = vsub.f32 %v5750, %v5780
      %v5788 = vsub.f32 %v5756, %v5780
      %v5789 = vmul.f32 %v5781, %v5781
      %v5790 = vmul.f32 %v5782, %v5782
      %v5791 = vmul.f32 %v5783, %v5783
      %v5792 = vmul.f32 %v5784, %v5784
      %v5793 = vmul.f32 %v5785, %v5785
      %v5794 = vmul.f32 %v5786, %v5786
      %v5795 = vmul.f32 %v5787, %v5787
      %v5796 = vmul.f32 %v5788, %v5788
      %v5797 = vsel %vm2411, %v5789, 0.0
      %v5798 = vsel %vm2411, %v5790, 0.0
      %v5799 = vadd.f32 %v5797, %v5798
      %v5800 = vsel %vm2411, %v5791, 0.0
      %v5801 = vadd.f32 %v5799, %v5800
      %v5802 = vsel %vm2411, %v5792, 0.0
      %v5803 = vadd.f32 %v5801, %v5802
      %v5804 = vsel %vm2411, %v5793, 0.0
      %v5805 = vadd.f32 %v5803, %v5804
      %v5806 = vsel %vm2411, %v5794, 0.0
      %v5807 = vadd.f32 %v5805, %v5806
      %v5808 = vsel %vm2411, %v5795, 0.0
      %v5809 = vadd.f32 %v5807, %v5808
      %v5810 = vsel %vm2411, %v5796, 0.0
      %v5811 = vadd.f32 %v5809, %v5810
      %v5812 = vrot.slane %v5811, 4
      %v5813 = vadd.f32 %v5811, %v5812
      %v5814 = vrot.slane %v5813, 2
      %v5815 = vadd.f32 %v5813, %v5814
      %v5816 = vrot.slane %v5815, 1
      %v5817 = vadd.f32 %v5815, %v5816
      %v5818 = vmul.f32 %v5817, %v4888
      %v5819 = vadd.f32 %v5818, 1e-05
      %v5820 = vrsqrt.pop %v5819
      %v5821 = vmul.f32 %v5781, %v5820
      %v5822 = vmul.f32 %v5782, %v5820
      %v5823 = vmul.f32 %v5783, %v5820
      %v5824 = vmul.f32 %v5784, %v5820
      %v5825 = vmul.f32 %v5785, %v5820
      %v5826 = vmul.f32 %v5786, %v5820
      %v5827 = vmul.f32 %v5787, %v5820
      %v5828 = vmul.f32 %v5788, %v5820
      %v5830 = vsel %vm2411, %v4930, 0
      %v5833 = vsel %vm2411, %v4931, 0
      %v5836 = vsel %vm2411, %v4932, 0
      %v5839 = vsel %vm2411, %v4933, 0
      %v5842 = vsel %vm2411, %v4934, 0
      %v5845 = vsel %vm2411, %v4935, 0
      %v5848 = vsel %vm2411, %v4936, 0
      %v5851 = vsel %vm2411, %v4937, 0
      %v5854 = vsel %vm2411, %v5821, 0
      %v5857 = vsel %vm2411, %v5822, 0
      %v5860 = vsel %vm2411, %v5823, 0
      %v5863 = vsel %vm2411, %v5824, 0
      %v5866 = vsel %vm2411, %v5825, 0
      %v5869 = vsel %vm2411, %v5826, 0
      %v5872 = vsel %vm2411, %v5827, 0
      %v5875 = vsel %vm2411, %v5828, 0
      %5877 = vmatprep.subr.mxu0 0.0
      %5878 = vmatpush1.xpose.msra.mxu0 0.0
      %5879 = vmatprep.subr.mxu0 0.0
      %5880 = vmatpush1.xpose.msra.mxu0 0.0
      %5881 = vmatprep.subr.mxu0 0.0
      %5882 = vmatpush1.xpose.msra.mxu0 0.0
      %5883 = vmatprep.subr.mxu0 0.0
      %5884 = vmatpush1.xpose.msra.mxu0 0.0
      %5885 = vmatprep.subr.mxu0 0.0
      %5886 = vmatpush1.xpose.msra.mxu0 0.0
      %5887 = vmatprep.subr.mxu0 0.0
      %5888 = vmatpush1.xpose.msra.mxu0 0.0
      %5889 = vmatprep.subr.mxu0 0.0
      %5890 = vmatpush1.xpose.msra.mxu0 0.0
      %5891 = vmatprep.subr.mxu0 0.0
      %5892 = vmatpush1.xpose.msra.mxu0 0.0
      %5893 = vmatprep.subr.mxu0 0.0
      %v5894 = vand.u32 %v5875, 4294901760
      %5895 = vmatpush1.xpose.msra.mxu0 %v5894
      %5896 = vmatprep.subr.mxu0 0.0
      %v5897 = vand.u32 %v5872, 4294901760
      %5898 = vmatpush1.xpose.msra.mxu0 %v5897
      %5899 = vmatprep.subr.mxu0 0.0
      %v5900 = vand.u32 %v5869, 4294901760
      %5901 = vmatpush1.xpose.msra.mxu0 %v5900
      %5902 = vmatprep.subr.mxu0 0.0
      %v5903 = vand.u32 %v5866, 4294901760
      %5904 = vmatpush1.xpose.msra.mxu0 %v5903
      %5905 = vmatprep.subr.mxu0 0.0
      %v5906 = vand.u32 %v5863, 4294901760
      %5907 = vmatpush1.xpose.msra.mxu0 %v5906
      %5908 = vmatprep.subr.mxu0 0.0
      %v5909 = vand.u32 %v5860, 4294901760
      %5910 = vmatpush1.xpose.msra.mxu0 %v5909
      %5911 = vmatprep.subr.mxu0 0.0
      %v5912 = vand.u32 %v5857, 4294901760
      %5913 = vmatpush1.xpose.msra.mxu0 %v5912
      %5914 = vmatprep.subr.mxu0 0.0
      %v5915 = vand.u32 %v5854, 4294901760
      %5916 = vmatpush1.xpose.msra.mxu0 %v5915
      %5917 = vmatprep.subr.mxu0 0.0
      %5918 = vmatpush2.xpose.msra.mxu0 0.0
      %5919 = vmatprep.subr.mxu0 0.0
      %5920 = vmatpush2.xpose.msra.mxu0 0.0
      %5921 = vmatprep.subr.mxu0 0.0
      %5922 = vmatpush2.xpose.msra.mxu0 0.0
      %5923 = vmatprep.subr.mxu0 0.0
      %5924 = vmatpush2.xpose.msra.mxu0 0.0
      %5925 = vmatprep.subr.mxu0 0.0
      %5926 = vmatpush2.xpose.msra.mxu0 0.0
      %5927 = vmatprep.subr.mxu0 0.0
      %5928 = vmatpush2.xpose.msra.mxu0 0.0
      %5929 = vmatprep.subr.mxu0 0.0
      %5930 = vmatpush2.xpose.msra.mxu0 0.0
      %5931 = vmatprep.subr.mxu0 0.0
      %5932 = vmatpush2.xpose.msra.mxu0 0.0
      %5933 = vmatprep.subr.mxu0 0.0
      %5934 = vmatpush2.xpose.msra.mxu0 0.0
      %5935 = vmatprep.subr.mxu0 0.0
      %5936 = vmatpush2.xpose.msra.mxu0 0.0
      %5937 = vmatprep.subr.mxu0 0.0
      %5938 = vmatpush2.xpose.msra.mxu0 0.0
      %5939 = vmatprep.subr.mxu0 0.0
      %5940 = vmatpush2.xpose.msra.mxu0 0.0
      %5941 = vmatprep.subr.mxu0 0.0
      %5942 = vmatpush2.xpose.msra.mxu0 0.0
      %5943 = vmatprep.subr.mxu0 0.0
      %5944 = vmatpush2.xpose.msra.mxu0 0.0
      %5945 = vmatprep.subr.mxu0 0.0
      %5946 = vmatpush2.xpose.msra.mxu0 0.0
      %5947 = vmatprep.subr.mxu0 0.0
      %5948 = vmatpush2.xpose.msra.mxu0 0.0
      %5949 = vmatprep.mubr.f32.mxu0 0.0
      %v5950 = vand.u32 %v5830, 4294901760
      %v5951 = vsub.f32 %v5830, %v5950
      %v5952 = vand.u32 %v5951, 4294901760
      %v5953 = vsub.f32 %v5951, %v5952
      %v5954 = vand.u32 %v5953, 4294901760
      %5955 = vmatmul.mubr.f32.gmra.mxu0 %v5954
      %v5956 = vpop.f32.mrf.mxu0
      %v5957 = vadd.f32 0.0, %v5956
      %v5958 = vpop.f32.mrf.mxu0
      %5959 = vmatprep.mubr.f32.mxu0 0.0
      %v5960 = vand.u32 %v5833, 4294901760
      %v5961 = vsub.f32 %v5833, %v5960
      %v5962 = vand.u32 %v5961, 4294901760
      %v5963 = vsub.f32 %v5961, %v5962
      %v5964 = vand.u32 %v5963, 4294901760
      %5965 = vmatmul.mubr.f32.gmra.mxu0 %v5964
      %v5966 = vpop.f32.mrf.mxu0
      %v5967 = vadd.f32 0.0, %v5966
      %v5968 = vpop.f32.mrf.mxu0
      %5969 = vmatprep.mubr.f32.mxu0 0.0
      %v5970 = vand.u32 %v5836, 4294901760
      %v5971 = vsub.f32 %v5836, %v5970
      %v5972 = vand.u32 %v5971, 4294901760
      %v5973 = vsub.f32 %v5971, %v5972
      %v5974 = vand.u32 %v5973, 4294901760
      %5975 = vmatmul.mubr.f32.gmra.mxu0 %v5974
      %v5976 = vpop.f32.mrf.mxu0
      %v5977 = vadd.f32 0.0, %v5976
      %v5978 = vpop.f32.mrf.mxu0
      %5979 = vmatprep.mubr.f32.mxu0 0.0
      %v5980 = vand.u32 %v5839, 4294901760
      %v5981 = vsub.f32 %v5839, %v5980
      %v5982 = vand.u32 %v5981, 4294901760
      %v5983 = vsub.f32 %v5981, %v5982
      %v5984 = vand.u32 %v5983, 4294901760
      %5985 = vmatmul.mubr.f32.gmra.mxu0 %v5984
      %v5986 = vpop.f32.mrf.mxu0
      %v5987 = vadd.f32 0.0, %v5986
      %v5988 = vpop.f32.mrf.mxu0
      %5989 = vmatprep.mubr.f32.mxu0 0.0
      %v5990 = vand.u32 %v5842, 4294901760
      %v5991 = vsub.f32 %v5842, %v5990
      %v5992 = vand.u32 %v5991, 4294901760
      %v5993 = vsub.f32 %v5991, %v5992
      %v5994 = vand.u32 %v5993, 4294901760
      %5995 = vmatmul.mubr.f32.gmra.mxu0 %v5994
      %v5996 = vpop.f32.mrf.mxu0
      %v5997 = vadd.f32 0.0, %v5996
      %v5998 = vpop.f32.mrf.mxu0
      %5999 = vmatprep.mubr.f32.mxu0 0.0
      %v6000 = vand.u32 %v5845, 4294901760
      %v6001 = vsub.f32 %v5845, %v6000
      %v6002 = vand.u32 %v6001, 4294901760
      %v6003 = vsub.f32 %v6001, %v6002
      %v6004 = vand.u32 %v6003, 4294901760
      %6005 = vmatmul.mubr.f32.gmra.mxu0 %v6004
      %v6006 = vpop.f32.mrf.mxu0
      %v6007 = vadd.f32 0.0, %v6006
      %v6008 = vpop.f32.mrf.mxu0
      %6009 = vmatprep.mubr.f32.mxu0 0.0
      %v6010 = vand.u32 %v5848, 4294901760
      %v6011 = vsub.f32 %v5848, %v6010
      %v6012 = vand.u32 %v6011, 4294901760
      %v6013 = vsub.f32 %v6011, %v6012
      %v6014 = vand.u32 %v6013, 4294901760
      %6015 = vmatmul.mubr.f32.gmra.mxu0 %v6014
      %v6016 = vpop.f32.mrf.mxu0
      %v6017 = vadd.f32 0.0, %v6016
      %v6018 = vpop.f32.mrf.mxu0
      %6019 = vmatprep.mubr.f32.mxu0 0.0
      %v6020 = vand.u32 %v5851, 4294901760
      %v6021 = vsub.f32 %v5851, %v6020
      %v6022 = vand.u32 %v6021, 4294901760
      %v6023 = vsub.f32 %v6021, %v6022
      %v6024 = vand.u32 %v6023, 4294901760
      %6025 = vmatmul.mubr.f32.gmra.mxu0 %v6024
      %v6026 = vpop.f32.mrf.mxu0
      %v6027 = vadd.f32 0.0, %v6026
      %v6028 = vpop.f32.mrf.mxu0
      %6029 = vdwg.mxu0
      %6030 = vmatprep.subr.mxu0 0.0
      %6031 = vmatpush1.xpose.msra.mxu0 0.0
      %6032 = vmatprep.subr.mxu0 0.0
      %6033 = vmatpush1.xpose.msra.mxu0 0.0
      %6034 = vmatprep.subr.mxu0 0.0
      %6035 = vmatpush1.xpose.msra.mxu0 0.0
      %6036 = vmatprep.subr.mxu0 0.0
      %6037 = vmatpush1.xpose.msra.mxu0 0.0
      %6038 = vmatprep.subr.mxu0 0.0
      %6039 = vmatpush1.xpose.msra.mxu0 0.0
      %6040 = vmatprep.subr.mxu0 0.0
      %6041 = vmatpush1.xpose.msra.mxu0 0.0
      %6042 = vmatprep.subr.mxu0 0.0
      %6043 = vmatpush1.xpose.msra.mxu0 0.0
      %6044 = vmatprep.subr.mxu0 0.0
      %6045 = vmatpush1.xpose.msra.mxu0 0.0
      %6046 = vmatprep.subr.mxu0 0.0
      %v6047 = vand.u32 %v5875, 4294901760
      %v6048 = vsub.f32 %v5875, %v6047
      %v6049 = vand.u32 %v6048, 4294901760
      %v6050 = vsub.f32 %v6048, %v6049
      %v6051 = vand.u32 %v6050, 4294901760
      %6052 = vmatpush1.xpose.msra.mxu0 %v6051
      %6053 = vmatprep.subr.mxu0 0.0
      %v6054 = vand.u32 %v5872, 4294901760
      %v6055 = vsub.f32 %v5872, %v6054
      %v6056 = vand.u32 %v6055, 4294901760
      %v6057 = vsub.f32 %v6055, %v6056
      %v6058 = vand.u32 %v6057, 4294901760
      %6059 = vmatpush1.xpose.msra.mxu0 %v6058
      %6060 = vmatprep.subr.mxu0 0.0
      %v6061 = vand.u32 %v5869, 4294901760
      %v6062 = vsub.f32 %v5869, %v6061
      %v6063 = vand.u32 %v6062, 4294901760
      %v6064 = vsub.f32 %v6062, %v6063
      %v6065 = vand.u32 %v6064, 4294901760
      %6066 = vmatpush1.xpose.msra.mxu0 %v6065
      %6067 = vmatprep.subr.mxu0 0.0
      %v6068 = vand.u32 %v5866, 4294901760
      %v6069 = vsub.f32 %v5866, %v6068
      %v6070 = vand.u32 %v6069, 4294901760
      %v6071 = vsub.f32 %v6069, %v6070
      %v6072 = vand.u32 %v6071, 4294901760
      %6073 = vmatpush1.xpose.msra.mxu0 %v6072
      %6074 = vmatprep.subr.mxu0 0.0
      %v6075 = vand.u32 %v5863, 4294901760
      %v6076 = vsub.f32 %v5863, %v6075
      %v6077 = vand.u32 %v6076, 4294901760
      %v6078 = vsub.f32 %v6076, %v6077
      %v6079 = vand.u32 %v6078, 4294901760
      %6080 = vmatpush1.xpose.msra.mxu0 %v6079
      %6081 = vmatprep.subr.mxu0 0.0
      %v6082 = vand.u32 %v5860, 4294901760
      %v6083 = vsub.f32 %v5860, %v6082
      %v6084 = vand.u32 %v6083, 4294901760
      %v6085 = vsub.f32 %v6083, %v6084
      %v6086 = vand.u32 %v6085, 4294901760
      %6087 = vmatpush1.xpose.msra.mxu0 %v6086
      %6088 = vmatprep.subr.mxu0 0.0
      %v6089 = vand.u32 %v5857, 4294901760
      %v6090 = vsub.f32 %v5857, %v6089
      %v6091 = vand.u32 %v6090, 4294901760
      %v6092 = vsub.f32 %v6090, %v6091
      %v6093 = vand.u32 %v6092, 4294901760
      %6094 = vmatpush1.xpose.msra.mxu0 %v6093
      %6095 = vmatprep.subr.mxu0 0.0
      %v6096 = vand.u32 %v5854, 4294901760
      %v6097 = vsub.f32 %v5854, %v6096
      %v6098 = vand.u32 %v6097, 4294901760
      %v6099 = vsub.f32 %v6097, %v6098
      %v6100 = vand.u32 %v6099, 4294901760
      %6101 = vmatpush1.xpose.msra.mxu0 %v6100
      %6102 = vmatprep.subr.mxu0 0.0
      %6103 = vmatpush2.xpose.msra.mxu0 0.0
      %6104 = vmatprep.subr.mxu0 0.0
      %6105 = vmatpush2.xpose.msra.mxu0 0.0
      %6106 = vmatprep.subr.mxu0 0.0
      %6107 = vmatpush2.xpose.msra.mxu0 0.0
      %6108 = vmatprep.subr.mxu0 0.0
      %6109 = vmatpush2.xpose.msra.mxu0 0.0
      %6110 = vmatprep.subr.mxu0 0.0
      %6111 = vmatpush2.xpose.msra.mxu0 0.0
      %6112 = vmatprep.subr.mxu0 0.0
      %6113 = vmatpush2.xpose.msra.mxu0 0.0
      %6114 = vmatprep.subr.mxu0 0.0
      %6115 = vmatpush2.xpose.msra.mxu0 0.0
      %6116 = vmatprep.subr.mxu0 0.0
      %6117 = vmatpush2.xpose.msra.mxu0 0.0
      %6118 = vmatprep.subr.mxu0 0.0
      %6119 = vmatpush2.xpose.msra.mxu0 0.0
      %6120 = vmatprep.subr.mxu0 0.0
      %6121 = vmatpush2.xpose.msra.mxu0 0.0
      %6122 = vmatprep.subr.mxu0 0.0
      %6123 = vmatpush2.xpose.msra.mxu0 0.0
      %6124 = vmatprep.subr.mxu0 0.0
      %6125 = vmatpush2.xpose.msra.mxu0 0.0
      %6126 = vmatprep.subr.mxu0 0.0
      %6127 = vmatpush2.xpose.msra.mxu0 0.0
      %6128 = vmatprep.subr.mxu0 0.0
      %6129 = vmatpush2.xpose.msra.mxu0 0.0
      %6130 = vmatprep.subr.mxu0 0.0
      %6131 = vmatpush2.xpose.msra.mxu0 0.0
      %6132 = vmatprep.subr.mxu0 0.0
      %6133 = vmatpush2.xpose.msra.mxu0 0.0
      %6134 = vmatprep.mubr.f32.mxu0 0.0
      %v6135 = vand.u32 %v5830, 4294901760
      %6136 = vmatmul.mubr.f32.gmra.mxu0 %v6135
      %v6137 = vpop.f32.mrf.mxu0
      %v6138 = vadd.f32 %v5957, %v6137
      %v6139 = vpop.f32.mrf.mxu0
      %6140 = vmatprep.mubr.f32.mxu0 0.0
      %v6141 = vand.u32 %v5833, 4294901760
      %6142 = vmatmul.mubr.f32.gmra.mxu0 %v6141
      %v6143 = vpop.f32.mrf.mxu0
      %v6144 = vadd.f32 %v5967, %v6143
      %v6145 = vpop.f32.mrf.mxu0
      %6146 = vmatprep.mubr.f32.mxu0 0.0
      %v6147 = vand.u32 %v5836, 4294901760
      %6148 = vmatmul.mubr.f32.gmra.mxu0 %v6147
      %v6149 = vpop.f32.mrf.mxu0
      %v6150 = vadd.f32 %v5977, %v6149
      %v6151 = vpop.f32.mrf.mxu0
      %6152 = vmatprep.mubr.f32.mxu0 0.0
      %v6153 = vand.u32 %v5839, 4294901760
      %6154 = vmatmul.mubr.f32.gmra.mxu0 %v6153
      %v6155 = vpop.f32.mrf.mxu0
      %v6156 = vadd.f32 %v5987, %v6155
      %v6157 = vpop.f32.mrf.mxu0
      %6158 = vmatprep.mubr.f32.mxu0 0.0
      %v6159 = vand.u32 %v5842, 4294901760
      %6160 = vmatmul.mubr.f32.gmra.mxu0 %v6159
      %v6161 = vpop.f32.mrf.mxu0
      %v6162 = vadd.f32 %v5997, %v6161
      %v6163 = vpop.f32.mrf.mxu0
      %6164 = vmatprep.mubr.f32.mxu0 0.0
      %v6165 = vand.u32 %v5845, 4294901760
      %6166 = vmatmul.mubr.f32.gmra.mxu0 %v6165
      %v6167 = vpop.f32.mrf.mxu0
      %v6168 = vadd.f32 %v6007, %v6167
      %v6169 = vpop.f32.mrf.mxu0
      %6170 = vmatprep.mubr.f32.mxu0 0.0
      %v6171 = vand.u32 %v5848, 4294901760
      %6172 = vmatmul.mubr.f32.gmra.mxu0 %v6171
      %v6173 = vpop.f32.mrf.mxu0
      %v6174 = vadd.f32 %v6017, %v6173
      %v6175 = vpop.f32.mrf.mxu0
      %6176 = vmatprep.mubr.f32.mxu0 0.0
      %v6177 = vand.u32 %v5851, 4294901760
      %6178 = vmatmul.mubr.f32.gmra.mxu0 %v6177
      %v6179 = vpop.f32.mrf.mxu0
      %v6180 = vadd.f32 %v6027, %v6179
      %v6181 = vpop.f32.mrf.mxu0
      %6182 = vdwg.mxu0
      %6183 = vmatprep.subr.mxu0 0.0
      %6184 = vmatpush1.xpose.msra.mxu0 0.0
      %6185 = vmatprep.subr.mxu0 0.0
      %6186 = vmatpush1.xpose.msra.mxu0 0.0
      %6187 = vmatprep.subr.mxu0 0.0
      %6188 = vmatpush1.xpose.msra.mxu0 0.0
      %6189 = vmatprep.subr.mxu0 0.0
      %6190 = vmatpush1.xpose.msra.mxu0 0.0
      %6191 = vmatprep.subr.mxu0 0.0
      %6192 = vmatpush1.xpose.msra.mxu0 0.0
      %6193 = vmatprep.subr.mxu0 0.0
      %6194 = vmatpush1.xpose.msra.mxu0 0.0
      %6195 = vmatprep.subr.mxu0 0.0
      %6196 = vmatpush1.xpose.msra.mxu0 0.0
      %6197 = vmatprep.subr.mxu0 0.0
      %6198 = vmatpush1.xpose.msra.mxu0 0.0
      %6199 = vmatprep.subr.mxu0 0.0
      %v6200 = vand.u32 %v5875, 4294901760
      %v6201 = vsub.f32 %v5875, %v6200
      %6202 = vmatpush1.xpose.msra.mxu0 %v6201
      %6203 = vmatprep.subr.mxu0 0.0
      %v6204 = vand.u32 %v5872, 4294901760
      %v6205 = vsub.f32 %v5872, %v6204
      %6206 = vmatpush1.xpose.msra.mxu0 %v6205
      %6207 = vmatprep.subr.mxu0 0.0
      %v6208 = vand.u32 %v5869, 4294901760
      %v6209 = vsub.f32 %v5869, %v6208
      %6210 = vmatpush1.xpose.msra.mxu0 %v6209
      %6211 = vmatprep.subr.mxu0 0.0
      %v6212 = vand.u32 %v5866, 4294901760
      %v6213 = vsub.f32 %v5866, %v6212
      %6214 = vmatpush1.xpose.msra.mxu0 %v6213
      %6215 = vmatprep.subr.mxu0 0.0
      %v6216 = vand.u32 %v5863, 4294901760
      %v6217 = vsub.f32 %v5863, %v6216
      %6218 = vmatpush1.xpose.msra.mxu0 %v6217
      %6219 = vmatprep.subr.mxu0 0.0
      %v6220 = vand.u32 %v5860, 4294901760
      %v6221 = vsub.f32 %v5860, %v6220
      %6222 = vmatpush1.xpose.msra.mxu0 %v6221
      %6223 = vmatprep.subr.mxu0 0.0
      %v6224 = vand.u32 %v5857, 4294901760
      %v6225 = vsub.f32 %v5857, %v6224
      %6226 = vmatpush1.xpose.msra.mxu0 %v6225
      %6227 = vmatprep.subr.mxu0 0.0
      %v6228 = vand.u32 %v5854, 4294901760
      %v6229 = vsub.f32 %v5854, %v6228
      %6230 = vmatpush1.xpose.msra.mxu0 %v6229
      %6231 = vmatprep.subr.mxu0 0.0
      %6232 = vmatpush2.xpose.msra.mxu0 0.0
      %6233 = vmatprep.subr.mxu0 0.0
      %6234 = vmatpush2.xpose.msra.mxu0 0.0
      %6235 = vmatprep.subr.mxu0 0.0
      %6236 = vmatpush2.xpose.msra.mxu0 0.0
      %6237 = vmatprep.subr.mxu0 0.0
      %6238 = vmatpush2.xpose.msra.mxu0 0.0
      %6239 = vmatprep.subr.mxu0 0.0
      %6240 = vmatpush2.xpose.msra.mxu0 0.0
      %6241 = vmatprep.subr.mxu0 0.0
      %6242 = vmatpush2.xpose.msra.mxu0 0.0
      %6243 = vmatprep.subr.mxu0 0.0
      %6244 = vmatpush2.xpose.msra.mxu0 0.0
      %6245 = vmatprep.subr.mxu0 0.0
      %6246 = vmatpush2.xpose.msra.mxu0 0.0
      %6247 = vmatprep.subr.mxu0 0.0
      %6248 = vmatpush2.xpose.msra.mxu0 0.0
      %6249 = vmatprep.subr.mxu0 0.0
      %6250 = vmatpush2.xpose.msra.mxu0 0.0
      %6251 = vmatprep.subr.mxu0 0.0
      %6252 = vmatpush2.xpose.msra.mxu0 0.0
      %6253 = vmatprep.subr.mxu0 0.0
      %6254 = vmatpush2.xpose.msra.mxu0 0.0
      %6255 = vmatprep.subr.mxu0 0.0
      %6256 = vmatpush2.xpose.msra.mxu0 0.0
      %6257 = vmatprep.subr.mxu0 0.0
      %6258 = vmatpush2.xpose.msra.mxu0 0.0
      %6259 = vmatprep.subr.mxu0 0.0
      %6260 = vmatpush2.xpose.msra.mxu0 0.0
      %6261 = vmatprep.subr.mxu0 0.0
      %6262 = vmatpush2.xpose.msra.mxu0 0.0
      %6263 = vmatprep.mubr.f32.mxu0 0.0
      %v6264 = vand.u32 %v5830, 4294901760
      %v6265 = vsub.f32 %v5830, %v6264
      %6266 = vmatmul.mubr.f32.gmra.mxu0 %v6265
      %v6267 = vpop.f32.mrf.mxu0
      %v6268 = vadd.f32 %v6138, %v6267
      %v6269 = vpop.f32.mrf.mxu0
      %6270 = vmatprep.mubr.f32.mxu0 0.0
      %v6271 = vand.u32 %v5833, 4294901760
      %v6272 = vsub.f32 %v5833, %v6271
      %6273 = vmatmul.mubr.f32.gmra.mxu0 %v6272
      %v6274 = vpop.f32.mrf.mxu0
      %v6275 = vadd.f32 %v6144, %v6274
      %v6276 = vpop.f32.mrf.mxu0
      %6277 = vmatprep.mubr.f32.mxu0 0.0
      %v6278 = vand.u32 %v5836, 4294901760
      %v6279 = vsub.f32 %v5836, %v6278
      %6280 = vmatmul.mubr.f32.gmra.mxu0 %v6279
      %v6281 = vpop.f32.mrf.mxu0
      %v6282 = vadd.f32 %v6150, %v6281
      %v6283 = vpop.f32.mrf.mxu0
      %6284 = vmatprep.mubr.f32.mxu0 0.0
      %v6285 = vand.u32 %v5839, 4294901760
      %v6286 = vsub.f32 %v5839, %v6285
      %6287 = vmatmul.mubr.f32.gmra.mxu0 %v6286
      %v6288 = vpop.f32.mrf.mxu0
      %v6289 = vadd.f32 %v6156, %v6288
      %v6290 = vpop.f32.mrf.mxu0
      %6291 = vmatprep.mubr.f32.mxu0 0.0
      %v6292 = vand.u32 %v5842, 4294901760
      %v6293 = vsub.f32 %v5842, %v6292
      %6294 = vmatmul.mubr.f32.gmra.mxu0 %v6293
      %v6295 = vpop.f32.mrf.mxu0
      %v6296 = vadd.f32 %v6162, %v6295
      %v6297 = vpop.f32.mrf.mxu0
      %6298 = vmatprep.mubr.f32.mxu0 0.0
      %v6299 = vand.u32 %v5845, 4294901760
      %v6300 = vsub.f32 %v5845, %v6299
      %6301 = vmatmul.mubr.f32.gmra.mxu0 %v6300
      %v6302 = vpop.f32.mrf.mxu0
      %v6303 = vadd.f32 %v6168, %v6302
      %v6304 = vpop.f32.mrf.mxu0
      %6305 = vmatprep.mubr.f32.mxu0 0.0
      %v6306 = vand.u32 %v5848, 4294901760
      %v6307 = vsub.f32 %v5848, %v6306
      %6308 = vmatmul.mubr.f32.gmra.mxu0 %v6307
      %v6309 = vpop.f32.mrf.mxu0
      %v6310 = vadd.f32 %v6174, %v6309
      %v6311 = vpop.f32.mrf.mxu0
      %6312 = vmatprep.mubr.f32.mxu0 0.0
      %v6313 = vand.u32 %v5851, 4294901760
      %v6314 = vsub.f32 %v5851, %v6313
      %6315 = vmatmul.mubr.f32.gmra.mxu0 %v6314
      %v6316 = vpop.f32.mrf.mxu0
      %v6317 = vadd.f32 %v6180, %v6316
      %v6318 = vpop.f32.mrf.mxu0
      %6319 = vdwg.mxu0
      %6320 = vmatprep.subr.mxu0 0.0
      %6321 = vmatpush1.xpose.msra.mxu0 0.0
      %6322 = vmatprep.subr.mxu0 0.0
      %6323 = vmatpush1.xpose.msra.mxu0 0.0
      %6324 = vmatprep.subr.mxu0 0.0
      %6325 = vmatpush1.xpose.msra.mxu0 0.0
      %6326 = vmatprep.subr.mxu0 0.0
      %6327 = vmatpush1.xpose.msra.mxu0 0.0
      %6328 = vmatprep.subr.mxu0 0.0
      %6329 = vmatpush1.xpose.msra.mxu0 0.0
      %6330 = vmatprep.subr.mxu0 0.0
      %6331 = vmatpush1.xpose.msra.mxu0 0.0
      %6332 = vmatprep.subr.mxu0 0.0
      %6333 = vmatpush1.xpose.msra.mxu0 0.0
      %6334 = vmatprep.subr.mxu0 0.0
      %6335 = vmatpush1.xpose.msra.mxu0 0.0
      %6336 = vmatprep.subr.mxu0 0.0
      %v6337 = vand.u32 %v5875, 4294901760
      %6338 = vmatpush1.xpose.msra.mxu0 %v6337
      %6339 = vmatprep.subr.mxu0 0.0
      %v6340 = vand.u32 %v5872, 4294901760
      %6341 = vmatpush1.xpose.msra.mxu0 %v6340
      %6342 = vmatprep.subr.mxu0 0.0
      %v6343 = vand.u32 %v5869, 4294901760
      %6344 = vmatpush1.xpose.msra.mxu0 %v6343
      %6345 = vmatprep.subr.mxu0 0.0
      %v6346 = vand.u32 %v5866, 4294901760
      %6347 = vmatpush1.xpose.msra.mxu0 %v6346
      %6348 = vmatprep.subr.mxu0 0.0
      %v6349 = vand.u32 %v5863, 4294901760
      %6350 = vmatpush1.xpose.msra.mxu0 %v6349
      %6351 = vmatprep.subr.mxu0 0.0
      %v6352 = vand.u32 %v5860, 4294901760
      %6353 = vmatpush1.xpose.msra.mxu0 %v6352
      %6354 = vmatprep.subr.mxu0 0.0
      %v6355 = vand.u32 %v5857, 4294901760
      %6356 = vmatpush1.xpose.msra.mxu0 %v6355
      %6357 = vmatprep.subr.mxu0 0.0
      %v6358 = vand.u32 %v5854, 4294901760
      %6359 = vmatpush1.xpose.msra.mxu0 %v6358
      %6360 = vmatprep.subr.mxu0 0.0
      %6361 = vmatpush2.xpose.msra.mxu0 0.0
      %6362 = vmatprep.subr.mxu0 0.0
      %6363 = vmatpush2.xpose.msra.mxu0 0.0
      %6364 = vmatprep.subr.mxu0 0.0
      %6365 = vmatpush2.xpose.msra.mxu0 0.0
      %6366 = vmatprep.subr.mxu0 0.0
      %6367 = vmatpush2.xpose.msra.mxu0 0.0
      %6368 = vmatprep.subr.mxu0 0.0
      %6369 = vmatpush2.xpose.msra.mxu0 0.0
      %6370 = vmatprep.subr.mxu0 0.0
      %6371 = vmatpush2.xpose.msra.mxu0 0.0
      %6372 = vmatprep.subr.mxu0 0.0
      %6373 = vmatpush2.xpose.msra.mxu0 0.0
      %6374 = vmatprep.subr.mxu0 0.0
      %6375 = vmatpush2.xpose.msra.mxu0 0.0
      %6376 = vmatprep.subr.mxu0 0.0
      %6377 = vmatpush2.xpose.msra.mxu0 0.0
      %6378 = vmatprep.subr.mxu0 0.0
      %6379 = vmatpush2.xpose.msra.mxu0 0.0
      %6380 = vmatprep.subr.mxu0 0.0
      %6381 = vmatpush2.xpose.msra.mxu0 0.0
      %6382 = vmatprep.subr.mxu0 0.0
      %6383 = vmatpush2.xpose.msra.mxu0 0.0
      %6384 = vmatprep.subr.mxu0 0.0
      %6385 = vmatpush2.xpose.msra.mxu0 0.0
      %6386 = vmatprep.subr.mxu0 0.0
      %6387 = vmatpush2.xpose.msra.mxu0 0.0
      %6388 = vmatprep.subr.mxu0 0.0
      %6389 = vmatpush2.xpose.msra.mxu0 0.0
      %6390 = vmatprep.subr.mxu0 0.0
      %6391 = vmatpush2.xpose.msra.mxu0 0.0
      %6392 = vmatprep.mubr.f32.mxu0 0.0
      %v6393 = vand.u32 %v5830, 4294901760
      %v6394 = vsub.f32 %v5830, %v6393
      %v6395 = vand.u32 %v6394, 4294901760
      %6396 = vmatmul.mubr.f32.gmra.mxu0 %v6395
      %v6397 = vpop.f32.mrf.mxu0
      %v6398 = vadd.f32 %v6268, %v6397
      %v6399 = vpop.f32.mrf.mxu0
      %6400 = vmatprep.mubr.f32.mxu0 0.0
      %v6401 = vand.u32 %v5833, 4294901760
      %v6402 = vsub.f32 %v5833, %v6401
      %v6403 = vand.u32 %v6402, 4294901760
      %6404 = vmatmul.mubr.f32.gmra.mxu0 %v6403
      %v6405 = vpop.f32.mrf.mxu0
      %v6406 = vadd.f32 %v6275, %v6405
      %v6407 = vpop.f32.mrf.mxu0
      %6408 = vmatprep.mubr.f32.mxu0 0.0
      %v6409 = vand.u32 %v5836, 4294901760
      %v6410 = vsub.f32 %v5836, %v6409
      %v6411 = vand.u32 %v6410, 4294901760
      %6412 = vmatmul.mubr.f32.gmra.mxu0 %v6411
      %v6413 = vpop.f32.mrf.mxu0
      %v6414 = vadd.f32 %v6282, %v6413
      %v6415 = vpop.f32.mrf.mxu0
      %6416 = vmatprep.mubr.f32.mxu0 0.0
      %v6417 = vand.u32 %v5839, 4294901760
      %v6418 = vsub.f32 %v5839, %v6417
      %v6419 = vand.u32 %v6418, 4294901760
      %6420 = vmatmul.mubr.f32.gmra.mxu0 %v6419
      %v6421 = vpop.f32.mrf.mxu0
      %v6422 = vadd.f32 %v6289, %v6421
      %v6423 = vpop.f32.mrf.mxu0
      %6424 = vmatprep.mubr.f32.mxu0 0.0
      %v6425 = vand.u32 %v5842, 4294901760
      %v6426 = vsub.f32 %v5842, %v6425
      %v6427 = vand.u32 %v6426, 4294901760
      %6428 = vmatmul.mubr.f32.gmra.mxu0 %v6427
      %v6429 = vpop.f32.mrf.mxu0
      %v6430 = vadd.f32 %v6296, %v6429
      %v6431 = vpop.f32.mrf.mxu0
      %6432 = vmatprep.mubr.f32.mxu0 0.0
      %v6433 = vand.u32 %v5845, 4294901760
      %v6434 = vsub.f32 %v5845, %v6433
      %v6435 = vand.u32 %v6434, 4294901760
      %6436 = vmatmul.mubr.f32.gmra.mxu0 %v6435
      %v6437 = vpop.f32.mrf.mxu0
      %v6438 = vadd.f32 %v6303, %v6437
      %v6439 = vpop.f32.mrf.mxu0
      %6440 = vmatprep.mubr.f32.mxu0 0.0
      %v6441 = vand.u32 %v5848, 4294901760
      %v6442 = vsub.f32 %v5848, %v6441
      %v6443 = vand.u32 %v6442, 4294901760
      %6444 = vmatmul.mubr.f32.gmra.mxu0 %v6443
      %v6445 = vpop.f32.mrf.mxu0
      %v6446 = vadd.f32 %v6310, %v6445
      %v6447 = vpop.f32.mrf.mxu0
      %6448 = vmatprep.mubr.f32.mxu0 0.0
      %v6449 = vand.u32 %v5851, 4294901760
      %v6450 = vsub.f32 %v5851, %v6449
      %v6451 = vand.u32 %v6450, 4294901760
      %6452 = vmatmul.mubr.f32.gmra.mxu0 %v6451
      %v6453 = vpop.f32.mrf.mxu0
      %v6454 = vadd.f32 %v6317, %v6453
      %v6455 = vpop.f32.mrf.mxu0
      %6456 = vdwg.mxu0
      %6457 = vmatprep.subr.mxu0 0.0
      %6458 = vmatpush1.xpose.msra.mxu0 0.0
      %6459 = vmatprep.subr.mxu0 0.0
      %6460 = vmatpush1.xpose.msra.mxu0 0.0
      %6461 = vmatprep.subr.mxu0 0.0
      %6462 = vmatpush1.xpose.msra.mxu0 0.0
      %6463 = vmatprep.subr.mxu0 0.0
      %6464 = vmatpush1.xpose.msra.mxu0 0.0
      %6465 = vmatprep.subr.mxu0 0.0
      %6466 = vmatpush1.xpose.msra.mxu0 0.0
      %6467 = vmatprep.subr.mxu0 0.0
      %6468 = vmatpush1.xpose.msra.mxu0 0.0
      %6469 = vmatprep.subr.mxu0 0.0
      %6470 = vmatpush1.xpose.msra.mxu0 0.0
      %6471 = vmatprep.subr.mxu0 0.0
      %6472 = vmatpush1.xpose.msra.mxu0 0.0
      %6473 = vmatprep.subr.mxu0 0.0
      %v6474 = vand.u32 %v5875, 4294901760
      %v6475 = vsub.f32 %v5875, %v6474
      %v6476 = vand.u32 %v6475, 4294901760
      %6477 = vmatpush1.xpose.msra.mxu0 %v6476
      %6478 = vmatprep.subr.mxu0 0.0
      %v6479 = vand.u32 %v5872, 4294901760
      %v6480 = vsub.f32 %v5872, %v6479
      %v6481 = vand.u32 %v6480, 4294901760
      %6482 = vmatpush1.xpose.msra.mxu0 %v6481
      %6483 = vmatprep.subr.mxu0 0.0
      %v6484 = vand.u32 %v5869, 4294901760
      %v6485 = vsub.f32 %v5869, %v6484
      %v6486 = vand.u32 %v6485, 4294901760
      %6487 = vmatpush1.xpose.msra.mxu0 %v6486
      %6488 = vmatprep.subr.mxu0 0.0
      %v6489 = vand.u32 %v5866, 4294901760
      %v6490 = vsub.f32 %v5866, %v6489
      %v6491 = vand.u32 %v6490, 4294901760
      %6492 = vmatpush1.xpose.msra.mxu0 %v6491
      %6493 = vmatprep.subr.mxu0 0.0
      %v6494 = vand.u32 %v5863, 4294901760
      %v6495 = vsub.f32 %v5863, %v6494
      %v6496 = vand.u32 %v6495, 4294901760
      %6497 = vmatpush1.xpose.msra.mxu0 %v6496
      %6498 = vmatprep.subr.mxu0 0.0
      %v6499 = vand.u32 %v5860, 4294901760
      %v6500 = vsub.f32 %v5860, %v6499
      %v6501 = vand.u32 %v6500, 4294901760
      %6502 = vmatpush1.xpose.msra.mxu0 %v6501
      %6503 = vmatprep.subr.mxu0 0.0
      %v6504 = vand.u32 %v5857, 4294901760
      %v6505 = vsub.f32 %v5857, %v6504
      %v6506 = vand.u32 %v6505, 4294901760
      %6507 = vmatpush1.xpose.msra.mxu0 %v6506
      %6508 = vmatprep.subr.mxu0 0.0
      %v6509 = vand.u32 %v5854, 4294901760
      %v6510 = vsub.f32 %v5854, %v6509
      %v6511 = vand.u32 %v6510, 4294901760
      %6512 = vmatpush1.xpose.msra.mxu0 %v6511
      %6513 = vmatprep.subr.mxu0 0.0
      %6514 = vmatpush2.xpose.msra.mxu0 0.0
      %6515 = vmatprep.subr.mxu0 0.0
      %6516 = vmatpush2.xpose.msra.mxu0 0.0
      %6517 = vmatprep.subr.mxu0 0.0
      %6518 = vmatpush2.xpose.msra.mxu0 0.0
      %6519 = vmatprep.subr.mxu0 0.0
      %6520 = vmatpush2.xpose.msra.mxu0 0.0
      %6521 = vmatprep.subr.mxu0 0.0
      %6522 = vmatpush2.xpose.msra.mxu0 0.0
      %6523 = vmatprep.subr.mxu0 0.0
      %6524 = vmatpush2.xpose.msra.mxu0 0.0
      %6525 = vmatprep.subr.mxu0 0.0
      %6526 = vmatpush2.xpose.msra.mxu0 0.0
      %6527 = vmatprep.subr.mxu0 0.0
      %6528 = vmatpush2.xpose.msra.mxu0 0.0
      %6529 = vmatprep.subr.mxu0 0.0
      %6530 = vmatpush2.xpose.msra.mxu0 0.0
      %6531 = vmatprep.subr.mxu0 0.0
      %6532 = vmatpush2.xpose.msra.mxu0 0.0
      %6533 = vmatprep.subr.mxu0 0.0
      %6534 = vmatpush2.xpose.msra.mxu0 0.0
      %6535 = vmatprep.subr.mxu0 0.0
      %6536 = vmatpush2.xpose.msra.mxu0 0.0
      %6537 = vmatprep.subr.mxu0 0.0
      %6538 = vmatpush2.xpose.msra.mxu0 0.0
      %6539 = vmatprep.subr.mxu0 0.0
      %6540 = vmatpush2.xpose.msra.mxu0 0.0
      %6541 = vmatprep.subr.mxu0 0.0
      %6542 = vmatpush2.xpose.msra.mxu0 0.0
      %6543 = vmatprep.subr.mxu0 0.0
      %6544 = vmatpush2.xpose.msra.mxu0 0.0
      %6545 = vmatprep.mubr.f32.mxu0 0.0
      %v6546 = vand.u32 %v5830, 4294901760
      %6547 = vmatmul.mubr.f32.gmra.mxu0 %v6546
      %v6548 = vpop.f32.mrf.mxu0
      %v6549 = vadd.f32 %v6398, %v6548
      %v6550 = vpop.f32.mrf.mxu0
      %6551 = vmatprep.mubr.f32.mxu0 0.0
      %v6552 = vand.u32 %v5833, 4294901760
      %6553 = vmatmul.mubr.f32.gmra.mxu0 %v6552
      %v6554 = vpop.f32.mrf.mxu0
      %v6555 = vadd.f32 %v6406, %v6554
      %v6556 = vpop.f32.mrf.mxu0
      %6557 = vmatprep.mubr.f32.mxu0 0.0
      %v6558 = vand.u32 %v5836, 4294901760
      %6559 = vmatmul.mubr.f32.gmra.mxu0 %v6558
      %v6560 = vpop.f32.mrf.mxu0
      %v6561 = vadd.f32 %v6414, %v6560
      %v6562 = vpop.f32.mrf.mxu0
      %6563 = vmatprep.mubr.f32.mxu0 0.0
      %v6564 = vand.u32 %v5839, 4294901760
      %6565 = vmatmul.mubr.f32.gmra.mxu0 %v6564
      %v6566 = vpop.f32.mrf.mxu0
      %v6567 = vadd.f32 %v6422, %v6566
      %v6568 = vpop.f32.mrf.mxu0
      %6569 = vmatprep.mubr.f32.mxu0 0.0
      %v6570 = vand.u32 %v5842, 4294901760
      %6571 = vmatmul.mubr.f32.gmra.mxu0 %v6570
      %v6572 = vpop.f32.mrf.mxu0
      %v6573 = vadd.f32 %v6430, %v6572
      %v6574 = vpop.f32.mrf.mxu0
      %6575 = vmatprep.mubr.f32.mxu0 0.0
      %v6576 = vand.u32 %v5845, 4294901760
      %6577 = vmatmul.mubr.f32.gmra.mxu0 %v6576
      %v6578 = vpop.f32.mrf.mxu0
      %v6579 = vadd.f32 %v6438, %v6578
      %v6580 = vpop.f32.mrf.mxu0
      %6581 = vmatprep.mubr.f32.mxu0 0.0
      %v6582 = vand.u32 %v5848, 4294901760
      %6583 = vmatmul.mubr.f32.gmra.mxu0 %v6582
      %v6584 = vpop.f32.mrf.mxu0
      %v6585 = vadd.f32 %v6446, %v6584
      %v6586 = vpop.f32.mrf.mxu0
      %6587 = vmatprep.mubr.f32.mxu0 0.0
      %v6588 = vand.u32 %v5851, 4294901760
      %6589 = vmatmul.mubr.f32.gmra.mxu0 %v6588
      %v6590 = vpop.f32.mrf.mxu0
      %v6591 = vadd.f32 %v6454, %v6590
      %v6592 = vpop.f32.mrf.mxu0
      %6593 = vdwg.mxu0
      %6594 = vmatprep.subr.mxu0 0.0
      %6595 = vmatpush1.xpose.msra.mxu0 0.0
      %6596 = vmatprep.subr.mxu0 0.0
      %6597 = vmatpush1.xpose.msra.mxu0 0.0
      %6598 = vmatprep.subr.mxu0 0.0
      %6599 = vmatpush1.xpose.msra.mxu0 0.0
      %6600 = vmatprep.subr.mxu0 0.0
      %6601 = vmatpush1.xpose.msra.mxu0 0.0
      %6602 = vmatprep.subr.mxu0 0.0
      %6603 = vmatpush1.xpose.msra.mxu0 0.0
      %6604 = vmatprep.subr.mxu0 0.0
      %6605 = vmatpush1.xpose.msra.mxu0 0.0
      %6606 = vmatprep.subr.mxu0 0.0
      %6607 = vmatpush1.xpose.msra.mxu0 0.0
      %6608 = vmatprep.subr.mxu0 0.0
      %6609 = vmatpush1.xpose.msra.mxu0 0.0
      %6610 = vmatprep.subr.mxu0 0.0
      %v6611 = vand.u32 %v5875, 4294901760
      %6612 = vmatpush1.xpose.msra.mxu0 %v6611
      %6613 = vmatprep.subr.mxu0 0.0
      %v6614 = vand.u32 %v5872, 4294901760
      %6615 = vmatpush1.xpose.msra.mxu0 %v6614
      %6616 = vmatprep.subr.mxu0 0.0
      %v6617 = vand.u32 %v5869, 4294901760
      %6618 = vmatpush1.xpose.msra.mxu0 %v6617
      %6619 = vmatprep.subr.mxu0 0.0
      %v6620 = vand.u32 %v5866, 4294901760
      %6621 = vmatpush1.xpose.msra.mxu0 %v6620
      %6622 = vmatprep.subr.mxu0 0.0
      %v6623 = vand.u32 %v5863, 4294901760
      %6624 = vmatpush1.xpose.msra.mxu0 %v6623
      %6625 = vmatprep.subr.mxu0 0.0
      %v6626 = vand.u32 %v5860, 4294901760
      %6627 = vmatpush1.xpose.msra.mxu0 %v6626
      %6628 = vmatprep.subr.mxu0 0.0
      %v6629 = vand.u32 %v5857, 4294901760
      %6630 = vmatpush1.xpose.msra.mxu0 %v6629
      %6631 = vmatprep.subr.mxu0 0.0
      %v6632 = vand.u32 %v5854, 4294901760
      %6633 = vmatpush1.xpose.msra.mxu0 %v6632
      %6634 = vmatprep.subr.mxu0 0.0
      %6635 = vmatpush2.xpose.msra.mxu0 0.0
      %6636 = vmatprep.subr.mxu0 0.0
      %6637 = vmatpush2.xpose.msra.mxu0 0.0
      %6638 = vmatprep.subr.mxu0 0.0
      %6639 = vmatpush2.xpose.msra.mxu0 0.0
      %6640 = vmatprep.subr.mxu0 0.0
      %6641 = vmatpush2.xpose.msra.mxu0 0.0
      %6642 = vmatprep.subr.mxu0 0.0
      %6643 = vmatpush2.xpose.msra.mxu0 0.0
      %6644 = vmatprep.subr.mxu0 0.0
      %6645 = vmatpush2.xpose.msra.mxu0 0.0
      %6646 = vmatprep.subr.mxu0 0.0
      %6647 = vmatpush2.xpose.msra.mxu0 0.0
      %6648 = vmatprep.subr.mxu0 0.0
      %6649 = vmatpush2.xpose.msra.mxu0 0.0
      %6650 = vmatprep.subr.mxu0 0.0
      %6651 = vmatpush2.xpose.msra.mxu0 0.0
      %6652 = vmatprep.subr.mxu0 0.0
      %6653 = vmatpush2.xpose.msra.mxu0 0.0
      %6654 = vmatprep.subr.mxu0 0.0
      %6655 = vmatpush2.xpose.msra.mxu0 0.0
      %6656 = vmatprep.subr.mxu0 0.0
      %6657 = vmatpush2.xpose.msra.mxu0 0.0
      %6658 = vmatprep.subr.mxu0 0.0
      %6659 = vmatpush2.xpose.msra.mxu0 0.0
      %6660 = vmatprep.subr.mxu0 0.0
      %6661 = vmatpush2.xpose.msra.mxu0 0.0
      %6662 = vmatprep.subr.mxu0 0.0
      %6663 = vmatpush2.xpose.msra.mxu0 0.0
      %6664 = vmatprep.subr.mxu0 0.0
      %6665 = vmatpush2.xpose.msra.mxu0 0.0
      %6666 = vmatprep.mubr.f32.mxu0 0.0
      %v6667 = vand.u32 %v5830, 4294901760
      %6668 = vmatmul.mubr.f32.gmra.mxu0 %v6667
      %v6669 = vpop.f32.mrf.mxu0
      %v6670 = vadd.f32 %v6549, %v6669
      %v6671 = vpop.f32.mrf.mxu0
      %6672 = vmatprep.mubr.f32.mxu0 0.0
      %v6673 = vand.u32 %v5833, 4294901760
      %6674 = vmatmul.mubr.f32.gmra.mxu0 %v6673
      %v6675 = vpop.f32.mrf.mxu0
      %v6676 = vadd.f32 %v6555, %v6675
      %v6677 = vpop.f32.mrf.mxu0
      %6678 = vmatprep.mubr.f32.mxu0 0.0
      %v6679 = vand.u32 %v5836, 4294901760
      %6680 = vmatmul.mubr.f32.gmra.mxu0 %v6679
      %v6681 = vpop.f32.mrf.mxu0
      %v6682 = vadd.f32 %v6561, %v6681
      %v6683 = vpop.f32.mrf.mxu0
      %6684 = vmatprep.mubr.f32.mxu0 0.0
      %v6685 = vand.u32 %v5839, 4294901760
      %6686 = vmatmul.mubr.f32.gmra.mxu0 %v6685
      %v6687 = vpop.f32.mrf.mxu0
      %v6688 = vadd.f32 %v6567, %v6687
      %v6689 = vpop.f32.mrf.mxu0
      %6690 = vmatprep.mubr.f32.mxu0 0.0
      %v6691 = vand.u32 %v5842, 4294901760
      %6692 = vmatmul.mubr.f32.gmra.mxu0 %v6691
      %v6693 = vpop.f32.mrf.mxu0
      %v6694 = vadd.f32 %v6573, %v6693
      %v6695 = vpop.f32.mrf.mxu0
      %6696 = vmatprep.mubr.f32.mxu0 0.0
      %v6697 = vand.u32 %v5845, 4294901760
      %6698 = vmatmul.mubr.f32.gmra.mxu0 %v6697
      %v6699 = vpop.f32.mrf.mxu0
      %v6700 = vadd.f32 %v6579, %v6699
      %v6701 = vpop.f32.mrf.mxu0
      %6702 = vmatprep.mubr.f32.mxu0 0.0
      %v6703 = vand.u32 %v5848, 4294901760
      %6704 = vmatmul.mubr.f32.gmra.mxu0 %v6703
      %v6705 = vpop.f32.mrf.mxu0
      %v6706 = vadd.f32 %v6585, %v6705
      %v6707 = vpop.f32.mrf.mxu0
      %6708 = vmatprep.mubr.f32.mxu0 0.0
      %v6709 = vand.u32 %v5851, 4294901760
      %6710 = vmatmul.mubr.f32.gmra.mxu0 %v6709
      %v6711 = vpop.f32.mrf.mxu0
      %v6712 = vadd.f32 %v6591, %v6711
      %v6713 = vpop.f32.mrf.mxu0
      %6714 = vdwg.mxu0
      %v6715 = vmul.f32 %v6670, 0.17677669
      %v6716 = vmul.f32 %v6676, 0.17677669
      %v6717 = vmul.f32 %v6682, 0.17677669
      %v6718 = vmul.f32 %v6688, 0.17677669
      %v6719 = vmul.f32 %v6694, 0.17677669
      %v6720 = vmul.f32 %v6700, 0.17677669
      %v6721 = vmul.f32 %v6706, 0.17677669
      %v6722 = vmul.f32 %v6712, 0.17677669
      %vm6723 = vcmask 523264
      %v6724 = vsel %vm6723, %v6715, -inf
      %6725 = vmax.xlane.f32.xlu0 %v6724
      %v6726 = vpop.xlane.xlu0 %6725
      %v6727 = vsel %vm6723, %v6716, -inf
      %6728 = vmax.xlane.f32.xlu0 %v6727
      %v6729 = vpop.xlane.xlu0 %6728
      %v6730 = vsel %vm6723, %v6717, -inf
      %6731 = vmax.xlane.f32.xlu0 %v6730
      %v6732 = vpop.xlane.xlu0 %6731
      %v6733 = vsel %vm6723, %v6718, -inf
      %6734 = vmax.xlane.f32.xlu0 %v6733
      %v6735 = vpop.xlane.xlu0 %6734
      %v6736 = vsel %vm6723, %v6719, -inf
      %6737 = vmax.xlane.f32.xlu0 %v6736
      %v6738 = vpop.xlane.xlu0 %6737
      %v6739 = vsel %vm6723, %v6720, -inf
      %6740 = vmax.xlane.f32.xlu0 %v6739
      %v6741 = vpop.xlane.xlu0 %6740
      %v6742 = vsel %vm6723, %v6721, -inf
      %6743 = vmax.xlane.f32.xlu0 %v6742
      %v6744 = vpop.xlane.xlu0 %6743
      %v6745 = vsel %vm6723, %v6722, -inf
      %6746 = vmax.xlane.f32.xlu0 %v6745
      %v6747 = vpop.xlane.xlu0 %6746
      %v6748 = vsub.f32 %v6715, %v6726
      %v6749 = vsub.f32 %v6716, %v6729
      %v6750 = vsub.f32 %v6717, %v6732
      %v6751 = vsub.f32 %v6718, %v6735
      %v6752 = vsub.f32 %v6719, %v6738
      %v6753 = vsub.f32 %v6720, %v6741
      %v6754 = vsub.f32 %v6721, %v6744
      %v6755 = vsub.f32 %v6722, %v6747
      %v6756 = vmul.f32 %v6748, 1.442695
      %v6757 = vpow.pop %v6756
      %v6758 = vmul.f32 %v6749, 1.442695
      %v6759 = vpow.pop %v6758
      %v6760 = vmul.f32 %v6750, 1.442695
      %v6761 = vpow.pop %v6760
      %v6762 = vmul.f32 %v6751, 1.442695
      %v6763 = vpow.pop %v6762
      %v6764 = vmul.f32 %v6752, 1.442695
      %v6765 = vpow.pop %v6764
      %v6766 = vmul.f32 %v6753, 1.442695
      %v6767 = vpow.pop %v6766
      %v6768 = vmul.f32 %v6754, 1.442695
      %v6769 = vpow.pop %v6768
      %v6770 = vmul.f32 %v6755, 1.442695
      %v6771 = vpow.pop %v6770
      %v6772 = vsel %vm6723, %v6757, 0.0
      %6773 = vadd.xlane.f32.xlu0 %v6772
      %v6774 = vpop.xlane.xlu0 %6773
      %v6775 = vsel %vm6723, %v6759, 0.0
      %6776 = vadd.xlane.f32.xlu0 %v6775
      %v6777 = vpop.xlane.xlu0 %6776
      %v6778 = vsel %vm6723, %v6761, 0.0
      %6779 = vadd.xlane.f32.xlu0 %v6778
      %v6780 = vpop.xlane.xlu0 %6779
      %v6781 = vsel %vm6723, %v6763, 0.0
      %6782 = vadd.xlane.f32.xlu0 %v6781
      %v6783 = vpop.xlane.xlu0 %6782
      %v6784 = vsel %vm6723, %v6765, 0.0
      %6785 = vadd.xlane.f32.xlu0 %v6784
      %v6786 = vpop.xlane.xlu0 %6785
      %v6787 = vsel %vm6723, %v6767, 0.0
      %6788 = vadd.xlane.f32.xlu0 %v6787
      %v6789 = vpop.xlane.xlu0 %6788
      %v6790 = vsel %vm6723, %v6769, 0.0
      %6791 = vadd.xlane.f32.xlu0 %v6790
      %v6792 = vpop.xlane.xlu0 %6791
      %v6793 = vsel %vm6723, %v6771, 0.0
      %6794 = vadd.xlane.f32.xlu0 %v6793
      %v6795 = vpop.xlane.xlu0 %6794
      %v6796 = vrcp.pop %v6774
      %v6797 = vmul.f32 %v6757, %v6796
      %v6798 = vrcp.pop %v6777
      %v6799 = vmul.f32 %v6759, %v6798
      %v6800 = vrcp.pop %v6780
      %v6801 = vmul.f32 %v6761, %v6800
      %v6802 = vrcp.pop %v6783
      %v6803 = vmul.f32 %v6763, %v6802
      %v6804 = vrcp.pop %v6786
      %v6805 = vmul.f32 %v6765, %v6804
      %v6806 = vrcp.pop %v6789
      %v6807 = vmul.f32 %v6767, %v6806
      %v6808 = vrcp.pop %v6792
      %v6809 = vmul.f32 %v6769, %v6808
      %v6810 = vrcp.pop %v6795
      %v6811 = vmul.f32 %v6771, %v6810
      %v6812 = vmax.f32 %v6724, %v6736
      %v6813 = vmax.f32 %v6727, %v6739
      %v6814 = vmax.f32 %v6730, %v6742
      %v6815 = vmax.f32 %v6733, %v6745
      %v6816 = vmax.f32 %v6812, %v6813
      %v6817 = vmax.f32 %v6814, %v6815
      %v6818 = vmax.f32 %v6816, %v6817
      %v6819 = vrot.slane %v6818, 4
      %v6820 = vmax.f32 %v6818, %v6819
      %v6821 = vrot.slane %v6820, 2
      %v6822 = vmax.f32 %v6820, %v6821
      %v6823 = vrot.slane %v6822, 1
      %v6824 = vmax.f32 %v6822, %v6823
      %v6825 = vsub.f32 %v6715, %v6824
      %v6826 = vsub.f32 %v6716, %v6824
      %v6827 = vsub.f32 %v6717, %v6824
      %v6828 = vsub.f32 %v6718, %v6824
      %v6829 = vsub.f32 %v6719, %v6824
      %v6830 = vsub.f32 %v6720, %v6824
      %v6831 = vsub.f32 %v6721, %v6824
      %v6832 = vsub.f32 %v6722, %v6824
      %v6833 = vmul.f32 %v6825, 1.442695
      %v6834 = vpow.pop %v6833
      %v6835 = vmul.f32 %v6826, 1.442695
      %v6836 = vpow.pop %v6835
      %v6837 = vmul.f32 %v6827, 1.442695
      %v6838 = vpow.pop %v6837
      %v6839 = vmul.f32 %v6828, 1.442695
      %v6840 = vpow.pop %v6839
      %v6841 = vmul.f32 %v6829, 1.442695
      %v6842 = vpow.pop %v6841
      %v6843 = vmul.f32 %v6830, 1.442695
      %v6844 = vpow.pop %v6843
      %v6845 = vmul.f32 %v6831, 1.442695
      %v6846 = vpow.pop %v6845
      %v6847 = vmul.f32 %v6832, 1.442695
      %v6848 = vpow.pop %v6847
      %v6849 = vsel %vm6723, %v6834, 0.0
      %v6850 = vsel %vm6723, %v6836, 0.0
      %v6851 = vadd.f32 %v6849, %v6850
      %v6852 = vsel %vm6723, %v6838, 0.0
      %v6853 = vadd.f32 %v6851, %v6852
      %v6854 = vsel %vm6723, %v6840, 0.0
      %v6855 = vadd.f32 %v6853, %v6854
      %v6856 = vsel %vm6723, %v6842, 0.0
      %v6857 = vadd.f32 %v6855, %v6856
      %v6858 = vsel %vm6723, %v6844, 0.0
      %v6859 = vadd.f32 %v6857, %v6858
      %v6860 = vsel %vm6723, %v6846, 0.0
      %v6861 = vadd.f32 %v6859, %v6860
      %v6862 = vsel %vm6723, %v6848, 0.0
      %v6863 = vadd.f32 %v6861, %v6862
      %v6864 = vrot.slane %v6863, 4
      %v6865 = vadd.f32 %v6863, %v6864
      %v6866 = vrot.slane %v6865, 2
      %v6867 = vadd.f32 %v6865, %v6866
      %v6868 = vrot.slane %v6867, 1
      %v6869 = vadd.f32 %v6867, %v6868
      %v6870 = vrcp.pop %v6869
      %v6871 = vmul.f32 %v6834, %v6870
      %v6872 = vmul.f32 %v6836, %v6870
      %v6873 = vmul.f32 %v6838, %v6870
      %v6874 = vmul.f32 %v6840, %v6870
      %v6875 = vmul.f32 %v6842, %v6870
      %v6876 = vmul.f32 %v6844, %v6870
      %v6877 = vmul.f32 %v6846, %v6870
      %v6878 = vmul.f32 %v6848, %v6870
      %v6880 = vsel %vm6723, %v6797, 0
      %v6883 = vsel %vm6723, %v6799, 0
      %v6886 = vsel %vm6723, %v6801, 0
      %v6889 = vsel %vm6723, %v6803, 0
      %v6892 = vsel %vm6723, %v6805, 0
      %v6895 = vsel %vm6723, %v6807, 0
      %v6898 = vsel %vm6723, %v6809, 0
      %v6901 = vsel %vm6723, %v6811, 0
      %6903 = vmatprep.subr.mxu0 0.0
      %6904 = vmatpush1.msra.mxu0 0.0
      %6905 = vmatprep.subr.mxu0 0.0
      %6906 = vmatpush1.msra.mxu0 0.0
      %6907 = vmatprep.subr.mxu0 0.0
      %6908 = vmatpush1.msra.mxu0 0.0
      %6909 = vmatprep.subr.mxu0 0.0
      %6910 = vmatpush1.msra.mxu0 0.0
      %6911 = vmatprep.subr.mxu0 0.0
      %6912 = vmatpush1.msra.mxu0 0.0
      %6913 = vmatprep.subr.mxu0 0.0
      %6914 = vmatpush1.msra.mxu0 0.0
      %6915 = vmatprep.subr.mxu0 0.0
      %6916 = vmatpush1.msra.mxu0 0.0
      %6917 = vmatprep.subr.mxu0 0.0
      %6918 = vmatpush1.msra.mxu0 0.0
      %6919 = vmatprep.subr.mxu0 0.0
      %v6920 = vand.u32 %v5828, 4294901760
      %6921 = vmatpush1.msra.mxu0 %v6920
      %6922 = vmatprep.subr.mxu0 0.0
      %v6923 = vand.u32 %v5827, 4294901760
      %6924 = vmatpush1.msra.mxu0 %v6923
      %6925 = vmatprep.subr.mxu0 0.0
      %v6926 = vand.u32 %v5826, 4294901760
      %6927 = vmatpush1.msra.mxu0 %v6926
      %6928 = vmatprep.subr.mxu0 0.0
      %v6929 = vand.u32 %v5825, 4294901760
      %6930 = vmatpush1.msra.mxu0 %v6929
      %6931 = vmatprep.subr.mxu0 0.0
      %v6932 = vand.u32 %v5824, 4294901760
      %6933 = vmatpush1.msra.mxu0 %v6932
      %6934 = vmatprep.subr.mxu0 0.0
      %v6935 = vand.u32 %v5823, 4294901760
      %6936 = vmatpush1.msra.mxu0 %v6935
      %6937 = vmatprep.subr.mxu0 0.0
      %v6938 = vand.u32 %v5822, 4294901760
      %6939 = vmatpush1.msra.mxu0 %v6938
      %6940 = vmatprep.subr.mxu0 0.0
      %v6941 = vand.u32 %v5821, 4294901760
      %6942 = vmatpush1.msra.mxu0 %v6941
      %6943 = vmatprep.subr.mxu0 0.0
      %6944 = vmatpush2.msra.mxu0 0.0
      %6945 = vmatprep.subr.mxu0 0.0
      %6946 = vmatpush2.msra.mxu0 0.0
      %6947 = vmatprep.subr.mxu0 0.0
      %6948 = vmatpush2.msra.mxu0 0.0
      %6949 = vmatprep.subr.mxu0 0.0
      %6950 = vmatpush2.msra.mxu0 0.0
      %6951 = vmatprep.subr.mxu0 0.0
      %6952 = vmatpush2.msra.mxu0 0.0
      %6953 = vmatprep.subr.mxu0 0.0
      %6954 = vmatpush2.msra.mxu0 0.0
      %6955 = vmatprep.subr.mxu0 0.0
      %6956 = vmatpush2.msra.mxu0 0.0
      %6957 = vmatprep.subr.mxu0 0.0
      %6958 = vmatpush2.msra.mxu0 0.0
      %6959 = vmatprep.subr.mxu0 0.0
      %6960 = vmatpush2.msra.mxu0 0.0
      %6961 = vmatprep.subr.mxu0 0.0
      %6962 = vmatpush2.msra.mxu0 0.0
      %6963 = vmatprep.subr.mxu0 0.0
      %6964 = vmatpush2.msra.mxu0 0.0
      %6965 = vmatprep.subr.mxu0 0.0
      %6966 = vmatpush2.msra.mxu0 0.0
      %6967 = vmatprep.subr.mxu0 0.0
      %6968 = vmatpush2.msra.mxu0 0.0
      %6969 = vmatprep.subr.mxu0 0.0
      %6970 = vmatpush2.msra.mxu0 0.0
      %6971 = vmatprep.subr.mxu0 0.0
      %6972 = vmatpush2.msra.mxu0 0.0
      %6973 = vmatprep.subr.mxu0 0.0
      %6974 = vmatpush2.msra.mxu0 0.0
      %6975 = vmatprep.mubr.f32.mxu0 0.0
      %v6976 = vand.u32 %v6880, 4294901760
      %v6977 = vsub.f32 %v6880, %v6976
      %v6978 = vand.u32 %v6977, 4294901760
      %v6979 = vsub.f32 %v6977, %v6978
      %v6980 = vand.u32 %v6979, 4294901760
      %6981 = vmatmul.mubr.f32.gmra.mxu0 %v6980
      %v6982 = vpop.f32.mrf.mxu0
      %v6983 = vadd.f32 0.0, %v6982
      %v6984 = vpop.f32.mrf.mxu0
      %6985 = vmatprep.mubr.f32.mxu0 0.0
      %v6986 = vand.u32 %v6883, 4294901760
      %v6987 = vsub.f32 %v6883, %v6986
      %v6988 = vand.u32 %v6987, 4294901760
      %v6989 = vsub.f32 %v6987, %v6988
      %v6990 = vand.u32 %v6989, 4294901760
      %6991 = vmatmul.mubr.f32.gmra.mxu0 %v6990
      %v6992 = vpop.f32.mrf.mxu0
      %v6993 = vadd.f32 0.0, %v6992
      %v6994 = vpop.f32.mrf.mxu0
      %6995 = vmatprep.mubr.f32.mxu0 0.0
      %v6996 = vand.u32 %v6886, 4294901760
      %v6997 = vsub.f32 %v6886, %v6996
      %v6998 = vand.u32 %v6997, 4294901760
      %v6999 = vsub.f32 %v6997, %v6998
      %v7000 = vand.u32 %v6999, 4294901760
      %7001 = vmatmul.mubr.f32.gmra.mxu0 %v7000
      %v7002 = vpop.f32.mrf.mxu0
      %v7003 = vadd.f32 0.0, %v7002
      %v7004 = vpop.f32.mrf.mxu0
      %7005 = vmatprep.mubr.f32.mxu0 0.0
      %v7006 = vand.u32 %v6889, 4294901760
      %v7007 = vsub.f32 %v6889, %v7006
      %v7008 = vand.u32 %v7007, 4294901760
      %v7009 = vsub.f32 %v7007, %v7008
      %v7010 = vand.u32 %v7009, 4294901760
      %7011 = vmatmul.mubr.f32.gmra.mxu0 %v7010
      %v7012 = vpop.f32.mrf.mxu0
      %v7013 = vadd.f32 0.0, %v7012
      %v7014 = vpop.f32.mrf.mxu0
      %7015 = vmatprep.mubr.f32.mxu0 0.0
      %v7016 = vand.u32 %v6892, 4294901760
      %v7017 = vsub.f32 %v6892, %v7016
      %v7018 = vand.u32 %v7017, 4294901760
      %v7019 = vsub.f32 %v7017, %v7018
      %v7020 = vand.u32 %v7019, 4294901760
      %7021 = vmatmul.mubr.f32.gmra.mxu0 %v7020
      %v7022 = vpop.f32.mrf.mxu0
      %v7023 = vadd.f32 0.0, %v7022
      %v7024 = vpop.f32.mrf.mxu0
      %7025 = vmatprep.mubr.f32.mxu0 0.0
      %v7026 = vand.u32 %v6895, 4294901760
      %v7027 = vsub.f32 %v6895, %v7026
      %v7028 = vand.u32 %v7027, 4294901760
      %v7029 = vsub.f32 %v7027, %v7028
      %v7030 = vand.u32 %v7029, 4294901760
      %7031 = vmatmul.mubr.f32.gmra.mxu0 %v7030
      %v7032 = vpop.f32.mrf.mxu0
      %v7033 = vadd.f32 0.0, %v7032
      %v7034 = vpop.f32.mrf.mxu0
      %7035 = vmatprep.mubr.f32.mxu0 0.0
      %v7036 = vand.u32 %v6898, 4294901760
      %v7037 = vsub.f32 %v6898, %v7036
      %v7038 = vand.u32 %v7037, 4294901760
      %v7039 = vsub.f32 %v7037, %v7038
      %v7040 = vand.u32 %v7039, 4294901760
      %7041 = vmatmul.mubr.f32.gmra.mxu0 %v7040
      %v7042 = vpop.f32.mrf.mxu0
      %v7043 = vadd.f32 0.0, %v7042
      %v7044 = vpop.f32.mrf.mxu0
      %7045 = vmatprep.mubr.f32.mxu0 0.0
      %v7046 = vand.u32 %v6901, 4294901760
      %v7047 = vsub.f32 %v6901, %v7046
      %v7048 = vand.u32 %v7047, 4294901760
      %v7049 = vsub.f32 %v7047, %v7048
      %v7050 = vand.u32 %v7049, 4294901760
      %7051 = vmatmul.mubr.f32.gmra.mxu0 %v7050
      %v7052 = vpop.f32.mrf.mxu0
      %v7053 = vadd.f32 0.0, %v7052
      %v7054 = vpop.f32.mrf.mxu0
      %7055 = vdwg.mxu0
      %7056 = vmatprep.subr.mxu0 0.0
      %7057 = vmatpush1.msra.mxu0 0.0
      %7058 = vmatprep.subr.mxu0 0.0
      %7059 = vmatpush1.msra.mxu0 0.0
      %7060 = vmatprep.subr.mxu0 0.0
      %7061 = vmatpush1.msra.mxu0 0.0
      %7062 = vmatprep.subr.mxu0 0.0
      %7063 = vmatpush1.msra.mxu0 0.0
      %7064 = vmatprep.subr.mxu0 0.0
      %7065 = vmatpush1.msra.mxu0 0.0
      %7066 = vmatprep.subr.mxu0 0.0
      %7067 = vmatpush1.msra.mxu0 0.0
      %7068 = vmatprep.subr.mxu0 0.0
      %7069 = vmatpush1.msra.mxu0 0.0
      %7070 = vmatprep.subr.mxu0 0.0
      %7071 = vmatpush1.msra.mxu0 0.0
      %7072 = vmatprep.subr.mxu0 0.0
      %v7073 = vand.u32 %v5828, 4294901760
      %v7074 = vsub.f32 %v5828, %v7073
      %v7075 = vand.u32 %v7074, 4294901760
      %v7076 = vsub.f32 %v7074, %v7075
      %v7077 = vand.u32 %v7076, 4294901760
      %7078 = vmatpush1.msra.mxu0 %v7077
      %7079 = vmatprep.subr.mxu0 0.0
      %v7080 = vand.u32 %v5827, 4294901760
      %v7081 = vsub.f32 %v5827, %v7080
      %v7082 = vand.u32 %v7081, 4294901760
      %v7083 = vsub.f32 %v7081, %v7082
      %v7084 = vand.u32 %v7083, 4294901760
      %7085 = vmatpush1.msra.mxu0 %v7084
      %7086 = vmatprep.subr.mxu0 0.0
      %v7087 = vand.u32 %v5826, 4294901760
      %v7088 = vsub.f32 %v5826, %v7087
      %v7089 = vand.u32 %v7088, 4294901760
      %v7090 = vsub.f32 %v7088, %v7089
      %v7091 = vand.u32 %v7090, 4294901760
      %7092 = vmatpush1.msra.mxu0 %v7091
      %7093 = vmatprep.subr.mxu0 0.0
      %v7094 = vand.u32 %v5825, 4294901760
      %v7095 = vsub.f32 %v5825, %v7094
      %v7096 = vand.u32 %v7095, 4294901760
      %v7097 = vsub.f32 %v7095, %v7096
      %v7098 = vand.u32 %v7097, 4294901760
      %7099 = vmatpush1.msra.mxu0 %v7098
      %7100 = vmatprep.subr.mxu0 0.0
      %v7101 = vand.u32 %v5824, 4294901760
      %v7102 = vsub.f32 %v5824, %v7101
      %v7103 = vand.u32 %v7102, 4294901760
      %v7104 = vsub.f32 %v7102, %v7103
      %v7105 = vand.u32 %v7104, 4294901760
      %7106 = vmatpush1.msra.mxu0 %v7105
      %7107 = vmatprep.subr.mxu0 0.0
      %v7108 = vand.u32 %v5823, 4294901760
      %v7109 = vsub.f32 %v5823, %v7108
      %v7110 = vand.u32 %v7109, 4294901760
      %v7111 = vsub.f32 %v7109, %v7110
      %v7112 = vand.u32 %v7111, 4294901760
      %7113 = vmatpush1.msra.mxu0 %v7112
      %7114 = vmatprep.subr.mxu0 0.0
      %v7115 = vand.u32 %v5822, 4294901760
      %v7116 = vsub.f32 %v5822, %v7115
      %v7117 = vand.u32 %v7116, 4294901760
      %v7118 = vsub.f32 %v7116, %v7117
      %v7119 = vand.u32 %v7118, 4294901760
      %7120 = vmatpush1.msra.mxu0 %v7119
      %7121 = vmatprep.subr.mxu0 0.0
      %v7122 = vand.u32 %v5821, 4294901760
      %v7123 = vsub.f32 %v5821, %v7122
      %v7124 = vand.u32 %v7123, 4294901760
      %v7125 = vsub.f32 %v7123, %v7124
      %v7126 = vand.u32 %v7125, 4294901760
      %7127 = vmatpush1.msra.mxu0 %v7126
      %7128 = vmatprep.subr.mxu0 0.0
      %7129 = vmatpush2.msra.mxu0 0.0
      %7130 = vmatprep.subr.mxu0 0.0
      %7131 = vmatpush2.msra.mxu0 0.0
      %7132 = vmatprep.subr.mxu0 0.0
      %7133 = vmatpush2.msra.mxu0 0.0
      %7134 = vmatprep.subr.mxu0 0.0
      %7135 = vmatpush2.msra.mxu0 0.0
      %7136 = vmatprep.subr.mxu0 0.0
      %7137 = vmatpush2.msra.mxu0 0.0
      %7138 = vmatprep.subr.mxu0 0.0
      %7139 = vmatpush2.msra.mxu0 0.0
      %7140 = vmatprep.subr.mxu0 0.0
      %7141 = vmatpush2.msra.mxu0 0.0
      %7142 = vmatprep.subr.mxu0 0.0
      %7143 = vmatpush2.msra.mxu0 0.0
      %7144 = vmatprep.subr.mxu0 0.0
      %7145 = vmatpush2.msra.mxu0 0.0
      %7146 = vmatprep.subr.mxu0 0.0
      %7147 = vmatpush2.msra.mxu0 0.0
      %7148 = vmatprep.subr.mxu0 0.0
      %7149 = vmatpush2.msra.mxu0 0.0
      %7150 = vmatprep.subr.mxu0 0.0
      %7151 = vmatpush2.msra.mxu0 0.0
      %7152 = vmatprep.subr.mxu0 0.0
      %7153 = vmatpush2.msra.mxu0 0.0
      %7154 = vmatprep.subr.mxu0 0.0
      %7155 = vmatpush2.msra.mxu0 0.0
      %7156 = vmatprep.subr.mxu0 0.0
      %7157 = vmatpush2.msra.mxu0 0.0
      %7158 = vmatprep.subr.mxu0 0.0
      %7159 = vmatpush2.msra.mxu0 0.0
      %7160 = vmatprep.mubr.f32.mxu0 0.0
      %v7161 = vand.u32 %v6880, 4294901760
      %7162 = vmatmul.mubr.f32.gmra.mxu0 %v7161
      %v7163 = vpop.f32.mrf.mxu0
      %v7164 = vadd.f32 %v6983, %v7163
      %v7165 = vpop.f32.mrf.mxu0
      %7166 = vmatprep.mubr.f32.mxu0 0.0
      %v7167 = vand.u32 %v6883, 4294901760
      %7168 = vmatmul.mubr.f32.gmra.mxu0 %v7167
      %v7169 = vpop.f32.mrf.mxu0
      %v7170 = vadd.f32 %v6993, %v7169
      %v7171 = vpop.f32.mrf.mxu0
      %7172 = vmatprep.mubr.f32.mxu0 0.0
      %v7173 = vand.u32 %v6886, 4294901760
      %7174 = vmatmul.mubr.f32.gmra.mxu0 %v7173
      %v7175 = vpop.f32.mrf.mxu0
      %v7176 = vadd.f32 %v7003, %v7175
      %v7177 = vpop.f32.mrf.mxu0
      %7178 = vmatprep.mubr.f32.mxu0 0.0
      %v7179 = vand.u32 %v6889, 4294901760
      %7180 = vmatmul.mubr.f32.gmra.mxu0 %v7179
      %v7181 = vpop.f32.mrf.mxu0
      %v7182 = vadd.f32 %v7013, %v7181
      %v7183 = vpop.f32.mrf.mxu0
      %7184 = vmatprep.mubr.f32.mxu0 0.0
      %v7185 = vand.u32 %v6892, 4294901760
      %7186 = vmatmul.mubr.f32.gmra.mxu0 %v7185
      %v7187 = vpop.f32.mrf.mxu0
      %v7188 = vadd.f32 %v7023, %v7187
      %v7189 = vpop.f32.mrf.mxu0
      %7190 = vmatprep.mubr.f32.mxu0 0.0
      %v7191 = vand.u32 %v6895, 4294901760
      %7192 = vmatmul.mubr.f32.gmra.mxu0 %v7191
      %v7193 = vpop.f32.mrf.mxu0
      %v7194 = vadd.f32 %v7033, %v7193
      %v7195 = vpop.f32.mrf.mxu0
      %7196 = vmatprep.mubr.f32.mxu0 0.0
      %v7197 = vand.u32 %v6898, 4294901760
      %7198 = vmatmul.mubr.f32.gmra.mxu0 %v7197
      %v7199 = vpop.f32.mrf.mxu0
      %v7200 = vadd.f32 %v7043, %v7199
      %v7201 = vpop.f32.mrf.mxu0
      %7202 = vmatprep.mubr.f32.mxu0 0.0
      %v7203 = vand.u32 %v6901, 4294901760
      %7204 = vmatmul.mubr.f32.gmra.mxu0 %v7203
      %v7205 = vpop.f32.mrf.mxu0
      %v7206 = vadd.f32 %v7053, %v7205
      %v7207 = vpop.f32.mrf.mxu0
      %7208 = vdwg.mxu0
      %7209 = vmatprep.subr.mxu0 0.0
      %7210 = vmatpush1.msra.mxu0 0.0
      %7211 = vmatprep.subr.mxu0 0.0
      %7212 = vmatpush1.msra.mxu0 0.0
      %7213 = vmatprep.subr.mxu0 0.0
      %7214 = vmatpush1.msra.mxu0 0.0
      %7215 = vmatprep.subr.mxu0 0.0
      %7216 = vmatpush1.msra.mxu0 0.0
      %7217 = vmatprep.subr.mxu0 0.0
      %7218 = vmatpush1.msra.mxu0 0.0
      %7219 = vmatprep.subr.mxu0 0.0
      %7220 = vmatpush1.msra.mxu0 0.0
      %7221 = vmatprep.subr.mxu0 0.0
      %7222 = vmatpush1.msra.mxu0 0.0
      %7223 = vmatprep.subr.mxu0 0.0
      %7224 = vmatpush1.msra.mxu0 0.0
      %7225 = vmatprep.subr.mxu0 0.0
      %v7226 = vand.u32 %v5828, 4294901760
      %v7227 = vsub.f32 %v5828, %v7226
      %7228 = vmatpush1.msra.mxu0 %v7227
      %7229 = vmatprep.subr.mxu0 0.0
      %v7230 = vand.u32 %v5827, 4294901760
      %v7231 = vsub.f32 %v5827, %v7230
      %7232 = vmatpush1.msra.mxu0 %v7231
      %7233 = vmatprep.subr.mxu0 0.0
      %v7234 = vand.u32 %v5826, 4294901760
      %v7235 = vsub.f32 %v5826, %v7234
      %7236 = vmatpush1.msra.mxu0 %v7235
      %7237 = vmatprep.subr.mxu0 0.0
      %v7238 = vand.u32 %v5825, 4294901760
      %v7239 = vsub.f32 %v5825, %v7238
      %7240 = vmatpush1.msra.mxu0 %v7239
      %7241 = vmatprep.subr.mxu0 0.0
      %v7242 = vand.u32 %v5824, 4294901760
      %v7243 = vsub.f32 %v5824, %v7242
      %7244 = vmatpush1.msra.mxu0 %v7243
      %7245 = vmatprep.subr.mxu0 0.0
      %v7246 = vand.u32 %v5823, 4294901760
      %v7247 = vsub.f32 %v5823, %v7246
      %7248 = vmatpush1.msra.mxu0 %v7247
      %7249 = vmatprep.subr.mxu0 0.0
      %v7250 = vand.u32 %v5822, 4294901760
      %v7251 = vsub.f32 %v5822, %v7250
      %7252 = vmatpush1.msra.mxu0 %v7251
      %7253 = vmatprep.subr.mxu0 0.0
      %v7254 = vand.u32 %v5821, 4294901760
      %v7255 = vsub.f32 %v5821, %v7254
      %7256 = vmatpush1.msra.mxu0 %v7255
      %7257 = vmatprep.subr.mxu0 0.0
      %7258 = vmatpush2.msra.mxu0 0.0
      %7259 = vmatprep.subr.mxu0 0.0
      %7260 = vmatpush2.msra.mxu0 0.0
      %7261 = vmatprep.subr.mxu0 0.0
      %7262 = vmatpush2.msra.mxu0 0.0
      %7263 = vmatprep.subr.mxu0 0.0
      %7264 = vmatpush2.msra.mxu0 0.0
      %7265 = vmatprep.subr.mxu0 0.0
      %7266 = vmatpush2.msra.mxu0 0.0
      %7267 = vmatprep.subr.mxu0 0.0
      %7268 = vmatpush2.msra.mxu0 0.0
      %7269 = vmatprep.subr.mxu0 0.0
      %7270 = vmatpush2.msra.mxu0 0.0
      %7271 = vmatprep.subr.mxu0 0.0
      %7272 = vmatpush2.msra.mxu0 0.0
      %7273 = vmatprep.subr.mxu0 0.0
      %7274 = vmatpush2.msra.mxu0 0.0
      %7275 = vmatprep.subr.mxu0 0.0
      %7276 = vmatpush2.msra.mxu0 0.0
      %7277 = vmatprep.subr.mxu0 0.0
      %7278 = vmatpush2.msra.mxu0 0.0
      %7279 = vmatprep.subr.mxu0 0.0
      %7280 = vmatpush2.msra.mxu0 0.0
      %7281 = vmatprep.subr.mxu0 0.0
      %7282 = vmatpush2.msra.mxu0 0.0
      %7283 = vmatprep.subr.mxu0 0.0
      %7284 = vmatpush2.msra.mxu0 0.0
      %7285 = vmatprep.subr.mxu0 0.0
      %7286 = vmatpush2.msra.mxu0 0.0
      %7287 = vmatprep.subr.mxu0 0.0
      %7288 = vmatpush2.msra.mxu0 0.0
      %7289 = vmatprep.mubr.f32.mxu0 0.0
      %v7290 = vand.u32 %v6880, 4294901760
      %v7291 = vsub.f32 %v6880, %v7290
      %7292 = vmatmul.mubr.f32.gmra.mxu0 %v7291
      %v7293 = vpop.f32.mrf.mxu0
      %v7294 = vadd.f32 %v7164, %v7293
      %v7295 = vpop.f32.mrf.mxu0
      %7296 = vmatprep.mubr.f32.mxu0 0.0
      %v7297 = vand.u32 %v6883, 4294901760
      %v7298 = vsub.f32 %v6883, %v7297
      %7299 = vmatmul.mubr.f32.gmra.mxu0 %v7298
      %v7300 = vpop.f32.mrf.mxu0
      %v7301 = vadd.f32 %v7170, %v7300
      %v7302 = vpop.f32.mrf.mxu0
      %7303 = vmatprep.mubr.f32.mxu0 0.0
      %v7304 = vand.u32 %v6886, 4294901760
      %v7305 = vsub.f32 %v6886, %v7304
      %7306 = vmatmul.mubr.f32.gmra.mxu0 %v7305
      %v7307 = vpop.f32.mrf.mxu0
      %v7308 = vadd.f32 %v7176, %v7307
      %v7309 = vpop.f32.mrf.mxu0
      %7310 = vmatprep.mubr.f32.mxu0 0.0
      %v7311 = vand.u32 %v6889, 4294901760
      %v7312 = vsub.f32 %v6889, %v7311
      %7313 = vmatmul.mubr.f32.gmra.mxu0 %v7312
      %v7314 = vpop.f32.mrf.mxu0
      %v7315 = vadd.f32 %v7182, %v7314
      %v7316 = vpop.f32.mrf.mxu0
      %7317 = vmatprep.mubr.f32.mxu0 0.0
      %v7318 = vand.u32 %v6892, 4294901760
      %v7319 = vsub.f32 %v6892, %v7318
      %7320 = vmatmul.mubr.f32.gmra.mxu0 %v7319
      %v7321 = vpop.f32.mrf.mxu0
      %v7322 = vadd.f32 %v7188, %v7321
      %v7323 = vpop.f32.mrf.mxu0
      %7324 = vmatprep.mubr.f32.mxu0 0.0
      %v7325 = vand.u32 %v6895, 4294901760
      %v7326 = vsub.f32 %v6895, %v7325
      %7327 = vmatmul.mubr.f32.gmra.mxu0 %v7326
      %v7328 = vpop.f32.mrf.mxu0
      %v7329 = vadd.f32 %v7194, %v7328
      %v7330 = vpop.f32.mrf.mxu0
      %7331 = vmatprep.mubr.f32.mxu0 0.0
      %v7332 = vand.u32 %v6898, 4294901760
      %v7333 = vsub.f32 %v6898, %v7332
      %7334 = vmatmul.mubr.f32.gmra.mxu0 %v7333
      %v7335 = vpop.f32.mrf.mxu0
      %v7336 = vadd.f32 %v7200, %v7335
      %v7337 = vpop.f32.mrf.mxu0
      %7338 = vmatprep.mubr.f32.mxu0 0.0
      %v7339 = vand.u32 %v6901, 4294901760
      %v7340 = vsub.f32 %v6901, %v7339
      %7341 = vmatmul.mubr.f32.gmra.mxu0 %v7340
      %v7342 = vpop.f32.mrf.mxu0
      %v7343 = vadd.f32 %v7206, %v7342
      %v7344 = vpop.f32.mrf.mxu0
      %7345 = vdwg.mxu0
      %7346 = vmatprep.subr.mxu0 0.0
      %7347 = vmatpush1.msra.mxu0 0.0
      %7348 = vmatprep.subr.mxu0 0.0
      %7349 = vmatpush1.msra.mxu0 0.0
      %7350 = vmatprep.subr.mxu0 0.0
      %7351 = vmatpush1.msra.mxu0 0.0
      %7352 = vmatprep.subr.mxu0 0.0
      %7353 = vmatpush1.msra.mxu0 0.0
      %7354 = vmatprep.subr.mxu0 0.0
      %7355 = vmatpush1.msra.mxu0 0.0
      %7356 = vmatprep.subr.mxu0 0.0
      %7357 = vmatpush1.msra.mxu0 0.0
      %7358 = vmatprep.subr.mxu0 0.0
      %7359 = vmatpush1.msra.mxu0 0.0
      %7360 = vmatprep.subr.mxu0 0.0
      %7361 = vmatpush1.msra.mxu0 0.0
      %7362 = vmatprep.subr.mxu0 0.0
      %v7363 = vand.u32 %v5828, 4294901760
      %7364 = vmatpush1.msra.mxu0 %v7363
      %7365 = vmatprep.subr.mxu0 0.0
      %v7366 = vand.u32 %v5827, 4294901760
      %7367 = vmatpush1.msra.mxu0 %v7366
      %7368 = vmatprep.subr.mxu0 0.0
      %v7369 = vand.u32 %v5826, 4294901760
      %7370 = vmatpush1.msra.mxu0 %v7369
      %7371 = vmatprep.subr.mxu0 0.0
      %v7372 = vand.u32 %v5825, 4294901760
      %7373 = vmatpush1.msra.mxu0 %v7372
      %7374 = vmatprep.subr.mxu0 0.0
      %v7375 = vand.u32 %v5824, 4294901760
      %7376 = vmatpush1.msra.mxu0 %v7375
      %7377 = vmatprep.subr.mxu0 0.0
      %v7378 = vand.u32 %v5823, 4294901760
      %7379 = vmatpush1.msra.mxu0 %v7378
      %7380 = vmatprep.subr.mxu0 0.0
      %v7381 = vand.u32 %v5822, 4294901760
      %7382 = vmatpush1.msra.mxu0 %v7381
      %7383 = vmatprep.subr.mxu0 0.0
      %v7384 = vand.u32 %v5821, 4294901760
      %7385 = vmatpush1.msra.mxu0 %v7384
      %7386 = vmatprep.subr.mxu0 0.0
      %7387 = vmatpush2.msra.mxu0 0.0
      %7388 = vmatprep.subr.mxu0 0.0
      %7389 = vmatpush2.msra.mxu0 0.0
      %7390 = vmatprep.subr.mxu0 0.0
      %7391 = vmatpush2.msra.mxu0 0.0
      %7392 = vmatprep.subr.mxu0 0.0
      %7393 = vmatpush2.msra.mxu0 0.0
      %7394 = vmatprep.subr.mxu0 0.0
      %7395 = vmatpush2.msra.mxu0 0.0
      %7396 = vmatprep.subr.mxu0 0.0
      %7397 = vmatpush2.msra.mxu0 0.0
      %7398 = vmatprep.subr.mxu0 0.0
      %7399 = vmatpush2.msra.mxu0 0.0
      %7400 = vmatprep.subr.mxu0 0.0
      %7401 = vmatpush2.msra.mxu0 0.0
      %7402 = vmatprep.subr.mxu0 0.0
      %7403 = vmatpush2.msra.mxu0 0.0
      %7404 = vmatprep.subr.mxu0 0.0
      %7405 = vmatpush2.msra.mxu0 0.0
      %7406 = vmatprep.subr.mxu0 0.0
      %7407 = vmatpush2.msra.mxu0 0.0
      %7408 = vmatprep.subr.mxu0 0.0
      %7409 = vmatpush2.msra.mxu0 0.0
      %7410 = vmatprep.subr.mxu0 0.0
      %7411 = vmatpush2.msra.mxu0 0.0
      %7412 = vmatprep.subr.mxu0 0.0
      %7413 = vmatpush2.msra.mxu0 0.0
      %7414 = vmatprep.subr.mxu0 0.0
      %7415 = vmatpush2.msra.mxu0 0.0
      %7416 = vmatprep.subr.mxu0 0.0
      %7417 = vmatpush2.msra.mxu0 0.0
      %7418 = vmatprep.mubr.f32.mxu0 0.0
      %v7419 = vand.u32 %v6880, 4294901760
      %v7420 = vsub.f32 %v6880, %v7419
      %v7421 = vand.u32 %v7420, 4294901760
      %7422 = vmatmul.mubr.f32.gmra.mxu0 %v7421
      %v7423 = vpop.f32.mrf.mxu0
      %v7424 = vadd.f32 %v7294, %v7423
      %v7425 = vpop.f32.mrf.mxu0
      %7426 = vmatprep.mubr.f32.mxu0 0.0
      %v7427 = vand.u32 %v6883, 4294901760
      %v7428 = vsub.f32 %v6883, %v7427
      %v7429 = vand.u32 %v7428, 4294901760
      %7430 = vmatmul.mubr.f32.gmra.mxu0 %v7429
      %v7431 = vpop.f32.mrf.mxu0
      %v7432 = vadd.f32 %v7301, %v7431
      %v7433 = vpop.f32.mrf.mxu0
      %7434 = vmatprep.mubr.f32.mxu0 0.0
      %v7435 = vand.u32 %v6886, 4294901760
      %v7436 = vsub.f32 %v6886, %v7435
      %v7437 = vand.u32 %v7436, 4294901760
      %7438 = vmatmul.mubr.f32.gmra.mxu0 %v7437
      %v7439 = vpop.f32.mrf.mxu0
      %v7440 = vadd.f32 %v7308, %v7439
      %v7441 = vpop.f32.mrf.mxu0
      %7442 = vmatprep.mubr.f32.mxu0 0.0
      %v7443 = vand.u32 %v6889, 4294901760
      %v7444 = vsub.f32 %v6889, %v7443
      %v7445 = vand.u32 %v7444, 4294901760
      %7446 = vmatmul.mubr.f32.gmra.mxu0 %v7445
      %v7447 = vpop.f32.mrf.mxu0
      %v7448 = vadd.f32 %v7315, %v7447
      %v7449 = vpop.f32.mrf.mxu0
      %7450 = vmatprep.mubr.f32.mxu0 0.0
      %v7451 = vand.u32 %v6892, 4294901760
      %v7452 = vsub.f32 %v6892, %v7451
      %v7453 = vand.u32 %v7452, 4294901760
      %7454 = vmatmul.mubr.f32.gmra.mxu0 %v7453
      %v7455 = vpop.f32.mrf.mxu0
      %v7456 = vadd.f32 %v7322, %v7455
      %v7457 = vpop.f32.mrf.mxu0
      %7458 = vmatprep.mubr.f32.mxu0 0.0
      %v7459 = vand.u32 %v6895, 4294901760
      %v7460 = vsub.f32 %v6895, %v7459
      %v7461 = vand.u32 %v7460, 4294901760
      %7462 = vmatmul.mubr.f32.gmra.mxu0 %v7461
      %v7463 = vpop.f32.mrf.mxu0
      %v7464 = vadd.f32 %v7329, %v7463
      %v7465 = vpop.f32.mrf.mxu0
      %7466 = vmatprep.mubr.f32.mxu0 0.0
      %v7467 = vand.u32 %v6898, 4294901760
      %v7468 = vsub.f32 %v6898, %v7467
      %v7469 = vand.u32 %v7468, 4294901760
      %7470 = vmatmul.mubr.f32.gmra.mxu0 %v7469
      %v7471 = vpop.f32.mrf.mxu0
      %v7472 = vadd.f32 %v7336, %v7471
      %v7473 = vpop.f32.mrf.mxu0
      %7474 = vmatprep.mubr.f32.mxu0 0.0
      %v7475 = vand.u32 %v6901, 4294901760
      %v7476 = vsub.f32 %v6901, %v7475
      %v7477 = vand.u32 %v7476, 4294901760
      %7478 = vmatmul.mubr.f32.gmra.mxu0 %v7477
      %v7479 = vpop.f32.mrf.mxu0
      %v7480 = vadd.f32 %v7343, %v7479
      %v7481 = vpop.f32.mrf.mxu0
      %7482 = vdwg.mxu0
      %7483 = vmatprep.subr.mxu0 0.0
      %7484 = vmatpush1.msra.mxu0 0.0
      %7485 = vmatprep.subr.mxu0 0.0
      %7486 = vmatpush1.msra.mxu0 0.0
      %7487 = vmatprep.subr.mxu0 0.0
      %7488 = vmatpush1.msra.mxu0 0.0
      %7489 = vmatprep.subr.mxu0 0.0
      %7490 = vmatpush1.msra.mxu0 0.0
      %7491 = vmatprep.subr.mxu0 0.0
      %7492 = vmatpush1.msra.mxu0 0.0
      %7493 = vmatprep.subr.mxu0 0.0
      %7494 = vmatpush1.msra.mxu0 0.0
      %7495 = vmatprep.subr.mxu0 0.0
      %7496 = vmatpush1.msra.mxu0 0.0
      %7497 = vmatprep.subr.mxu0 0.0
      %7498 = vmatpush1.msra.mxu0 0.0
      %7499 = vmatprep.subr.mxu0 0.0
      %v7500 = vand.u32 %v5828, 4294901760
      %v7501 = vsub.f32 %v5828, %v7500
      %v7502 = vand.u32 %v7501, 4294901760
      %7503 = vmatpush1.msra.mxu0 %v7502
      %7504 = vmatprep.subr.mxu0 0.0
      %v7505 = vand.u32 %v5827, 4294901760
      %v7506 = vsub.f32 %v5827, %v7505
      %v7507 = vand.u32 %v7506, 4294901760
      %7508 = vmatpush1.msra.mxu0 %v7507
      %7509 = vmatprep.subr.mxu0 0.0
      %v7510 = vand.u32 %v5826, 4294901760
      %v7511 = vsub.f32 %v5826, %v7510
      %v7512 = vand.u32 %v7511, 4294901760
      %7513 = vmatpush1.msra.mxu0 %v7512
      %7514 = vmatprep.subr.mxu0 0.0
      %v7515 = vand.u32 %v5825, 4294901760
      %v7516 = vsub.f32 %v5825, %v7515
      %v7517 = vand.u32 %v7516, 4294901760
      %7518 = vmatpush1.msra.mxu0 %v7517
      %7519 = vmatprep.subr.mxu0 0.0
      %v7520 = vand.u32 %v5824, 4294901760
      %v7521 = vsub.f32 %v5824, %v7520
      %v7522 = vand.u32 %v7521, 4294901760
      %7523 = vmatpush1.msra.mxu0 %v7522
      %7524 = vmatprep.subr.mxu0 0.0
      %v7525 = vand.u32 %v5823, 4294901760
      %v7526 = vsub.f32 %v5823, %v7525
      %v7527 = vand.u32 %v7526, 4294901760
      %7528 = vmatpush1.msra.mxu0 %v7527
      %7529 = vmatprep.subr.mxu0 0.0
      %v7530 = vand.u32 %v5822, 4294901760
      %v7531 = vsub.f32 %v5822, %v7530
      %v7532 = vand.u32 %v7531, 4294901760
      %7533 = vmatpush1.msra.mxu0 %v7532
      %7534 = vmatprep.subr.mxu0 0.0
      %v7535 = vand.u32 %v5821, 4294901760
      %v7536 = vsub.f32 %v5821, %v7535
      %v7537 = vand.u32 %v7536, 4294901760
      %7538 = vmatpush1.msra.mxu0 %v7537
      %7539 = vmatprep.subr.mxu0 0.0
      %7540 = vmatpush2.msra.mxu0 0.0
      %7541 = vmatprep.subr.mxu0 0.0
      %7542 = vmatpush2.msra.mxu0 0.0
      %7543 = vmatprep.subr.mxu0 0.0
      %7544 = vmatpush2.msra.mxu0 0.0
      %7545 = vmatprep.subr.mxu0 0.0
      %7546 = vmatpush2.msra.mxu0 0.0
      %7547 = vmatprep.subr.mxu0 0.0
      %7548 = vmatpush2.msra.mxu0 0.0
      %7549 = vmatprep.subr.mxu0 0.0
      %7550 = vmatpush2.msra.mxu0 0.0
      %7551 = vmatprep.subr.mxu0 0.0
      %7552 = vmatpush2.msra.mxu0 0.0
      %7553 = vmatprep.subr.mxu0 0.0
      %7554 = vmatpush2.msra.mxu0 0.0
      %7555 = vmatprep.subr.mxu0 0.0
      %7556 = vmatpush2.msra.mxu0 0.0
      %7557 = vmatprep.subr.mxu0 0.0
      %7558 = vmatpush2.msra.mxu0 0.0
      %7559 = vmatprep.subr.mxu0 0.0
      %7560 = vmatpush2.msra.mxu0 0.0
      %7561 = vmatprep.subr.mxu0 0.0
      %7562 = vmatpush2.msra.mxu0 0.0
      %7563 = vmatprep.subr.mxu0 0.0
      %7564 = vmatpush2.msra.mxu0 0.0
      %7565 = vmatprep.subr.mxu0 0.0
      %7566 = vmatpush2.msra.mxu0 0.0
      %7567 = vmatprep.subr.mxu0 0.0
      %7568 = vmatpush2.msra.mxu0 0.0
      %7569 = vmatprep.subr.mxu0 0.0
      %7570 = vmatpush2.msra.mxu0 0.0
      %7571 = vmatprep.mubr.f32.mxu0 0.0
      %v7572 = vand.u32 %v6880, 4294901760
      %7573 = vmatmul.mubr.f32.gmra.mxu0 %v7572
      %v7574 = vpop.f32.mrf.mxu0
      %v7575 = vadd.f32 %v7424, %v7574
      %v7576 = vpop.f32.mrf.mxu0
      %7577 = vmatprep.mubr.f32.mxu0 0.0
      %v7578 = vand.u32 %v6883, 4294901760
      %7579 = vmatmul.mubr.f32.gmra.mxu0 %v7578
      %v7580 = vpop.f32.mrf.mxu0
      %v7581 = vadd.f32 %v7432, %v7580
      %v7582 = vpop.f32.mrf.mxu0
      %7583 = vmatprep.mubr.f32.mxu0 0.0
      %v7584 = vand.u32 %v6886, 4294901760
      %7585 = vmatmul.mubr.f32.gmra.mxu0 %v7584
      %v7586 = vpop.f32.mrf.mxu0
      %v7587 = vadd.f32 %v7440, %v7586
      %v7588 = vpop.f32.mrf.mxu0
      %7589 = vmatprep.mubr.f32.mxu0 0.0
      %v7590 = vand.u32 %v6889, 4294901760
      %7591 = vmatmul.mubr.f32.gmra.mxu0 %v7590
      %v7592 = vpop.f32.mrf.mxu0
      %v7593 = vadd.f32 %v7448, %v7592
      %v7594 = vpop.f32.mrf.mxu0
      %7595 = vmatprep.mubr.f32.mxu0 0.0
      %v7596 = vand.u32 %v6892, 4294901760
      %7597 = vmatmul.mubr.f32.gmra.mxu0 %v7596
      %v7598 = vpop.f32.mrf.mxu0
      %v7599 = vadd.f32 %v7456, %v7598
      %v7600 = vpop.f32.mrf.mxu0
      %7601 = vmatprep.mubr.f32.mxu0 0.0
      %v7602 = vand.u32 %v6895, 4294901760
      %7603 = vmatmul.mubr.f32.gmra.mxu0 %v7602
      %v7604 = vpop.f32.mrf.mxu0
      %v7605 = vadd.f32 %v7464, %v7604
      %v7606 = vpop.f32.mrf.mxu0
      %7607 = vmatprep.mubr.f32.mxu0 0.0
      %v7608 = vand.u32 %v6898, 4294901760
      %7609 = vmatmul.mubr.f32.gmra.mxu0 %v7608
      %v7610 = vpop.f32.mrf.mxu0
      %v7611 = vadd.f32 %v7472, %v7610
      %v7612 = vpop.f32.mrf.mxu0
      %7613 = vmatprep.mubr.f32.mxu0 0.0
      %v7614 = vand.u32 %v6901, 4294901760
      %7615 = vmatmul.mubr.f32.gmra.mxu0 %v7614
      %v7616 = vpop.f32.mrf.mxu0
      %v7617 = vadd.f32 %v7480, %v7616
      %v7618 = vpop.f32.mrf.mxu0
      %7619 = vdwg.mxu0
      %7620 = vmatprep.subr.mxu0 0.0
      %7621 = vmatpush1.msra.mxu0 0.0
      %7622 = vmatprep.subr.mxu0 0.0
      %7623 = vmatpush1.msra.mxu0 0.0
      %7624 = vmatprep.subr.mxu0 0.0
      %7625 = vmatpush1.msra.mxu0 0.0
      %7626 = vmatprep.subr.mxu0 0.0
      %7627 = vmatpush1.msra.mxu0 0.0
      %7628 = vmatprep.subr.mxu0 0.0
      %7629 = vmatpush1.msra.mxu0 0.0
      %7630 = vmatprep.subr.mxu0 0.0
      %7631 = vmatpush1.msra.mxu0 0.0
      %7632 = vmatprep.subr.mxu0 0.0
      %7633 = vmatpush1.msra.mxu0 0.0
      %7634 = vmatprep.subr.mxu0 0.0
      %7635 = vmatpush1.msra.mxu0 0.0
      %7636 = vmatprep.subr.mxu0 0.0
      %v7637 = vand.u32 %v5828, 4294901760
      %7638 = vmatpush1.msra.mxu0 %v7637
      %7639 = vmatprep.subr.mxu0 0.0
      %v7640 = vand.u32 %v5827, 4294901760
      %7641 = vmatpush1.msra.mxu0 %v7640
      %7642 = vmatprep.subr.mxu0 0.0
      %v7643 = vand.u32 %v5826, 4294901760
      %7644 = vmatpush1.msra.mxu0 %v7643
      %7645 = vmatprep.subr.mxu0 0.0
      %v7646 = vand.u32 %v5825, 4294901760
      %7647 = vmatpush1.msra.mxu0 %v7646
      %7648 = vmatprep.subr.mxu0 0.0
      %v7649 = vand.u32 %v5824, 4294901760
      %7650 = vmatpush1.msra.mxu0 %v7649
      %7651 = vmatprep.subr.mxu0 0.0
      %v7652 = vand.u32 %v5823, 4294901760
      %7653 = vmatpush1.msra.mxu0 %v7652
      %7654 = vmatprep.subr.mxu0 0.0
      %v7655 = vand.u32 %v5822, 4294901760
      %7656 = vmatpush1.msra.mxu0 %v7655
      %7657 = vmatprep.subr.mxu0 0.0
      %v7658 = vand.u32 %v5821, 4294901760
      %7659 = vmatpush1.msra.mxu0 %v7658
      %7660 = vmatprep.subr.mxu0 0.0
      %7661 = vmatpush2.msra.mxu0 0.0
      %7662 = vmatprep.subr.mxu0 0.0
      %7663 = vmatpush2.msra.mxu0 0.0
      %7664 = vmatprep.subr.mxu0 0.0
      %7665 = vmatpush2.msra.mxu0 0.0
      %7666 = vmatprep.subr.mxu0 0.0
      %7667 = vmatpush2.msra.mxu0 0.0
      %7668 = vmatprep.subr.mxu0 0.0
      %7669 = vmatpush2.msra.mxu0 0.0
      %7670 = vmatprep.subr.mxu0 0.0
      %7671 = vmatpush2.msra.mxu0 0.0
      %7672 = vmatprep.subr.mxu0 0.0
      %7673 = vmatpush2.msra.mxu0 0.0
      %7674 = vmatprep.subr.mxu0 0.0
      %7675 = vmatpush2.msra.mxu0 0.0
      %7676 = vmatprep.subr.mxu0 0.0
      %7677 = vmatpush2.msra.mxu0 0.0
      %7678 = vmatprep.subr.mxu0 0.0
      %7679 = vmatpush2.msra.mxu0 0.0
      %7680 = vmatprep.subr.mxu0 0.0
      %7681 = vmatpush2.msra.mxu0 0.0
      %7682 = vmatprep.subr.mxu0 0.0
      %7683 = vmatpush2.msra.mxu0 0.0
      %7684 = vmatprep.subr.mxu0 0.0
      %7685 = vmatpush2.msra.mxu0 0.0
      %7686 = vmatprep.subr.mxu0 0.0
      %7687 = vmatpush2.msra.mxu0 0.0
      %7688 = vmatprep.subr.mxu0 0.0
      %7689 = vmatpush2.msra.mxu0 0.0
      %7690 = vmatprep.subr.mxu0 0.0
      %7691 = vmatpush2.msra.mxu0 0.0
      %7692 = vmatprep.mubr.f32.mxu0 0.0
      %v7693 = vand.u32 %v6880, 4294901760
      %7694 = vmatmul.mubr.f32.gmra.mxu0 %v7693
      %v7695 = vpop.f32.mrf.mxu0
      %v7696 = vadd.f32 %v7575, %v7695
      %v7697 = vpop.f32.mrf.mxu0
      %7698 = vmatprep.mubr.f32.mxu0 0.0
      %v7699 = vand.u32 %v6883, 4294901760
      %7700 = vmatmul.mubr.f32.gmra.mxu0 %v7699
      %v7701 = vpop.f32.mrf.mxu0
      %v7702 = vadd.f32 %v7581, %v7701
      %v7703 = vpop.f32.mrf.mxu0
      %7704 = vmatprep.mubr.f32.mxu0 0.0
      %v7705 = vand.u32 %v6886, 4294901760
      %7706 = vmatmul.mubr.f32.gmra.mxu0 %v7705
      %v7707 = vpop.f32.mrf.mxu0
      %v7708 = vadd.f32 %v7587, %v7707
      %v7709 = vpop.f32.mrf.mxu0
      %7710 = vmatprep.mubr.f32.mxu0 0.0
      %v7711 = vand.u32 %v6889, 4294901760
      %7712 = vmatmul.mubr.f32.gmra.mxu0 %v7711
      %v7713 = vpop.f32.mrf.mxu0
      %v7714 = vadd.f32 %v7593, %v7713
      %v7715 = vpop.f32.mrf.mxu0
      %7716 = vmatprep.mubr.f32.mxu0 0.0
      %v7717 = vand.u32 %v6892, 4294901760
      %7718 = vmatmul.mubr.f32.gmra.mxu0 %v7717
      %v7719 = vpop.f32.mrf.mxu0
      %v7720 = vadd.f32 %v7599, %v7719
      %v7721 = vpop.f32.mrf.mxu0
      %7722 = vmatprep.mubr.f32.mxu0 0.0
      %v7723 = vand.u32 %v6895, 4294901760
      %7724 = vmatmul.mubr.f32.gmra.mxu0 %v7723
      %v7725 = vpop.f32.mrf.mxu0
      %v7726 = vadd.f32 %v7605, %v7725
      %v7727 = vpop.f32.mrf.mxu0
      %7728 = vmatprep.mubr.f32.mxu0 0.0
      %v7729 = vand.u32 %v6898, 4294901760
      %7730 = vmatmul.mubr.f32.gmra.mxu0 %v7729
      %v7731 = vpop.f32.mrf.mxu0
      %v7732 = vadd.f32 %v7611, %v7731
      %v7733 = vpop.f32.mrf.mxu0
      %7734 = vmatprep.mubr.f32.mxu0 0.0
      %v7735 = vand.u32 %v6901, 4294901760
      %7736 = vmatmul.mubr.f32.gmra.mxu0 %v7735
      %v7737 = vpop.f32.mrf.mxu0
      %v7738 = vadd.f32 %v7617, %v7737
      %v7739 = vpop.f32.mrf.mxu0
      %7740 = vdwg.mxu0
      %7741 = vxpose.xlu0.b32.start [1/16] %v6871, 128
      %7742 = vxpose.xlu0.b32.cont [2/16] %v6872, 128
      %7743 = vxpose.xlu0.b32.cont [3/16] %v6873, 128
      %7744 = vxpose.xlu0.b32.cont [4/16] %v6874, 128
      %7745 = vxpose.xlu0.b32.cont [5/16] %v6875, 128
      %7746 = vxpose.xlu0.b32.cont [6/16] %v6876, 128
      %7747 = vxpose.xlu0.b32.cont [7/16] %v6877, 128
      %7748 = vxpose.xlu0.b32.cont [8/16] %v6878, 128
      %7749 = vxpose.xlu0.b32.cont [9/16] 0.0, 128
      %7750 = vxpose.xlu0.b32.cont [10/16] 0.0, 128
      %7751 = vxpose.xlu0.b32.cont [11/16] 0.0, 128
      %7752 = vxpose.xlu0.b32.cont [12/16] 0.0, 128
      %7753 = vxpose.xlu0.b32.cont [13/16] 0.0, 128
      %7754 = vxpose.xlu0.b32.cont [14/16] 0.0, 128
      %7755 = vxpose.xlu0.b32.cont [15/16] 0.0, 128
      %7756 = vxpose.xlu0.b32.end [16/16] 0.0, 128
      %v7757 = vpop.trf.xlu0
      %v7758 = vpop.trf.xlu0
      %v7759 = vpop.trf.xlu0
      %v7760 = vpop.trf.xlu0
      %v7761 = vpop.trf.xlu0
      %v7762 = vpop.trf.xlu0
      %v7763 = vpop.trf.xlu0
      %v7764 = vpop.trf.xlu0
      %v7765 = vpop.trf.xlu0
      %v7766 = vpop.trf.xlu0
      %v7767 = vpop.trf.xlu0
      %v7768 = vpop.trf.xlu0
      %v7769 = vpop.trf.xlu0
      %v7770 = vpop.trf.xlu0
      %v7771 = vpop.trf.xlu0
      %v7772 = vpop.trf.xlu0
      %v7774 = vsel %vm6723, %v7757, 0
      %v7777 = vsel %vm6723, %v7758, 0
      %v7780 = vsel %vm6723, %v7759, 0
      %v7783 = vsel %vm6723, %v7760, 0
      %v7786 = vsel %vm6723, %v7761, 0
      %v7789 = vsel %vm6723, %v7762, 0
      %v7792 = vsel %vm6723, %v7763, 0
      %v7795 = vsel %vm6723, %v7764, 0
      %7797 = vmatprep.subr.mxu0 0.0
      %7798 = vmatpush1.msra.mxu0 0.0
      %7799 = vmatprep.subr.mxu0 0.0
      %7800 = vmatpush1.msra.mxu0 0.0
      %7801 = vmatprep.subr.mxu0 0.0
      %7802 = vmatpush1.msra.mxu0 0.0
      %7803 = vmatprep.subr.mxu0 0.0
      %7804 = vmatpush1.msra.mxu0 0.0
      %7805 = vmatprep.subr.mxu0 0.0
      %7806 = vmatpush1.msra.mxu0 0.0
      %7807 = vmatprep.subr.mxu0 0.0
      %7808 = vmatpush1.msra.mxu0 0.0
      %7809 = vmatprep.subr.mxu0 0.0
      %7810 = vmatpush1.msra.mxu0 0.0
      %7811 = vmatprep.subr.mxu0 0.0
      %7812 = vmatpush1.msra.mxu0 0.0
      %7813 = vmatprep.subr.mxu0 0.0
      %v7814 = vand.u32 %v4937, 4294901760
      %7815 = vmatpush1.msra.mxu0 %v7814
      %7816 = vmatprep.subr.mxu0 0.0
      %v7817 = vand.u32 %v4936, 4294901760
      %7818 = vmatpush1.msra.mxu0 %v7817
      %7819 = vmatprep.subr.mxu0 0.0
      %v7820 = vand.u32 %v4935, 4294901760
      %7821 = vmatpush1.msra.mxu0 %v7820
      %7822 = vmatprep.subr.mxu0 0.0
      %v7823 = vand.u32 %v4934, 4294901760
      %7824 = vmatpush1.msra.mxu0 %v7823
      %7825 = vmatprep.subr.mxu0 0.0
      %v7826 = vand.u32 %v4933, 4294901760
      %7827 = vmatpush1.msra.mxu0 %v7826
      %7828 = vmatprep.subr.mxu0 0.0
      %v7829 = vand.u32 %v4932, 4294901760
      %7830 = vmatpush1.msra.mxu0 %v7829
      %7831 = vmatprep.subr.mxu0 0.0
      %v7832 = vand.u32 %v4931, 4294901760
      %7833 = vmatpush1.msra.mxu0 %v7832
      %7834 = vmatprep.subr.mxu0 0.0
      %v7835 = vand.u32 %v4930, 4294901760
      %7836 = vmatpush1.msra.mxu0 %v7835
      %7837 = vmatprep.subr.mxu0 0.0
      %7838 = vmatpush2.msra.mxu0 0.0
      %7839 = vmatprep.subr.mxu0 0.0
      %7840 = vmatpush2.msra.mxu0 0.0
      %7841 = vmatprep.subr.mxu0 0.0
      %7842 = vmatpush2.msra.mxu0 0.0
      %7843 = vmatprep.subr.mxu0 0.0
      %7844 = vmatpush2.msra.mxu0 0.0
      %7845 = vmatprep.subr.mxu0 0.0
      %7846 = vmatpush2.msra.mxu0 0.0
      %7847 = vmatprep.subr.mxu0 0.0
      %7848 = vmatpush2.msra.mxu0 0.0
      %7849 = vmatprep.subr.mxu0 0.0
      %7850 = vmatpush2.msra.mxu0 0.0
      %7851 = vmatprep.subr.mxu0 0.0
      %7852 = vmatpush2.msra.mxu0 0.0
      %7853 = vmatprep.subr.mxu0 0.0
      %7854 = vmatpush2.msra.mxu0 0.0
      %7855 = vmatprep.subr.mxu0 0.0
      %7856 = vmatpush2.msra.mxu0 0.0
      %7857 = vmatprep.subr.mxu0 0.0
      %7858 = vmatpush2.msra.mxu0 0.0
      %7859 = vmatprep.subr.mxu0 0.0
      %7860 = vmatpush2.msra.mxu0 0.0
      %7861 = vmatprep.subr.mxu0 0.0
      %7862 = vmatpush2.msra.mxu0 0.0
      %7863 = vmatprep.subr.mxu0 0.0
      %7864 = vmatpush2.msra.mxu0 0.0
      %7865 = vmatprep.subr.mxu0 0.0
      %7866 = vmatpush2.msra.mxu0 0.0
      %7867 = vmatprep.subr.mxu0 0.0
      %7868 = vmatpush2.msra.mxu0 0.0
      %7869 = vmatprep.mubr.f32.mxu0 0.0
      %v7870 = vand.u32 %v7774, 4294901760
      %v7871 = vsub.f32 %v7774, %v7870
      %v7872 = vand.u32 %v7871, 4294901760
      %v7873 = vsub.f32 %v7871, %v7872
      %v7874 = vand.u32 %v7873, 4294901760
      %7875 = vmatmul.mubr.f32.gmra.mxu0 %v7874
      %v7876 = vpop.f32.mrf.mxu0
      %v7877 = vadd.f32 0.0, %v7876
      %v7878 = vpop.f32.mrf.mxu0
      %7879 = vmatprep.mubr.f32.mxu0 0.0
      %v7880 = vand.u32 %v7777, 4294901760
      %v7881 = vsub.f32 %v7777, %v7880
      %v7882 = vand.u32 %v7881, 4294901760
      %v7883 = vsub.f32 %v7881, %v7882
      %v7884 = vand.u32 %v7883, 4294901760
      %7885 = vmatmul.mubr.f32.gmra.mxu0 %v7884
      %v7886 = vpop.f32.mrf.mxu0
      %v7887 = vadd.f32 0.0, %v7886
      %v7888 = vpop.f32.mrf.mxu0
      %7889 = vmatprep.mubr.f32.mxu0 0.0
      %v7890 = vand.u32 %v7780, 4294901760
      %v7891 = vsub.f32 %v7780, %v7890
      %v7892 = vand.u32 %v7891, 4294901760
      %v7893 = vsub.f32 %v7891, %v7892
      %v7894 = vand.u32 %v7893, 4294901760
      %7895 = vmatmul.mubr.f32.gmra.mxu0 %v7894
      %v7896 = vpop.f32.mrf.mxu0
      %v7897 = vadd.f32 0.0, %v7896
      %v7898 = vpop.f32.mrf.mxu0
      %7899 = vmatprep.mubr.f32.mxu0 0.0
      %v7900 = vand.u32 %v7783, 4294901760
      %v7901 = vsub.f32 %v7783, %v7900
      %v7902 = vand.u32 %v7901, 4294901760
      %v7903 = vsub.f32 %v7901, %v7902
      %v7904 = vand.u32 %v7903, 4294901760
      %7905 = vmatmul.mubr.f32.gmra.mxu0 %v7904
      %v7906 = vpop.f32.mrf.mxu0
      %v7907 = vadd.f32 0.0, %v7906
      %v7908 = vpop.f32.mrf.mxu0
      %7909 = vmatprep.mubr.f32.mxu0 0.0
      %v7910 = vand.u32 %v7786, 4294901760
      %v7911 = vsub.f32 %v7786, %v7910
      %v7912 = vand.u32 %v7911, 4294901760
      %v7913 = vsub.f32 %v7911, %v7912
      %v7914 = vand.u32 %v7913, 4294901760
      %7915 = vmatmul.mubr.f32.gmra.mxu0 %v7914
      %v7916 = vpop.f32.mrf.mxu0
      %v7917 = vadd.f32 0.0, %v7916
      %v7918 = vpop.f32.mrf.mxu0
      %7919 = vmatprep.mubr.f32.mxu0 0.0
      %v7920 = vand.u32 %v7789, 4294901760
      %v7921 = vsub.f32 %v7789, %v7920
      %v7922 = vand.u32 %v7921, 4294901760
      %v7923 = vsub.f32 %v7921, %v7922
      %v7924 = vand.u32 %v7923, 4294901760
      %7925 = vmatmul.mubr.f32.gmra.mxu0 %v7924
      %v7926 = vpop.f32.mrf.mxu0
      %v7927 = vadd.f32 0.0, %v7926
      %v7928 = vpop.f32.mrf.mxu0
      %7929 = vmatprep.mubr.f32.mxu0 0.0
      %v7930 = vand.u32 %v7792, 4294901760
      %v7931 = vsub.f32 %v7792, %v7930
      %v7932 = vand.u32 %v7931, 4294901760
      %v7933 = vsub.f32 %v7931, %v7932
      %v7934 = vand.u32 %v7933, 4294901760
      %7935 = vmatmul.mubr.f32.gmra.mxu0 %v7934
      %v7936 = vpop.f32.mrf.mxu0
      %v7937 = vadd.f32 0.0, %v7936
      %v7938 = vpop.f32.mrf.mxu0
      %7939 = vmatprep.mubr.f32.mxu0 0.0
      %v7940 = vand.u32 %v7795, 4294901760
      %v7941 = vsub.f32 %v7795, %v7940
      %v7942 = vand.u32 %v7941, 4294901760
      %v7943 = vsub.f32 %v7941, %v7942
      %v7944 = vand.u32 %v7943, 4294901760
      %7945 = vmatmul.mubr.f32.gmra.mxu0 %v7944
      %v7946 = vpop.f32.mrf.mxu0
      %v7947 = vadd.f32 0.0, %v7946
      %v7948 = vpop.f32.mrf.mxu0
      %7949 = vdwg.mxu0
      %7950 = vmatprep.subr.mxu0 0.0
      %7951 = vmatpush1.msra.mxu0 0.0
      %7952 = vmatprep.subr.mxu0 0.0
      %7953 = vmatpush1.msra.mxu0 0.0
      %7954 = vmatprep.subr.mxu0 0.0
      %7955 = vmatpush1.msra.mxu0 0.0
      %7956 = vmatprep.subr.mxu0 0.0
      %7957 = vmatpush1.msra.mxu0 0.0
      %7958 = vmatprep.subr.mxu0 0.0
      %7959 = vmatpush1.msra.mxu0 0.0
      %7960 = vmatprep.subr.mxu0 0.0
      %7961 = vmatpush1.msra.mxu0 0.0
      %7962 = vmatprep.subr.mxu0 0.0
      %7963 = vmatpush1.msra.mxu0 0.0
      %7964 = vmatprep.subr.mxu0 0.0
      %7965 = vmatpush1.msra.mxu0 0.0
      %7966 = vmatprep.subr.mxu0 0.0
      %v7967 = vand.u32 %v4937, 4294901760
      %v7968 = vsub.f32 %v4937, %v7967
      %v7969 = vand.u32 %v7968, 4294901760
      %v7970 = vsub.f32 %v7968, %v7969
      %v7971 = vand.u32 %v7970, 4294901760
      %7972 = vmatpush1.msra.mxu0 %v7971
      %7973 = vmatprep.subr.mxu0 0.0
      %v7974 = vand.u32 %v4936, 4294901760
      %v7975 = vsub.f32 %v4936, %v7974
      %v7976 = vand.u32 %v7975, 4294901760
      %v7977 = vsub.f32 %v7975, %v7976
      %v7978 = vand.u32 %v7977, 4294901760
      %7979 = vmatpush1.msra.mxu0 %v7978
      %7980 = vmatprep.subr.mxu0 0.0
      %v7981 = vand.u32 %v4935, 4294901760
      %v7982 = vsub.f32 %v4935, %v7981
      %v7983 = vand.u32 %v7982, 4294901760
      %v7984 = vsub.f32 %v7982, %v7983
      %v7985 = vand.u32 %v7984, 4294901760
      %7986 = vmatpush1.msra.mxu0 %v7985
      %7987 = vmatprep.subr.mxu0 0.0
      %v7988 = vand.u32 %v4934, 4294901760
      %v7989 = vsub.f32 %v4934, %v7988
      %v7990 = vand.u32 %v7989, 4294901760
      %v7991 = vsub.f32 %v7989, %v7990
      %v7992 = vand.u32 %v7991, 4294901760
      %7993 = vmatpush1.msra.mxu0 %v7992
      %7994 = vmatprep.subr.mxu0 0.0
      %v7995 = vand.u32 %v4933, 4294901760
      %v7996 = vsub.f32 %v4933, %v7995
      %v7997 = vand.u32 %v7996, 4294901760
      %v7998 = vsub.f32 %v7996, %v7997
      %v7999 = vand.u32 %v7998, 4294901760
      %8000 = vmatpush1.msra.mxu0 %v7999
      %8001 = vmatprep.subr.mxu0 0.0
      %v8002 = vand.u32 %v4932, 4294901760
      %v8003 = vsub.f32 %v4932, %v8002
      %v8004 = vand.u32 %v8003, 4294901760
      %v8005 = vsub.f32 %v8003, %v8004
      %v8006 = vand.u32 %v8005, 4294901760
      %8007 = vmatpush1.msra.mxu0 %v8006
      %8008 = vmatprep.subr.mxu0 0.0
      %v8009 = vand.u32 %v4931, 4294901760
      %v8010 = vsub.f32 %v4931, %v8009
      %v8011 = vand.u32 %v8010, 4294901760
      %v8012 = vsub.f32 %v8010, %v8011
      %v8013 = vand.u32 %v8012, 4294901760
      %8014 = vmatpush1.msra.mxu0 %v8013
      %8015 = vmatprep.subr.mxu0 0.0
      %v8016 = vand.u32 %v4930, 4294901760
      %v8017 = vsub.f32 %v4930, %v8016
      %v8018 = vand.u32 %v8017, 4294901760
      %v8019 = vsub.f32 %v8017, %v8018
      %v8020 = vand.u32 %v8019, 4294901760
      %8021 = vmatpush1.msra.mxu0 %v8020
      %8022 = vmatprep.subr.mxu0 0.0
      %8023 = vmatpush2.msra.mxu0 0.0
      %8024 = vmatprep.subr.mxu0 0.0
      %8025 = vmatpush2.msra.mxu0 0.0
      %8026 = vmatprep.subr.mxu0 0.0
      %8027 = vmatpush2.msra.mxu0 0.0
      %8028 = vmatprep.subr.mxu0 0.0
      %8029 = vmatpush2.msra.mxu0 0.0
      %8030 = vmatprep.subr.mxu0 0.0
      %8031 = vmatpush2.msra.mxu0 0.0
      %8032 = vmatprep.subr.mxu0 0.0
      %8033 = vmatpush2.msra.mxu0 0.0
      %8034 = vmatprep.subr.mxu0 0.0
      %8035 = vmatpush2.msra.mxu0 0.0
      %8036 = vmatprep.subr.mxu0 0.0
      %8037 = vmatpush2.msra.mxu0 0.0
      %8038 = vmatprep.subr.mxu0 0.0
      %8039 = vmatpush2.msra.mxu0 0.0
      %8040 = vmatprep.subr.mxu0 0.0
      %8041 = vmatpush2.msra.mxu0 0.0
      %8042 = vmatprep.subr.mxu0 0.0
      %8043 = vmatpush2.msra.mxu0 0.0
      %8044 = vmatprep.subr.mxu0 0.0
      %8045 = vmatpush2.msra.mxu0 0.0
      %8046 = vmatprep.subr.mxu0 0.0
      %8047 = vmatpush2.msra.mxu0 0.0
      %8048 = vmatprep.subr.mxu0 0.0
      %8049 = vmatpush2.msra.mxu0 0.0
      %8050 = vmatprep.subr.mxu0 0.0
      %8051 = vmatpush2.msra.mxu0 0.0
      %8052 = vmatprep.subr.mxu0 0.0
      %8053 = vmatpush2.msra.mxu0 0.0
      %8054 = vmatprep.mubr.f32.mxu0 0.0
      %v8055 = vand.u32 %v7774, 4294901760
      %8056 = vmatmul.mubr.f32.gmra.mxu0 %v8055
      %v8057 = vpop.f32.mrf.mxu0
      %v8058 = vadd.f32 %v7877, %v8057
      %v8059 = vpop.f32.mrf.mxu0
      %8060 = vmatprep.mubr.f32.mxu0 0.0
      %v8061 = vand.u32 %v7777, 4294901760
      %8062 = vmatmul.mubr.f32.gmra.mxu0 %v8061
      %v8063 = vpop.f32.mrf.mxu0
      %v8064 = vadd.f32 %v7887, %v8063
      %v8065 = vpop.f32.mrf.mxu0
      %8066 = vmatprep.mubr.f32.mxu0 0.0
      %v8067 = vand.u32 %v7780, 4294901760
      %8068 = vmatmul.mubr.f32.gmra.mxu0 %v8067
      %v8069 = vpop.f32.mrf.mxu0
      %v8070 = vadd.f32 %v7897, %v8069
      %v8071 = vpop.f32.mrf.mxu0
      %8072 = vmatprep.mubr.f32.mxu0 0.0
      %v8073 = vand.u32 %v7783, 4294901760
      %8074 = vmatmul.mubr.f32.gmra.mxu0 %v8073
      %v8075 = vpop.f32.mrf.mxu0
      %v8076 = vadd.f32 %v7907, %v8075
      %v8077 = vpop.f32.mrf.mxu0
      %8078 = vmatprep.mubr.f32.mxu0 0.0
      %v8079 = vand.u32 %v7786, 4294901760
      %8080 = vmatmul.mubr.f32.gmra.mxu0 %v8079
      %v8081 = vpop.f32.mrf.mxu0
      %v8082 = vadd.f32 %v7917, %v8081
      %v8083 = vpop.f32.mrf.mxu0
      %8084 = vmatprep.mubr.f32.mxu0 0.0
      %v8085 = vand.u32 %v7789, 4294901760
      %8086 = vmatmul.mubr.f32.gmra.mxu0 %v8085
      %v8087 = vpop.f32.mrf.mxu0
      %v8088 = vadd.f32 %v7927, %v8087
      %v8089 = vpop.f32.mrf.mxu0
      %8090 = vmatprep.mubr.f32.mxu0 0.0
      %v8091 = vand.u32 %v7792, 4294901760
      %8092 = vmatmul.mubr.f32.gmra.mxu0 %v8091
      %v8093 = vpop.f32.mrf.mxu0
      %v8094 = vadd.f32 %v7937, %v8093
      %v8095 = vpop.f32.mrf.mxu0
      %8096 = vmatprep.mubr.f32.mxu0 0.0
      %v8097 = vand.u32 %v7795, 4294901760
      %8098 = vmatmul.mubr.f32.gmra.mxu0 %v8097
      %v8099 = vpop.f32.mrf.mxu0
      %v8100 = vadd.f32 %v7947, %v8099
      %v8101 = vpop.f32.mrf.mxu0
      %8102 = vdwg.mxu0
      %8103 = vmatprep.subr.mxu0 0.0
      %8104 = vmatpush1.msra.mxu0 0.0
      %8105 = vmatprep.subr.mxu0 0.0
      %8106 = vmatpush1.msra.mxu0 0.0
      %8107 = vmatprep.subr.mxu0 0.0
      %8108 = vmatpush1.msra.mxu0 0.0
      %8109 = vmatprep.subr.mxu0 0.0
      %8110 = vmatpush1.msra.mxu0 0.0
      %8111 = vmatprep.subr.mxu0 0.0
      %8112 = vmatpush1.msra.mxu0 0.0
      %8113 = vmatprep.subr.mxu0 0.0
      %8114 = vmatpush1.msra.mxu0 0.0
      %8115 = vmatprep.subr.mxu0 0.0
      %8116 = vmatpush1.msra.mxu0 0.0
      %8117 = vmatprep.subr.mxu0 0.0
      %8118 = vmatpush1.msra.mxu0 0.0
      %8119 = vmatprep.subr.mxu0 0.0
      %v8120 = vand.u32 %v4937, 4294901760
      %v8121 = vsub.f32 %v4937, %v8120
      %8122 = vmatpush1.msra.mxu0 %v8121
      %8123 = vmatprep.subr.mxu0 0.0
      %v8124 = vand.u32 %v4936, 4294901760
      %v8125 = vsub.f32 %v4936, %v8124
      %8126 = vmatpush1.msra.mxu0 %v8125
      %8127 = vmatprep.subr.mxu0 0.0
      %v8128 = vand.u32 %v4935, 4294901760
      %v8129 = vsub.f32 %v4935, %v8128
      %8130 = vmatpush1.msra.mxu0 %v8129
      %8131 = vmatprep.subr.mxu0 0.0
      %v8132 = vand.u32 %v4934, 4294901760
      %v8133 = vsub.f32 %v4934, %v8132
      %8134 = vmatpush1.msra.mxu0 %v8133
      %8135 = vmatprep.subr.mxu0 0.0
      %v8136 = vand.u32 %v4933, 4294901760
      %v8137 = vsub.f32 %v4933, %v8136
      %8138 = vmatpush1.msra.mxu0 %v8137
      %8139 = vmatprep.subr.mxu0 0.0
      %v8140 = vand.u32 %v4932, 4294901760
      %v8141 = vsub.f32 %v4932, %v8140
      %8142 = vmatpush1.msra.mxu0 %v8141
      %8143 = vmatprep.subr.mxu0 0.0
      %v8144 = vand.u32 %v4931, 4294901760
      %v8145 = vsub.f32 %v4931, %v8144
      %8146 = vmatpush1.msra.mxu0 %v8145
      %8147 = vmatprep.subr.mxu0 0.0
      %v8148 = vand.u32 %v4930, 4294901760
      %v8149 = vsub.f32 %v4930, %v8148
      %8150 = vmatpush1.msra.mxu0 %v8149
      %8151 = vmatprep.subr.mxu0 0.0
      %8152 = vmatpush2.msra.mxu0 0.0
      %8153 = vmatprep.subr.mxu0 0.0
      %8154 = vmatpush2.msra.mxu0 0.0
      %8155 = vmatprep.subr.mxu0 0.0
      %8156 = vmatpush2.msra.mxu0 0.0
      %8157 = vmatprep.subr.mxu0 0.0
      %8158 = vmatpush2.msra.mxu0 0.0
      %8159 = vmatprep.subr.mxu0 0.0
      %8160 = vmatpush2.msra.mxu0 0.0
      %8161 = vmatprep.subr.mxu0 0.0
      %8162 = vmatpush2.msra.mxu0 0.0
      %8163 = vmatprep.subr.mxu0 0.0
      %8164 = vmatpush2.msra.mxu0 0.0
      %8165 = vmatprep.subr.mxu0 0.0
      %8166 = vmatpush2.msra.mxu0 0.0
      %8167 = vmatprep.subr.mxu0 0.0
      %8168 = vmatpush2.msra.mxu0 0.0
      %8169 = vmatprep.subr.mxu0 0.0
      %8170 = vmatpush2.msra.mxu0 0.0
      %8171 = vmatprep.subr.mxu0 0.0
      %8172 = vmatpush2.msra.mxu0 0.0
      %8173 = vmatprep.subr.mxu0 0.0
      %8174 = vmatpush2.msra.mxu0 0.0
      %8175 = vmatprep.subr.mxu0 0.0
      %8176 = vmatpush2.msra.mxu0 0.0
      %8177 = vmatprep.subr.mxu0 0.0
      %8178 = vmatpush2.msra.mxu0 0.0
      %8179 = vmatprep.subr.mxu0 0.0
      %8180 = vmatpush2.msra.mxu0 0.0
      %8181 = vmatprep.subr.mxu0 0.0
      %8182 = vmatpush2.msra.mxu0 0.0
      %8183 = vmatprep.mubr.f32.mxu0 0.0
      %v8184 = vand.u32 %v7774, 4294901760
      %v8185 = vsub.f32 %v7774, %v8184
      %8186 = vmatmul.mubr.f32.gmra.mxu0 %v8185
      %v8187 = vpop.f32.mrf.mxu0
      %v8188 = vadd.f32 %v8058, %v8187
      %v8189 = vpop.f32.mrf.mxu0
      %8190 = vmatprep.mubr.f32.mxu0 0.0
      %v8191 = vand.u32 %v7777, 4294901760
      %v8192 = vsub.f32 %v7777, %v8191
      %8193 = vmatmul.mubr.f32.gmra.mxu0 %v8192
      %v8194 = vpop.f32.mrf.mxu0
      %v8195 = vadd.f32 %v8064, %v8194
      %v8196 = vpop.f32.mrf.mxu0
      %8197 = vmatprep.mubr.f32.mxu0 0.0
      %v8198 = vand.u32 %v7780, 4294901760
      %v8199 = vsub.f32 %v7780, %v8198
      %8200 = vmatmul.mubr.f32.gmra.mxu0 %v8199
      %v8201 = vpop.f32.mrf.mxu0
      %v8202 = vadd.f32 %v8070, %v8201
      %v8203 = vpop.f32.mrf.mxu0
      %8204 = vmatprep.mubr.f32.mxu0 0.0
      %v8205 = vand.u32 %v7783, 4294901760
      %v8206 = vsub.f32 %v7783, %v8205
      %8207 = vmatmul.mubr.f32.gmra.mxu0 %v8206
      %v8208 = vpop.f32.mrf.mxu0
      %v8209 = vadd.f32 %v8076, %v8208
      %v8210 = vpop.f32.mrf.mxu0
      %8211 = vmatprep.mubr.f32.mxu0 0.0
      %v8212 = vand.u32 %v7786, 4294901760
      %v8213 = vsub.f32 %v7786, %v8212
      %8214 = vmatmul.mubr.f32.gmra.mxu0 %v8213
      %v8215 = vpop.f32.mrf.mxu0
      %v8216 = vadd.f32 %v8082, %v8215
      %v8217 = vpop.f32.mrf.mxu0
      %8218 = vmatprep.mubr.f32.mxu0 0.0
      %v8219 = vand.u32 %v7789, 4294901760
      %v8220 = vsub.f32 %v7789, %v8219
      %8221 = vmatmul.mubr.f32.gmra.mxu0 %v8220
      %v8222 = vpop.f32.mrf.mxu0
      %v8223 = vadd.f32 %v8088, %v8222
      %v8224 = vpop.f32.mrf.mxu0
      %8225 = vmatprep.mubr.f32.mxu0 0.0
      %v8226 = vand.u32 %v7792, 4294901760
      %v8227 = vsub.f32 %v7792, %v8226
      %8228 = vmatmul.mubr.f32.gmra.mxu0 %v8227
      %v8229 = vpop.f32.mrf.mxu0
      %v8230 = vadd.f32 %v8094, %v8229
      %v8231 = vpop.f32.mrf.mxu0
      %8232 = vmatprep.mubr.f32.mxu0 0.0
      %v8233 = vand.u32 %v7795, 4294901760
      %v8234 = vsub.f32 %v7795, %v8233
      %8235 = vmatmul.mubr.f32.gmra.mxu0 %v8234
      %v8236 = vpop.f32.mrf.mxu0
      %v8237 = vadd.f32 %v8100, %v8236
      %v8238 = vpop.f32.mrf.mxu0
      %8239 = vdwg.mxu0
      %8240 = vmatprep.subr.mxu0 0.0
      %8241 = vmatpush1.msra.mxu0 0.0
      %8242 = vmatprep.subr.mxu0 0.0
      %8243 = vmatpush1.msra.mxu0 0.0
      %8244 = vmatprep.subr.mxu0 0.0
      %8245 = vmatpush1.msra.mxu0 0.0
      %8246 = vmatprep.subr.mxu0 0.0
      %8247 = vmatpush1.msra.mxu0 0.0
      %8248 = vmatprep.subr.mxu0 0.0
      %8249 = vmatpush1.msra.mxu0 0.0
      %8250 = vmatprep.subr.mxu0 0.0
      %8251 = vmatpush1.msra.mxu0 0.0
      %8252 = vmatprep.subr.mxu0 0.0
      %8253 = vmatpush1.msra.mxu0 0.0
      %8254 = vmatprep.subr.mxu0 0.0
      %8255 = vmatpush1.msra.mxu0 0.0
      %8256 = vmatprep.subr.mxu0 0.0
      %v8257 = vand.u32 %v4937, 4294901760
      %8258 = vmatpush1.msra.mxu0 %v8257
      %8259 = vmatprep.subr.mxu0 0.0
      %v8260 = vand.u32 %v4936, 4294901760
      %8261 = vmatpush1.msra.mxu0 %v8260
      %8262 = vmatprep.subr.mxu0 0.0
      %v8263 = vand.u32 %v4935, 4294901760
      %8264 = vmatpush1.msra.mxu0 %v8263
      %8265 = vmatprep.subr.mxu0 0.0
      %v8266 = vand.u32 %v4934, 4294901760
      %8267 = vmatpush1.msra.mxu0 %v8266
      %8268 = vmatprep.subr.mxu0 0.0
      %v8269 = vand.u32 %v4933, 4294901760
      %8270 = vmatpush1.msra.mxu0 %v8269
      %8271 = vmatprep.subr.mxu0 0.0
      %v8272 = vand.u32 %v4932, 4294901760
      %8273 = vmatpush1.msra.mxu0 %v8272
      %8274 = vmatprep.subr.mxu0 0.0
      %v8275 = vand.u32 %v4931, 4294901760
      %8276 = vmatpush1.msra.mxu0 %v8275
      %8277 = vmatprep.subr.mxu0 0.0
      %v8278 = vand.u32 %v4930, 4294901760
      %8279 = vmatpush1.msra.mxu0 %v8278
      %8280 = vmatprep.subr.mxu0 0.0
      %8281 = vmatpush2.msra.mxu0 0.0
      %8282 = vmatprep.subr.mxu0 0.0
      %8283 = vmatpush2.msra.mxu0 0.0
      %8284 = vmatprep.subr.mxu0 0.0
      %8285 = vmatpush2.msra.mxu0 0.0
      %8286 = vmatprep.subr.mxu0 0.0
      %8287 = vmatpush2.msra.mxu0 0.0
      %8288 = vmatprep.subr.mxu0 0.0
      %8289 = vmatpush2.msra.mxu0 0.0
      %8290 = vmatprep.subr.mxu0 0.0
      %8291 = vmatpush2.msra.mxu0 0.0
      %8292 = vmatprep.subr.mxu0 0.0
      %8293 = vmatpush2.msra.mxu0 0.0
      %8294 = vmatprep.subr.mxu0 0.0
      %8295 = vmatpush2.msra.mxu0 0.0
      %8296 = vmatprep.subr.mxu0 0.0
      %8297 = vmatpush2.msra.mxu0 0.0
      %8298 = vmatprep.subr.mxu0 0.0
      %8299 = vmatpush2.msra.mxu0 0.0
      %8300 = vmatprep.subr.mxu0 0.0
      %8301 = vmatpush2.msra.mxu0 0.0
      %8302 = vmatprep.subr.mxu0 0.0
      %8303 = vmatpush2.msra.mxu0 0.0
      %8304 = vmatprep.subr.mxu0 0.0
      %8305 = vmatpush2.msra.mxu0 0.0
      %8306 = vmatprep.subr.mxu0 0.0
      %8307 = vmatpush2.msra.mxu0 0.0
      %8308 = vmatprep.subr.mxu0 0.0
      %8309 = vmatpush2.msra.mxu0 0.0
      %8310 = vmatprep.subr.mxu0 0.0
      %8311 = vmatpush2.msra.mxu0 0.0
      %8312 = vmatprep.mubr.f32.mxu0 0.0
      %v8313 = vand.u32 %v7774, 4294901760
      %v8314 = vsub.f32 %v7774, %v8313
      %v8315 = vand.u32 %v8314, 4294901760
      %8316 = vmatmul.mubr.f32.gmra.mxu0 %v8315
      %v8317 = vpop.f32.mrf.mxu0
      %v8318 = vadd.f32 %v8188, %v8317
      %v8319 = vpop.f32.mrf.mxu0
      %8320 = vmatprep.mubr.f32.mxu0 0.0
      %v8321 = vand.u32 %v7777, 4294901760
      %v8322 = vsub.f32 %v7777, %v8321
      %v8323 = vand.u32 %v8322, 4294901760
      %8324 = vmatmul.mubr.f32.gmra.mxu0 %v8323
      %v8325 = vpop.f32.mrf.mxu0
      %v8326 = vadd.f32 %v8195, %v8325
      %v8327 = vpop.f32.mrf.mxu0
      %8328 = vmatprep.mubr.f32.mxu0 0.0
      %v8329 = vand.u32 %v7780, 4294901760
      %v8330 = vsub.f32 %v7780, %v8329
      %v8331 = vand.u32 %v8330, 4294901760
      %8332 = vmatmul.mubr.f32.gmra.mxu0 %v8331
      %v8333 = vpop.f32.mrf.mxu0
      %v8334 = vadd.f32 %v8202, %v8333
      %v8335 = vpop.f32.mrf.mxu0
      %8336 = vmatprep.mubr.f32.mxu0 0.0
      %v8337 = vand.u32 %v7783, 4294901760
      %v8338 = vsub.f32 %v7783, %v8337
      %v8339 = vand.u32 %v8338, 4294901760
      %8340 = vmatmul.mubr.f32.gmra.mxu0 %v8339
      %v8341 = vpop.f32.mrf.mxu0
      %v8342 = vadd.f32 %v8209, %v8341
      %v8343 = vpop.f32.mrf.mxu0
      %8344 = vmatprep.mubr.f32.mxu0 0.0
      %v8345 = vand.u32 %v7786, 4294901760
      %v8346 = vsub.f32 %v7786, %v8345
      %v8347 = vand.u32 %v8346, 4294901760
      %8348 = vmatmul.mubr.f32.gmra.mxu0 %v8347
      %v8349 = vpop.f32.mrf.mxu0
      %v8350 = vadd.f32 %v8216, %v8349
      %v8351 = vpop.f32.mrf.mxu0
      %8352 = vmatprep.mubr.f32.mxu0 0.0
      %v8353 = vand.u32 %v7789, 4294901760
      %v8354 = vsub.f32 %v7789, %v8353
      %v8355 = vand.u32 %v8354, 4294901760
      %8356 = vmatmul.mubr.f32.gmra.mxu0 %v8355
      %v8357 = vpop.f32.mrf.mxu0
      %v8358 = vadd.f32 %v8223, %v8357
      %v8359 = vpop.f32.mrf.mxu0
      %8360 = vmatprep.mubr.f32.mxu0 0.0
      %v8361 = vand.u32 %v7792, 4294901760
      %v8362 = vsub.f32 %v7792, %v8361
      %v8363 = vand.u32 %v8362, 4294901760
      %8364 = vmatmul.mubr.f32.gmra.mxu0 %v8363
      %v8365 = vpop.f32.mrf.mxu0
      %v8366 = vadd.f32 %v8230, %v8365
      %v8367 = vpop.f32.mrf.mxu0
      %8368 = vmatprep.mubr.f32.mxu0 0.0
      %v8369 = vand.u32 %v7795, 4294901760
      %v8370 = vsub.f32 %v7795, %v8369
      %v8371 = vand.u32 %v8370, 4294901760
      %8372 = vmatmul.mubr.f32.gmra.mxu0 %v8371
      %v8373 = vpop.f32.mrf.mxu0
      %v8374 = vadd.f32 %v8237, %v8373
      %v8375 = vpop.f32.mrf.mxu0
      %8376 = vdwg.mxu0
      %8377 = vmatprep.subr.mxu0 0.0
      %8378 = vmatpush1.msra.mxu0 0.0
      %8379 = vmatprep.subr.mxu0 0.0
      %8380 = vmatpush1.msra.mxu0 0.0
      %8381 = vmatprep.subr.mxu0 0.0
      %8382 = vmatpush1.msra.mxu0 0.0
      %8383 = vmatprep.subr.mxu0 0.0
      %8384 = vmatpush1.msra.mxu0 0.0
      %8385 = vmatprep.subr.mxu0 0.0
      %8386 = vmatpush1.msra.mxu0 0.0
      %8387 = vmatprep.subr.mxu0 0.0
      %8388 = vmatpush1.msra.mxu0 0.0
      %8389 = vmatprep.subr.mxu0 0.0
      %8390 = vmatpush1.msra.mxu0 0.0
      %8391 = vmatprep.subr.mxu0 0.0
      %8392 = vmatpush1.msra.mxu0 0.0
      %8393 = vmatprep.subr.mxu0 0.0
      %v8394 = vand.u32 %v4937, 4294901760
      %v8395 = vsub.f32 %v4937, %v8394
      %v8396 = vand.u32 %v8395, 4294901760
      %8397 = vmatpush1.msra.mxu0 %v8396
      %8398 = vmatprep.subr.mxu0 0.0
      %v8399 = vand.u32 %v4936, 4294901760
      %v8400 = vsub.f32 %v4936, %v8399
      %v8401 = vand.u32 %v8400, 4294901760
      %8402 = vmatpush1.msra.mxu0 %v8401
      %8403 = vmatprep.subr.mxu0 0.0
      %v8404 = vand.u32 %v4935, 4294901760
      %v8405 = vsub.f32 %v4935, %v8404
      %v8406 = vand.u32 %v8405, 4294901760
      %8407 = vmatpush1.msra.mxu0 %v8406
      %8408 = vmatprep.subr.mxu0 0.0
      %v8409 = vand.u32 %v4934, 4294901760
      %v8410 = vsub.f32 %v4934, %v8409
      %v8411 = vand.u32 %v8410, 4294901760
      %8412 = vmatpush1.msra.mxu0 %v8411
      %8413 = vmatprep.subr.mxu0 0.0
      %v8414 = vand.u32 %v4933, 4294901760
      %v8415 = vsub.f32 %v4933, %v8414
      %v8416 = vand.u32 %v8415, 4294901760
      %8417 = vmatpush1.msra.mxu0 %v8416
      %8418 = vmatprep.subr.mxu0 0.0
      %v8419 = vand.u32 %v4932, 4294901760
      %v8420 = vsub.f32 %v4932, %v8419
      %v8421 = vand.u32 %v8420, 4294901760
      %8422 = vmatpush1.msra.mxu0 %v8421
      %8423 = vmatprep.subr.mxu0 0.0
      %v8424 = vand.u32 %v4931, 4294901760
      %v8425 = vsub.f32 %v4931, %v8424
      %v8426 = vand.u32 %v8425, 4294901760
      %8427 = vmatpush1.msra.mxu0 %v8426
      %8428 = vmatprep.subr.mxu0 0.0
      %v8429 = vand.u32 %v4930, 4294901760
      %v8430 = vsub.f32 %v4930, %v8429
      %v8431 = vand.u32 %v8430, 4294901760
      %8432 = vmatpush1.msra.mxu0 %v8431
      %8433 = vmatprep.subr.mxu0 0.0
      %8434 = vmatpush2.msra.mxu0 0.0
      %8435 = vmatprep.subr.mxu0 0.0
      %8436 = vmatpush2.msra.mxu0 0.0
      %8437 = vmatprep.subr.mxu0 0.0
      %8438 = vmatpush2.msra.mxu0 0.0
      %8439 = vmatprep.subr.mxu0 0.0
      %8440 = vmatpush2.msra.mxu0 0.0
      %8441 = vmatprep.subr.mxu0 0.0
      %8442 = vmatpush2.msra.mxu0 0.0
      %8443 = vmatprep.subr.mxu0 0.0
      %8444 = vmatpush2.msra.mxu0 0.0
      %8445 = vmatprep.subr.mxu0 0.0
      %8446 = vmatpush2.msra.mxu0 0.0
      %8447 = vmatprep.subr.mxu0 0.0
      %8448 = vmatpush2.msra.mxu0 0.0
      %8449 = vmatprep.subr.mxu0 0.0
      %8450 = vmatpush2.msra.mxu0 0.0
      %8451 = vmatprep.subr.mxu0 0.0
      %8452 = vmatpush2.msra.mxu0 0.0
      %8453 = vmatprep.subr.mxu0 0.0
      %8454 = vmatpush2.msra.mxu0 0.0
      %8455 = vmatprep.subr.mxu0 0.0
      %8456 = vmatpush2.msra.mxu0 0.0
      %8457 = vmatprep.subr.mxu0 0.0
      %8458 = vmatpush2.msra.mxu0 0.0
      %8459 = vmatprep.subr.mxu0 0.0
      %8460 = vmatpush2.msra.mxu0 0.0
      %8461 = vmatprep.subr.mxu0 0.0
      %8462 = vmatpush2.msra.mxu0 0.0
      %8463 = vmatprep.subr.mxu0 0.0
      %8464 = vmatpush2.msra.mxu0 0.0
      %8465 = vmatprep.mubr.f32.mxu0 0.0
      %v8466 = vand.u32 %v7774, 4294901760
      %8467 = vmatmul.mubr.f32.gmra.mxu0 %v8466
      %v8468 = vpop.f32.mrf.mxu0
      %v8469 = vadd.f32 %v8318, %v8468
      %v8470 = vpop.f32.mrf.mxu0
      %8471 = vmatprep.mubr.f32.mxu0 0.0
      %v8472 = vand.u32 %v7777, 4294901760
      %8473 = vmatmul.mubr.f32.gmra.mxu0 %v8472
      %v8474 = vpop.f32.mrf.mxu0
      %v8475 = vadd.f32 %v8326, %v8474
      %v8476 = vpop.f32.mrf.mxu0
      %8477 = vmatprep.mubr.f32.mxu0 0.0
      %v8478 = vand.u32 %v7780, 4294901760
      %8479 = vmatmul.mubr.f32.gmra.mxu0 %v8478
      %v8480 = vpop.f32.mrf.mxu0
      %v8481 = vadd.f32 %v8334, %v8480
      %v8482 = vpop.f32.mrf.mxu0
      %8483 = vmatprep.mubr.f32.mxu0 0.0
      %v8484 = vand.u32 %v7783, 4294901760
      %8485 = vmatmul.mubr.f32.gmra.mxu0 %v8484
      %v8486 = vpop.f32.mrf.mxu0
      %v8487 = vadd.f32 %v8342, %v8486
      %v8488 = vpop.f32.mrf.mxu0
      %8489 = vmatprep.mubr.f32.mxu0 0.0
      %v8490 = vand.u32 %v7786, 4294901760
      %8491 = vmatmul.mubr.f32.gmra.mxu0 %v8490
      %v8492 = vpop.f32.mrf.mxu0
      %v8493 = vadd.f32 %v8350, %v8492
      %v8494 = vpop.f32.mrf.mxu0
      %8495 = vmatprep.mubr.f32.mxu0 0.0
      %v8496 = vand.u32 %v7789, 4294901760
      %8497 = vmatmul.mubr.f32.gmra.mxu0 %v8496
      %v8498 = vpop.f32.mrf.mxu0
      %v8499 = vadd.f32 %v8358, %v8498
      %v8500 = vpop.f32.mrf.mxu0
      %8501 = vmatprep.mubr.f32.mxu0 0.0
      %v8502 = vand.u32 %v7792, 4294901760
      %8503 = vmatmul.mubr.f32.gmra.mxu0 %v8502
      %v8504 = vpop.f32.mrf.mxu0
      %v8505 = vadd.f32 %v8366, %v8504
      %v8506 = vpop.f32.mrf.mxu0
      %8507 = vmatprep.mubr.f32.mxu0 0.0
      %v8508 = vand.u32 %v7795, 4294901760
      %8509 = vmatmul.mubr.f32.gmra.mxu0 %v8508
      %v8510 = vpop.f32.mrf.mxu0
      %v8511 = vadd.f32 %v8374, %v8510
      %v8512 = vpop.f32.mrf.mxu0
      %8513 = vdwg.mxu0
      %8514 = vmatprep.subr.mxu0 0.0
      %8515 = vmatpush1.msra.mxu0 0.0
      %8516 = vmatprep.subr.mxu0 0.0
      %8517 = vmatpush1.msra.mxu0 0.0
      %8518 = vmatprep.subr.mxu0 0.0
      %8519 = vmatpush1.msra.mxu0 0.0
      %8520 = vmatprep.subr.mxu0 0.0
      %8521 = vmatpush1.msra.mxu0 0.0
      %8522 = vmatprep.subr.mxu0 0.0
      %8523 = vmatpush1.msra.mxu0 0.0
      %8524 = vmatprep.subr.mxu0 0.0
      %8525 = vmatpush1.msra.mxu0 0.0
      %8526 = vmatprep.subr.mxu0 0.0
      %8527 = vmatpush1.msra.mxu0 0.0
      %8528 = vmatprep.subr.mxu0 0.0
      %8529 = vmatpush1.msra.mxu0 0.0
      %8530 = vmatprep.subr.mxu0 0.0
      %v8531 = vand.u32 %v4937, 4294901760
      %8532 = vmatpush1.msra.mxu0 %v8531
      %8533 = vmatprep.subr.mxu0 0.0
      %v8534 = vand.u32 %v4936, 4294901760
      %8535 = vmatpush1.msra.mxu0 %v8534
      %8536 = vmatprep.subr.mxu0 0.0
      %v8537 = vand.u32 %v4935, 4294901760
      %8538 = vmatpush1.msra.mxu0 %v8537
      %8539 = vmatprep.subr.mxu0 0.0
      %v8540 = vand.u32 %v4934, 4294901760
      %8541 = vmatpush1.msra.mxu0 %v8540
      %8542 = vmatprep.subr.mxu0 0.0
      %v8543 = vand.u32 %v4933, 4294901760
      %8544 = vmatpush1.msra.mxu0 %v8543
      %8545 = vmatprep.subr.mxu0 0.0
      %v8546 = vand.u32 %v4932, 4294901760
      %8547 = vmatpush1.msra.mxu0 %v8546
      %8548 = vmatprep.subr.mxu0 0.0
      %v8549 = vand.u32 %v4931, 4294901760
      %8550 = vmatpush1.msra.mxu0 %v8549
      %8551 = vmatprep.subr.mxu0 0.0
      %v8552 = vand.u32 %v4930, 4294901760
      %8553 = vmatpush1.msra.mxu0 %v8552
      %8554 = vmatprep.subr.mxu0 0.0
      %8555 = vmatpush2.msra.mxu0 0.0
      %8556 = vmatprep.subr.mxu0 0.0
      %8557 = vmatpush2.msra.mxu0 0.0
      %8558 = vmatprep.subr.mxu0 0.0
      %8559 = vmatpush2.msra.mxu0 0.0
      %8560 = vmatprep.subr.mxu0 0.0
      %8561 = vmatpush2.msra.mxu0 0.0
      %8562 = vmatprep.subr.mxu0 0.0
      %8563 = vmatpush2.msra.mxu0 0.0
      %8564 = vmatprep.subr.mxu0 0.0
      %8565 = vmatpush2.msra.mxu0 0.0
      %8566 = vmatprep.subr.mxu0 0.0
      %8567 = vmatpush2.msra.mxu0 0.0
      %8568 = vmatprep.subr.mxu0 0.0
      %8569 = vmatpush2.msra.mxu0 0.0
      %8570 = vmatprep.subr.mxu0 0.0
      %8571 = vmatpush2.msra.mxu0 0.0
      %8572 = vmatprep.subr.mxu0 0.0
      %8573 = vmatpush2.msra.mxu0 0.0
      %8574 = vmatprep.subr.mxu0 0.0
      %8575 = vmatpush2.msra.mxu0 0.0
      %8576 = vmatprep.subr.mxu0 0.0
      %8577 = vmatpush2.msra.mxu0 0.0
      %8578 = vmatprep.subr.mxu0 0.0
      %8579 = vmatpush2.msra.mxu0 0.0
      %8580 = vmatprep.subr.mxu0 0.0
      %8581 = vmatpush2.msra.mxu0 0.0
      %8582 = vmatprep.subr.mxu0 0.0
      %8583 = vmatpush2.msra.mxu0 0.0
      %8584 = vmatprep.subr.mxu0 0.0
      %8585 = vmatpush2.msra.mxu0 0.0
      %8586 = vmatprep.mubr.f32.mxu0 0.0
      %v8587 = vand.u32 %v7774, 4294901760
      %8588 = vmatmul.mubr.f32.gmra.mxu0 %v8587
      %v8589 = vpop.f32.mrf.mxu0
      %v8590 = vadd.f32 %v8469, %v8589
      %v8591 = vpop.f32.mrf.mxu0
      %8592 = vmatprep.mubr.f32.mxu0 0.0
      %v8593 = vand.u32 %v7777, 4294901760
      %8594 = vmatmul.mubr.f32.gmra.mxu0 %v8593
      %v8595 = vpop.f32.mrf.mxu0
      %v8596 = vadd.f32 %v8475, %v8595
      %v8597 = vpop.f32.mrf.mxu0
      %8598 = vmatprep.mubr.f32.mxu0 0.0
      %v8599 = vand.u32 %v7780, 4294901760
      %8600 = vmatmul.mubr.f32.gmra.mxu0 %v8599
      %v8601 = vpop.f32.mrf.mxu0
      %v8602 = vadd.f32 %v8481, %v8601
      %v8603 = vpop.f32.mrf.mxu0
      %8604 = vmatprep.mubr.f32.mxu0 0.0
      %v8605 = vand.u32 %v7783, 4294901760
      %8606 = vmatmul.mubr.f32.gmra.mxu0 %v8605
      %v8607 = vpop.f32.mrf.mxu0
      %v8608 = vadd.f32 %v8487, %v8607
      %v8609 = vpop.f32.mrf.mxu0
      %8610 = vmatprep.mubr.f32.mxu0 0.0
      %v8611 = vand.u32 %v7786, 4294901760
      %8612 = vmatmul.mubr.f32.gmra.mxu0 %v8611
      %v8613 = vpop.f32.mrf.mxu0
      %v8614 = vadd.f32 %v8493, %v8613
      %v8615 = vpop.f32.mrf.mxu0
      %8616 = vmatprep.mubr.f32.mxu0 0.0
      %v8617 = vand.u32 %v7789, 4294901760
      %8618 = vmatmul.mubr.f32.gmra.mxu0 %v8617
      %v8619 = vpop.f32.mrf.mxu0
      %v8620 = vadd.f32 %v8499, %v8619
      %v8621 = vpop.f32.mrf.mxu0
      %8622 = vmatprep.mubr.f32.mxu0 0.0
      %v8623 = vand.u32 %v7792, 4294901760
      %8624 = vmatmul.mubr.f32.gmra.mxu0 %v8623
      %v8625 = vpop.f32.mrf.mxu0
      %v8626 = vadd.f32 %v8505, %v8625
      %v8627 = vpop.f32.mrf.mxu0
      %8628 = vmatprep.mubr.f32.mxu0 0.0
      %v8629 = vand.u32 %v7795, 4294901760
      %8630 = vmatmul.mubr.f32.gmra.mxu0 %v8629
      %v8631 = vpop.f32.mrf.mxu0
      %v8632 = vadd.f32 %v8511, %v8631
      %v8633 = vpop.f32.mrf.mxu0
      %8634 = vdwg.mxu0
      %v8635 = vlaneseq
      %v8636 = vshrl.u32 %v8635, 7
      %v8637 = vadd.s32 %v8636, 8
      %v8638 = vadd.s32 %v8636, 16
      %v8639 = vadd.s32 %v8636, 24
      %v8640 = vadd.s32 %v8636, 32
      %v8641 = vadd.s32 %v8636, 40
      %v8642 = vadd.s32 %v8636, 48
      %v8643 = vadd.s32 %v8636, 56
      %vm8644 = vcmp.gt.s32.totalorder %v8636, 0
      %vm8645 = vcmp.gt.s32.totalorder %v8637, 0
      %vm8646 = vcmp.gt.s32.totalorder %v8638, 0
      %vm8647 = vcmp.gt.s32.totalorder %v8639, 0
      %vm8648 = vcmp.gt.s32.totalorder %v8640, 0
      %vm8649 = vcmp.gt.s32.totalorder %v8641, 0
      %vm8650 = vcmp.gt.s32.totalorder %v8642, 0
      %vm8651 = vcmp.gt.s32.totalorder %v8643, 0
      %v8652 = vsel %vm8644, 1, 0
      %v8653 = vsel %vm8645, 1, 0
      %v8654 = vsel %vm8646, 1, 0
      %v8655 = vsel %vm8647, 1, 0
      %v8656 = vsel %vm8648, 1, 0
      %v8657 = vsel %vm8649, 1, 0
      %v8658 = vsel %vm8650, 1, 0
      %v8659 = vsel %vm8651, 1, 0
      %v8660 = vcvt.s32.f32 %v8652
      %v8661 = vcvt.s32.f32 %v8653
      %v8662 = vcvt.s32.f32 %v8654
      %v8663 = vcvt.s32.f32 %v8655
      %v8664 = vcvt.s32.f32 %v8656
      %v8665 = vcvt.s32.f32 %v8657
      %v8666 = vcvt.s32.f32 %v8658
      %v8667 = vcvt.s32.f32 %v8659
      %vm8668 = vcmp.lt.s32.totalorder %v8636, 63
      %vm8669 = vcmp.lt.s32.totalorder %v8637, 63
      %vm8670 = vcmp.lt.s32.totalorder %v8638, 63
      %vm8671 = vcmp.lt.s32.totalorder %v8639, 63
      %vm8672 = vcmp.lt.s32.totalorder %v8640, 63
      %vm8673 = vcmp.lt.s32.totalorder %v8641, 63
      %vm8674 = vcmp.lt.s32.totalorder %v8642, 63
      %vm8675 = vcmp.lt.s32.totalorder %v8643, 63
      %v8676 = vsel %vm8668, 1, 0
      %v8677 = vsel %vm8669, 1, 0
      %v8678 = vsel %vm8670, 1, 0
      %v8679 = vsel %vm8671, 1, 0
      %v8680 = vsel %vm8672, 1, 0
      %v8681 = vsel %vm8673, 1, 0
      %v8682 = vsel %vm8674, 1, 0
      %v8683 = vsel %vm8675, 1, 0
      %v8684 = vcvt.s32.f32 %v8676
      %v8685 = vcvt.s32.f32 %v8677
      %v8686 = vcvt.s32.f32 %v8678
      %v8687 = vcvt.s32.f32 %v8679
      %v8688 = vcvt.s32.f32 %v8680
      %v8689 = vcvt.s32.f32 %v8681
      %v8690 = vcvt.s32.f32 %v8682
      %v8691 = vcvt.s32.f32 %v8683
      %v8692 = vrot.slane %v7696, 7
      %v8693 = vrot.slane %v7702, 7
      %v8694 = vrot.slane %v7708, 7
      %v8695 = vrot.slane %v7714, 7
      %v8696 = vrot.slane %v7720, 7
      %v8697 = vrot.slane %v7726, 7
      %v8698 = vrot.slane %v7732, 7
      %v8699 = vrot.slane %v7738, 7
      %vm8700 = vcmp.lt.s32.totalorder %v8636, 1
      %v8701 = vsel %vm8700, %v8698, %v8699
      %v8702 = vsel %vm8700, %v8697, %v8698
      %v8703 = vsel %vm8700, %v8696, %v8697
      %v8704 = vsel %vm8700, %v8695, %v8696
      %v8705 = vsel %vm8700, %v8694, %v8695
      %v8706 = vsel %vm8700, %v8693, %v8694
      %v8707 = vsel %vm8700, %v8692, %v8693
      %v8708 = vsel %vm8700, %v8699, %v8692
      %v8709 = vmul.f32 %v8708, %v8660
      %v8710 = vmul.f32 %v8707, %v8661
      %v8711 = vmul.f32 %v8706, %v8662
      %v8712 = vmul.f32 %v8705, %v8663
      %v8713 = vmul.f32 %v8704, %v8664
      %v8714 = vmul.f32 %v8703, %v8665
      %v8715 = vmul.f32 %v8702, %v8666
      %v8716 = vmul.f32 %v8701, %v8667
      %v8717 = vrot.slane %v8590, 7
      %v8718 = vrot.slane %v8596, 7
      %v8719 = vrot.slane %v8602, 7
      %v8720 = vrot.slane %v8608, 7
      %v8721 = vrot.slane %v8614, 7
      %v8722 = vrot.slane %v8620, 7
      %v8723 = vrot.slane %v8626, 7
      %v8724 = vrot.slane %v8632, 7
      %v8725 = vsel %vm8700, %v8723, %v8724
      %v8726 = vsel %vm8700, %v8722, %v8723
      %v8727 = vsel %vm8700, %v8721, %v8722
      %v8728 = vsel %vm8700, %v8720, %v8721
      %v8729 = vsel %vm8700, %v8719, %v8720
      %v8730 = vsel %vm8700, %v8718, %v8719
      %v8731 = vsel %vm8700, %v8717, %v8718
      %v8732 = vsel %vm8700, %v8724, %v8717
      %v8733 = vmul.f32 %v8732, %v8660
      %v8734 = vmul.f32 %v8731, %v8661
      %v8735 = vmul.f32 %v8730, %v8662
      %v8736 = vmul.f32 %v8729, %v8663
      %v8737 = vmul.f32 %v8728, %v8664
      %v8738 = vmul.f32 %v8727, %v8665
      %v8739 = vmul.f32 %v8726, %v8666
      %v8740 = vmul.f32 %v8725, %v8667
      %v8741 = vrot.slane %v7696, 1
      %v8742 = vrot.slane %v7702, 1
      %v8743 = vrot.slane %v7708, 1
      %v8744 = vrot.slane %v7714, 1
      %v8745 = vrot.slane %v7720, 1
      %v8746 = vrot.slane %v7726, 1
      %v8747 = vrot.slane %v7732, 1
      %v8748 = vrot.slane %v7738, 1
      %vm8749 = vcmp.lt.s32.totalorder %v8636, 7
      %v8750 = vsel %vm8749, %v8747, %v8748
      %v8751 = vsel %vm8749, %v8746, %v8747
      %v8752 = vsel %vm8749, %v8745, %v8746
      %v8753 = vsel %vm8749, %v8744, %v8745
      %v8754 = vsel %vm8749, %v8743, %v8744
      %v8755 = vsel %vm8749, %v8742, %v8743
      %v8756 = vsel %vm8749, %v8741, %v8742
      %v8757 = vsel %vm8749, %v8748, %v8741
      %v8758 = vmul.f32 %v8756, %v8684
      %v8759 = vmul.f32 %v8755, %v8685
      %v8760 = vmul.f32 %v8754, %v8686
      %v8761 = vmul.f32 %v8753, %v8687
      %v8762 = vmul.f32 %v8752, %v8688
      %v8763 = vmul.f32 %v8751, %v8689
      %v8764 = vmul.f32 %v8750, %v8690
      %v8765 = vmul.f32 %v8757, %v8691
      %v8766 = vrot.slane %v8590, 1
      %v8767 = vrot.slane %v8596, 1
      %v8768 = vrot.slane %v8602, 1
      %v8769 = vrot.slane %v8608, 1
      %v8770 = vrot.slane %v8614, 1
      %v8771 = vrot.slane %v8620, 1
      %v8772 = vrot.slane %v8626, 1
      %v8773 = vrot.slane %v8632, 1
      %v8774 = vsel %vm8749, %v8772, %v8773
      %v8775 = vsel %vm8749, %v8771, %v8772
      %v8776 = vsel %vm8749, %v8770, %v8771
      %v8777 = vsel %vm8749, %v8769, %v8770
      %v8778 = vsel %vm8749, %v8768, %v8769
      %v8779 = vsel %vm8749, %v8767, %v8768
      %v8780 = vsel %vm8749, %v8766, %v8767
      %v8781 = vsel %vm8749, %v8773, %v8766
      %v8782 = vmul.f32 %v8780, %v8684
      %v8783 = vmul.f32 %v8779, %v8685
      %v8784 = vmul.f32 %v8778, %v8686
      %v8785 = vmul.f32 %v8777, %v8687
      %v8786 = vmul.f32 %v8776, %v8688
      %v8787 = vmul.f32 %v8775, %v8689
      %v8788 = vmul.f32 %v8774, %v8690
      %v8789 = vmul.f32 %v8781, %v8691
      %8798 = vrot.lane.b32.xlu0 %v8733, 32
      %v8799 = vpop.permute.xlu0 %8798
      %8800 = vrot.lane.b32.xlu0 %v8734, 32
      %v8801 = vpop.permute.xlu0 %8800
      %8802 = vrot.lane.b32.xlu0 %v8735, 32
      %v8803 = vpop.permute.xlu0 %8802
      %8804 = vrot.lane.b32.xlu0 %v8736, 32
      %v8805 = vpop.permute.xlu0 %8804
      %8806 = vrot.lane.b32.xlu0 %v8737, 32
      %v8807 = vpop.permute.xlu0 %8806
      %8808 = vrot.lane.b32.xlu0 %v8738, 32
      %v8809 = vpop.permute.xlu0 %8808
      %8810 = vrot.lane.b32.xlu0 %v8739, 32
      %v8811 = vpop.permute.xlu0 %8810
      %8812 = vrot.lane.b32.xlu0 %v8740, 32
      %v8813 = vpop.permute.xlu0 %8812
      %8830 = vrot.lane.b32.xlu0 %v7696, 64
      %v8831 = vpop.permute.xlu0 %8830
      %8832 = vrot.lane.b32.xlu0 %v7702, 64
      %v8833 = vpop.permute.xlu0 %8832
      %8834 = vrot.lane.b32.xlu0 %v7708, 64
      %v8835 = vpop.permute.xlu0 %8834
      %8836 = vrot.lane.b32.xlu0 %v7714, 64
      %v8837 = vpop.permute.xlu0 %8836
      %8838 = vrot.lane.b32.xlu0 %v7720, 64
      %v8839 = vpop.permute.xlu0 %8838
      %8840 = vrot.lane.b32.xlu0 %v7726, 64
      %v8841 = vpop.permute.xlu0 %8840
      %8842 = vrot.lane.b32.xlu0 %v7732, 64
      %v8843 = vpop.permute.xlu0 %8842
      %8844 = vrot.lane.b32.xlu0 %v7738, 64
      %v8845 = vpop.permute.xlu0 %8844
      %8862 = vrot.lane.b32.xlu0 %v8590, 96
      %v8863 = vpop.permute.xlu0 %8862
      %8864 = vrot.lane.b32.xlu0 %v8596, 96
      %v8865 = vpop.permute.xlu0 %8864
      %8866 = vrot.lane.b32.xlu0 %v8602, 96
      %v8867 = vpop.permute.xlu0 %8866
      %8868 = vrot.lane.b32.xlu0 %v8608, 96
      %v8869 = vpop.permute.xlu0 %8868
      %8870 = vrot.lane.b32.xlu0 %v8614, 96
      %v8871 = vpop.permute.xlu0 %8870
      %8872 = vrot.lane.b32.xlu0 %v8620, 96
      %v8873 = vpop.permute.xlu0 %8872
      %8874 = vrot.lane.b32.xlu0 %v8626, 96
      %v8875 = vpop.permute.xlu0 %8874
      %8876 = vrot.lane.b32.xlu0 %v8632, 96
      %v8877 = vpop.permute.xlu0 %8876
      %8894 = vrot.lane.b32.xlu0 %v8782, 32
      %v8895 = vpop.permute.xlu0 %8894
      %8896 = vrot.lane.b32.xlu0 %v8783, 32
      %v8897 = vpop.permute.xlu0 %8896
      %8898 = vrot.lane.b32.xlu0 %v8784, 32
      %v8899 = vpop.permute.xlu0 %8898
      %8900 = vrot.lane.b32.xlu0 %v8785, 32
      %v8901 = vpop.permute.xlu0 %8900
      %8902 = vrot.lane.b32.xlu0 %v8786, 32
      %v8903 = vpop.permute.xlu0 %8902
      %8904 = vrot.lane.b32.xlu0 %v8787, 32
      %v8905 = vpop.permute.xlu0 %8904
      %8906 = vrot.lane.b32.xlu0 %v8788, 32
      %v8907 = vpop.permute.xlu0 %8906
      %8908 = vrot.lane.b32.xlu0 %v8789, 32
      %v8909 = vpop.permute.xlu0 %8908
      %v8918 = vsel %vm2411, %v8709, %v8799
      %v8919 = vsel %vm2411, %v8710, %v8801
      %v8920 = vsel %vm2411, %v8711, %v8803
      %v8921 = vsel %vm2411, %v8712, %v8805
      %v8922 = vsel %vm2411, %v8713, %v8807
      %v8923 = vsel %vm2411, %v8714, %v8809
      %v8924 = vsel %vm2411, %v8715, %v8811
      %v8925 = vsel %vm2411, %v8716, %v8813
      %v8926 = vsel %vm6723, %v8918, %v8831
      %v8927 = vsel %vm6723, %v8919, %v8833
      %v8928 = vsel %vm6723, %v8920, %v8835
      %v8929 = vsel %vm6723, %v8921, %v8837
      %v8930 = vsel %vm6723, %v8922, %v8839
      %v8931 = vsel %vm6723, %v8923, %v8841
      %v8932 = vsel %vm6723, %v8924, %v8843
      %v8933 = vsel %vm6723, %v8925, %v8845
      %vm8934 = vcmask 785408
      %v8935 = vsel %vm8934, %v8926, %v8863
      %v8936 = vsel %vm8934, %v8927, %v8865
      %v8937 = vsel %vm8934, %v8928, %v8867
      %v8938 = vsel %vm8934, %v8929, %v8869
      %v8939 = vsel %vm8934, %v8930, %v8871
      %v8940 = vsel %vm8934, %v8931, %v8873
      %v8941 = vsel %vm8934, %v8932, %v8875
      %v8942 = vsel %vm8934, %v8933, %v8877
      %v8943 = vsel %vm2411, %v8758, %v8895
      %v8944 = vsel %vm2411, %v8759, %v8897
      %v8945 = vsel %vm2411, %v8760, %v8899
      %v8946 = vsel %vm2411, %v8761, %v8901
      %v8947 = vsel %vm2411, %v8762, %v8903
      %v8948 = vsel %vm2411, %v8763, %v8905
      %v8949 = vsel %vm2411, %v8764, %v8907
      %v8950 = vsel %vm2411, %v8765, %v8909
      %v8951 = vld [vmem:[%s13] sm:$0xff]
      %v8952 = vld [vmem:[%s13 + $0x8] sm:$0xff]
      %v8953 = vld [vmem:[%s13 + $0x10] sm:$0xff]
      %v8954 = vld [vmem:[%s13 + $0x18] sm:$0xff]
      %v8955 = vld [vmem:[%s13 + $0x20] sm:$0xff]
      %v8956 = vld [vmem:[%s13 + $0x28] sm:$0xff]
      %v8957 = vld [vmem:[%s13 + $0x30] sm:$0xff]
      %v8958 = vld [vmem:[%s13 + $0x38] sm:$0xff]
      %v8959 = vld [vmem:[%s13 + $0x40] sm:$0xff]
      %v8960 = vld [vmem:[%s13 + $0x48] sm:$0xff]
      %v8961 = vld [vmem:[%s13 + $0x50] sm:$0xff]
      %v8962 = vld [vmem:[%s13 + $0x58] sm:$0xff]
      %v8963 = vld [vmem:[%s13 + $0x60] sm:$0xff]
      %v8964 = vld [vmem:[%s13 + $0x68] sm:$0xff]
      %v8965 = vld [vmem:[%s13 + $0x70] sm:$0xff]
      %v8966 = vld [vmem:[%s13 + $0x78] sm:$0xff]
      %v8967 = vld [vmem:[%s13 + $0x80] sm:$0xff]
      %v8968 = vld [vmem:[%s13 + $0x88] sm:$0xff]
      %v8969 = vld [vmem:[%s13 + $0x90] sm:$0xff]
      %v8970 = vld [vmem:[%s13 + $0x98] sm:$0xff]
      %v8971 = vld [vmem:[%s13 + $0xa0] sm:$0xff]
      %v8972 = vld [vmem:[%s13 + $0xa8] sm:$0xff]
      %v8973 = vld [vmem:[%s13 + $0xb0] sm:$0xff]
      %v8974 = vld [vmem:[%s13 + $0xb8] sm:$0xff]
      %v8975 = vld [vmem:[%s14] sm:$0x1]
      %v8977 = vlaneseq
      %v8978 = vshrl.u32 %v8977, 7
      %v8979 = vsub.s32 0, %v8978
      %v8980 = vrot.slane %v8975, %v8979
      %v8983 = vsel %vm6723, %v8943, 0
      %v8986 = vsel %vm6723, %v8944, 0
      %v8989 = vsel %vm6723, %v8945, 0
      %v8992 = vsel %vm6723, %v8946, 0
      %v8995 = vsel %vm6723, %v8947, 0
      %v8998 = vsel %vm6723, %v8948, 0
      %v9001 = vsel %vm6723, %v8949, 0
      %v9004 = vsel %vm6723, %v8950, 0
      %9006 = vmatprep.subr.mxu0 0.0
      %v9007 = vand.u32 %v8966, 4294901760
      %9008 = vmatpush1.msra.mxu0 %v9007
      %9009 = vmatprep.subr.mxu0 0.0
      %v9010 = vand.u32 %v8965, 4294901760
      %9011 = vmatpush1.msra.mxu0 %v9010
      %9012 = vmatprep.subr.mxu0 0.0
      %v9013 = vand.u32 %v8964, 4294901760
      %9014 = vmatpush1.msra.mxu0 %v9013
      %9015 = vmatprep.subr.mxu0 0.0
      %v9016 = vand.u32 %v8963, 4294901760
      %9017 = vmatpush1.msra.mxu0 %v9016
      %9018 = vmatprep.subr.mxu0 0.0
      %v9019 = vand.u32 %v8962, 4294901760
      %9020 = vmatpush1.msra.mxu0 %v9019
      %9021 = vmatprep.subr.mxu0 0.0
      %v9022 = vand.u32 %v8961, 4294901760
      %9023 = vmatpush1.msra.mxu0 %v9022
      %9024 = vmatprep.subr.mxu0 0.0
      %v9025 = vand.u32 %v8960, 4294901760
      %9026 = vmatpush1.msra.mxu0 %v9025
      %9027 = vmatprep.subr.mxu0 0.0
      %v9028 = vand.u32 %v8959, 4294901760
      %9029 = vmatpush1.msra.mxu0 %v9028
      %9030 = vmatprep.subr.mxu0 0.0
      %v9031 = vand.u32 %v8958, 4294901760
      %9032 = vmatpush1.msra.mxu0 %v9031
      %9033 = vmatprep.subr.mxu0 0.0
      %v9034 = vand.u32 %v8957, 4294901760
      %9035 = vmatpush1.msra.mxu0 %v9034
      %9036 = vmatprep.subr.mxu0 0.0
      %v9037 = vand.u32 %v8956, 4294901760
      %9038 = vmatpush1.msra.mxu0 %v9037
      %9039 = vmatprep.subr.mxu0 0.0
      %v9040 = vand.u32 %v8955, 4294901760
      %9041 = vmatpush1.msra.mxu0 %v9040
      %9042 = vmatprep.subr.mxu0 0.0
      %v9043 = vand.u32 %v8954, 4294901760
      %9044 = vmatpush1.msra.mxu0 %v9043
      %9045 = vmatprep.subr.mxu0 0.0
      %v9046 = vand.u32 %v8953, 4294901760
      %9047 = vmatpush1.msra.mxu0 %v9046
      %9048 = vmatprep.subr.mxu0 0.0
      %v9049 = vand.u32 %v8952, 4294901760
      %9050 = vmatpush1.msra.mxu0 %v9049
      %9051 = vmatprep.subr.mxu0 0.0
      %v9052 = vand.u32 %v8951, 4294901760
      %9053 = vmatpush1.msra.mxu0 %v9052
      %9054 = vmatprep.subr.mxu0 0.0
      %9055 = vmatpush2.msra.mxu0 0.0
      %9056 = vmatprep.subr.mxu0 0.0
      %9057 = vmatpush2.msra.mxu0 0.0
      %9058 = vmatprep.subr.mxu0 0.0
      %9059 = vmatpush2.msra.mxu0 0.0
      %9060 = vmatprep.subr.mxu0 0.0
      %9061 = vmatpush2.msra.mxu0 0.0
      %9062 = vmatprep.subr.mxu0 0.0
      %9063 = vmatpush2.msra.mxu0 0.0
      %9064 = vmatprep.subr.mxu0 0.0
      %9065 = vmatpush2.msra.mxu0 0.0
      %9066 = vmatprep.subr.mxu0 0.0
      %9067 = vmatpush2.msra.mxu0 0.0
      %9068 = vmatprep.subr.mxu0 0.0
      %9069 = vmatpush2.msra.mxu0 0.0
      %9070 = vmatprep.subr.mxu0 0.0
      %v9071 = vand.u32 %v8974, 4294901760
      %9072 = vmatpush2.msra.mxu0 %v9071
      %9073 = vmatprep.subr.mxu0 0.0
      %v9074 = vand.u32 %v8973, 4294901760
      %9075 = vmatpush2.msra.mxu0 %v9074
      %9076 = vmatprep.subr.mxu0 0.0
      %v9077 = vand.u32 %v8972, 4294901760
      %9078 = vmatpush2.msra.mxu0 %v9077
      %9079 = vmatprep.subr.mxu0 0.0
      %v9080 = vand.u32 %v8971, 4294901760
      %9081 = vmatpush2.msra.mxu0 %v9080
      %9082 = vmatprep.subr.mxu0 0.0
      %v9083 = vand.u32 %v8970, 4294901760
      %9084 = vmatpush2.msra.mxu0 %v9083
      %9085 = vmatprep.subr.mxu0 0.0
      %v9086 = vand.u32 %v8969, 4294901760
      %9087 = vmatpush2.msra.mxu0 %v9086
      %9088 = vmatprep.subr.mxu0 0.0
      %v9089 = vand.u32 %v8968, 4294901760
      %9090 = vmatpush2.msra.mxu0 %v9089
      %9091 = vmatprep.subr.mxu0 0.0
      %v9092 = vand.u32 %v8967, 4294901760
      %9093 = vmatpush2.msra.mxu0 %v9092
      %v9094 = vand.u32 %v8983, 4294901760
      %v9095 = vsub.f32 %v8983, %v9094
      %v9096 = vand.u32 %v9095, 4294901760
      %v9097 = vsub.f32 %v9095, %v9096
      %v9098 = vand.u32 %v9097, 4294901760
      %9099 = vmatprep.mubr.f32.mxu0 %v9098
      %v9100 = vand.u32 %v8935, 4294901760
      %v9101 = vsub.f32 %v8935, %v9100
      %v9102 = vand.u32 %v9101, 4294901760
      %v9103 = vsub.f32 %v9101, %v9102
      %v9104 = vand.u32 %v9103, 4294901760
      %9105 = vmatmul.mubr.f32.gmra.mxu0 %v9104
      %v9106 = vpop.f32.mrf.mxu0
      %v9107 = vadd.f32 %v8980, %v9106
      %v9108 = vpop.f32.mrf.mxu0
      %v9109 = vand.u32 %v8986, 4294901760
      %v9110 = vsub.f32 %v8986, %v9109
      %v9111 = vand.u32 %v9110, 4294901760
      %v9112 = vsub.f32 %v9110, %v9111
      %v9113 = vand.u32 %v9112, 4294901760
      %9114 = vmatprep.mubr.f32.mxu0 %v9113
      %v9115 = vand.u32 %v8936, 4294901760
      %v9116 = vsub.f32 %v8936, %v9115
      %v9117 = vand.u32 %v9116, 4294901760
      %v9118 = vsub.f32 %v9116, %v9117
      %v9119 = vand.u32 %v9118, 4294901760
      %9120 = vmatmul.mubr.f32.gmra.mxu0 %v9119
      %v9121 = vpop.f32.mrf.mxu0
      %v9122 = vadd.f32 %v8980, %v9121
      %v9123 = vpop.f32.mrf.mxu0
      %v9124 = vand.u32 %v8989, 4294901760
      %v9125 = vsub.f32 %v8989, %v9124
      %v9126 = vand.u32 %v9125, 4294901760
      %v9127 = vsub.f32 %v9125, %v9126
      %v9128 = vand.u32 %v9127, 4294901760
      %9129 = vmatprep.mubr.f32.mxu0 %v9128
      %v9130 = vand.u32 %v8937, 4294901760
      %v9131 = vsub.f32 %v8937, %v9130
      %v9132 = vand.u32 %v9131, 4294901760
      %v9133 = vsub.f32 %v9131, %v9132
      %v9134 = vand.u32 %v9133, 4294901760
      %9135 = vmatmul.mubr.f32.gmra.mxu0 %v9134
      %v9136 = vpop.f32.mrf.mxu0
      %v9137 = vadd.f32 %v8980, %v9136
      %v9138 = vpop.f32.mrf.mxu0
      %v9139 = vand.u32 %v8992, 4294901760
      %v9140 = vsub.f32 %v8992, %v9139
      %v9141 = vand.u32 %v9140, 4294901760
      %v9142 = vsub.f32 %v9140, %v9141
      %v9143 = vand.u32 %v9142, 4294901760
      %9144 = vmatprep.mubr.f32.mxu0 %v9143
      %v9145 = vand.u32 %v8938, 4294901760
      %v9146 = vsub.f32 %v8938, %v9145
      %v9147 = vand.u32 %v9146, 4294901760
      %v9148 = vsub.f32 %v9146, %v9147
      %v9149 = vand.u32 %v9148, 4294901760
      %9150 = vmatmul.mubr.f32.gmra.mxu0 %v9149
      %v9151 = vpop.f32.mrf.mxu0
      %v9152 = vadd.f32 %v8980, %v9151
      %v9153 = vpop.f32.mrf.mxu0
      %v9154 = vand.u32 %v8995, 4294901760
      %v9155 = vsub.f32 %v8995, %v9154
      %v9156 = vand.u32 %v9155, 4294901760
      %v9157 = vsub.f32 %v9155, %v9156
      %v9158 = vand.u32 %v9157, 4294901760
      %9159 = vmatprep.mubr.f32.mxu0 %v9158
      %v9160 = vand.u32 %v8939, 4294901760
      %v9161 = vsub.f32 %v8939, %v9160
      %v9162 = vand.u32 %v9161, 4294901760
      %v9163 = vsub.f32 %v9161, %v9162
      %v9164 = vand.u32 %v9163, 4294901760
      %9165 = vmatmul.mubr.f32.gmra.mxu0 %v9164
      %v9166 = vpop.f32.mrf.mxu0
      %v9167 = vadd.f32 %v8980, %v9166
      %v9168 = vpop.f32.mrf.mxu0
      %v9169 = vand.u32 %v8998, 4294901760
      %v9170 = vsub.f32 %v8998, %v9169
      %v9171 = vand.u32 %v9170, 4294901760
      %v9172 = vsub.f32 %v9170, %v9171
      %v9173 = vand.u32 %v9172, 4294901760
      %9174 = vmatprep.mubr.f32.mxu0 %v9173
      %v9175 = vand.u32 %v8940, 4294901760
      %v9176 = vsub.f32 %v8940, %v9175
      %v9177 = vand.u32 %v9176, 4294901760
      %v9178 = vsub.f32 %v9176, %v9177
      %v9179 = vand.u32 %v9178, 4294901760
      %9180 = vmatmul.mubr.f32.gmra.mxu0 %v9179
      %v9181 = vpop.f32.mrf.mxu0
      %v9182 = vadd.f32 %v8980, %v9181
      %v9183 = vpop.f32.mrf.mxu0
      %v9184 = vand.u32 %v9001, 4294901760
      %v9185 = vsub.f32 %v9001, %v9184
      %v9186 = vand.u32 %v9185, 4294901760
      %v9187 = vsub.f32 %v9185, %v9186
      %v9188 = vand.u32 %v9187, 4294901760
      %9189 = vmatprep.mubr.f32.mxu0 %v9188
      %v9190 = vand.u32 %v8941, 4294901760
      %v9191 = vsub.f32 %v8941, %v9190
      %v9192 = vand.u32 %v9191, 4294901760
      %v9193 = vsub.f32 %v9191, %v9192
      %v9194 = vand.u32 %v9193, 4294901760
      %9195 = vmatmul.mubr.f32.gmra.mxu0 %v9194
      %v9196 = vpop.f32.mrf.mxu0
      %v9197 = vadd.f32 %v8980, %v9196
      %v9198 = vpop.f32.mrf.mxu0
      %v9199 = vand.u32 %v9004, 4294901760
      %v9200 = vsub.f32 %v9004, %v9199
      %v9201 = vand.u32 %v9200, 4294901760
      %v9202 = vsub.f32 %v9200, %v9201
      %v9203 = vand.u32 %v9202, 4294901760
      %9204 = vmatprep.mubr.f32.mxu0 %v9203
      %v9205 = vand.u32 %v8942, 4294901760
      %v9206 = vsub.f32 %v8942, %v9205
      %v9207 = vand.u32 %v9206, 4294901760
      %v9208 = vsub.f32 %v9206, %v9207
      %v9209 = vand.u32 %v9208, 4294901760
      %9210 = vmatmul.mubr.f32.gmra.mxu0 %v9209
      %v9211 = vpop.f32.mrf.mxu0
      %v9212 = vadd.f32 %v8980, %v9211
      %v9213 = vpop.f32.mrf.mxu0
      %9214 = vdwg.mxu0
      %9215 = vmatprep.subr.mxu0 0.0
      %v9216 = vand.u32 %v8966, 4294901760
      %v9217 = vsub.f32 %v8966, %v9216
      %v9218 = vand.u32 %v9217, 4294901760
      %v9219 = vsub.f32 %v9217, %v9218
      %v9220 = vand.u32 %v9219, 4294901760
      %9221 = vmatpush1.msra.mxu0 %v9220
      %9222 = vmatprep.subr.mxu0 0.0
      %v9223 = vand.u32 %v8965, 4294901760
      %v9224 = vsub.f32 %v8965, %v9223
      %v9225 = vand.u32 %v9224, 4294901760
      %v9226 = vsub.f32 %v9224, %v9225
      %v9227 = vand.u32 %v9226, 4294901760
      %9228 = vmatpush1.msra.mxu0 %v9227
      %9229 = vmatprep.subr.mxu0 0.0
      %v9230 = vand.u32 %v8964, 4294901760
      %v9231 = vsub.f32 %v8964, %v9230
      %v9232 = vand.u32 %v9231, 4294901760
      %v9233 = vsub.f32 %v9231, %v9232
      %v9234 = vand.u32 %v9233, 4294901760
      %9235 = vmatpush1.msra.mxu0 %v9234
      %9236 = vmatprep.subr.mxu0 0.0
      %v9237 = vand.u32 %v8963, 4294901760
      %v9238 = vsub.f32 %v8963, %v9237
      %v9239 = vand.u32 %v9238, 4294901760
      %v9240 = vsub.f32 %v9238, %v9239
      %v9241 = vand.u32 %v9240, 4294901760
      %9242 = vmatpush1.msra.mxu0 %v9241
      %9243 = vmatprep.subr.mxu0 0.0
      %v9244 = vand.u32 %v8962, 4294901760
      %v9245 = vsub.f32 %v8962, %v9244
      %v9246 = vand.u32 %v9245, 4294901760
      %v9247 = vsub.f32 %v9245, %v9246
      %v9248 = vand.u32 %v9247, 4294901760
      %9249 = vmatpush1.msra.mxu0 %v9248
      %9250 = vmatprep.subr.mxu0 0.0
      %v9251 = vand.u32 %v8961, 4294901760
      %v9252 = vsub.f32 %v8961, %v9251
      %v9253 = vand.u32 %v9252, 4294901760
      %v9254 = vsub.f32 %v9252, %v9253
      %v9255 = vand.u32 %v9254, 4294901760
      %9256 = vmatpush1.msra.mxu0 %v9255
      %9257 = vmatprep.subr.mxu0 0.0
      %v9258 = vand.u32 %v8960, 4294901760
      %v9259 = vsub.f32 %v8960, %v9258
      %v9260 = vand.u32 %v9259, 4294901760
      %v9261 = vsub.f32 %v9259, %v9260
      %v9262 = vand.u32 %v9261, 4294901760
      %9263 = vmatpush1.msra.mxu0 %v9262
      %9264 = vmatprep.subr.mxu0 0.0
      %v9265 = vand.u32 %v8959, 4294901760
      %v9266 = vsub.f32 %v8959, %v9265
      %v9267 = vand.u32 %v9266, 4294901760
      %v9268 = vsub.f32 %v9266, %v9267
      %v9269 = vand.u32 %v9268, 4294901760
      %9270 = vmatpush1.msra.mxu0 %v9269
      %9271 = vmatprep.subr.mxu0 0.0
      %v9272 = vand.u32 %v8958, 4294901760
      %v9273 = vsub.f32 %v8958, %v9272
      %v9274 = vand.u32 %v9273, 4294901760
      %v9275 = vsub.f32 %v9273, %v9274
      %v9276 = vand.u32 %v9275, 4294901760
      %9277 = vmatpush1.msra.mxu0 %v9276
      %9278 = vmatprep.subr.mxu0 0.0
      %v9279 = vand.u32 %v8957, 4294901760
      %v9280 = vsub.f32 %v8957, %v9279
      %v9281 = vand.u32 %v9280, 4294901760
      %v9282 = vsub.f32 %v9280, %v9281
      %v9283 = vand.u32 %v9282, 4294901760
      %9284 = vmatpush1.msra.mxu0 %v9283
      %9285 = vmatprep.subr.mxu0 0.0
      %v9286 = vand.u32 %v8956, 4294901760
      %v9287 = vsub.f32 %v8956, %v9286
      %v9288 = vand.u32 %v9287, 4294901760
      %v9289 = vsub.f32 %v9287, %v9288
      %v9290 = vand.u32 %v9289, 4294901760
      %9291 = vmatpush1.msra.mxu0 %v9290
      %9292 = vmatprep.subr.mxu0 0.0
      %v9293 = vand.u32 %v8955, 4294901760
      %v9294 = vsub.f32 %v8955, %v9293
      %v9295 = vand.u32 %v9294, 4294901760
      %v9296 = vsub.f32 %v9294, %v9295
      %v9297 = vand.u32 %v9296, 4294901760
      %9298 = vmatpush1.msra.mxu0 %v9297
      %9299 = vmatprep.subr.mxu0 0.0
      %v9300 = vand.u32 %v8954, 4294901760
      %v9301 = vsub.f32 %v8954, %v9300
      %v9302 = vand.u32 %v9301, 4294901760
      %v9303 = vsub.f32 %v9301, %v9302
      %v9304 = vand.u32 %v9303, 4294901760
      %9305 = vmatpush1.msra.mxu0 %v9304
      %9306 = vmatprep.subr.mxu0 0.0
      %v9307 = vand.u32 %v8953, 4294901760
      %v9308 = vsub.f32 %v8953, %v9307
      %v9309 = vand.u32 %v9308, 4294901760
      %v9310 = vsub.f32 %v9308, %v9309
      %v9311 = vand.u32 %v9310, 4294901760
      %9312 = vmatpush1.msra.mxu0 %v9311
      %9313 = vmatprep.subr.mxu0 0.0
      %v9314 = vand.u32 %v8952, 4294901760
      %v9315 = vsub.f32 %v8952, %v9314
      %v9316 = vand.u32 %v9315, 4294901760
      %v9317 = vsub.f32 %v9315, %v9316
      %v9318 = vand.u32 %v9317, 4294901760
      %9319 = vmatpush1.msra.mxu0 %v9318
      %9320 = vmatprep.subr.mxu0 0.0
      %v9321 = vand.u32 %v8951, 4294901760
      %v9322 = vsub.f32 %v8951, %v9321
      %v9323 = vand.u32 %v9322, 4294901760
      %v9324 = vsub.f32 %v9322, %v9323
      %v9325 = vand.u32 %v9324, 4294901760
      %9326 = vmatpush1.msra.mxu0 %v9325
      %9327 = vmatprep.subr.mxu0 0.0
      %9328 = vmatpush2.msra.mxu0 0.0
      %9329 = vmatprep.subr.mxu0 0.0
      %9330 = vmatpush2.msra.mxu0 0.0
      %9331 = vmatprep.subr.mxu0 0.0
      %9332 = vmatpush2.msra.mxu0 0.0
      %9333 = vmatprep.subr.mxu0 0.0
      %9334 = vmatpush2.msra.mxu0 0.0
      %9335 = vmatprep.subr.mxu0 0.0
      %9336 = vmatpush2.msra.mxu0 0.0
      %9337 = vmatprep.subr.mxu0 0.0
      %9338 = vmatpush2.msra.mxu0 0.0
      %9339 = vmatprep.subr.mxu0 0.0
      %9340 = vmatpush2.msra.mxu0 0.0
      %9341 = vmatprep.subr.mxu0 0.0
      %9342 = vmatpush2.msra.mxu0 0.0
      %9343 = vmatprep.subr.mxu0 0.0
      %v9344 = vand.u32 %v8974, 4294901760
      %v9345 = vsub.f32 %v8974, %v9344
      %v9346 = vand.u32 %v9345, 4294901760
      %v9347 = vsub.f32 %v9345, %v9346
      %v9348 = vand.u32 %v9347, 4294901760
      %9349 = vmatpush2.msra.mxu0 %v9348
      %9350 = vmatprep.subr.mxu0 0.0
      %v9351 = vand.u32 %v8973, 4294901760
      %v9352 = vsub.f32 %v8973, %v9351
      %v9353 = vand.u32 %v9352, 4294901760
      %v9354 = vsub.f32 %v9352, %v9353
      %v9355 = vand.u32 %v9354, 4294901760
      %9356 = vmatpush2.msra.mxu0 %v9355
      %9357 = vmatprep.subr.mxu0 0.0
      %v9358 = vand.u32 %v8972, 4294901760
      %v9359 = vsub.f32 %v8972, %v9358
      %v9360 = vand.u32 %v9359, 4294901760
      %v9361 = vsub.f32 %v9359, %v9360
      %v9362 = vand.u32 %v9361, 4294901760
      %9363 = vmatpush2.msra.mxu0 %v9362
      %9364 = vmatprep.subr.mxu0 0.0
      %v9365 = vand.u32 %v8971, 4294901760
      %v9366 = vsub.f32 %v8971, %v9365
      %v9367 = vand.u32 %v9366, 4294901760
      %v9368 = vsub.f32 %v9366, %v9367
      %v9369 = vand.u32 %v9368, 4294901760
      %9370 = vmatpush2.msra.mxu0 %v9369
      %9371 = vmatprep.subr.mxu0 0.0
      %v9372 = vand.u32 %v8970, 4294901760
      %v9373 = vsub.f32 %v8970, %v9372
      %v9374 = vand.u32 %v9373, 4294901760
      %v9375 = vsub.f32 %v9373, %v9374
      %v9376 = vand.u32 %v9375, 4294901760
      %9377 = vmatpush2.msra.mxu0 %v9376
      %9378 = vmatprep.subr.mxu0 0.0
      %v9379 = vand.u32 %v8969, 4294901760
      %v9380 = vsub.f32 %v8969, %v9379
      %v9381 = vand.u32 %v9380, 4294901760
      %v9382 = vsub.f32 %v9380, %v9381
      %v9383 = vand.u32 %v9382, 4294901760
      %9384 = vmatpush2.msra.mxu0 %v9383
      %9385 = vmatprep.subr.mxu0 0.0
      %v9386 = vand.u32 %v8968, 4294901760
      %v9387 = vsub.f32 %v8968, %v9386
      %v9388 = vand.u32 %v9387, 4294901760
      %v9389 = vsub.f32 %v9387, %v9388
      %v9390 = vand.u32 %v9389, 4294901760
      %9391 = vmatpush2.msra.mxu0 %v9390
      %9392 = vmatprep.subr.mxu0 0.0
      %v9393 = vand.u32 %v8967, 4294901760
      %v9394 = vsub.f32 %v8967, %v9393
      %v9395 = vand.u32 %v9394, 4294901760
      %v9396 = vsub.f32 %v9394, %v9395
      %v9397 = vand.u32 %v9396, 4294901760
      %9398 = vmatpush2.msra.mxu0 %v9397
      %v9399 = vand.u32 %v8983, 4294901760
      %9400 = vmatprep.mubr.f32.mxu0 %v9399
      %v9401 = vand.u32 %v8935, 4294901760
      %9402 = vmatmul.mubr.f32.gmra.mxu0 %v9401
      %v9403 = vpop.f32.mrf.mxu0
      %v9404 = vadd.f32 %v9107, %v9403
      %v9405 = vpop.f32.mrf.mxu0
      %v9406 = vand.u32 %v8986, 4294901760
      %9407 = vmatprep.mubr.f32.mxu0 %v9406
      %v9408 = vand.u32 %v8936, 4294901760
      %9409 = vmatmul.mubr.f32.gmra.mxu0 %v9408
      %v9410 = vpop.f32.mrf.mxu0
      %v9411 = vadd.f32 %v9122, %v9410
      %v9412 = vpop.f32.mrf.mxu0
      %v9413 = vand.u32 %v8989, 4294901760
      %9414 = vmatprep.mubr.f32.mxu0 %v9413
      %v9415 = vand.u32 %v8937, 4294901760
      %9416 = vmatmul.mubr.f32.gmra.mxu0 %v9415
      %v9417 = vpop.f32.mrf.mxu0
      %v9418 = vadd.f32 %v9137, %v9417
      %v9419 = vpop.f32.mrf.mxu0
      %v9420 = vand.u32 %v8992, 4294901760
      %9421 = vmatprep.mubr.f32.mxu0 %v9420
      %v9422 = vand.u32 %v8938, 4294901760
      %9423 = vmatmul.mubr.f32.gmra.mxu0 %v9422
      %v9424 = vpop.f32.mrf.mxu0
      %v9425 = vadd.f32 %v9152, %v9424
      %v9426 = vpop.f32.mrf.mxu0
      %v9427 = vand.u32 %v8995, 4294901760
      %9428 = vmatprep.mubr.f32.mxu0 %v9427
      %v9429 = vand.u32 %v8939, 4294901760
      %9430 = vmatmul.mubr.f32.gmra.mxu0 %v9429
      %v9431 = vpop.f32.mrf.mxu0
      %v9432 = vadd.f32 %v9167, %v9431
      %v9433 = vpop.f32.mrf.mxu0
      %v9434 = vand.u32 %v8998, 4294901760
      %9435 = vmatprep.mubr.f32.mxu0 %v9434
      %v9436 = vand.u32 %v8940, 4294901760
      %9437 = vmatmul.mubr.f32.gmra.mxu0 %v9436
      %v9438 = vpop.f32.mrf.mxu0
      %v9439 = vadd.f32 %v9182, %v9438
      %v9440 = vpop.f32.mrf.mxu0
      %v9441 = vand.u32 %v9001, 4294901760
      %9442 = vmatprep.mubr.f32.mxu0 %v9441
      %v9443 = vand.u32 %v8941, 4294901760
      %9444 = vmatmul.mubr.f32.gmra.mxu0 %v9443
      %v9445 = vpop.f32.mrf.mxu0
      %v9446 = vadd.f32 %v9197, %v9445
      %v9447 = vpop.f32.mrf.mxu0
      %v9448 = vand.u32 %v9004, 4294901760
      %9449 = vmatprep.mubr.f32.mxu0 %v9448
      %v9450 = vand.u32 %v8942, 4294901760
      %9451 = vmatmul.mubr.f32.gmra.mxu0 %v9450
      %v9452 = vpop.f32.mrf.mxu0
      %v9453 = vadd.f32 %v9212, %v9452
      %v9454 = vpop.f32.mrf.mxu0
      %9455 = vdwg.mxu0
      %9456 = vmatprep.subr.mxu0 0.0
      %v9457 = vand.u32 %v8966, 4294901760
      %v9458 = vsub.f32 %v8966, %v9457
      %9459 = vmatpush1.msra.mxu0 %v9458
      %9460 = vmatprep.subr.mxu0 0.0
      %v9461 = vand.u32 %v8965, 4294901760
      %v9462 = vsub.f32 %v8965, %v9461
      %9463 = vmatpush1.msra.mxu0 %v9462
      %9464 = vmatprep.subr.mxu0 0.0
      %v9465 = vand.u32 %v8964, 4294901760
      %v9466 = vsub.f32 %v8964, %v9465
      %9467 = vmatpush1.msra.mxu0 %v9466
      %9468 = vmatprep.subr.mxu0 0.0
      %v9469 = vand.u32 %v8963, 4294901760
      %v9470 = vsub.f32 %v8963, %v9469
      %9471 = vmatpush1.msra.mxu0 %v9470
      %9472 = vmatprep.subr.mxu0 0.0
      %v9473 = vand.u32 %v8962, 4294901760
      %v9474 = vsub.f32 %v8962, %v9473
      %9475 = vmatpush1.msra.mxu0 %v9474
      %9476 = vmatprep.subr.mxu0 0.0
      %v9477 = vand.u32 %v8961, 4294901760
      %v9478 = vsub.f32 %v8961, %v9477
      %9479 = vmatpush1.msra.mxu0 %v9478
      %9480 = vmatprep.subr.mxu0 0.0
      %v9481 = vand.u32 %v8960, 4294901760
      %v9482 = vsub.f32 %v8960, %v9481
      %9483 = vmatpush1.msra.mxu0 %v9482
      %9484 = vmatprep.subr.mxu0 0.0
      %v9485 = vand.u32 %v8959, 4294901760
      %v9486 = vsub.f32 %v8959, %v9485
      %9487 = vmatpush1.msra.mxu0 %v9486
      %9488 = vmatprep.subr.mxu0 0.0
      %v9489 = vand.u32 %v8958, 4294901760
      %v9490 = vsub.f32 %v8958, %v9489
      %9491 = vmatpush1.msra.mxu0 %v9490
      %9492 = vmatprep.subr.mxu0 0.0
      %v9493 = vand.u32 %v8957, 4294901760
      %v9494 = vsub.f32 %v8957, %v9493
      %9495 = vmatpush1.msra.mxu0 %v9494
      %9496 = vmatprep.subr.mxu0 0.0
      %v9497 = vand.u32 %v8956, 4294901760
      %v9498 = vsub.f32 %v8956, %v9497
      %9499 = vmatpush1.msra.mxu0 %v9498
      %9500 = vmatprep.subr.mxu0 0.0
      %v9501 = vand.u32 %v8955, 4294901760
      %v9502 = vsub.f32 %v8955, %v9501
      %9503 = vmatpush1.msra.mxu0 %v9502
      %9504 = vmatprep.subr.mxu0 0.0
      %v9505 = vand.u32 %v8954, 4294901760
      %v9506 = vsub.f32 %v8954, %v9505
      %9507 = vmatpush1.msra.mxu0 %v9506
      %9508 = vmatprep.subr.mxu0 0.0
      %v9509 = vand.u32 %v8953, 4294901760
      %v9510 = vsub.f32 %v8953, %v9509
      %9511 = vmatpush1.msra.mxu0 %v9510
      %9512 = vmatprep.subr.mxu0 0.0
      %v9513 = vand.u32 %v8952, 4294901760
      %v9514 = vsub.f32 %v8952, %v9513
      %9515 = vmatpush1.msra.mxu0 %v9514
      %9516 = vmatprep.subr.mxu0 0.0
      %v9517 = vand.u32 %v8951, 4294901760
      %v9518 = vsub.f32 %v8951, %v9517
      %9519 = vmatpush1.msra.mxu0 %v9518
      %9520 = vmatprep.subr.mxu0 0.0
      %9521 = vmatpush2.msra.mxu0 0.0
      %9522 = vmatprep.subr.mxu0 0.0
      %9523 = vmatpush2.msra.mxu0 0.0
      %9524 = vmatprep.subr.mxu0 0.0
      %9525 = vmatpush2.msra.mxu0 0.0
      %9526 = vmatprep.subr.mxu0 0.0
      %9527 = vmatpush2.msra.mxu0 0.0
      %9528 = vmatprep.subr.mxu0 0.0
      %9529 = vmatpush2.msra.mxu0 0.0
      %9530 = vmatprep.subr.mxu0 0.0
      %9531 = vmatpush2.msra.mxu0 0.0
      %9532 = vmatprep.subr.mxu0 0.0
      %9533 = vmatpush2.msra.mxu0 0.0
      %9534 = vmatprep.subr.mxu0 0.0
      %9535 = vmatpush2.msra.mxu0 0.0
      %9536 = vmatprep.subr.mxu0 0.0
      %v9537 = vand.u32 %v8974, 4294901760
      %v9538 = vsub.f32 %v8974, %v9537
      %9539 = vmatpush2.msra.mxu0 %v9538
      %9540 = vmatprep.subr.mxu0 0.0
      %v9541 = vand.u32 %v8973, 4294901760
      %v9542 = vsub.f32 %v8973, %v9541
      %9543 = vmatpush2.msra.mxu0 %v9542
      %9544 = vmatprep.subr.mxu0 0.0
      %v9545 = vand.u32 %v8972, 4294901760
      %v9546 = vsub.f32 %v8972, %v9545
      %9547 = vmatpush2.msra.mxu0 %v9546
      %9548 = vmatprep.subr.mxu0 0.0
      %v9549 = vand.u32 %v8971, 4294901760
      %v9550 = vsub.f32 %v8971, %v9549
      %9551 = vmatpush2.msra.mxu0 %v9550
      %9552 = vmatprep.subr.mxu0 0.0
      %v9553 = vand.u32 %v8970, 4294901760
      %v9554 = vsub.f32 %v8970, %v9553
      %9555 = vmatpush2.msra.mxu0 %v9554
      %9556 = vmatprep.subr.mxu0 0.0
      %v9557 = vand.u32 %v8969, 4294901760
      %v9558 = vsub.f32 %v8969, %v9557
      %9559 = vmatpush2.msra.mxu0 %v9558
      %9560 = vmatprep.subr.mxu0 0.0
      %v9561 = vand.u32 %v8968, 4294901760
      %v9562 = vsub.f32 %v8968, %v9561
      %9563 = vmatpush2.msra.mxu0 %v9562
      %9564 = vmatprep.subr.mxu0 0.0
      %v9565 = vand.u32 %v8967, 4294901760
      %v9566 = vsub.f32 %v8967, %v9565
      %9567 = vmatpush2.msra.mxu0 %v9566
      %v9568 = vand.u32 %v8983, 4294901760
      %v9569 = vsub.f32 %v8983, %v9568
      %9570 = vmatprep.mubr.f32.mxu0 %v9569
      %v9571 = vand.u32 %v8935, 4294901760
      %v9572 = vsub.f32 %v8935, %v9571
      %9573 = vmatmul.mubr.f32.gmra.mxu0 %v9572
      %v9574 = vpop.f32.mrf.mxu0
      %v9575 = vadd.f32 %v9404, %v9574
      %v9576 = vpop.f32.mrf.mxu0
      %v9577 = vand.u32 %v8986, 4294901760
      %v9578 = vsub.f32 %v8986, %v9577
      %9579 = vmatprep.mubr.f32.mxu0 %v9578
      %v9580 = vand.u32 %v8936, 4294901760
      %v9581 = vsub.f32 %v8936, %v9580
      %9582 = vmatmul.mubr.f32.gmra.mxu0 %v9581
      %v9583 = vpop.f32.mrf.mxu0
      %v9584 = vadd.f32 %v9411, %v9583
      %v9585 = vpop.f32.mrf.mxu0
      %v9586 = vand.u32 %v8989, 4294901760
      %v9587 = vsub.f32 %v8989, %v9586
      %9588 = vmatprep.mubr.f32.mxu0 %v9587
      %v9589 = vand.u32 %v8937, 4294901760
      %v9590 = vsub.f32 %v8937, %v9589
      %9591 = vmatmul.mubr.f32.gmra.mxu0 %v9590
      %v9592 = vpop.f32.mrf.mxu0
      %v9593 = vadd.f32 %v9418, %v9592
      %v9594 = vpop.f32.mrf.mxu0
      %v9595 = vand.u32 %v8992, 4294901760
      %v9596 = vsub.f32 %v8992, %v9595
      %9597 = vmatprep.mubr.f32.mxu0 %v9596
      %v9598 = vand.u32 %v8938, 4294901760
      %v9599 = vsub.f32 %v8938, %v9598
      %9600 = vmatmul.mubr.f32.gmra.mxu0 %v9599
      %v9601 = vpop.f32.mrf.mxu0
      %v9602 = vadd.f32 %v9425, %v9601
      %v9603 = vpop.f32.mrf.mxu0
      %v9604 = vand.u32 %v8995, 4294901760
      %v9605 = vsub.f32 %v8995, %v9604
      %9606 = vmatprep.mubr.f32.mxu0 %v9605
      %v9607 = vand.u32 %v8939, 4294901760
      %v9608 = vsub.f32 %v8939, %v9607
      %9609 = vmatmul.mubr.f32.gmra.mxu0 %v9608
      %v9610 = vpop.f32.mrf.mxu0
      %v9611 = vadd.f32 %v9432, %v9610
      %v9612 = vpop.f32.mrf.mxu0
      %v9613 = vand.u32 %v8998, 4294901760
      %v9614 = vsub.f32 %v8998, %v9613
      %9615 = vmatprep.mubr.f32.mxu0 %v9614
      %v9616 = vand.u32 %v8940, 4294901760
      %v9617 = vsub.f32 %v8940, %v9616
      %9618 = vmatmul.mubr.f32.gmra.mxu0 %v9617
      %v9619 = vpop.f32.mrf.mxu0
      %v9620 = vadd.f32 %v9439, %v9619
      %v9621 = vpop.f32.mrf.mxu0
      %v9622 = vand.u32 %v9001, 4294901760
      %v9623 = vsub.f32 %v9001, %v9622
      %9624 = vmatprep.mubr.f32.mxu0 %v9623
      %v9625 = vand.u32 %v8941, 4294901760
      %v9626 = vsub.f32 %v8941, %v9625
      %9627 = vmatmul.mubr.f32.gmra.mxu0 %v9626
      %v9628 = vpop.f32.mrf.mxu0
      %v9629 = vadd.f32 %v9446, %v9628
      %v9630 = vpop.f32.mrf.mxu0
      %v9631 = vand.u32 %v9004, 4294901760
      %v9632 = vsub.f32 %v9004, %v9631
      %9633 = vmatprep.mubr.f32.mxu0 %v9632
      %v9634 = vand.u32 %v8942, 4294901760
      %v9635 = vsub.f32 %v8942, %v9634
      %9636 = vmatmul.mubr.f32.gmra.mxu0 %v9635
      %v9637 = vpop.f32.mrf.mxu0
      %v9638 = vadd.f32 %v9453, %v9637
      %v9639 = vpop.f32.mrf.mxu0
      %9640 = vdwg.mxu0
      %9641 = vmatprep.subr.mxu0 0.0
      %v9642 = vand.u32 %v8966, 4294901760
      %9643 = vmatpush1.msra.mxu0 %v9642
      %9644 = vmatprep.subr.mxu0 0.0
      %v9645 = vand.u32 %v8965, 4294901760
      %9646 = vmatpush1.msra.mxu0 %v9645
      %9647 = vmatprep.subr.mxu0 0.0
      %v9648 = vand.u32 %v8964, 4294901760
      %9649 = vmatpush1.msra.mxu0 %v9648
      %9650 = vmatprep.subr.mxu0 0.0
      %v9651 = vand.u32 %v8963, 4294901760
      %9652 = vmatpush1.msra.mxu0 %v9651
      %9653 = vmatprep.subr.mxu0 0.0
      %v9654 = vand.u32 %v8962, 4294901760
      %9655 = vmatpush1.msra.mxu0 %v9654
      %9656 = vmatprep.subr.mxu0 0.0
      %v9657 = vand.u32 %v8961, 4294901760
      %9658 = vmatpush1.msra.mxu0 %v9657
      %9659 = vmatprep.subr.mxu0 0.0
      %v9660 = vand.u32 %v8960, 4294901760
      %9661 = vmatpush1.msra.mxu0 %v9660
      %9662 = vmatprep.subr.mxu0 0.0
      %v9663 = vand.u32 %v8959, 4294901760
      %9664 = vmatpush1.msra.mxu0 %v9663
      %9665 = vmatprep.subr.mxu0 0.0
      %v9666 = vand.u32 %v8958, 4294901760
      %9667 = vmatpush1.msra.mxu0 %v9666
      %9668 = vmatprep.subr.mxu0 0.0
      %v9669 = vand.u32 %v8957, 4294901760
      %9670 = vmatpush1.msra.mxu0 %v9669
      %9671 = vmatprep.subr.mxu0 0.0
      %v9672 = vand.u32 %v8956, 4294901760
      %9673 = vmatpush1.msra.mxu0 %v9672
      %9674 = vmatprep.subr.mxu0 0.0
      %v9675 = vand.u32 %v8955, 4294901760
      %9676 = vmatpush1.msra.mxu0 %v9675
      %9677 = vmatprep.subr.mxu0 0.0
      %v9678 = vand.u32 %v8954, 4294901760
      %9679 = vmatpush1.msra.mxu0 %v9678
      %9680 = vmatprep.subr.mxu0 0.0
      %v9681 = vand.u32 %v8953, 4294901760
      %9682 = vmatpush1.msra.mxu0 %v9681
      %9683 = vmatprep.subr.mxu0 0.0
      %v9684 = vand.u32 %v8952, 4294901760
      %9685 = vmatpush1.msra.mxu0 %v9684
      %9686 = vmatprep.subr.mxu0 0.0
      %v9687 = vand.u32 %v8951, 4294901760
      %9688 = vmatpush1.msra.mxu0 %v9687
      %9689 = vmatprep.subr.mxu0 0.0
      %9690 = vmatpush2.msra.mxu0 0.0
      %9691 = vmatprep.subr.mxu0 0.0
      %9692 = vmatpush2.msra.mxu0 0.0
      %9693 = vmatprep.subr.mxu0 0.0
      %9694 = vmatpush2.msra.mxu0 0.0
      %9695 = vmatprep.subr.mxu0 0.0
      %9696 = vmatpush2.msra.mxu0 0.0
      %9697 = vmatprep.subr.mxu0 0.0
      %9698 = vmatpush2.msra.mxu0 0.0
      %9699 = vmatprep.subr.mxu0 0.0
      %9700 = vmatpush2.msra.mxu0 0.0
      %9701 = vmatprep.subr.mxu0 0.0
      %9702 = vmatpush2.msra.mxu0 0.0
      %9703 = vmatprep.subr.mxu0 0.0
      %9704 = vmatpush2.msra.mxu0 0.0
      %9705 = vmatprep.subr.mxu0 0.0
      %v9706 = vand.u32 %v8974, 4294901760
      %9707 = vmatpush2.msra.mxu0 %v9706
      %9708 = vmatprep.subr.mxu0 0.0
      %v9709 = vand.u32 %v8973, 4294901760
      %9710 = vmatpush2.msra.mxu0 %v9709
      %9711 = vmatprep.subr.mxu0 0.0
      %v9712 = vand.u32 %v8972, 4294901760
      %9713 = vmatpush2.msra.mxu0 %v9712
      %9714 = vmatprep.subr.mxu0 0.0
      %v9715 = vand.u32 %v8971, 4294901760
      %9716 = vmatpush2.msra.mxu0 %v9715
      %9717 = vmatprep.subr.mxu0 0.0
      %v9718 = vand.u32 %v8970, 4294901760
      %9719 = vmatpush2.msra.mxu0 %v9718
      %9720 = vmatprep.subr.mxu0 0.0
      %v9721 = vand.u32 %v8969, 4294901760
      %9722 = vmatpush2.msra.mxu0 %v9721
      %9723 = vmatprep.subr.mxu0 0.0
      %v9724 = vand.u32 %v8968, 4294901760
      %9725 = vmatpush2.msra.mxu0 %v9724
      %9726 = vmatprep.subr.mxu0 0.0
      %v9727 = vand.u32 %v8967, 4294901760
      %9728 = vmatpush2.msra.mxu0 %v9727
      %v9729 = vand.u32 %v8983, 4294901760
      %v9730 = vsub.f32 %v8983, %v9729
      %v9731 = vand.u32 %v9730, 4294901760
      %9732 = vmatprep.mubr.f32.mxu0 %v9731
      %v9733 = vand.u32 %v8935, 4294901760
      %v9734 = vsub.f32 %v8935, %v9733
      %v9735 = vand.u32 %v9734, 4294901760
      %9736 = vmatmul.mubr.f32.gmra.mxu0 %v9735
      %v9737 = vpop.f32.mrf.mxu0
      %v9738 = vadd.f32 %v9575, %v9737
      %v9739 = vpop.f32.mrf.mxu0
      %v9740 = vand.u32 %v8986, 4294901760
      %v9741 = vsub.f32 %v8986, %v9740
      %v9742 = vand.u32 %v9741, 4294901760
      %9743 = vmatprep.mubr.f32.mxu0 %v9742
      %v9744 = vand.u32 %v8936, 4294901760
      %v9745 = vsub.f32 %v8936, %v9744
      %v9746 = vand.u32 %v9745, 4294901760
      %9747 = vmatmul.mubr.f32.gmra.mxu0 %v9746
      %v9748 = vpop.f32.mrf.mxu0
      %v9749 = vadd.f32 %v9584, %v9748
      %v9750 = vpop.f32.mrf.mxu0
      %v9751 = vand.u32 %v8989, 4294901760
      %v9752 = vsub.f32 %v8989, %v9751
      %v9753 = vand.u32 %v9752, 4294901760
      %9754 = vmatprep.mubr.f32.mxu0 %v9753
      %v9755 = vand.u32 %v8937, 4294901760
      %v9756 = vsub.f32 %v8937, %v9755
      %v9757 = vand.u32 %v9756, 4294901760
      %9758 = vmatmul.mubr.f32.gmra.mxu0 %v9757
      %v9759 = vpop.f32.mrf.mxu0
      %v9760 = vadd.f32 %v9593, %v9759
      %v9761 = vpop.f32.mrf.mxu0
      %v9762 = vand.u32 %v8992, 4294901760
      %v9763 = vsub.f32 %v8992, %v9762
      %v9764 = vand.u32 %v9763, 4294901760
      %9765 = vmatprep.mubr.f32.mxu0 %v9764
      %v9766 = vand.u32 %v8938, 4294901760
      %v9767 = vsub.f32 %v8938, %v9766
      %v9768 = vand.u32 %v9767, 4294901760
      %9769 = vmatmul.mubr.f32.gmra.mxu0 %v9768
      %v9770 = vpop.f32.mrf.mxu0
      %v9771 = vadd.f32 %v9602, %v9770
      %v9772 = vpop.f32.mrf.mxu0
      %v9773 = vand.u32 %v8995, 4294901760
      %v9774 = vsub.f32 %v8995, %v9773
      %v9775 = vand.u32 %v9774, 4294901760
      %9776 = vmatprep.mubr.f32.mxu0 %v9775
      %v9777 = vand.u32 %v8939, 4294901760
      %v9778 = vsub.f32 %v8939, %v9777
      %v9779 = vand.u32 %v9778, 4294901760
      %9780 = vmatmul.mubr.f32.gmra.mxu0 %v9779
      %v9781 = vpop.f32.mrf.mxu0
      %v9782 = vadd.f32 %v9611, %v9781
      %v9783 = vpop.f32.mrf.mxu0
      %v9784 = vand.u32 %v8998, 4294901760
      %v9785 = vsub.f32 %v8998, %v9784
      %v9786 = vand.u32 %v9785, 4294901760
      %9787 = vmatprep.mubr.f32.mxu0 %v9786
      %v9788 = vand.u32 %v8940, 4294901760
      %v9789 = vsub.f32 %v8940, %v9788
      %v9790 = vand.u32 %v9789, 4294901760
      %9791 = vmatmul.mubr.f32.gmra.mxu0 %v9790
      %v9792 = vpop.f32.mrf.mxu0
      %v9793 = vadd.f32 %v9620, %v9792
      %v9794 = vpop.f32.mrf.mxu0
      %v9795 = vand.u32 %v9001, 4294901760
      %v9796 = vsub.f32 %v9001, %v9795
      %v9797 = vand.u32 %v9796, 4294901760
      %9798 = vmatprep.mubr.f32.mxu0 %v9797
      %v9799 = vand.u32 %v8941, 4294901760
      %v9800 = vsub.f32 %v8941, %v9799
      %v9801 = vand.u32 %v9800, 4294901760
      %9802 = vmatmul.mubr.f32.gmra.mxu0 %v9801
      %v9803 = vpop.f32.mrf.mxu0
      %v9804 = vadd.f32 %v9629, %v9803
      %v9805 = vpop.f32.mrf.mxu0
      %v9806 = vand.u32 %v9004, 4294901760
      %v9807 = vsub.f32 %v9004, %v9806
      %v9808 = vand.u32 %v9807, 4294901760
      %9809 = vmatprep.mubr.f32.mxu0 %v9808
      %v9810 = vand.u32 %v8942, 4294901760
      %v9811 = vsub.f32 %v8942, %v9810
      %v9812 = vand.u32 %v9811, 4294901760
      %9813 = vmatmul.mubr.f32.gmra.mxu0 %v9812
      %v9814 = vpop.f32.mrf.mxu0
      %v9815 = vadd.f32 %v9638, %v9814
      %v9816 = vpop.f32.mrf.mxu0
      %9817 = vdwg.mxu0
      %9818 = vmatprep.subr.mxu0 0.0
      %v9819 = vand.u32 %v8966, 4294901760
      %v9820 = vsub.f32 %v8966, %v9819
      %v9821 = vand.u32 %v9820, 4294901760
      %9822 = vmatpush1.msra.mxu0 %v9821
      %9823 = vmatprep.subr.mxu0 0.0
      %v9824 = vand.u32 %v8965, 4294901760
      %v9825 = vsub.f32 %v8965, %v9824
      %v9826 = vand.u32 %v9825, 4294901760
      %9827 = vmatpush1.msra.mxu0 %v9826
      %9828 = vmatprep.subr.mxu0 0.0
      %v9829 = vand.u32 %v8964, 4294901760
      %v9830 = vsub.f32 %v8964, %v9829
      %v9831 = vand.u32 %v9830, 4294901760
      %9832 = vmatpush1.msra.mxu0 %v9831
      %9833 = vmatprep.subr.mxu0 0.0
      %v9834 = vand.u32 %v8963, 4294901760
      %v9835 = vsub.f32 %v8963, %v9834
      %v9836 = vand.u32 %v9835, 4294901760
      %9837 = vmatpush1.msra.mxu0 %v9836
      %9838 = vmatprep.subr.mxu0 0.0
      %v9839 = vand.u32 %v8962, 4294901760
      %v9840 = vsub.f32 %v8962, %v9839
      %v9841 = vand.u32 %v9840, 4294901760
      %9842 = vmatpush1.msra.mxu0 %v9841
      %9843 = vmatprep.subr.mxu0 0.0
      %v9844 = vand.u32 %v8961, 4294901760
      %v9845 = vsub.f32 %v8961, %v9844
      %v9846 = vand.u32 %v9845, 4294901760
      %9847 = vmatpush1.msra.mxu0 %v9846
      %9848 = vmatprep.subr.mxu0 0.0
      %v9849 = vand.u32 %v8960, 4294901760
      %v9850 = vsub.f32 %v8960, %v9849
      %v9851 = vand.u32 %v9850, 4294901760
      %9852 = vmatpush1.msra.mxu0 %v9851
      %9853 = vmatprep.subr.mxu0 0.0
      %v9854 = vand.u32 %v8959, 4294901760
      %v9855 = vsub.f32 %v8959, %v9854
      %v9856 = vand.u32 %v9855, 4294901760
      %9857 = vmatpush1.msra.mxu0 %v9856
      %9858 = vmatprep.subr.mxu0 0.0
      %v9859 = vand.u32 %v8958, 4294901760
      %v9860 = vsub.f32 %v8958, %v9859
      %v9861 = vand.u32 %v9860, 4294901760
      %9862 = vmatpush1.msra.mxu0 %v9861
      %9863 = vmatprep.subr.mxu0 0.0
      %v9864 = vand.u32 %v8957, 4294901760
      %v9865 = vsub.f32 %v8957, %v9864
      %v9866 = vand.u32 %v9865, 4294901760
      %9867 = vmatpush1.msra.mxu0 %v9866
      %9868 = vmatprep.subr.mxu0 0.0
      %v9869 = vand.u32 %v8956, 4294901760
      %v9870 = vsub.f32 %v8956, %v9869
      %v9871 = vand.u32 %v9870, 4294901760
      %9872 = vmatpush1.msra.mxu0 %v9871
      %9873 = vmatprep.subr.mxu0 0.0
      %v9874 = vand.u32 %v8955, 4294901760
      %v9875 = vsub.f32 %v8955, %v9874
      %v9876 = vand.u32 %v9875, 4294901760
      %9877 = vmatpush1.msra.mxu0 %v9876
      %9878 = vmatprep.subr.mxu0 0.0
      %v9879 = vand.u32 %v8954, 4294901760
      %v9880 = vsub.f32 %v8954, %v9879
      %v9881 = vand.u32 %v9880, 4294901760
      %9882 = vmatpush1.msra.mxu0 %v9881
      %9883 = vmatprep.subr.mxu0 0.0
      %v9884 = vand.u32 %v8953, 4294901760
      %v9885 = vsub.f32 %v8953, %v9884
      %v9886 = vand.u32 %v9885, 4294901760
      %9887 = vmatpush1.msra.mxu0 %v9886
      %9888 = vmatprep.subr.mxu0 0.0
      %v9889 = vand.u32 %v8952, 4294901760
      %v9890 = vsub.f32 %v8952, %v9889
      %v9891 = vand.u32 %v9890, 4294901760
      %9892 = vmatpush1.msra.mxu0 %v9891
      %9893 = vmatprep.subr.mxu0 0.0
      %v9894 = vand.u32 %v8951, 4294901760
      %v9895 = vsub.f32 %v8951, %v9894
      %v9896 = vand.u32 %v9895, 4294901760
      %9897 = vmatpush1.msra.mxu0 %v9896
      %9898 = vmatprep.subr.mxu0 0.0
      %9899 = vmatpush2.msra.mxu0 0.0
      %9900 = vmatprep.subr.mxu0 0.0
      %9901 = vmatpush2.msra.mxu0 0.0
      %9902 = vmatprep.subr.mxu0 0.0
      %9903 = vmatpush2.msra.mxu0 0.0
      %9904 = vmatprep.subr.mxu0 0.0
      %9905 = vmatpush2.msra.mxu0 0.0
      %9906 = vmatprep.subr.mxu0 0.0
      %9907 = vmatpush2.msra.mxu0 0.0
      %9908 = vmatprep.subr.mxu0 0.0
      %9909 = vmatpush2.msra.mxu0 0.0
      %9910 = vmatprep.subr.mxu0 0.0
      %9911 = vmatpush2.msra.mxu0 0.0
      %9912 = vmatprep.subr.mxu0 0.0
      %9913 = vmatpush2.msra.mxu0 0.0
      %9914 = vmatprep.subr.mxu0 0.0
      %v9915 = vand.u32 %v8974, 4294901760
      %v9916 = vsub.f32 %v8974, %v9915
      %v9917 = vand.u32 %v9916, 4294901760
      %9918 = vmatpush2.msra.mxu0 %v9917
      %9919 = vmatprep.subr.mxu0 0.0
      %v9920 = vand.u32 %v8973, 4294901760
      %v9921 = vsub.f32 %v8973, %v9920
      %v9922 = vand.u32 %v9921, 4294901760
      %9923 = vmatpush2.msra.mxu0 %v9922
      %9924 = vmatprep.subr.mxu0 0.0
      %v9925 = vand.u32 %v8972, 4294901760
      %v9926 = vsub.f32 %v8972, %v9925
      %v9927 = vand.u32 %v9926, 4294901760
      %9928 = vmatpush2.msra.mxu0 %v9927
      %9929 = vmatprep.subr.mxu0 0.0
      %v9930 = vand.u32 %v8971, 4294901760
      %v9931 = vsub.f32 %v8971, %v9930
      %v9932 = vand.u32 %v9931, 4294901760
      %9933 = vmatpush2.msra.mxu0 %v9932
      %9934 = vmatprep.subr.mxu0 0.0
      %v9935 = vand.u32 %v8970, 4294901760
      %v9936 = vsub.f32 %v8970, %v9935
      %v9937 = vand.u32 %v9936, 4294901760
      %9938 = vmatpush2.msra.mxu0 %v9937
      %9939 = vmatprep.subr.mxu0 0.0
      %v9940 = vand.u32 %v8969, 4294901760
      %v9941 = vsub.f32 %v8969, %v9940
      %v9942 = vand.u32 %v9941, 4294901760
      %9943 = vmatpush2.msra.mxu0 %v9942
      %9944 = vmatprep.subr.mxu0 0.0
      %v9945 = vand.u32 %v8968, 4294901760
      %v9946 = vsub.f32 %v8968, %v9945
      %v9947 = vand.u32 %v9946, 4294901760
      %9948 = vmatpush2.msra.mxu0 %v9947
      %9949 = vmatprep.subr.mxu0 0.0
      %v9950 = vand.u32 %v8967, 4294901760
      %v9951 = vsub.f32 %v8967, %v9950
      %v9952 = vand.u32 %v9951, 4294901760
      %9953 = vmatpush2.msra.mxu0 %v9952
      %v9954 = vand.u32 %v8983, 4294901760
      %9955 = vmatprep.mubr.f32.mxu0 %v9954
      %v9956 = vand.u32 %v8935, 4294901760
      %9957 = vmatmul.mubr.f32.gmra.mxu0 %v9956
      %v9958 = vpop.f32.mrf.mxu0
      %v9959 = vadd.f32 %v9738, %v9958
      %v9960 = vpop.f32.mrf.mxu0
      %v9961 = vand.u32 %v8986, 4294901760
      %9962 = vmatprep.mubr.f32.mxu0 %v9961
      %v9963 = vand.u32 %v8936, 4294901760
      %9964 = vmatmul.mubr.f32.gmra.mxu0 %v9963
      %v9965 = vpop.f32.mrf.mxu0
      %v9966 = vadd.f32 %v9749, %v9965
      %v9967 = vpop.f32.mrf.mxu0
      %v9968 = vand.u32 %v8989, 4294901760
      %9969 = vmatprep.mubr.f32.mxu0 %v9968
      %v9970 = vand.u32 %v8937, 4294901760
      %9971 = vmatmul.mubr.f32.gmra.mxu0 %v9970
      %v9972 = vpop.f32.mrf.mxu0
      %v9973 = vadd.f32 %v9760, %v9972
      %v9974 = vpop.f32.mrf.mxu0
      %v9975 = vand.u32 %v8992, 4294901760
      %9976 = vmatprep.mubr.f32.mxu0 %v9975
      %v9977 = vand.u32 %v8938, 4294901760
      %9978 = vmatmul.mubr.f32.gmra.mxu0 %v9977
      %v9979 = vpop.f32.mrf.mxu0
      %v9980 = vadd.f32 %v9771, %v9979
      %v9981 = vpop.f32.mrf.mxu0
      %v9982 = vand.u32 %v8995, 4294901760
      %9983 = vmatprep.mubr.f32.mxu0 %v9982
      %v9984 = vand.u32 %v8939, 4294901760
      %9985 = vmatmul.mubr.f32.gmra.mxu0 %v9984
      %v9986 = vpop.f32.mrf.mxu0
      %v9987 = vadd.f32 %v9782, %v9986
      %v9988 = vpop.f32.mrf.mxu0
      %v9989 = vand.u32 %v8998, 4294901760
      %9990 = vmatprep.mubr.f32.mxu0 %v9989
      %v9991 = vand.u32 %v8940, 4294901760
      %9992 = vmatmul.mubr.f32.gmra.mxu0 %v9991
      %v9993 = vpop.f32.mrf.mxu0
      %v9994 = vadd.f32 %v9793, %v9993
      %v9995 = vpop.f32.mrf.mxu0
      %v9996 = vand.u32 %v9001, 4294901760
      %9997 = vmatprep.mubr.f32.mxu0 %v9996
      %v9998 = vand.u32 %v8941, 4294901760
      %9999 = vmatmul.mubr.f32.gmra.mxu0 %v9998
      %v10000 = vpop.f32.mrf.mxu0
      %v10001 = vadd.f32 %v9804, %v10000
      %v10002 = vpop.f32.mrf.mxu0
      %v10003 = vand.u32 %v9004, 4294901760
      %10004 = vmatprep.mubr.f32.mxu0 %v10003
      %v10005 = vand.u32 %v8942, 4294901760
      %10006 = vmatmul.mubr.f32.gmra.mxu0 %v10005
      %v10007 = vpop.f32.mrf.mxu0
      %v10008 = vadd.f32 %v9815, %v10007
      %v10009 = vpop.f32.mrf.mxu0
      %10010 = vdwg.mxu0
      %10011 = vmatprep.subr.mxu0 0.0
      %v10012 = vand.u32 %v8966, 4294901760
      %10013 = vmatpush1.msra.mxu0 %v10012
      %10014 = vmatprep.subr.mxu0 0.0
      %v10015 = vand.u32 %v8965, 4294901760
      %10016 = vmatpush1.msra.mxu0 %v10015
      %10017 = vmatprep.subr.mxu0 0.0
      %v10018 = vand.u32 %v8964, 4294901760
      %10019 = vmatpush1.msra.mxu0 %v10018
      %10020 = vmatprep.subr.mxu0 0.0
      %v10021 = vand.u32 %v8963, 4294901760
      %10022 = vmatpush1.msra.mxu0 %v10021
      %10023 = vmatprep.subr.mxu0 0.0
      %v10024 = vand.u32 %v8962, 4294901760
      %10025 = vmatpush1.msra.mxu0 %v10024
      %10026 = vmatprep.subr.mxu0 0.0
      %v10027 = vand.u32 %v8961, 4294901760
      %10028 = vmatpush1.msra.mxu0 %v10027
      %10029 = vmatprep.subr.mxu0 0.0
      %v10030 = vand.u32 %v8960, 4294901760
      %10031 = vmatpush1.msra.mxu0 %v10030
      %10032 = vmatprep.subr.mxu0 0.0
      %v10033 = vand.u32 %v8959, 4294901760
      %10034 = vmatpush1.msra.mxu0 %v10033
      %10035 = vmatprep.subr.mxu0 0.0
      %v10036 = vand.u32 %v8958, 4294901760
      %10037 = vmatpush1.msra.mxu0 %v10036
      %10038 = vmatprep.subr.mxu0 0.0
      %v10039 = vand.u32 %v8957, 4294901760
      %10040 = vmatpush1.msra.mxu0 %v10039
      %10041 = vmatprep.subr.mxu0 0.0
      %v10042 = vand.u32 %v8956, 4294901760
      %10043 = vmatpush1.msra.mxu0 %v10042
      %10044 = vmatprep.subr.mxu0 0.0
      %v10045 = vand.u32 %v8955, 4294901760
      %10046 = vmatpush1.msra.mxu0 %v10045
      %10047 = vmatprep.subr.mxu0 0.0
      %v10048 = vand.u32 %v8954, 4294901760
      %10049 = vmatpush1.msra.mxu0 %v10048
      %10050 = vmatprep.subr.mxu0 0.0
      %v10051 = vand.u32 %v8953, 4294901760
      %10052 = vmatpush1.msra.mxu0 %v10051
      %10053 = vmatprep.subr.mxu0 0.0
      %v10054 = vand.u32 %v8952, 4294901760
      %10055 = vmatpush1.msra.mxu0 %v10054
      %10056 = vmatprep.subr.mxu0 0.0
      %v10057 = vand.u32 %v8951, 4294901760
      %10058 = vmatpush1.msra.mxu0 %v10057
      %10059 = vmatprep.subr.mxu0 0.0
      %10060 = vmatpush2.msra.mxu0 0.0
      %10061 = vmatprep.subr.mxu0 0.0
      %10062 = vmatpush2.msra.mxu0 0.0
      %10063 = vmatprep.subr.mxu0 0.0
      %10064 = vmatpush2.msra.mxu0 0.0
      %10065 = vmatprep.subr.mxu0 0.0
      %10066 = vmatpush2.msra.mxu0 0.0
      %10067 = vmatprep.subr.mxu0 0.0
      %10068 = vmatpush2.msra.mxu0 0.0
      %10069 = vmatprep.subr.mxu0 0.0
      %10070 = vmatpush2.msra.mxu0 0.0
      %10071 = vmatprep.subr.mxu0 0.0
      %10072 = vmatpush2.msra.mxu0 0.0
      %10073 = vmatprep.subr.mxu0 0.0
      %10074 = vmatpush2.msra.mxu0 0.0
      %10075 = vmatprep.subr.mxu0 0.0
      %v10076 = vand.u32 %v8974, 4294901760
      %10077 = vmatpush2.msra.mxu0 %v10076
      %10078 = vmatprep.subr.mxu0 0.0
      %v10079 = vand.u32 %v8973, 4294901760
      %10080 = vmatpush2.msra.mxu0 %v10079
      %10081 = vmatprep.subr.mxu0 0.0
      %v10082 = vand.u32 %v8972, 4294901760
      %10083 = vmatpush2.msra.mxu0 %v10082
      %10084 = vmatprep.subr.mxu0 0.0
      %v10085 = vand.u32 %v8971, 4294901760
      %10086 = vmatpush2.msra.mxu0 %v10085
      %10087 = vmatprep.subr.mxu0 0.0
      %v10088 = vand.u32 %v8970, 4294901760
      %10089 = vmatpush2.msra.mxu0 %v10088
      %10090 = vmatprep.subr.mxu0 0.0
      %v10091 = vand.u32 %v8969, 4294901760
      %10092 = vmatpush2.msra.mxu0 %v10091
      %10093 = vmatprep.subr.mxu0 0.0
      %v10094 = vand.u32 %v8968, 4294901760
      %10095 = vmatpush2.msra.mxu0 %v10094
      %10096 = vmatprep.subr.mxu0 0.0
      %v10097 = vand.u32 %v8967, 4294901760
      %10098 = vmatpush2.msra.mxu0 %v10097
      %v10099 = vand.u32 %v8983, 4294901760
      %10100 = vmatprep.mubr.f32.mxu0 %v10099
      %v10101 = vand.u32 %v8935, 4294901760
      %10102 = vmatmul.mubr.f32.gmra.mxu0 %v10101
      %v10103 = vpop.f32.mrf.mxu0
      %v10104 = vadd.f32 %v9959, %v10103
      %v10105 = vpop.f32.mrf.mxu0
      %v10106 = vand.u32 %v8986, 4294901760
      %10107 = vmatprep.mubr.f32.mxu0 %v10106
      %v10108 = vand.u32 %v8936, 4294901760
      %10109 = vmatmul.mubr.f32.gmra.mxu0 %v10108
      %v10110 = vpop.f32.mrf.mxu0
      %v10111 = vadd.f32 %v9966, %v10110
      %v10112 = vpop.f32.mrf.mxu0
      %v10113 = vand.u32 %v8989, 4294901760
      %10114 = vmatprep.mubr.f32.mxu0 %v10113
      %v10115 = vand.u32 %v8937, 4294901760
      %10116 = vmatmul.mubr.f32.gmra.mxu0 %v10115
      %v10117 = vpop.f32.mrf.mxu0
      %v10118 = vadd.f32 %v9973, %v10117
      %v10119 = vpop.f32.mrf.mxu0
      %v10120 = vand.u32 %v8992, 4294901760
      %10121 = vmatprep.mubr.f32.mxu0 %v10120
      %v10122 = vand.u32 %v8938, 4294901760
      %10123 = vmatmul.mubr.f32.gmra.mxu0 %v10122
      %v10124 = vpop.f32.mrf.mxu0
      %v10125 = vadd.f32 %v9980, %v10124
      %v10126 = vpop.f32.mrf.mxu0
      %v10127 = vand.u32 %v8995, 4294901760
      %10128 = vmatprep.mubr.f32.mxu0 %v10127
      %v10129 = vand.u32 %v8939, 4294901760
      %10130 = vmatmul.mubr.f32.gmra.mxu0 %v10129
      %v10131 = vpop.f32.mrf.mxu0
      %v10132 = vadd.f32 %v9987, %v10131
      %v10133 = vpop.f32.mrf.mxu0
      %v10134 = vand.u32 %v8998, 4294901760
      %10135 = vmatprep.mubr.f32.mxu0 %v10134
      %v10136 = vand.u32 %v8940, 4294901760
      %10137 = vmatmul.mubr.f32.gmra.mxu0 %v10136
      %v10138 = vpop.f32.mrf.mxu0
      %v10139 = vadd.f32 %v9994, %v10138
      %v10140 = vpop.f32.mrf.mxu0
      %v10141 = vand.u32 %v9001, 4294901760
      %10142 = vmatprep.mubr.f32.mxu0 %v10141
      %v10143 = vand.u32 %v8941, 4294901760
      %10144 = vmatmul.mubr.f32.gmra.mxu0 %v10143
      %v10145 = vpop.f32.mrf.mxu0
      %v10146 = vadd.f32 %v10001, %v10145
      %v10147 = vpop.f32.mrf.mxu0
      %v10148 = vand.u32 %v9004, 4294901760
      %10149 = vmatprep.mubr.f32.mxu0 %v10148
      %v10150 = vand.u32 %v8942, 4294901760
      %10151 = vmatmul.mubr.f32.gmra.mxu0 %v10150
      %v10152 = vpop.f32.mrf.mxu0
      %v10153 = vadd.f32 %v10008, %v10152
      %v10154 = vpop.f32.mrf.mxu0
      %10155 = vdwg.mxu0
      %v10156 = vsel %vm2411, %v10104, 0.0
      %v10157 = vsel %vm2411, %v10111, 0.0
      %v10158 = vadd.f32 %v10156, %v10157
      %v10159 = vsel %vm2411, %v10118, 0.0
      %v10160 = vadd.f32 %v10158, %v10159
      %v10161 = vsel %vm2411, %v10125, 0.0
      %v10162 = vadd.f32 %v10160, %v10161
      %v10163 = vsel %vm2411, %v10132, 0.0
      %v10164 = vadd.f32 %v10162, %v10163
      %v10165 = vsel %vm2411, %v10139, 0.0
      %v10166 = vadd.f32 %v10164, %v10165
      %v10167 = vsel %vm2411, %v10146, 0.0
      %v10168 = vadd.f32 %v10166, %v10167
      %v10169 = vsel %vm2411, %v10153, 0.0
      %v10170 = vadd.f32 %v10168, %v10169
      %v10171 = vrot.slane %v10170, 4
      %v10172 = vadd.f32 %v10170, %v10171
      %v10173 = vrot.slane %v10172, 2
      %v10174 = vadd.f32 %v10172, %v10173
      %v10175 = vrot.slane %v10174, 1
      %v10176 = vadd.f32 %v10174, %v10175
      %v10177 = vmul.f32 %v10176, %v4888
      %v10178 = vsub.f32 %v10104, %v10177
      %v10179 = vsub.f32 %v10111, %v10177
      %v10180 = vsub.f32 %v10118, %v10177
      %v10181 = vsub.f32 %v10125, %v10177
      %v10182 = vsub.f32 %v10132, %v10177
      %v10183 = vsub.f32 %v10139, %v10177
      %v10184 = vsub.f32 %v10146, %v10177
      %v10185 = vsub.f32 %v10153, %v10177
      %v10186 = vmul.f32 %v10178, %v10178
      %v10187 = vmul.f32 %v10179, %v10179
      %v10188 = vmul.f32 %v10180, %v10180
      %v10189 = vmul.f32 %v10181, %v10181
      %v10190 = vmul.f32 %v10182, %v10182
      %v10191 = vmul.f32 %v10183, %v10183
      %v10192 = vmul.f32 %v10184, %v10184
      %v10193 = vmul.f32 %v10185, %v10185
      %v10194 = vsel %vm2411, %v10186, 0.0
      %v10195 = vsel %vm2411, %v10187, 0.0
      %v10196 = vadd.f32 %v10194, %v10195
      %v10197 = vsel %vm2411, %v10188, 0.0
      %v10198 = vadd.f32 %v10196, %v10197
      %v10199 = vsel %vm2411, %v10189, 0.0
      %v10200 = vadd.f32 %v10198, %v10199
      %v10201 = vsel %vm2411, %v10190, 0.0
      %v10202 = vadd.f32 %v10200, %v10201
      %v10203 = vsel %vm2411, %v10191, 0.0
      %v10204 = vadd.f32 %v10202, %v10203
      %v10205 = vsel %vm2411, %v10192, 0.0
      %v10206 = vadd.f32 %v10204, %v10205
      %v10207 = vsel %vm2411, %v10193, 0.0
      %v10208 = vadd.f32 %v10206, %v10207
      %v10209 = vrot.slane %v10208, 4
      %v10210 = vadd.f32 %v10208, %v10209
      %v10211 = vrot.slane %v10210, 2
      %v10212 = vadd.f32 %v10210, %v10211
      %v10213 = vrot.slane %v10212, 1
      %v10214 = vadd.f32 %v10212, %v10213
      %v10215 = vmul.f32 %v10214, %v4888
      %v10216 = vadd.f32 %v10215, 1e-05
      %v10217 = vrsqrt.pop %v10216
      %v10218 = vmul.f32 %v10178, %v10217
      %v10219 = vmul.f32 %v10179, %v10217
      %v10220 = vmul.f32 %v10180, %v10217
      %v10221 = vmul.f32 %v10181, %v10217
      %v10222 = vmul.f32 %v10182, %v10217
      %v10223 = vmul.f32 %v10183, %v10217
      %v10224 = vmul.f32 %v10184, %v10217
      %v10225 = vmul.f32 %v10185, %v10217
      %10226 = vst.msk [vmem:[%s542] sm:$0xff] %vm2411, %v10218
      %10227 = vst.msk [vmem:[%s542 + $0x8] sm:$0xff] %vm2411, %v10219
      %10228 = vst.msk [vmem:[%s542 + $0x10] sm:$0xff] %vm2411, %v10220
      %10229 = vst.msk [vmem:[%s542 + $0x18] sm:$0xff] %vm2411, %v10221
      %10230 = vst.msk [vmem:[%s542 + $0x20] sm:$0xff] %vm2411, %v10222
      %10231 = vst.msk [vmem:[%s542 + $0x28] sm:$0xff] %vm2411, %v10223
      %10232 = vst.msk [vmem:[%s542 + $0x30] sm:$0xff] %vm2411, %v10224
      %10233 = vst.msk [vmem:[%s542 + $0x38] sm:$0xff] %vm2411, %v10225
      %p10234 = scmp.lt.s32.totalorder %s26, 1
      %s10235 = scalar_select %p10234, %s26, 1
      %s10236 = smul.addr %s10235, 8
      %s10237 = smul.addr %s10236, 8
      %s10238 = scalar_lea.vmem %s15, %s10237
      // Predicated region
      $region81: #{tpu_custom_call.1} parent=79 // pred_check
        %p10239 = pneg %p379
      $region82: #{tpu_custom_call.1} parent=79 // pred_check_branch
        %10241 = sbr.rel (%p10239) target = $region84
      $region83: #{tpu_custom_call.1} parent=79 // pred_region
        _
      $region84: #{tpu_custom_call.1} parent=79 // pred_fallthru
        _
    $region80: #{tpu_custom_call.1} parent=5 // pred_fallthru
      _
    %p10242 = scmp.le.s32.totalorder 2, %s21
    // Predicated region
    $region85: #{tpu_custom_call.1} parent=5 // pred_check
      %p10243 = pneg %p10242
    $region86: #{tpu_custom_call.1} parent=5 // pred_check_branch
      %10245 = sbr.rel (%p10243) target = $region88
    $region87: #{tpu_custom_call.1} parent=5 // pred_region
      %s10246 = ssub.s32 %s21, 2
      // Predicated region
      $region89: #{tpu_custom_call.1} parent=87 // pred_check
        %p10247 = pneg %p385
      $region90: #{tpu_custom_call.1} parent=87 // pred_check_branch
        %10249 = sbr.rel (%p10247) target = $region92
      $region91: #{tpu_custom_call.1} parent=87 // pred_region
        %p10250 = scmp.lt.s32.totalorder %s27, 1
        %s10251 = scalar_select %p10250, %s27, 1
        %s10252 = smul.addr %s10251, 8
        %s10253 = smul.addr %s10252, 8
        %s10254 = scalar_lea.vmem %s15, %s10253
      $region92: #{tpu_custom_call.1} parent=87 // pred_fallthru
        _
    $region88: #{tpu_custom_call.1} parent=5 // pred_fallthru
      _
  $region6: #{tpu_custom_call.1} parent=0 // loop_footer
    %s25 = sadd.s32 1, %s21
  $region7: #{tpu_custom_call.1} parent=0 // loop_footer_branch
    %20 = sbr.rel target = $region3
  $region8: #{tpu_custom_call.1} parent=0 // loop_exit
    _

</llo_original>
